<compile_context>
chip_gen: v5e
topology: v5e:2x2
jax: 0.10.0
libtpu: 0.0.40
codegen_flags: <defaults>
</compile_context>

<pallas_src>
import functools
import math

import jax
import jax.numpy as jnp
from jax.experimental import pallas as pl
from jax.experimental.pallas import tpu as pltpu


def _window_mha_kernel(x_ref, wqkv_ref, bqkv_ref, wo_ref, bo_ref, o_ref, *,
                       num_heads, windows_per_block, tokens_per_window):
    """One grid step == windows_per_block windows: fused QKV, attention, out-proj."""
    WB = windows_per_block
    L = tokens_per_window
    E = x_ref.shape[-1]
    hd = E // num_heads

    x = x_ref[...]                                            # (WB*L, E)

    # Fused QKV projection: single MXU matmul with the pre-transposed packed
    # weight (no in-kernel transpose).  The 1/sqrt(hd) scale is already folded
    # into the Q slice of wqkv/bqkv by the wrapper.
    qkv = jnp.dot(x, wqkv_ref[...],
                  preferred_element_type=jnp.float32) + bqkv_ref[...]
    q = qkv[:, 0 * E:1 * E]                                   # (WB*L, E), pre-scaled
    k = qkv[:, 1 * E:2 * E]
    v = qkv[:, 2 * E:3 * E]

    wo = wo_ref[...]                                          # (E, E) == W_o^T

    acc = None
    for h in range(num_heads):                                # static unroll (4)
        qh = q[:, h * hd:(h + 1) * hd].reshape(WB, L, hd)
        kh = k[:, h * hd:(h + 1) * hd].reshape(WB, L, hd)
        vh = v[:, h * hd:(h + 1) * hd].reshape(WB, L, hd)

        # Scores batched over all windows in the block (one batch dim).
        s = jnp.einsum("wld,wmd->wlm", qh, kh,
                       preferred_element_type=jnp.float32)    # (WB, L, L)
        s = s - jnp.max(s, axis=-1, keepdims=True)            # stable softmax
        p = jnp.exp(s)
        inv = pl.reciprocal(jnp.sum(p, axis=-1, keepdims=True), approx=True)
        p = p * inv
        ctx = jnp.einsum("wlm,wmd->wld", p, vh,
                         preferred_element_type=jnp.float32)  # (WB, L, hd)

        # Fold this head's context straight into the output projection
        # (accumulation instead of a concat-over-heads relayout).
        contrib = jnp.dot(ctx.reshape(WB * L, hd),
                          wo[h * hd:(h + 1) * hd, :],
                          preferred_element_type=jnp.float32)  # (WB*L, E)
        acc = contrib if acc is None else acc + contrib

    out = acc + bo_ref[...]
    o_ref[...] = out.astype(o_ref.dtype)


def _choose_windows_per_block(num_win):
    # Prefer ~2 grid steps so v7x's two TensorCores can each take half of the
    # "parallel" window axis; fall back to whatever divides evenly.
    for blk in (num_win // 2, num_win, 1):
        if blk >= 1 and num_win % blk == 0:
            return blk
    return 1


def window_self_attention(x, params, *, num_heads, window_size,
                          windows_per_block=None):
    """x: (B, N, E) with N = H*W a perfect square.  Returns (B, N, E)."""
    B, N, E = x.shape
    assert E % num_heads == 0
    H = W = int(math.sqrt(N))
    ws = window_size
    nWh, nWw = H // ws, W // ws
    L = ws * ws
    hd = E // num_heads

    # Window partition (plain JAX glue): (B, N, E) -> (num_win*L, E).
    xw = x.reshape(B, nWh, ws, nWw, ws, E)
    xw = xw.transpose(0, 1, 3, 2, 4, 5).reshape(-1, L, E)
    num_win = xw.shape[0]
    x2d = xw.reshape(num_win * L, E)

    if windows_per_block is None:
        windows_per_block = _choose_windows_per_block(num_win)
    assert num_win % windows_per_block == 0
    grid = (num_win // windows_per_block,)
    rows_per_block = windows_per_block * L

    # Fuse + pre-transpose the projection weights in the wrapper (PyTorch
    # stores W as (out, in) and applies x @ W.T):  Wqkv_t = [Wq;Wk;Wv].T.
    # Fold the 1/sqrt(hd) attention scale into the Q weights/bias (one-time
    # constant fold over an (E,E) weight, removes a per-block VALU multiply).
    scale = 1.0 / math.sqrt(hd)
    wqkv_t = jnp.concatenate(
        [params["wq"] * scale, params["wk"], params["wv"]], axis=0).T  # (E, 3E)
    bqkv = jnp.concatenate(
        [params["bq"] * scale, params["bk"], params["bv"]], axis=-1)   # (1, 3E)
    wo_t = params["wo"].T                                              # (E, E)
    bo = params["bo"]                                                  # (1, E)

    kernel = functools.partial(
        _window_mha_kernel, num_heads=num_heads,
        windows_per_block=windows_per_block, tokens_per_window=L)

    out2d = pl.pallas_call(
        kernel,
        out_shape=jax.ShapeDtypeStruct((num_win * L, E), x.dtype),
        grid_spec=pltpu.PrefetchScalarGridSpec(
            num_scalar_prefetch=0,
            grid=grid,
            in_specs=[
                pl.BlockSpec((rows_per_block, E), lambda i: (i, 0)),  # x rows
                pl.BlockSpec((E, 3 * E), lambda i: (0, 0)),           # Wqkv^T (resident)
                pl.BlockSpec((1, 3 * E), lambda i: (0, 0)),           # bqkv
                pl.BlockSpec((E, E), lambda i: (0, 0)),               # Wo^T
                pl.BlockSpec((1, E), lambda i: (0, 0)),               # bo
            ],
            out_specs=pl.BlockSpec((rows_per_block, E), lambda i: (i, 0)),
        ),
        compiler_params=pltpu.CompilerParams(
            dimension_semantics=("parallel",)),
    )(x2d, wqkv_t, bqkv, wo_t, bo)

    # Window un-partition (glue): (num_win*L, E) -> (B, N, E).
    out = out2d.reshape(B, nWh, nWw, ws, ws, E)
    out = out.transpose(0, 1, 3, 2, 4, 5).reshape(B, H * W, E)
    return out


def _reference(x, params, *, num_heads, window_size):
    """Pure-JAX reference mirroring nn.MultiheadAttention (eval mode)."""
    B, N, E = x.shape
    H = W = int(math.sqrt(N))
    ws = window_size
    nWh, nWw = H // ws, W // ws
    L = ws * ws
    hd = E // num_heads
    xw = x.reshape(B, nWh, ws, nWw, ws, E).transpose(0, 1, 3, 2, 4, 5).reshape(-1, L, E)

    q = xw @ params["wq"].T + params["bq"]
    k = xw @ params["wk"].T + params["bk"]
    v = xw @ params["wv"].T + params["bv"]
    nw = xw.shape[0]
    q = q.reshape(nw, L, num_heads, hd).transpose(0, 2, 1, 3) / math.sqrt(hd)
    k = k.reshape(nw, L, num_heads, hd).transpose(0, 2, 1, 3)
    v = v.reshape(nw, L, num_heads, hd).transpose(0, 2, 1, 3)
    s = jnp.einsum("nhqd,nhkd->nhqk", q, k)
    p = jax.nn.softmax(s, axis=-1)
    ctx = jnp.einsum("nhqk,nhkd->nhqd", p, v).transpose(0, 2, 1, 3).reshape(nw, L, E)
    out_w = ctx @ params["wo"].T + params["bo"]
    out = out_w.reshape(B, nWh, nWw, ws, ws, E).transpose(0, 1, 3, 2, 4, 5)
    return out.reshape(B, H * W, E)


def init_params(key, embed_dim):
    """Deterministic init with shapes matching nn.MultiheadAttention."""
    E = embed_dim
    ks = jax.random.split(key, 4)
    in_proj_w = 0.05 * jax.random.normal(ks[0], (3 * E, E), jnp.float32)
    in_proj_b = 0.05 * jax.random.normal(ks[1], (3 * E,), jnp.float32)
    out_proj_w = 0.05 * jax.random.normal(ks[2], (E, E), jnp.float32)
    out_proj_b = 0.05 * jax.random.normal(ks[3], (E,), jnp.float32)
    return {
        "wq": in_proj_w[0 * E:1 * E],
        "wk": in_proj_w[1 * E:2 * E],
        "wv": in_proj_w[2 * E:3 * E],
        "bq": in_proj_b[0 * E:1 * E].reshape(1, E),
        "bk": in_proj_b[1 * E:2 * E].reshape(1, E),
        "bv": in_proj_b[2 * E:3 * E].reshape(1, E),
        "wo": out_proj_w,
        "bo": out_proj_b.reshape(1, E),
    }


if __name__ == "__main__":
    # Small shapes consistent with the module: B=2, N=16*16=256, E=32,
    # num_heads=4, window_size=4 -> 32 windows of 16 tokens, 16 windows/block.
    B, E = 2, 32
    num_heads, window_size = 4, 4
    H = W = 16
    N = H * W

    key = jax.random.PRNGKey(0)
    kx, kp = jax.random.split(key)
    x = jax.random.normal(kx, (B, N, E), jnp.float32)
    params = init_params(kp, E)

    out = window_self_attention(x, params, num_heads=num_heads,
                                window_size=window_size)
    out = jax.block_until_ready(out)

    ref = _reference(x, params, num_heads=num_heads, window_size=window_size)
    assert out.shape == (B, N, E)
    # Tolerance at 1e-3 for the approximate EUP reciprocal in the softmax
    # normalization.
    assert jnp.allclose(out, ref, atol=1e-3, rtol=1e-3), "mismatch vs reference"

    print("KERNEL_OK")
</pallas_src>

<mosaic_0001>
module attributes {stable_mosaic.version = 11 : i64} {
  func.func @_window_mha_kernel(%arg0: i32, %arg1: memref<256x32xf32, #tpu.memory_space<vmem>>, %arg2: memref<32x96xf32, #tpu.memory_space<vmem>>, %arg3: memref<1x96xf32, #tpu.memory_space<vmem>>, %arg4: memref<32x32xf32, #tpu.memory_space<vmem>>, %arg5: memref<1x32xf32, #tpu.memory_space<vmem>>, %arg6: memref<256x32xf32, #tpu.memory_space<vmem>>) attributes {dimension_semantics = [#tpu.dimension_semantics<parallel>], iteration_bounds = array<i64: 2>, scalar_prefetch = 0 : i64, scratch_operands = 0 : i64, tpu.core_type = #tpu.core_type<tc>, window_params = [{transform_indices = @transform_0, window_bounds = array<i64: 256, 32>}, {pipeline_mode = #tpu.pipeline_mode<synchronous>, transform_indices = @transform_1, window_bounds = array<i64: 32, 96>}, {pipeline_mode = #tpu.pipeline_mode<synchronous>, transform_indices = @transform_2, window_bounds = array<i64: 1, 96>}, {pipeline_mode = #tpu.pipeline_mode<synchronous>, transform_indices = @transform_3, window_bounds = array<i64: 32, 32>}, {pipeline_mode = #tpu.pipeline_mode<synchronous>, transform_indices = @transform_4, window_bounds = array<i64: 1, 32>}, {transform_indices = @transform_5, window_bounds = array<i64: 256, 32>}]} {
    %c0 = arith.constant 0 : index
    %c0_0 = arith.constant 0 : index
    %0 = vector.load %arg1[%c0, %c0_0] : memref<256x32xf32, #tpu.memory_space<vmem>>, vector<256x32xf32>
    %c0_1 = arith.constant 0 : index
    %c0_2 = arith.constant 0 : index
    %1 = vector.load %arg2[%c0_1, %c0_2] : memref<32x96xf32, #tpu.memory_space<vmem>>, vector<32x96xf32>
    %cst = arith.constant dense<0.000000e+00> : vector<256x96xf32>
    %2 = tpu.matmul %0, %1, %cst {dimension_numbers = #tpu.dot_dimension_numbers<[1], [0], [0], [1], [0, 0, 1, 1], [], []>} : vector<256x32xf32>, vector<32x96xf32>, vector<256x96xf32> -> vector<256x96xf32>
    %c0_3 = arith.constant 0 : index
    %c0_4 = arith.constant 0 : index
    %3 = vector.load %arg3[%c0_3, %c0_4] : memref<1x96xf32, #tpu.memory_space<vmem>>, vector<1x96xf32>
    %4 = vector.broadcast %3 : vector<1x96xf32> to vector<256x96xf32>
    %5 = arith.addf %2, %4 : vector<256x96xf32>
    %6 = vector.extract_strided_slice %5 {offsets = [0, 0], sizes = [256, 32], strides = [1, 1]} : vector<256x96xf32> to vector<256x32xf32>
    %7 = vector.extract_strided_slice %5 {offsets = [0, 32], sizes = [256, 32], strides = [1, 1]} : vector<256x96xf32> to vector<256x32xf32>
    %8 = vector.extract_strided_slice %5 {offsets = [0, 64], sizes = [256, 32], strides = [1, 1]} : vector<256x96xf32> to vector<256x32xf32>
    %c0_5 = arith.constant 0 : index
    %c0_6 = arith.constant 0 : index
    %9 = vector.load %arg4[%c0_5, %c0_6] : memref<32x32xf32, #tpu.memory_space<vmem>>, vector<32x32xf32>
    %10 = vector.extract_strided_slice %6 {offsets = [0, 0], sizes = [256, 8], strides = [1, 1]} : vector<256x32xf32> to vector<256x8xf32>
    %11 = vector.shape_cast %10 : vector<256x8xf32> to vector<16x16x8xf32>
    %12 = vector.extract_strided_slice %7 {offsets = [0, 0], sizes = [256, 8], strides = [1, 1]} : vector<256x32xf32> to vector<256x8xf32>
    %13 = vector.shape_cast %12 : vector<256x8xf32> to vector<16x16x8xf32>
    %14 = vector.extract_strided_slice %8 {offsets = [0, 0], sizes = [256, 8], strides = [1, 1]} : vector<256x32xf32> to vector<256x8xf32>
    %15 = vector.shape_cast %14 : vector<256x8xf32> to vector<16x16x8xf32>
    "tpu.trace_start"() <{level = 10 : i32, message = "wld,wmd->wlm"}> : () -> ()
    %cst_7 = arith.constant dense<0.000000e+00> : vector<16x16x16xf32>
    %16 = tpu.matmul %11, %13, %cst_7 {dimension_numbers = #tpu.dot_dimension_numbers<[2], [2], [1], [1], [0, 0, 0, 1, 1, 1], [0], [0]>} : vector<16x16x8xf32>, vector<16x16x8xf32>, vector<16x16x16xf32> -> vector<16x16x16xf32>
    "tpu.trace_stop"() : () -> ()
    %cst_8 = arith.constant dense<0xFF800000> : vector<16x16xf32>
    %17 = vector.multi_reduction <maximumf>, %16, %cst_8 [2] : vector<16x16x16xf32> to vector<16x16xf32>
    %18 = vector.shape_cast %17 : vector<16x16xf32> to vector<16x16x1xf32>
    %19 = vector.broadcast %18 : vector<16x16x1xf32> to vector<16x16x16xf32>
    %20 = arith.subf %16, %19 : vector<16x16x16xf32>
    %21 = math.exp %20 : vector<16x16x16xf32>
    %cst_9 = arith.constant dense<0.000000e+00> : vector<16x16xf32>
    %22 = vector.multi_reduction <add>, %21, %cst_9 [2] : vector<16x16x16xf32> to vector<16x16xf32>
    %23 = vector.shape_cast %22 : vector<16x16xf32> to vector<16x16x1xf32>
    %24 = tpu.reciprocal %23 {approx = true} : vector<16x16x1xf32> -> vector<16x16x1xf32>
    %25 = vector.broadcast %24 : vector<16x16x1xf32> to vector<16x16x16xf32>
    %26 = arith.mulf %21, %25 : vector<16x16x16xf32>
    "tpu.trace_start"() <{level = 10 : i32, message = "wlm,wmd->wld"}> : () -> ()
    %cst_10 = arith.constant dense<0.000000e+00> : vector<16x16x8xf32>
    %27 = tpu.matmul %26, %15, %cst_10 {dimension_numbers = #tpu.dot_dimension_numbers<[2], [1], [1], [2], [0, 0, 0, 1, 1, 2], [0], [0]>} : vector<16x16x16xf32>, vector<16x16x8xf32>, vector<16x16x8xf32> -> vector<16x16x8xf32>
    "tpu.trace_stop"() : () -> ()
    %28 = vector.shape_cast %27 : vector<16x16x8xf32> to vector<256x8xf32>
    %29 = vector.extract_strided_slice %9 {offsets = [0, 0], sizes = [8, 32], strides = [1, 1]} : vector<32x32xf32> to vector<8x32xf32>
    %cst_11 = arith.constant dense<0.000000e+00> : vector<256x32xf32>
    %30 = tpu.matmul %28, %29, %cst_11 {dimension_numbers = #tpu.dot_dimension_numbers<[1], [0], [0], [1], [0, 0, 1, 1], [], []>} : vector<256x8xf32>, vector<8x32xf32>, vector<256x32xf32> -> vector<256x32xf32>
    %31 = vector.extract_strided_slice %6 {offsets = [0, 8], sizes = [256, 8], strides = [1, 1]} : vector<256x32xf32> to vector<256x8xf32>
    %32 = vector.shape_cast %31 : vector<256x8xf32> to vector<16x16x8xf32>
    %33 = vector.extract_strided_slice %7 {offsets = [0, 8], sizes = [256, 8], strides = [1, 1]} : vector<256x32xf32> to vector<256x8xf32>
    %34 = vector.shape_cast %33 : vector<256x8xf32> to vector<16x16x8xf32>
    %35 = vector.extract_strided_slice %8 {offsets = [0, 8], sizes = [256, 8], strides = [1, 1]} : vector<256x32xf32> to vector<256x8xf32>
    %36 = vector.shape_cast %35 : vector<256x8xf32> to vector<16x16x8xf32>
    "tpu.trace_start"() <{level = 10 : i32, message = "wld,wmd->wlm"}> : () -> ()
    %cst_12 = arith.constant dense<0.000000e+00> : vector<16x16x16xf32>
    %37 = tpu.matmul %32, %34, %cst_12 {dimension_numbers = #tpu.dot_dimension_numbers<[2], [2], [1], [1], [0, 0, 0, 1, 1, 1], [0], [0]>} : vector<16x16x8xf32>, vector<16x16x8xf32>, vector<16x16x16xf32> -> vector<16x16x16xf32>
    "tpu.trace_stop"() : () -> ()
    %cst_13 = arith.constant dense<0xFF800000> : vector<16x16xf32>
    %38 = vector.multi_reduction <maximumf>, %37, %cst_13 [2] : vector<16x16x16xf32> to vector<16x16xf32>
    %39 = vector.shape_cast %38 : vector<16x16xf32> to vector<16x16x1xf32>
    %40 = vector.broadcast %39 : vector<16x16x1xf32> to vector<16x16x16xf32>
    %41 = arith.subf %37, %40 : vector<16x16x16xf32>
    %42 = math.exp %41 : vector<16x16x16xf32>
    %cst_14 = arith.constant dense<0.000000e+00> : vector<16x16xf32>
    %43 = vector.multi_reduction <add>, %42, %cst_14 [2] : vector<16x16x16xf32> to vector<16x16xf32>
    %44 = vector.shape_cast %43 : vector<16x16xf32> to vector<16x16x1xf32>
    %45 = tpu.reciprocal %44 {approx = true} : vector<16x16x1xf32> -> vector<16x16x1xf32>
    %46 = vector.broadcast %45 : vector<16x16x1xf32> to vector<16x16x16xf32>
    %47 = arith.mulf %42, %46 : vector<16x16x16xf32>
    "tpu.trace_start"() <{level = 10 : i32, message = "wlm,wmd->wld"}> : () -> ()
    %cst_15 = arith.constant dense<0.000000e+00> : vector<16x16x8xf32>
    %48 = tpu.matmul %47, %36, %cst_15 {dimension_numbers = #tpu.dot_dimension_numbers<[2], [1], [1], [2], [0, 0, 0, 1, 1, 2], [0], [0]>} : vector<16x16x16xf32>, vector<16x16x8xf32>, vector<16x16x8xf32> -> vector<16x16x8xf32>
    "tpu.trace_stop"() : () -> ()
    %49 = vector.shape_cast %48 : vector<16x16x8xf32> to vector<256x8xf32>
    %50 = vector.extract_strided_slice %9 {offsets = [8, 0], sizes = [8, 32], strides = [1, 1]} : vector<32x32xf32> to vector<8x32xf32>
    %cst_16 = arith.constant dense<0.000000e+00> : vector<256x32xf32>
    %51 = tpu.matmul %49, %50, %cst_16 {dimension_numbers = #tpu.dot_dimension_numbers<[1], [0], [0], [1], [0, 0, 1, 1], [], []>} : vector<256x8xf32>, vector<8x32xf32>, vector<256x32xf32> -> vector<256x32xf32>
    %52 = arith.addf %30, %51 : vector<256x32xf32>
    %53 = vector.extract_strided_slice %6 {offsets = [0, 16], sizes = [256, 8], strides = [1, 1]} : vector<256x32xf32> to vector<256x8xf32>
    %54 = vector.shape_cast %53 : vector<256x8xf32> to vector<16x16x8xf32>
    %55 = vector.extract_strided_slice %7 {offsets = [0, 16], sizes = [256, 8], strides = [1, 1]} : vector<256x32xf32> to vector<256x8xf32>
    %56 = vector.shape_cast %55 : vector<256x8xf32> to vector<16x16x8xf32>
    %57 = vector.extract_strided_slice %8 {offsets = [0, 16], sizes = [256, 8], strides = [1, 1]} : vector<256x32xf32> to vector<256x8xf32>
    %58 = vector.shape_cast %57 : vector<256x8xf32> to vector<16x16x8xf32>
    "tpu.trace_start"() <{level = 10 : i32, message = "wld,wmd->wlm"}> : () -> ()
    %cst_17 = arith.constant dense<0.000000e+00> : vector<16x16x16xf32>
    %59 = tpu.matmul %54, %56, %cst_17 {dimension_numbers = #tpu.dot_dimension_numbers<[2], [2], [1], [1], [0, 0, 0, 1, 1, 1], [0], [0]>} : vector<16x16x8xf32>, vector<16x16x8xf32>, vector<16x16x16xf32> -> vector<16x16x16xf32>
    "tpu.trace_stop"() : () -> ()
    %cst_18 = arith.constant dense<0xFF800000> : vector<16x16xf32>
    %60 = vector.multi_reduction <maximumf>, %59, %cst_18 [2] : vector<16x16x16xf32> to vector<16x16xf32>
    %61 = vector.shape_cast %60 : vector<16x16xf32> to vector<16x16x1xf32>
    %62 = vector.broadcast %61 : vector<16x16x1xf32> to vector<16x16x16xf32>
    %63 = arith.subf %59, %62 : vector<16x16x16xf32>
    %64 = math.exp %63 : vector<16x16x16xf32>
    %cst_19 = arith.constant dense<0.000000e+00> : vector<16x16xf32>
    %65 = vector.multi_reduction <add>, %64, %cst_19 [2] : vector<16x16x16xf32> to vector<16x16xf32>
    %66 = vector.shape_cast %65 : vector<16x16xf32> to vector<16x16x1xf32>
    %67 = tpu.reciprocal %66 {approx = true} : vector<16x16x1xf32> -> vector<16x16x1xf32>
    %68 = vector.broadcast %67 : vector<16x16x1xf32> to vector<16x16x16xf32>
    %69 = arith.mulf %64, %68 : vector<16x16x16xf32>
    "tpu.trace_start"() <{level = 10 : i32, message = "wlm,wmd->wld"}> : () -> ()
    %cst_20 = arith.constant dense<0.000000e+00> : vector<16x16x8xf32>
    %70 = tpu.matmul %69, %58, %cst_20 {dimension_numbers = #tpu.dot_dimension_numbers<[2], [1], [1], [2], [0, 0, 0, 1, 1, 2], [0], [0]>} : vector<16x16x16xf32>, vector<16x16x8xf32>, vector<16x16x8xf32> -> vector<16x16x8xf32>
    "tpu.trace_stop"() : () -> ()
    %71 = vector.shape_cast %70 : vector<16x16x8xf32> to vector<256x8xf32>
    %72 = vector.extract_strided_slice %9 {offsets = [16, 0], sizes = [8, 32], strides = [1, 1]} : vector<32x32xf32> to vector<8x32xf32>
    %cst_21 = arith.constant dense<0.000000e+00> : vector<256x32xf32>
    %73 = tpu.matmul %71, %72, %cst_21 {dimension_numbers = #tpu.dot_dimension_numbers<[1], [0], [0], [1], [0, 0, 1, 1], [], []>} : vector<256x8xf32>, vector<8x32xf32>, vector<256x32xf32> -> vector<256x32xf32>
    %74 = arith.addf %52, %73 : vector<256x32xf32>
    %75 = vector.extract_strided_slice %6 {offsets = [0, 24], sizes = [256, 8], strides = [1, 1]} : vector<256x32xf32> to vector<256x8xf32>
    %76 = vector.shape_cast %75 : vector<256x8xf32> to vector<16x16x8xf32>
    %77 = vector.extract_strided_slice %7 {offsets = [0, 24], sizes = [256, 8], strides = [1, 1]} : vector<256x32xf32> to vector<256x8xf32>
    %78 = vector.shape_cast %77 : vector<256x8xf32> to vector<16x16x8xf32>
    %79 = vector.extract_strided_slice %8 {offsets = [0, 24], sizes = [256, 8], strides = [1, 1]} : vector<256x32xf32> to vector<256x8xf32>
    %80 = vector.shape_cast %79 : vector<256x8xf32> to vector<16x16x8xf32>
    "tpu.trace_start"() <{level = 10 : i32, message = "wld,wmd->wlm"}> : () -> ()
    %cst_22 = arith.constant dense<0.000000e+00> : vector<16x16x16xf32>
    %81 = tpu.matmul %76, %78, %cst_22 {dimension_numbers = #tpu.dot_dimension_numbers<[2], [2], [1], [1], [0, 0, 0, 1, 1, 1], [0], [0]>} : vector<16x16x8xf32>, vector<16x16x8xf32>, vector<16x16x16xf32> -> vector<16x16x16xf32>
    "tpu.trace_stop"() : () -> ()
    %cst_23 = arith.constant dense<0xFF800000> : vector<16x16xf32>
    %82 = vector.multi_reduction <maximumf>, %81, %cst_23 [2] : vector<16x16x16xf32> to vector<16x16xf32>
    %83 = vector.shape_cast %82 : vector<16x16xf32> to vector<16x16x1xf32>
    %84 = vector.broadcast %83 : vector<16x16x1xf32> to vector<16x16x16xf32>
    %85 = arith.subf %81, %84 : vector<16x16x16xf32>
    %86 = math.exp %85 : vector<16x16x16xf32>
    %cst_24 = arith.constant dense<0.000000e+00> : vector<16x16xf32>
    %87 = vector.multi_reduction <add>, %86, %cst_24 [2] : vector<16x16x16xf32> to vector<16x16xf32>
    %88 = vector.shape_cast %87 : vector<16x16xf32> to vector<16x16x1xf32>
    %89 = tpu.reciprocal %88 {approx = true} : vector<16x16x1xf32> -> vector<16x16x1xf32>
    %90 = vector.broadcast %89 : vector<16x16x1xf32> to vector<16x16x16xf32>
    %91 = arith.mulf %86, %90 : vector<16x16x16xf32>
    "tpu.trace_start"() <{level = 10 : i32, message = "wlm,wmd->wld"}> : () -> ()
    %cst_25 = arith.constant dense<0.000000e+00> : vector<16x16x8xf32>
    %92 = tpu.matmul %91, %80, %cst_25 {dimension_numbers = #tpu.dot_dimension_numbers<[2], [1], [1], [2], [0, 0, 0, 1, 1, 2], [0], [0]>} : vector<16x16x16xf32>, vector<16x16x8xf32>, vector<16x16x8xf32> -> vector<16x16x8xf32>
    "tpu.trace_stop"() : () -> ()
    %93 = vector.shape_cast %92 : vector<16x16x8xf32> to vector<256x8xf32>
    %94 = vector.extract_strided_slice %9 {offsets = [24, 0], sizes = [8, 32], strides = [1, 1]} : vector<32x32xf32> to vector<8x32xf32>
    %cst_26 = arith.constant dense<0.000000e+00> : vector<256x32xf32>
    %95 = tpu.matmul %93, %94, %cst_26 {dimension_numbers = #tpu.dot_dimension_numbers<[1], [0], [0], [1], [0, 0, 1, 1], [], []>} : vector<256x8xf32>, vector<8x32xf32>, vector<256x32xf32> -> vector<256x32xf32>
    %96 = arith.addf %74, %95 : vector<256x32xf32>
    %c0_27 = arith.constant 0 : index
    %c0_28 = arith.constant 0 : index
    %97 = vector.load %arg5[%c0_27, %c0_28] : memref<1x32xf32, #tpu.memory_space<vmem>>, vector<1x32xf32>
    %98 = vector.broadcast %97 : vector<1x32xf32> to vector<256x32xf32>
    %99 = arith.addf %96, %98 : vector<256x32xf32>
    %c0_29 = arith.constant 0 : index
    %c0_30 = arith.constant 0 : index
    %100 = vector.load %arg6[%c0_29, %c0_30] : memref<256x32xf32, #tpu.memory_space<vmem>>, vector<256x32xf32>
    tpu.vector_store %arg6[%c0_29, %c0_30], %99 {strides = array<i32>} : memref<256x32xf32, #tpu.memory_space<vmem>>, vector<256x32xf32>,
    return
  }
  func.func @transform_0(%arg0: i32) -> (i32, i32) {
    %c0_i32 = arith.constant 0 : i32
    %c0_i32_0 = arith.constant 0 : i32
    return %arg0, %c0_i32 : i32, i32
  }
  func.func @transform_1(%arg0: i32) -> (i32, i32) {
    %c0_i32 = arith.constant 0 : i32
    %c0_i32_0 = arith.constant 0 : i32
    %c0_i32_1 = arith.constant 0 : i32
    return %c0_i32, %c0_i32_0 : i32, i32
  }
  func.func @transform_2(%arg0: i32) -> (i32, i32) {
    %c0_i32 = arith.constant 0 : i32
    %c0_i32_0 = arith.constant 0 : i32
    %c0_i32_1 = arith.constant 0 : i32
    return %c0_i32, %c0_i32_0 : i32, i32
  }
  func.func @transform_3(%arg0: i32) -> (i32, i32) {
    %c0_i32 = arith.constant 0 : i32
    %c0_i32_0 = arith.constant 0 : i32
    %c0_i32_1 = arith.constant 0 : i32
    return %c0_i32, %c0_i32_0 : i32, i32
  }
  func.func @transform_4(%arg0: i32) -> (i32, i32) {
    %c0_i32 = arith.constant 0 : i32
    %c0_i32_0 = arith.constant 0 : i32
    %c0_i32_1 = arith.constant 0 : i32
    return %c0_i32, %c0_i32_0 : i32, i32
  }
  func.func @transform_5(%arg0: i32) -> (i32, i32) {
    %c0_i32 = arith.constant 0 : i32
    %c0_i32_0 = arith.constant 0 : i32
    return %arg0, %c0_i32 : i32, i32
  }
}

</mosaic_0001>

<llo_original>
// kernel: tpu_custom_call.1
$region0: #{tpu_custom_call.1}
  #allocation0 [shape = 'u32[]', space=smem, size = 0x4, offset = 0x4, fixed_abs, tag = 'smem constant byte address 0x4 - core index']
  #allocation1 [shape = 'u32[72,128]{1,0:T(1,128)}', space=vmem, size = 0x9000, scoped, tag = 'internal scratch']
  %s0 = inlined_call_operand.vmem [shape: f32[512,32], index: 0, kind: input, shape index: {}]
  %s1 = inlined_call_operand.vmem [shape: f32[32,96], index: 1, kind: input, shape index: {}]
  %s2 = inlined_call_operand.vmem [shape: f32[1,96], index: 2, kind: input, shape index: {}]
  %s3 = inlined_call_operand.vmem [shape: f32[32,32], index: 3, kind: input, shape index: {}]
  %s4 = inlined_call_operand.vmem [shape: f32[1,32], index: 4, kind: input, shape index: {}]
  %s5 = inlined_call_operand.vmem [shape: f32[512,32], index: 5, kind: output, shape index: {}]
  %s6 = sld [smem:[#allocation0]]
  $region53: #{tpu_custom_call.1} parent=0
    _
  %s8 = ssub.s32 1, %s6
  %s9 = scalar_select 0, %s8, %s6
  loop: start=0, step=1, limit=4
  $region2: #{tpu_custom_call.1} parent=0 // loop_pre_header
    _
  $region3: #{tpu_custom_call.1} parent=0 // loop_header
    %s11 = sphi 0, %s15
    %p12 = scmp.ge.s32.totalorder %s11, 4
    %s21 = sphi 0, %s23
    %s24 = sphi 0, %s21
    %s25 = sphi 0, %s24
    %s41 = sphi 0, %s25
    %s45 = sphi 0, %s45
    %s47 = sphi 0, %s45
    %s48 = sphi 0, %s47
    %s62 = sphi 0, %s48
    %s66 = sphi 0, %s66
    %s68 = sphi 0, %s66
    %s69 = sphi 0, %s68
    %s83 = sphi 0, %s69
    %s87 = sphi 0, %s87
    %s89 = sphi 0, %s87
    %s90 = sphi 0, %s89
    %s104 = sphi 0, %s90
    %s108 = sphi 0, %s108
    %s110 = sphi 0, %s108
    %s111 = sphi 0, %s110
    %s125 = sphi 0, %s111
    %s131 = sphi 0, %s133
    %s134 = sphi 0, %s131
    %s135 = sphi 0, %s134
    %s151 = sphi 0, %s135
  $region4: #{tpu_custom_call.1} parent=0 // loop_header_branch
    %14 = sbr.rel (%p12) target = $region8
  $region5: #{tpu_custom_call.1} parent=0 // loop_body
    %s16 = ssub.s32 %s11, 1
    %s17 = ssub.s32 %s11, 2
    %s18 = sadd.s32 %s11, 1
    %s19 = ssub.s32 %s11, %s18
    %p20 = scmp.eq.s32.totalorder %s19, 0
    %s22 = sadd.s32 %s21, 1
    %s23 = scalar_select %p20, %s21, %s22
    %p26 = pneg %p20
    %p27 = scmp.eq.s32.totalorder %s11, 1
    %p28 = por %p26, %p27
    %p29 = scmp.ne.s32.totalorder %s21, %s24
    %p30 = scmp.eq.s32.totalorder %s11, 0
    %p31 = por %p29, %p30
    %p32 = scmp.ne.s32.totalorder %s21, %s24
    %p33 = scmp.eq.s32.totalorder %s16, 1
    %p34 = por %p32, %p33
    %p35 = scmp.ne.s32.totalorder %s24, %s25
    %p36 = scmp.eq.s32.totalorder %s16, 0
    %p37 = por %p35, %p36
    %p38 = scmp.ne.s32.totalorder %s24, %s25
    %p39 = scmp.eq.s32.totalorder %s17, 1
    %p40 = por %p38, %p39
    %p42 = scmp.ne.s32.totalorder %s25, %s41
    %p43 = scmp.eq.s32.totalorder %s17, 0
    %p44 = por %p42, %p43
    %s46 = sadd.s32 %s45, 1
    %p49 = scmp.eq.s32.totalorder %s11, 1
    %p50 = scmp.ne.s32.totalorder %s45, %s47
    %p51 = scmp.eq.s32.totalorder %s11, 0
    %p52 = por %p50, %p51
    %p53 = scmp.ne.s32.totalorder %s45, %s47
    %p54 = scmp.eq.s32.totalorder %s16, 1
    %p55 = por %p53, %p54
    %p56 = scmp.ne.s32.totalorder %s47, %s48
    %p57 = scmp.eq.s32.totalorder %s16, 0
    %p58 = por %p56, %p57
    %p59 = scmp.ne.s32.totalorder %s47, %s48
    %p60 = scmp.eq.s32.totalorder %s17, 1
    %p61 = por %p59, %p60
    %p63 = scmp.ne.s32.totalorder %s48, %s62
    %p64 = scmp.eq.s32.totalorder %s17, 0
    %p65 = por %p63, %p64
    %s67 = sadd.s32 %s66, 1
    %p70 = scmp.eq.s32.totalorder %s11, 1
    %p71 = scmp.ne.s32.totalorder %s66, %s68
    %p72 = scmp.eq.s32.totalorder %s11, 0
    %p73 = por %p71, %p72
    %p74 = scmp.ne.s32.totalorder %s66, %s68
    %p75 = scmp.eq.s32.totalorder %s16, 1
    %p76 = por %p74, %p75
    %p77 = scmp.ne.s32.totalorder %s68, %s69
    %p78 = scmp.eq.s32.totalorder %s16, 0
    %p79 = por %p77, %p78
    %p80 = scmp.ne.s32.totalorder %s68, %s69
    %p81 = scmp.eq.s32.totalorder %s17, 1
    %p82 = por %p80, %p81
    %p84 = scmp.ne.s32.totalorder %s69, %s83
    %p85 = scmp.eq.s32.totalorder %s17, 0
    %p86 = por %p84, %p85
    %s88 = sadd.s32 %s87, 1
    %p91 = scmp.eq.s32.totalorder %s11, 1
    %p92 = scmp.ne.s32.totalorder %s87, %s89
    %p93 = scmp.eq.s32.totalorder %s11, 0
    %p94 = por %p92, %p93
    %p95 = scmp.ne.s32.totalorder %s87, %s89
    %p96 = scmp.eq.s32.totalorder %s16, 1
    %p97 = por %p95, %p96
    %p98 = scmp.ne.s32.totalorder %s89, %s90
    %p99 = scmp.eq.s32.totalorder %s16, 0
    %p100 = por %p98, %p99
    %p101 = scmp.ne.s32.totalorder %s89, %s90
    %p102 = scmp.eq.s32.totalorder %s17, 1
    %p103 = por %p101, %p102
    %p105 = scmp.ne.s32.totalorder %s90, %s104
    %p106 = scmp.eq.s32.totalorder %s17, 0
    %p107 = por %p105, %p106
    %s109 = sadd.s32 %s108, 1
    %p112 = scmp.eq.s32.totalorder %s11, 1
    %p113 = scmp.ne.s32.totalorder %s108, %s110
    %p114 = scmp.eq.s32.totalorder %s11, 0
    %p115 = por %p113, %p114
    %p116 = scmp.ne.s32.totalorder %s108, %s110
    %p117 = scmp.eq.s32.totalorder %s16, 1
    %p118 = por %p116, %p117
    %p119 = scmp.ne.s32.totalorder %s110, %s111
    %p120 = scmp.eq.s32.totalorder %s16, 0
    %p121 = por %p119, %p120
    %p122 = scmp.ne.s32.totalorder %s110, %s111
    %p123 = scmp.eq.s32.totalorder %s17, 1
    %p124 = por %p122, %p123
    %p126 = scmp.ne.s32.totalorder %s111, %s125
    %p127 = scmp.eq.s32.totalorder %s17, 0
    %p128 = por %p126, %p127
    %s129 = ssub.s32 %s11, %s18
    %p130 = scmp.eq.s32.totalorder %s129, 0
    %s132 = sadd.s32 %s131, 1
    %s133 = scalar_select %p130, %s131, %s132
    %p136 = pneg %p130
    %p137 = scmp.eq.s32.totalorder %s11, 1
    %p138 = por %p136, %p137
    %p139 = scmp.ne.s32.totalorder %s131, %s134
    %p140 = scmp.eq.s32.totalorder %s11, 0
    %p141 = por %p139, %p140
    %p142 = scmp.ne.s32.totalorder %s131, %s134
    %p143 = scmp.eq.s32.totalorder %s16, 1
    %p144 = por %p142, %p143
    %p145 = scmp.ne.s32.totalorder %s134, %s135
    %p146 = scmp.eq.s32.totalorder %s16, 0
    %p147 = por %p145, %p146
    %p148 = scmp.ne.s32.totalorder %s134, %s135
    %p149 = scmp.eq.s32.totalorder %s17, 1
    %p150 = por %p148, %p149
    %p152 = scmp.ne.s32.totalorder %s135, %s151
    %p153 = scmp.eq.s32.totalorder %s17, 0
    %p154 = por %p152, %p153
    %p155 = scmp.le.s32.totalorder 1, %s11
    %p156 = scmp.lt.s32.totalorder %s11, 3
    %p157 = pnand %p155, %p156
    %p158 = pneg %p157
    // Predicated region
    $region9: #{tpu_custom_call.1} parent=5 // pred_check
      _
    $region10: #{tpu_custom_call.1} parent=5 // pred_check_branch
      %160 = sbr.rel (%p157) target = $region12
    $region11: #{tpu_custom_call.1} parent=5 // pred_region
      %s161 = ssub.s32 %s11, 1
      // Predicated region
      $region13: #{tpu_custom_call.1} parent=11 // pred_check
        %p162 = pneg %p58
      $region14: #{tpu_custom_call.1} parent=11 // pred_check_branch
        %164 = sbr.rel (%p162) target = $region16
      $region15: #{tpu_custom_call.1} parent=11 // pred_region
        _
      $region16: #{tpu_custom_call.1} parent=11 // pred_fallthru
        _
      // Predicated region
      $region17: #{tpu_custom_call.1} parent=11 // pred_check
        %p165 = pneg %p79
      $region18: #{tpu_custom_call.1} parent=11 // pred_check_branch
        %167 = sbr.rel (%p165) target = $region20
      $region19: #{tpu_custom_call.1} parent=11 // pred_region
        _
      $region20: #{tpu_custom_call.1} parent=11 // pred_fallthru
        _
      // Predicated region
      $region21: #{tpu_custom_call.1} parent=11 // pred_check
        %p168 = pneg %p100
      $region22: #{tpu_custom_call.1} parent=11 // pred_check_branch
        %170 = sbr.rel (%p168) target = $region24
      $region23: #{tpu_custom_call.1} parent=11 // pred_region
        _
      $region24: #{tpu_custom_call.1} parent=11 // pred_fallthru
        _
      // Predicated region
      $region25: #{tpu_custom_call.1} parent=11 // pred_check
        %p171 = pneg %p121
      $region26: #{tpu_custom_call.1} parent=11 // pred_check_branch
        %173 = sbr.rel (%p171) target = $region28
      $region27: #{tpu_custom_call.1} parent=11 // pred_region
        _
      $region28: #{tpu_custom_call.1} parent=11 // pred_fallthru
        _
    $region12: #{tpu_custom_call.1} parent=5 // pred_fallthru
      _
    %p174 = scmp.lt.s32.totalorder %s11, 2
    // Predicated region
    $region29: #{tpu_custom_call.1} parent=5 // pred_check
      %p175 = pneg %p174
    $region30: #{tpu_custom_call.1} parent=5 // pred_check_branch
      %177 = sbr.rel (%p175) target = $region32
    $region31: #{tpu_custom_call.1} parent=5 // pred_region
      // Predicated region
      $region33: #{tpu_custom_call.1} parent=31 // pred_check
        %p178 = pneg %p31
      $region34: #{tpu_custom_call.1} parent=31 // pred_check_branch
        %180 = sbr.rel (%p178) target = $region36
      $region35: #{tpu_custom_call.1} parent=31 // pred_region
        %s181 = smul.u32 32, %s11
        %p182 = scmp.lt.s32.totalorder %s181, 63
        %s183 = scalar_select %p182, %s181, 63
        %s184 = smul.addr %s183, 8
        %s185 = scalar_lea.vmem %s0, %s184
        %s186 = smul.u32 32, %s11
      $region36: #{tpu_custom_call.1} parent=31 // pred_fallthru
        _
    $region32: #{tpu_custom_call.1} parent=5 // pred_fallthru
      _
    %p187 = scmp.le.s32.totalorder 1, %s11
    %p188 = scmp.lt.s32.totalorder %s11, 3
    %p189 = pnand %p187, %p188
    %p190 = pneg %p189
    // Predicated region
    $region37: #{tpu_custom_call.1} parent=5 // pred_check
      _
    $region38: #{tpu_custom_call.1} parent=5 // pred_check_branch
      %192 = sbr.rel (%p189) target = $region40
    $region39: #{tpu_custom_call.1} parent=5 // pred_region
      %s193 = ssub.s32 %s11, 1
      %s194 = smul.u32 32, %s16
      %p195 = scmp.lt.s32.totalorder %s194, 63
      %s196 = scalar_select %p195, %s194, 63
      %s197 = smul.addr %s196, 8
      %s198 = scalar_lea.vmem %s0, %s197
      %p199 = pneg %p37
      %p200 = pneg %p34
      %p201 = pneg %p58
      %p202 = pneg %p55
      %p203 = pneg %p79
      %p204 = pneg %p76
      %p205 = pneg %p100
      %p206 = pneg %p97
      %p207 = pneg %p121
      %p208 = pneg %p118
      %p209 = pneg %p147
      %p210 = pneg %p144
      %s211 = smul.u32 32, %s16
      %p212 = scmp.lt.s32.totalorder %s211, 63
      %s213 = scalar_select %p212, %s211, 63
      %s214 = smul.addr %s213, 8
      %s215 = scalar_lea.vmem %s5, %s214
      %s216 = smul.u32 32, %s16
      %p217 = scmp.lt.s32.totalorder %s216, 63
      %s218 = scalar_select %p217, %s216, 63
      %s219 = smul.addr %s218, 8
      %s220 = scalar_lea.vmem %s0, %s219
      %s221 = smul.u32 32, %s16
      %s222 = smul.u32 32, %s16
      %p223 = scmp.lt.s32.totalorder %s222, 63
      %s224 = scalar_select %p223, %s222, 63
      %s225 = smul.addr %s224, 8
      %s226 = scalar_lea.vmem %s5, %s225
      %s227 = smul.u32 32, %s16
      %v228 = vld [vmem:[%s220] sm:$0xff]
      %v229 = vld [vmem:[%s220 + $0x8] sm:$0xff]
      %v230 = vld [vmem:[%s220 + $0x10] sm:$0xff]
      %v231 = vld [vmem:[%s220 + $0x18] sm:$0xff]
      %v232 = vld [vmem:[%s220 + $0x20] sm:$0xff]
      %v233 = vld [vmem:[%s220 + $0x28] sm:$0xff]
      %v234 = vld [vmem:[%s220 + $0x30] sm:$0xff]
      %v235 = vld [vmem:[%s220 + $0x38] sm:$0xff]
      %v236 = vld [vmem:[%s220 + $0x40] sm:$0xff]
      %v237 = vld [vmem:[%s220 + $0x48] sm:$0xff]
      %v238 = vld [vmem:[%s220 + $0x50] sm:$0xff]
      %v239 = vld [vmem:[%s220 + $0x58] sm:$0xff]
      %v240 = vld [vmem:[%s220 + $0x60] sm:$0xff]
      %v241 = vld [vmem:[%s220 + $0x68] sm:$0xff]
      %v242 = vld [vmem:[%s220 + $0x70] sm:$0xff]
      %v243 = vld [vmem:[%s220 + $0x78] sm:$0xff]
      %v244 = vld [vmem:[%s220 + $0x80] sm:$0xff]
      %v245 = vld [vmem:[%s220 + $0x88] sm:$0xff]
      %v246 = vld [vmem:[%s220 + $0x90] sm:$0xff]
      %v247 = vld [vmem:[%s220 + $0x98] sm:$0xff]
      %v248 = vld [vmem:[%s220 + $0xa0] sm:$0xff]
      %v249 = vld [vmem:[%s220 + $0xa8] sm:$0xff]
      %v250 = vld [vmem:[%s220 + $0xb0] sm:$0xff]
      %v251 = vld [vmem:[%s220 + $0xb8] sm:$0xff]
      %v252 = vld [vmem:[%s220 + $0xc0] sm:$0xff]
      %v253 = vld [vmem:[%s220 + $0xc8] sm:$0xff]
      %v254 = vld [vmem:[%s220 + $0xd0] sm:$0xff]
      %v255 = vld [vmem:[%s220 + $0xd8] sm:$0xff]
      %v256 = vld [vmem:[%s220 + $0xe0] sm:$0xff]
      %v257 = vld [vmem:[%s220 + $0xe8] sm:$0xff]
      %v258 = vld [vmem:[%s220 + $0xf0] sm:$0xff]
      %v259 = vld [vmem:[%s220 + $0xf8] sm:$0xff]
      %v260 = vld [vmem:[%s1] sm:$0xff]
      %v261 = vld [vmem:[%s1 + $0x8] sm:$0xff]
      %v262 = vld [vmem:[%s1 + $0x10] sm:$0xff]
      %v263 = vld [vmem:[%s1 + $0x18] sm:$0xff]
      %v264 = vld [vmem:[%s2] sm:$0x1]
      %v266 = vperm.slane %v264, 0
      %vm268 = vcmask 261120
      %v270 = vsel %vm268, %v228, 0
      %v273 = vsel %vm268, %v229, 0
      %v276 = vsel %vm268, %v230, 0
      %v279 = vsel %vm268, %v231, 0
      %v282 = vsel %vm268, %v232, 0
      %v285 = vsel %vm268, %v233, 0
      %v288 = vsel %vm268, %v234, 0
      %v291 = vsel %vm268, %v235, 0
      %v294 = vsel %vm268, %v236, 0
      %v297 = vsel %vm268, %v237, 0
      %v300 = vsel %vm268, %v238, 0
      %v303 = vsel %vm268, %v239, 0
      %v306 = vsel %vm268, %v240, 0
      %v309 = vsel %vm268, %v241, 0
      %v312 = vsel %vm268, %v242, 0
      %v315 = vsel %vm268, %v243, 0
      %v318 = vsel %vm268, %v244, 0
      %v321 = vsel %vm268, %v245, 0
      %v324 = vsel %vm268, %v246, 0
      %v327 = vsel %vm268, %v247, 0
      %v330 = vsel %vm268, %v248, 0
      %v333 = vsel %vm268, %v249, 0
      %v336 = vsel %vm268, %v250, 0
      %v339 = vsel %vm268, %v251, 0
      %v342 = vsel %vm268, %v252, 0
      %v345 = vsel %vm268, %v253, 0
      %v348 = vsel %vm268, %v254, 0
      %v351 = vsel %vm268, %v255, 0
      %v354 = vsel %vm268, %v256, 0
      %v357 = vsel %vm268, %v257, 0
      %v360 = vsel %vm268, %v258, 0
      %v363 = vsel %vm268, %v259, 0
      %365 = vmatpush.msra.mxu0 0.0
      %366 = vmatpush.msra.mxu0 0.0
      %367 = vmatpush.msra.mxu0 0.0
      %368 = vmatpush.msra.mxu0 0.0
      %369 = vmatpush.msra.mxu0 0.0
      %370 = vmatpush.msra.mxu0 0.0
      %371 = vmatpush.msra.mxu0 0.0
      %372 = vmatpush.msra.mxu0 0.0
      %373 = vmatpush.msra.mxu0 0.0
      %374 = vmatpush.msra.mxu0 0.0
      %375 = vmatpush.msra.mxu0 0.0
      %376 = vmatpush.msra.mxu0 0.0
      %377 = vmatpush.msra.mxu0 %v263
      %378 = vmatpush.msra.mxu0 %v262
      %379 = vmatpush.msra.mxu0 %v261
      %380 = vmatpush.msra.mxu0 %v260
      %381 = vmatmul.f32.gmra.mxu0 %v270
      %v382 = vpop.f32.mrf.mxu0
      %v383 = vadd.f32 %v266, %v382
      %384 = vmatmul.f32.gmra.mxu0 %v273
      %v385 = vpop.f32.mrf.mxu0
      %v386 = vadd.f32 %v266, %v385
      %387 = vmatmul.f32.gmra.mxu0 %v276
      %v388 = vpop.f32.mrf.mxu0
      %v389 = vadd.f32 %v266, %v388
      %390 = vmatmul.f32.gmra.mxu0 %v279
      %v391 = vpop.f32.mrf.mxu0
      %v392 = vadd.f32 %v266, %v391
      %393 = vmatmul.f32.gmra.mxu0 %v282
      %v394 = vpop.f32.mrf.mxu0
      %v395 = vadd.f32 %v266, %v394
      %396 = vmatmul.f32.gmra.mxu0 %v285
      %v397 = vpop.f32.mrf.mxu0
      %v398 = vadd.f32 %v266, %v397
      %399 = vmatmul.f32.gmra.mxu0 %v288
      %v400 = vpop.f32.mrf.mxu0
      %v401 = vadd.f32 %v266, %v400
      %402 = vmatmul.f32.gmra.mxu0 %v291
      %v403 = vpop.f32.mrf.mxu0
      %v404 = vadd.f32 %v266, %v403
      %405 = vmatmul.f32.gmra.mxu0 %v294
      %v406 = vpop.f32.mrf.mxu0
      %v407 = vadd.f32 %v266, %v406
      %408 = vmatmul.f32.gmra.mxu0 %v297
      %v409 = vpop.f32.mrf.mxu0
      %v410 = vadd.f32 %v266, %v409
      %411 = vmatmul.f32.gmra.mxu0 %v300
      %v412 = vpop.f32.mrf.mxu0
      %v413 = vadd.f32 %v266, %v412
      %414 = vmatmul.f32.gmra.mxu0 %v303
      %v415 = vpop.f32.mrf.mxu0
      %v416 = vadd.f32 %v266, %v415
      %417 = vmatmul.f32.gmra.mxu0 %v306
      %v418 = vpop.f32.mrf.mxu0
      %v419 = vadd.f32 %v266, %v418
      %420 = vmatmul.f32.gmra.mxu0 %v309
      %v421 = vpop.f32.mrf.mxu0
      %v422 = vadd.f32 %v266, %v421
      %423 = vmatmul.f32.gmra.mxu0 %v312
      %v424 = vpop.f32.mrf.mxu0
      %v425 = vadd.f32 %v266, %v424
      %426 = vmatmul.f32.gmra.mxu0 %v315
      %v427 = vpop.f32.mrf.mxu0
      %v428 = vadd.f32 %v266, %v427
      %429 = vmatmul.f32.gmra.mxu0 %v318
      %v430 = vpop.f32.mrf.mxu0
      %v431 = vadd.f32 %v266, %v430
      %432 = vmatmul.f32.gmra.mxu0 %v321
      %v433 = vpop.f32.mrf.mxu0
      %v434 = vadd.f32 %v266, %v433
      %435 = vmatmul.f32.gmra.mxu0 %v324
      %v436 = vpop.f32.mrf.mxu0
      %v437 = vadd.f32 %v266, %v436
      %438 = vmatmul.f32.gmra.mxu0 %v327
      %v439 = vpop.f32.mrf.mxu0
      %v440 = vadd.f32 %v266, %v439
      %441 = vmatmul.f32.gmra.mxu0 %v330
      %v442 = vpop.f32.mrf.mxu0
      %v443 = vadd.f32 %v266, %v442
      %444 = vmatmul.f32.gmra.mxu0 %v333
      %v445 = vpop.f32.mrf.mxu0
      %v446 = vadd.f32 %v266, %v445
      %447 = vmatmul.f32.gmra.mxu0 %v336
      %v448 = vpop.f32.mrf.mxu0
      %v449 = vadd.f32 %v266, %v448
      %450 = vmatmul.f32.gmra.mxu0 %v339
      %v451 = vpop.f32.mrf.mxu0
      %v452 = vadd.f32 %v266, %v451
      %453 = vmatmul.f32.gmra.mxu0 %v342
      %v454 = vpop.f32.mrf.mxu0
      %v455 = vadd.f32 %v266, %v454
      %456 = vmatmul.f32.gmra.mxu0 %v345
      %v457 = vpop.f32.mrf.mxu0
      %v458 = vadd.f32 %v266, %v457
      %459 = vmatmul.f32.gmra.mxu0 %v348
      %v460 = vpop.f32.mrf.mxu0
      %v461 = vadd.f32 %v266, %v460
      %462 = vmatmul.f32.gmra.mxu0 %v351
      %v463 = vpop.f32.mrf.mxu0
      %v464 = vadd.f32 %v266, %v463
      %465 = vmatmul.f32.gmra.mxu0 %v354
      %v466 = vpop.f32.mrf.mxu0
      %v467 = vadd.f32 %v266, %v466
      %468 = vmatmul.f32.gmra.mxu0 %v357
      %v469 = vpop.f32.mrf.mxu0
      %v470 = vadd.f32 %v266, %v469
      %471 = vmatmul.f32.gmra.mxu0 %v360
      %v472 = vpop.f32.mrf.mxu0
      %v473 = vadd.f32 %v266, %v472
      %474 = vmatmul.f32.gmra.mxu0 %v363
      %v475 = vpop.f32.mrf.mxu0
      %v476 = vadd.f32 %v266, %v475
      %477 = vdwg.mxu0
      %v478 = vld [vmem:[%s3] sm:$0xff]
      %v479 = vld [vmem:[%s3 + $0x8] sm:$0xff]
      %v480 = vld [vmem:[%s3 + $0x10] sm:$0xff]
      %v481 = vld [vmem:[%s3 + $0x18] sm:$0xff]
      %484 = vrot.lane.b32.xlu0 %v383, 96
      %v485 = vpop.permute.xlu0 %484
      %486 = vrot.lane.b32.xlu0 %v386, 96
      %v487 = vpop.permute.xlu0 %486
      %vm488 = vcmask 64512
      %v489 = vsel %vm488, %v383, 0
      %v491 = vsel %vm488, %v386, 0
      %v493 = vsel %vm488, %v485, 0
      %v495 = vsel %vm488, %v487, 0
      %497 = vmatpush.xpose.msra.mxu0 0.0
      %498 = vmatpush.xpose.msra.mxu0 0.0
      %499 = vmatpush.xpose.msra.mxu0 0.0
      %500 = vmatpush.xpose.msra.mxu0 0.0
      %501 = vmatpush.xpose.msra.mxu0 0.0
      %502 = vmatpush.xpose.msra.mxu0 0.0
      %503 = vmatpush.xpose.msra.mxu0 0.0
      %504 = vmatpush.xpose.msra.mxu0 0.0
      %505 = vmatpush.xpose.msra.mxu0 0.0
      %506 = vmatpush.xpose.msra.mxu0 0.0
      %507 = vmatpush.xpose.msra.mxu0 0.0
      %508 = vmatpush.xpose.msra.mxu0 0.0
      %509 = vmatpush.xpose.msra.mxu0 0.0
      %510 = vmatpush.xpose.msra.mxu0 0.0
      %511 = vmatpush.xpose.msra.mxu0 %v495
      %512 = vmatpush.xpose.msra.mxu0 %v493
      %513 = vmatmul.f32.gmra.mxu0 %v489
      %v514 = vpop.f32.mrf.mxu0
      %v515 = vadd.f32 0.0, %v514
      %516 = vmatmul.f32.gmra.mxu0 %v491
      %v517 = vpop.f32.mrf.mxu0
      %v518 = vadd.f32 0.0, %v517
      %519 = vdwg.mxu0
      %522 = vrot.lane.b32.xlu0 %v389, 96
      %v523 = vpop.permute.xlu0 %522
      %524 = vrot.lane.b32.xlu0 %v392, 96
      %v525 = vpop.permute.xlu0 %524
      %v526 = vsel %vm488, %v389, 0
      %v528 = vsel %vm488, %v392, 0
      %v530 = vsel %vm488, %v523, 0
      %v532 = vsel %vm488, %v525, 0
      %534 = vmatpush.xpose.msra.mxu0 0.0
      %535 = vmatpush.xpose.msra.mxu0 0.0
      %536 = vmatpush.xpose.msra.mxu0 0.0
      %537 = vmatpush.xpose.msra.mxu0 0.0
      %538 = vmatpush.xpose.msra.mxu0 0.0
      %539 = vmatpush.xpose.msra.mxu0 0.0
      %540 = vmatpush.xpose.msra.mxu0 0.0
      %541 = vmatpush.xpose.msra.mxu0 0.0
      %542 = vmatpush.xpose.msra.mxu0 0.0
      %543 = vmatpush.xpose.msra.mxu0 0.0
      %544 = vmatpush.xpose.msra.mxu0 0.0
      %545 = vmatpush.xpose.msra.mxu0 0.0
      %546 = vmatpush.xpose.msra.mxu0 0.0
      %547 = vmatpush.xpose.msra.mxu0 0.0
      %548 = vmatpush.xpose.msra.mxu0 %v532
      %549 = vmatpush.xpose.msra.mxu0 %v530
      %550 = vmatmul.f32.gmra.mxu0 %v526
      %v551 = vpop.f32.mrf.mxu0
      %v552 = vadd.f32 0.0, %v551
      %553 = vmatmul.f32.gmra.mxu0 %v528
      %v554 = vpop.f32.mrf.mxu0
      %v555 = vadd.f32 0.0, %v554
      %556 = vdwg.mxu0
      %559 = vrot.lane.b32.xlu0 %v395, 96
      %v560 = vpop.permute.xlu0 %559
      %561 = vrot.lane.b32.xlu0 %v398, 96
      %v562 = vpop.permute.xlu0 %561
      %v563 = vsel %vm488, %v395, 0
      %v565 = vsel %vm488, %v398, 0
      %v567 = vsel %vm488, %v560, 0
      %v569 = vsel %vm488, %v562, 0
      %571 = vmatpush.xpose.msra.mxu0 0.0
      %572 = vmatpush.xpose.msra.mxu0 0.0
      %573 = vmatpush.xpose.msra.mxu0 0.0
      %574 = vmatpush.xpose.msra.mxu0 0.0
      %575 = vmatpush.xpose.msra.mxu0 0.0
      %576 = vmatpush.xpose.msra.mxu0 0.0
      %577 = vmatpush.xpose.msra.mxu0 0.0
      %578 = vmatpush.xpose.msra.mxu0 0.0
      %579 = vmatpush.xpose.msra.mxu0 0.0
      %580 = vmatpush.xpose.msra.mxu0 0.0
      %581 = vmatpush.xpose.msra.mxu0 0.0
      %582 = vmatpush.xpose.msra.mxu0 0.0
      %583 = vmatpush.xpose.msra.mxu0 0.0
      %584 = vmatpush.xpose.msra.mxu0 0.0
      %585 = vmatpush.xpose.msra.mxu0 %v569
      %586 = vmatpush.xpose.msra.mxu0 %v567
      %587 = vmatmul.f32.gmra.mxu0 %v563
      %v588 = vpop.f32.mrf.mxu0
      %v589 = vadd.f32 0.0, %v588
      %590 = vmatmul.f32.gmra.mxu0 %v565
      %v591 = vpop.f32.mrf.mxu0
      %v592 = vadd.f32 0.0, %v591
      %593 = vdwg.mxu0
      %596 = vrot.lane.b32.xlu0 %v401, 96
      %v597 = vpop.permute.xlu0 %596
      %598 = vrot.lane.b32.xlu0 %v404, 96
      %v599 = vpop.permute.xlu0 %598
      %v600 = vsel %vm488, %v401, 0
      %v602 = vsel %vm488, %v404, 0
      %v604 = vsel %vm488, %v597, 0
      %v606 = vsel %vm488, %v599, 0
      %608 = vmatpush.xpose.msra.mxu0 0.0
      %609 = vmatpush.xpose.msra.mxu0 0.0
      %610 = vmatpush.xpose.msra.mxu0 0.0
      %611 = vmatpush.xpose.msra.mxu0 0.0
      %612 = vmatpush.xpose.msra.mxu0 0.0
      %613 = vmatpush.xpose.msra.mxu0 0.0
      %614 = vmatpush.xpose.msra.mxu0 0.0
      %615 = vmatpush.xpose.msra.mxu0 0.0
      %616 = vmatpush.xpose.msra.mxu0 0.0
      %617 = vmatpush.xpose.msra.mxu0 0.0
      %618 = vmatpush.xpose.msra.mxu0 0.0
      %619 = vmatpush.xpose.msra.mxu0 0.0
      %620 = vmatpush.xpose.msra.mxu0 0.0
      %621 = vmatpush.xpose.msra.mxu0 0.0
      %622 = vmatpush.xpose.msra.mxu0 %v606
      %623 = vmatpush.xpose.msra.mxu0 %v604
      %624 = vmatmul.f32.gmra.mxu0 %v600
      %v625 = vpop.f32.mrf.mxu0
      %v626 = vadd.f32 0.0, %v625
      %627 = vmatmul.f32.gmra.mxu0 %v602
      %v628 = vpop.f32.mrf.mxu0
      %v629 = vadd.f32 0.0, %v628
      %630 = vdwg.mxu0
      %633 = vrot.lane.b32.xlu0 %v407, 96
      %v634 = vpop.permute.xlu0 %633
      %635 = vrot.lane.b32.xlu0 %v410, 96
      %v636 = vpop.permute.xlu0 %635
      %v637 = vsel %vm488, %v407, 0
      %v639 = vsel %vm488, %v410, 0
      %v641 = vsel %vm488, %v634, 0
      %v643 = vsel %vm488, %v636, 0
      %645 = vmatpush.xpose.msra.mxu0 0.0
      %646 = vmatpush.xpose.msra.mxu0 0.0
      %647 = vmatpush.xpose.msra.mxu0 0.0
      %648 = vmatpush.xpose.msra.mxu0 0.0
      %649 = vmatpush.xpose.msra.mxu0 0.0
      %650 = vmatpush.xpose.msra.mxu0 0.0
      %651 = vmatpush.xpose.msra.mxu0 0.0
      %652 = vmatpush.xpose.msra.mxu0 0.0
      %653 = vmatpush.xpose.msra.mxu0 0.0
      %654 = vmatpush.xpose.msra.mxu0 0.0
      %655 = vmatpush.xpose.msra.mxu0 0.0
      %656 = vmatpush.xpose.msra.mxu0 0.0
      %657 = vmatpush.xpose.msra.mxu0 0.0
      %658 = vmatpush.xpose.msra.mxu0 0.0
      %659 = vmatpush.xpose.msra.mxu0 %v643
      %660 = vmatpush.xpose.msra.mxu0 %v641
      %661 = vmatmul.f32.gmra.mxu0 %v637
      %v662 = vpop.f32.mrf.mxu0
      %v663 = vadd.f32 0.0, %v662
      %664 = vmatmul.f32.gmra.mxu0 %v639
      %v665 = vpop.f32.mrf.mxu0
      %v666 = vadd.f32 0.0, %v665
      %667 = vdwg.mxu0
      %670 = vrot.lane.b32.xlu0 %v413, 96
      %v671 = vpop.permute.xlu0 %670
      %672 = vrot.lane.b32.xlu0 %v416, 96
      %v673 = vpop.permute.xlu0 %672
      %v674 = vsel %vm488, %v413, 0
      %v676 = vsel %vm488, %v416, 0
      %v678 = vsel %vm488, %v671, 0
      %v680 = vsel %vm488, %v673, 0
      %682 = vmatpush.xpose.msra.mxu0 0.0
      %683 = vmatpush.xpose.msra.mxu0 0.0
      %684 = vmatpush.xpose.msra.mxu0 0.0
      %685 = vmatpush.xpose.msra.mxu0 0.0
      %686 = vmatpush.xpose.msra.mxu0 0.0
      %687 = vmatpush.xpose.msra.mxu0 0.0
      %688 = vmatpush.xpose.msra.mxu0 0.0
      %689 = vmatpush.xpose.msra.mxu0 0.0
      %690 = vmatpush.xpose.msra.mxu0 0.0
      %691 = vmatpush.xpose.msra.mxu0 0.0
      %692 = vmatpush.xpose.msra.mxu0 0.0
      %693 = vmatpush.xpose.msra.mxu0 0.0
      %694 = vmatpush.xpose.msra.mxu0 0.0
      %695 = vmatpush.xpose.msra.mxu0 0.0
      %696 = vmatpush.xpose.msra.mxu0 %v680
      %697 = vmatpush.xpose.msra.mxu0 %v678
      %698 = vmatmul.f32.gmra.mxu0 %v674
      %v699 = vpop.f32.mrf.mxu0
      %v700 = vadd.f32 0.0, %v699
      %701 = vmatmul.f32.gmra.mxu0 %v676
      %v702 = vpop.f32.mrf.mxu0
      %v703 = vadd.f32 0.0, %v702
      %704 = vdwg.mxu0
      %707 = vrot.lane.b32.xlu0 %v419, 96
      %v708 = vpop.permute.xlu0 %707
      %709 = vrot.lane.b32.xlu0 %v422, 96
      %v710 = vpop.permute.xlu0 %709
      %v711 = vsel %vm488, %v419, 0
      %v713 = vsel %vm488, %v422, 0
      %v715 = vsel %vm488, %v708, 0
      %v717 = vsel %vm488, %v710, 0
      %719 = vmatpush.xpose.msra.mxu0 0.0
      %720 = vmatpush.xpose.msra.mxu0 0.0
      %721 = vmatpush.xpose.msra.mxu0 0.0
      %722 = vmatpush.xpose.msra.mxu0 0.0
      %723 = vmatpush.xpose.msra.mxu0 0.0
      %724 = vmatpush.xpose.msra.mxu0 0.0
      %725 = vmatpush.xpose.msra.mxu0 0.0
      %726 = vmatpush.xpose.msra.mxu0 0.0
      %727 = vmatpush.xpose.msra.mxu0 0.0
      %728 = vmatpush.xpose.msra.mxu0 0.0
      %729 = vmatpush.xpose.msra.mxu0 0.0
      %730 = vmatpush.xpose.msra.mxu0 0.0
      %731 = vmatpush.xpose.msra.mxu0 0.0
      %732 = vmatpush.xpose.msra.mxu0 0.0
      %733 = vmatpush.xpose.msra.mxu0 %v717
      %734 = vmatpush.xpose.msra.mxu0 %v715
      %735 = vmatmul.f32.gmra.mxu0 %v711
      %v736 = vpop.f32.mrf.mxu0
      %v737 = vadd.f32 0.0, %v736
      %738 = vmatmul.f32.gmra.mxu0 %v713
      %v739 = vpop.f32.mrf.mxu0
      %v740 = vadd.f32 0.0, %v739
      %741 = vdwg.mxu0
      %744 = vrot.lane.b32.xlu0 %v425, 96
      %v745 = vpop.permute.xlu0 %744
      %746 = vrot.lane.b32.xlu0 %v428, 96
      %v747 = vpop.permute.xlu0 %746
      %v748 = vsel %vm488, %v425, 0
      %v750 = vsel %vm488, %v428, 0
      %v752 = vsel %vm488, %v745, 0
      %v754 = vsel %vm488, %v747, 0
      %756 = vmatpush.xpose.msra.mxu0 0.0
      %757 = vmatpush.xpose.msra.mxu0 0.0
      %758 = vmatpush.xpose.msra.mxu0 0.0
      %759 = vmatpush.xpose.msra.mxu0 0.0
      %760 = vmatpush.xpose.msra.mxu0 0.0
      %761 = vmatpush.xpose.msra.mxu0 0.0
      %762 = vmatpush.xpose.msra.mxu0 0.0
      %763 = vmatpush.xpose.msra.mxu0 0.0
      %764 = vmatpush.xpose.msra.mxu0 0.0
      %765 = vmatpush.xpose.msra.mxu0 0.0
      %766 = vmatpush.xpose.msra.mxu0 0.0
      %767 = vmatpush.xpose.msra.mxu0 0.0
      %768 = vmatpush.xpose.msra.mxu0 0.0
      %769 = vmatpush.xpose.msra.mxu0 0.0
      %770 = vmatpush.xpose.msra.mxu0 %v754
      %771 = vmatpush.xpose.msra.mxu0 %v752
      %772 = vmatmul.f32.gmra.mxu0 %v748
      %v773 = vpop.f32.mrf.mxu0
      %v774 = vadd.f32 0.0, %v773
      %775 = vmatmul.f32.gmra.mxu0 %v750
      %v776 = vpop.f32.mrf.mxu0
      %v777 = vadd.f32 0.0, %v776
      %778 = vdwg.mxu0
      %781 = vrot.lane.b32.xlu0 %v431, 96
      %v782 = vpop.permute.xlu0 %781
      %783 = vrot.lane.b32.xlu0 %v434, 96
      %v784 = vpop.permute.xlu0 %783
      %v785 = vsel %vm488, %v431, 0
      %v787 = vsel %vm488, %v434, 0
      %v789 = vsel %vm488, %v782, 0
      %v791 = vsel %vm488, %v784, 0
      %793 = vmatpush.xpose.msra.mxu0 0.0
      %794 = vmatpush.xpose.msra.mxu0 0.0
      %795 = vmatpush.xpose.msra.mxu0 0.0
      %796 = vmatpush.xpose.msra.mxu0 0.0
      %797 = vmatpush.xpose.msra.mxu0 0.0
      %798 = vmatpush.xpose.msra.mxu0 0.0
      %799 = vmatpush.xpose.msra.mxu0 0.0
      %800 = vmatpush.xpose.msra.mxu0 0.0
      %801 = vmatpush.xpose.msra.mxu0 0.0
      %802 = vmatpush.xpose.msra.mxu0 0.0
      %803 = vmatpush.xpose.msra.mxu0 0.0
      %804 = vmatpush.xpose.msra.mxu0 0.0
      %805 = vmatpush.xpose.msra.mxu0 0.0
      %806 = vmatpush.xpose.msra.mxu0 0.0
      %807 = vmatpush.xpose.msra.mxu0 %v791
      %808 = vmatpush.xpose.msra.mxu0 %v789
      %809 = vmatmul.f32.gmra.mxu0 %v785
      %v810 = vpop.f32.mrf.mxu0
      %v811 = vadd.f32 0.0, %v810
      %812 = vmatmul.f32.gmra.mxu0 %v787
      %v813 = vpop.f32.mrf.mxu0
      %v814 = vadd.f32 0.0, %v813
      %815 = vdwg.mxu0
      %818 = vrot.lane.b32.xlu0 %v437, 96
      %v819 = vpop.permute.xlu0 %818
      %820 = vrot.lane.b32.xlu0 %v440, 96
      %v821 = vpop.permute.xlu0 %820
      %v822 = vsel %vm488, %v437, 0
      %v824 = vsel %vm488, %v440, 0
      %v826 = vsel %vm488, %v819, 0
      %v828 = vsel %vm488, %v821, 0
      %830 = vmatpush.xpose.msra.mxu0 0.0
      %831 = vmatpush.xpose.msra.mxu0 0.0
      %832 = vmatpush.xpose.msra.mxu0 0.0
      %833 = vmatpush.xpose.msra.mxu0 0.0
      %834 = vmatpush.xpose.msra.mxu0 0.0
      %835 = vmatpush.xpose.msra.mxu0 0.0
      %836 = vmatpush.xpose.msra.mxu0 0.0
      %837 = vmatpush.xpose.msra.mxu0 0.0
      %838 = vmatpush.xpose.msra.mxu0 0.0
      %839 = vmatpush.xpose.msra.mxu0 0.0
      %840 = vmatpush.xpose.msra.mxu0 0.0
      %841 = vmatpush.xpose.msra.mxu0 0.0
      %842 = vmatpush.xpose.msra.mxu0 0.0
      %843 = vmatpush.xpose.msra.mxu0 0.0
      %844 = vmatpush.xpose.msra.mxu0 %v828
      %845 = vmatpush.xpose.msra.mxu0 %v826
      %846 = vmatmul.f32.gmra.mxu0 %v822
      %v847 = vpop.f32.mrf.mxu0
      %v848 = vadd.f32 0.0, %v847
      %849 = vmatmul.f32.gmra.mxu0 %v824
      %v850 = vpop.f32.mrf.mxu0
      %v851 = vadd.f32 0.0, %v850
      %852 = vdwg.mxu0
      %855 = vrot.lane.b32.xlu0 %v443, 96
      %v856 = vpop.permute.xlu0 %855
      %857 = vrot.lane.b32.xlu0 %v446, 96
      %v858 = vpop.permute.xlu0 %857
      %v859 = vsel %vm488, %v443, 0
      %v861 = vsel %vm488, %v446, 0
      %v863 = vsel %vm488, %v856, 0
      %v865 = vsel %vm488, %v858, 0
      %867 = vmatpush.xpose.msra.mxu0 0.0
      %868 = vmatpush.xpose.msra.mxu0 0.0
      %869 = vmatpush.xpose.msra.mxu0 0.0
      %870 = vmatpush.xpose.msra.mxu0 0.0
      %871 = vmatpush.xpose.msra.mxu0 0.0
      %872 = vmatpush.xpose.msra.mxu0 0.0
      %873 = vmatpush.xpose.msra.mxu0 0.0
      %874 = vmatpush.xpose.msra.mxu0 0.0
      %875 = vmatpush.xpose.msra.mxu0 0.0
      %876 = vmatpush.xpose.msra.mxu0 0.0
      %877 = vmatpush.xpose.msra.mxu0 0.0
      %878 = vmatpush.xpose.msra.mxu0 0.0
      %879 = vmatpush.xpose.msra.mxu0 0.0
      %880 = vmatpush.xpose.msra.mxu0 0.0
      %881 = vmatpush.xpose.msra.mxu0 %v865
      %882 = vmatpush.xpose.msra.mxu0 %v863
      %883 = vmatmul.f32.gmra.mxu0 %v859
      %v884 = vpop.f32.mrf.mxu0
      %v885 = vadd.f32 0.0, %v884
      %886 = vmatmul.f32.gmra.mxu0 %v861
      %v887 = vpop.f32.mrf.mxu0
      %v888 = vadd.f32 0.0, %v887
      %889 = vdwg.mxu0
      %892 = vrot.lane.b32.xlu0 %v449, 96
      %v893 = vpop.permute.xlu0 %892
      %894 = vrot.lane.b32.xlu0 %v452, 96
      %v895 = vpop.permute.xlu0 %894
      %v896 = vsel %vm488, %v449, 0
      %v898 = vsel %vm488, %v452, 0
      %v900 = vsel %vm488, %v893, 0
      %v902 = vsel %vm488, %v895, 0
      %904 = vmatpush.xpose.msra.mxu0 0.0
      %905 = vmatpush.xpose.msra.mxu0 0.0
      %906 = vmatpush.xpose.msra.mxu0 0.0
      %907 = vmatpush.xpose.msra.mxu0 0.0
      %908 = vmatpush.xpose.msra.mxu0 0.0
      %909 = vmatpush.xpose.msra.mxu0 0.0
      %910 = vmatpush.xpose.msra.mxu0 0.0
      %911 = vmatpush.xpose.msra.mxu0 0.0
      %912 = vmatpush.xpose.msra.mxu0 0.0
      %913 = vmatpush.xpose.msra.mxu0 0.0
      %914 = vmatpush.xpose.msra.mxu0 0.0
      %915 = vmatpush.xpose.msra.mxu0 0.0
      %916 = vmatpush.xpose.msra.mxu0 0.0
      %917 = vmatpush.xpose.msra.mxu0 0.0
      %918 = vmatpush.xpose.msra.mxu0 %v902
      %919 = vmatpush.xpose.msra.mxu0 %v900
      %920 = vmatmul.f32.gmra.mxu0 %v896
      %v921 = vpop.f32.mrf.mxu0
      %v922 = vadd.f32 0.0, %v921
      %923 = vmatmul.f32.gmra.mxu0 %v898
      %v924 = vpop.f32.mrf.mxu0
      %v925 = vadd.f32 0.0, %v924
      %926 = vdwg.mxu0
      %929 = vrot.lane.b32.xlu0 %v455, 96
      %v930 = vpop.permute.xlu0 %929
      %931 = vrot.lane.b32.xlu0 %v458, 96
      %v932 = vpop.permute.xlu0 %931
      %v933 = vsel %vm488, %v455, 0
      %v935 = vsel %vm488, %v458, 0
      %v937 = vsel %vm488, %v930, 0
      %v939 = vsel %vm488, %v932, 0
      %941 = vmatpush.xpose.msra.mxu0 0.0
      %942 = vmatpush.xpose.msra.mxu0 0.0
      %943 = vmatpush.xpose.msra.mxu0 0.0
      %944 = vmatpush.xpose.msra.mxu0 0.0
      %945 = vmatpush.xpose.msra.mxu0 0.0
      %946 = vmatpush.xpose.msra.mxu0 0.0
      %947 = vmatpush.xpose.msra.mxu0 0.0
      %948 = vmatpush.xpose.msra.mxu0 0.0
      %949 = vmatpush.xpose.msra.mxu0 0.0
      %950 = vmatpush.xpose.msra.mxu0 0.0
      %951 = vmatpush.xpose.msra.mxu0 0.0
      %952 = vmatpush.xpose.msra.mxu0 0.0
      %953 = vmatpush.xpose.msra.mxu0 0.0
      %954 = vmatpush.xpose.msra.mxu0 0.0
      %955 = vmatpush.xpose.msra.mxu0 %v939
      %956 = vmatpush.xpose.msra.mxu0 %v937
      %957 = vmatmul.f32.gmra.mxu0 %v933
      %v958 = vpop.f32.mrf.mxu0
      %v959 = vadd.f32 0.0, %v958
      %960 = vmatmul.f32.gmra.mxu0 %v935
      %v961 = vpop.f32.mrf.mxu0
      %v962 = vadd.f32 0.0, %v961
      %963 = vdwg.mxu0
      %966 = vrot.lane.b32.xlu0 %v461, 96
      %v967 = vpop.permute.xlu0 %966
      %968 = vrot.lane.b32.xlu0 %v464, 96
      %v969 = vpop.permute.xlu0 %968
      %v970 = vsel %vm488, %v461, 0
      %v972 = vsel %vm488, %v464, 0
      %v974 = vsel %vm488, %v967, 0
      %v976 = vsel %vm488, %v969, 0
      %978 = vmatpush.xpose.msra.mxu0 0.0
      %979 = vmatpush.xpose.msra.mxu0 0.0
      %980 = vmatpush.xpose.msra.mxu0 0.0
      %981 = vmatpush.xpose.msra.mxu0 0.0
      %982 = vmatpush.xpose.msra.mxu0 0.0
      %983 = vmatpush.xpose.msra.mxu0 0.0
      %984 = vmatpush.xpose.msra.mxu0 0.0
      %985 = vmatpush.xpose.msra.mxu0 0.0
      %986 = vmatpush.xpose.msra.mxu0 0.0
      %987 = vmatpush.xpose.msra.mxu0 0.0
      %988 = vmatpush.xpose.msra.mxu0 0.0
      %989 = vmatpush.xpose.msra.mxu0 0.0
      %990 = vmatpush.xpose.msra.mxu0 0.0
      %991 = vmatpush.xpose.msra.mxu0 0.0
      %992 = vmatpush.xpose.msra.mxu0 %v976
      %993 = vmatpush.xpose.msra.mxu0 %v974
      %994 = vmatmul.f32.gmra.mxu0 %v970
      %v995 = vpop.f32.mrf.mxu0
      %v996 = vadd.f32 0.0, %v995
      %997 = vmatmul.f32.gmra.mxu0 %v972
      %v998 = vpop.f32.mrf.mxu0
      %v999 = vadd.f32 0.0, %v998
      %1000 = vdwg.mxu0
      %1003 = vrot.lane.b32.xlu0 %v467, 96
      %v1004 = vpop.permute.xlu0 %1003
      %1005 = vrot.lane.b32.xlu0 %v470, 96
      %v1006 = vpop.permute.xlu0 %1005
      %v1007 = vsel %vm488, %v467, 0
      %v1009 = vsel %vm488, %v470, 0
      %v1011 = vsel %vm488, %v1004, 0
      %v1013 = vsel %vm488, %v1006, 0
      %1015 = vmatpush.xpose.msra.mxu0 0.0
      %1016 = vmatpush.xpose.msra.mxu0 0.0
      %1017 = vmatpush.xpose.msra.mxu0 0.0
      %1018 = vmatpush.xpose.msra.mxu0 0.0
      %1019 = vmatpush.xpose.msra.mxu0 0.0
      %1020 = vmatpush.xpose.msra.mxu0 0.0
      %1021 = vmatpush.xpose.msra.mxu0 0.0
      %1022 = vmatpush.xpose.msra.mxu0 0.0
      %1023 = vmatpush.xpose.msra.mxu0 0.0
      %1024 = vmatpush.xpose.msra.mxu0 0.0
      %1025 = vmatpush.xpose.msra.mxu0 0.0
      %1026 = vmatpush.xpose.msra.mxu0 0.0
      %1027 = vmatpush.xpose.msra.mxu0 0.0
      %1028 = vmatpush.xpose.msra.mxu0 0.0
      %1029 = vmatpush.xpose.msra.mxu0 %v1013
      %1030 = vmatpush.xpose.msra.mxu0 %v1011
      %1031 = vmatmul.f32.gmra.mxu0 %v1007
      %v1032 = vpop.f32.mrf.mxu0
      %v1033 = vadd.f32 0.0, %v1032
      %1034 = vmatmul.f32.gmra.mxu0 %v1009
      %v1035 = vpop.f32.mrf.mxu0
      %v1036 = vadd.f32 0.0, %v1035
      %1037 = vdwg.mxu0
      %1040 = vrot.lane.b32.xlu0 %v473, 96
      %v1041 = vpop.permute.xlu0 %1040
      %1042 = vrot.lane.b32.xlu0 %v476, 96
      %v1043 = vpop.permute.xlu0 %1042
      %v1044 = vsel %vm488, %v473, 0
      %v1046 = vsel %vm488, %v476, 0
      %v1048 = vsel %vm488, %v1041, 0
      %v1050 = vsel %vm488, %v1043, 0
      %1052 = vmatpush.xpose.msra.mxu0 0.0
      %1053 = vmatpush.xpose.msra.mxu0 0.0
      %1054 = vmatpush.xpose.msra.mxu0 0.0
      %1055 = vmatpush.xpose.msra.mxu0 0.0
      %1056 = vmatpush.xpose.msra.mxu0 0.0
      %1057 = vmatpush.xpose.msra.mxu0 0.0
      %1058 = vmatpush.xpose.msra.mxu0 0.0
      %1059 = vmatpush.xpose.msra.mxu0 0.0
      %1060 = vmatpush.xpose.msra.mxu0 0.0
      %1061 = vmatpush.xpose.msra.mxu0 0.0
      %1062 = vmatpush.xpose.msra.mxu0 0.0
      %1063 = vmatpush.xpose.msra.mxu0 0.0
      %1064 = vmatpush.xpose.msra.mxu0 0.0
      %1065 = vmatpush.xpose.msra.mxu0 0.0
      %1066 = vmatpush.xpose.msra.mxu0 %v1050
      %1067 = vmatpush.xpose.msra.mxu0 %v1048
      %1068 = vmatmul.f32.gmra.mxu0 %v1044
      %v1069 = vpop.f32.mrf.mxu0
      %v1070 = vadd.f32 0.0, %v1069
      %1071 = vmatmul.f32.gmra.mxu0 %v1046
      %v1072 = vpop.f32.mrf.mxu0
      %v1073 = vadd.f32 0.0, %v1072
      %1074 = vdwg.mxu0
      %vm1075 = vcmask 130048
      %v1076 = vsel %vm1075, %v515, -inf
      %1077 = vmax.xlane.f32.xlu0 %v1076
      %v1078 = vpop.xlane.xlu0 %1077
      %v1079 = vsel %vm1075, %v518, -inf
      %1080 = vmax.xlane.f32.xlu0 %v1079
      %v1081 = vpop.xlane.xlu0 %1080
      %v1082 = vsel %vm1075, %v552, -inf
      %1083 = vmax.xlane.f32.xlu0 %v1082
      %v1084 = vpop.xlane.xlu0 %1083
      %v1085 = vsel %vm1075, %v555, -inf
      %1086 = vmax.xlane.f32.xlu0 %v1085
      %v1087 = vpop.xlane.xlu0 %1086
      %v1088 = vsel %vm1075, %v589, -inf
      %1089 = vmax.xlane.f32.xlu0 %v1088
      %v1090 = vpop.xlane.xlu0 %1089
      %v1091 = vsel %vm1075, %v592, -inf
      %1092 = vmax.xlane.f32.xlu0 %v1091
      %v1093 = vpop.xlane.xlu0 %1092
      %v1094 = vsel %vm1075, %v626, -inf
      %1095 = vmax.xlane.f32.xlu0 %v1094
      %v1096 = vpop.xlane.xlu0 %1095
      %v1097 = vsel %vm1075, %v629, -inf
      %1098 = vmax.xlane.f32.xlu0 %v1097
      %v1099 = vpop.xlane.xlu0 %1098
      %v1100 = vsel %vm1075, %v663, -inf
      %1101 = vmax.xlane.f32.xlu0 %v1100
      %v1102 = vpop.xlane.xlu0 %1101
      %v1103 = vsel %vm1075, %v666, -inf
      %1104 = vmax.xlane.f32.xlu0 %v1103
      %v1105 = vpop.xlane.xlu0 %1104
      %v1106 = vsel %vm1075, %v700, -inf
      %1107 = vmax.xlane.f32.xlu0 %v1106
      %v1108 = vpop.xlane.xlu0 %1107
      %v1109 = vsel %vm1075, %v703, -inf
      %1110 = vmax.xlane.f32.xlu0 %v1109
      %v1111 = vpop.xlane.xlu0 %1110
      %v1112 = vsel %vm1075, %v737, -inf
      %1113 = vmax.xlane.f32.xlu0 %v1112
      %v1114 = vpop.xlane.xlu0 %1113
      %v1115 = vsel %vm1075, %v740, -inf
      %1116 = vmax.xlane.f32.xlu0 %v1115
      %v1117 = vpop.xlane.xlu0 %1116
      %v1118 = vsel %vm1075, %v774, -inf
      %1119 = vmax.xlane.f32.xlu0 %v1118
      %v1120 = vpop.xlane.xlu0 %1119
      %v1121 = vsel %vm1075, %v777, -inf
      %1122 = vmax.xlane.f32.xlu0 %v1121
      %v1123 = vpop.xlane.xlu0 %1122
      %v1124 = vsel %vm1075, %v811, -inf
      %1125 = vmax.xlane.f32.xlu0 %v1124
      %v1126 = vpop.xlane.xlu0 %1125
      %v1127 = vsel %vm1075, %v814, -inf
      %1128 = vmax.xlane.f32.xlu0 %v1127
      %v1129 = vpop.xlane.xlu0 %1128
      %v1130 = vsel %vm1075, %v848, -inf
      %1131 = vmax.xlane.f32.xlu0 %v1130
      %v1132 = vpop.xlane.xlu0 %1131
      %v1133 = vsel %vm1075, %v851, -inf
      %1134 = vmax.xlane.f32.xlu0 %v1133
      %v1135 = vpop.xlane.xlu0 %1134
      %v1136 = vsel %vm1075, %v885, -inf
      %1137 = vmax.xlane.f32.xlu0 %v1136
      %v1138 = vpop.xlane.xlu0 %1137
      %v1139 = vsel %vm1075, %v888, -inf
      %1140 = vmax.xlane.f32.xlu0 %v1139
      %v1141 = vpop.xlane.xlu0 %1140
      %v1142 = vsel %vm1075, %v922, -inf
      %1143 = vmax.xlane.f32.xlu0 %v1142
      %v1144 = vpop.xlane.xlu0 %1143
      %v1145 = vsel %vm1075, %v925, -inf
      %1146 = vmax.xlane.f32.xlu0 %v1145
      %v1147 = vpop.xlane.xlu0 %1146
      %v1148 = vsel %vm1075, %v959, -inf
      %1149 = vmax.xlane.f32.xlu0 %v1148
      %v1150 = vpop.xlane.xlu0 %1149
      %v1151 = vsel %vm1075, %v962, -inf
      %1152 = vmax.xlane.f32.xlu0 %v1151
      %v1153 = vpop.xlane.xlu0 %1152
      %v1154 = vsel %vm1075, %v996, -inf
      %1155 = vmax.xlane.f32.xlu0 %v1154
      %v1156 = vpop.xlane.xlu0 %1155
      %v1157 = vsel %vm1075, %v999, -inf
      %1158 = vmax.xlane.f32.xlu0 %v1157
      %v1159 = vpop.xlane.xlu0 %1158
      %v1160 = vsel %vm1075, %v1033, -inf
      %1161 = vmax.xlane.f32.xlu0 %v1160
      %v1162 = vpop.xlane.xlu0 %1161
      %v1163 = vsel %vm1075, %v1036, -inf
      %1164 = vmax.xlane.f32.xlu0 %v1163
      %v1165 = vpop.xlane.xlu0 %1164
      %v1166 = vsel %vm1075, %v1070, -inf
      %1167 = vmax.xlane.f32.xlu0 %v1166
      %v1168 = vpop.xlane.xlu0 %1167
      %v1169 = vsel %vm1075, %v1073, -inf
      %1170 = vmax.xlane.f32.xlu0 %v1169
      %v1171 = vpop.xlane.xlu0 %1170
      %v1172 = vsub.f32 %v515, %v1078
      %v1173 = vsub.f32 %v518, %v1081
      %v1174 = vsub.f32 %v552, %v1084
      %v1175 = vsub.f32 %v555, %v1087
      %v1176 = vsub.f32 %v589, %v1090
      %v1177 = vsub.f32 %v592, %v1093
      %v1178 = vsub.f32 %v626, %v1096
      %v1179 = vsub.f32 %v629, %v1099
      %v1180 = vsub.f32 %v663, %v1102
      %v1181 = vsub.f32 %v666, %v1105
      %v1182 = vsub.f32 %v700, %v1108
      %v1183 = vsub.f32 %v703, %v1111
      %v1184 = vsub.f32 %v737, %v1114
      %v1185 = vsub.f32 %v740, %v1117
      %v1186 = vsub.f32 %v774, %v1120
      %v1187 = vsub.f32 %v777, %v1123
      %v1188 = vsub.f32 %v811, %v1126
      %v1189 = vsub.f32 %v814, %v1129
      %v1190 = vsub.f32 %v848, %v1132
      %v1191 = vsub.f32 %v851, %v1135
      %v1192 = vsub.f32 %v885, %v1138
      %v1193 = vsub.f32 %v888, %v1141
      %v1194 = vsub.f32 %v922, %v1144
      %v1195 = vsub.f32 %v925, %v1147
      %v1196 = vsub.f32 %v959, %v1150
      %v1197 = vsub.f32 %v962, %v1153
      %v1198 = vsub.f32 %v996, %v1156
      %v1199 = vsub.f32 %v999, %v1159
      %v1200 = vsub.f32 %v1033, %v1162
      %v1201 = vsub.f32 %v1036, %v1165
      %v1202 = vsub.f32 %v1070, %v1168
      %v1203 = vsub.f32 %v1073, %v1171
      %v1204 = vmul.f32 %v1172, 1.442695
      %v1205 = vpow.pop %v1204
      %v1206 = vmul.f32 %v1173, 1.442695
      %v1207 = vpow.pop %v1206
      %v1208 = vmul.f32 %v1174, 1.442695
      %v1209 = vpow.pop %v1208
      %v1210 = vmul.f32 %v1175, 1.442695
      %v1211 = vpow.pop %v1210
      %v1212 = vmul.f32 %v1176, 1.442695
      %v1213 = vpow.pop %v1212
      %v1214 = vmul.f32 %v1177, 1.442695
      %v1215 = vpow.pop %v1214
      %v1216 = vmul.f32 %v1178, 1.442695
      %v1217 = vpow.pop %v1216
      %v1218 = vmul.f32 %v1179, 1.442695
      %v1219 = vpow.pop %v1218
      %v1220 = vmul.f32 %v1180, 1.442695
      %v1221 = vpow.pop %v1220
      %v1222 = vmul.f32 %v1181, 1.442695
      %v1223 = vpow.pop %v1222
      %v1224 = vmul.f32 %v1182, 1.442695
      %v1225 = vpow.pop %v1224
      %v1226 = vmul.f32 %v1183, 1.442695
      %v1227 = vpow.pop %v1226
      %v1228 = vmul.f32 %v1184, 1.442695
      %v1229 = vpow.pop %v1228
      %v1230 = vmul.f32 %v1185, 1.442695
      %v1231 = vpow.pop %v1230
      %v1232 = vmul.f32 %v1186, 1.442695
      %v1233 = vpow.pop %v1232
      %v1234 = vmul.f32 %v1187, 1.442695
      %v1235 = vpow.pop %v1234
      %v1236 = vmul.f32 %v1188, 1.442695
      %v1237 = vpow.pop %v1236
      %v1238 = vmul.f32 %v1189, 1.442695
      %v1239 = vpow.pop %v1238
      %v1240 = vmul.f32 %v1190, 1.442695
      %v1241 = vpow.pop %v1240
      %v1242 = vmul.f32 %v1191, 1.442695
      %v1243 = vpow.pop %v1242
      %v1244 = vmul.f32 %v1192, 1.442695
      %v1245 = vpow.pop %v1244
      %v1246 = vmul.f32 %v1193, 1.442695
      %v1247 = vpow.pop %v1246
      %v1248 = vmul.f32 %v1194, 1.442695
      %v1249 = vpow.pop %v1248
      %v1250 = vmul.f32 %v1195, 1.442695
      %v1251 = vpow.pop %v1250
      %v1252 = vmul.f32 %v1196, 1.442695
      %v1253 = vpow.pop %v1252
      %v1254 = vmul.f32 %v1197, 1.442695
      %v1255 = vpow.pop %v1254
      %v1256 = vmul.f32 %v1198, 1.442695
      %v1257 = vpow.pop %v1256
      %v1258 = vmul.f32 %v1199, 1.442695
      %v1259 = vpow.pop %v1258
      %v1260 = vmul.f32 %v1200, 1.442695
      %v1261 = vpow.pop %v1260
      %v1262 = vmul.f32 %v1201, 1.442695
      %v1263 = vpow.pop %v1262
      %v1264 = vmul.f32 %v1202, 1.442695
      %v1265 = vpow.pop %v1264
      %v1266 = vmul.f32 %v1203, 1.442695
      %v1267 = vpow.pop %v1266
      %v1268 = vsel %vm1075, %v1205, 0.0
      %1269 = vadd.xlane.f32.xlu0 %v1268
      %v1270 = vpop.xlane.xlu0 %1269
      %v1271 = vsel %vm1075, %v1207, 0.0
      %1272 = vadd.xlane.f32.xlu0 %v1271
      %v1273 = vpop.xlane.xlu0 %1272
      %v1274 = vsel %vm1075, %v1209, 0.0
      %1275 = vadd.xlane.f32.xlu0 %v1274
      %v1276 = vpop.xlane.xlu0 %1275
      %v1277 = vsel %vm1075, %v1211, 0.0
      %1278 = vadd.xlane.f32.xlu0 %v1277
      %v1279 = vpop.xlane.xlu0 %1278
      %v1280 = vsel %vm1075, %v1213, 0.0
      %1281 = vadd.xlane.f32.xlu0 %v1280
      %v1282 = vpop.xlane.xlu0 %1281
      %v1283 = vsel %vm1075, %v1215, 0.0
      %1284 = vadd.xlane.f32.xlu0 %v1283
      %v1285 = vpop.xlane.xlu0 %1284
      %v1286 = vsel %vm1075, %v1217, 0.0
      %1287 = vadd.xlane.f32.xlu0 %v1286
      %v1288 = vpop.xlane.xlu0 %1287
      %v1289 = vsel %vm1075, %v1219, 0.0
      %1290 = vadd.xlane.f32.xlu0 %v1289
      %v1291 = vpop.xlane.xlu0 %1290
      %v1292 = vsel %vm1075, %v1221, 0.0
      %1293 = vadd.xlane.f32.xlu0 %v1292
      %v1294 = vpop.xlane.xlu0 %1293
      %v1295 = vsel %vm1075, %v1223, 0.0
      %1296 = vadd.xlane.f32.xlu0 %v1295
      %v1297 = vpop.xlane.xlu0 %1296
      %v1298 = vsel %vm1075, %v1225, 0.0
      %1299 = vadd.xlane.f32.xlu0 %v1298
      %v1300 = vpop.xlane.xlu0 %1299
      %v1301 = vsel %vm1075, %v1227, 0.0
      %1302 = vadd.xlane.f32.xlu0 %v1301
      %v1303 = vpop.xlane.xlu0 %1302
      %v1304 = vsel %vm1075, %v1229, 0.0
      %1305 = vadd.xlane.f32.xlu0 %v1304
      %v1306 = vpop.xlane.xlu0 %1305
      %v1307 = vsel %vm1075, %v1231, 0.0
      %1308 = vadd.xlane.f32.xlu0 %v1307
      %v1309 = vpop.xlane.xlu0 %1308
      %v1310 = vsel %vm1075, %v1233, 0.0
      %1311 = vadd.xlane.f32.xlu0 %v1310
      %v1312 = vpop.xlane.xlu0 %1311
      %v1313 = vsel %vm1075, %v1235, 0.0
      %1314 = vadd.xlane.f32.xlu0 %v1313
      %v1315 = vpop.xlane.xlu0 %1314
      %v1316 = vsel %vm1075, %v1237, 0.0
      %1317 = vadd.xlane.f32.xlu0 %v1316
      %v1318 = vpop.xlane.xlu0 %1317
      %v1319 = vsel %vm1075, %v1239, 0.0
      %1320 = vadd.xlane.f32.xlu0 %v1319
      %v1321 = vpop.xlane.xlu0 %1320
      %v1322 = vsel %vm1075, %v1241, 0.0
      %1323 = vadd.xlane.f32.xlu0 %v1322
      %v1324 = vpop.xlane.xlu0 %1323
      %v1325 = vsel %vm1075, %v1243, 0.0
      %1326 = vadd.xlane.f32.xlu0 %v1325
      %v1327 = vpop.xlane.xlu0 %1326
      %v1328 = vsel %vm1075, %v1245, 0.0
      %1329 = vadd.xlane.f32.xlu0 %v1328
      %v1330 = vpop.xlane.xlu0 %1329
      %v1331 = vsel %vm1075, %v1247, 0.0
      %1332 = vadd.xlane.f32.xlu0 %v1331
      %v1333 = vpop.xlane.xlu0 %1332
      %v1334 = vsel %vm1075, %v1249, 0.0
      %1335 = vadd.xlane.f32.xlu0 %v1334
      %v1336 = vpop.xlane.xlu0 %1335
      %v1337 = vsel %vm1075, %v1251, 0.0
      %1338 = vadd.xlane.f32.xlu0 %v1337
      %v1339 = vpop.xlane.xlu0 %1338
      %v1340 = vsel %vm1075, %v1253, 0.0
      %1341 = vadd.xlane.f32.xlu0 %v1340
      %v1342 = vpop.xlane.xlu0 %1341
      %v1343 = vsel %vm1075, %v1255, 0.0
      %1344 = vadd.xlane.f32.xlu0 %v1343
      %v1345 = vpop.xlane.xlu0 %1344
      %v1346 = vsel %vm1075, %v1257, 0.0
      %1347 = vadd.xlane.f32.xlu0 %v1346
      %v1348 = vpop.xlane.xlu0 %1347
      %v1349 = vsel %vm1075, %v1259, 0.0
      %1350 = vadd.xlane.f32.xlu0 %v1349
      %v1351 = vpop.xlane.xlu0 %1350
      %v1352 = vsel %vm1075, %v1261, 0.0
      %1353 = vadd.xlane.f32.xlu0 %v1352
      %v1354 = vpop.xlane.xlu0 %1353
      %v1355 = vsel %vm1075, %v1263, 0.0
      %1356 = vadd.xlane.f32.xlu0 %v1355
      %v1357 = vpop.xlane.xlu0 %1356
      %v1358 = vsel %vm1075, %v1265, 0.0
      %1359 = vadd.xlane.f32.xlu0 %v1358
      %v1360 = vpop.xlane.xlu0 %1359
      %v1361 = vsel %vm1075, %v1267, 0.0
      %1362 = vadd.xlane.f32.xlu0 %v1361
      %v1363 = vpop.xlane.xlu0 %1362
      %v1364 = vrcp.pop %v1270
      %v1365 = vrcp.pop %v1273
      %v1366 = vrcp.pop %v1276
      %v1367 = vrcp.pop %v1279
      %v1368 = vrcp.pop %v1282
      %v1369 = vrcp.pop %v1285
      %v1370 = vrcp.pop %v1288
      %v1371 = vrcp.pop %v1291
      %v1372 = vrcp.pop %v1294
      %v1373 = vrcp.pop %v1297
      %v1374 = vrcp.pop %v1300
      %v1375 = vrcp.pop %v1303
      %v1376 = vrcp.pop %v1306
      %v1377 = vrcp.pop %v1309
      %v1378 = vrcp.pop %v1312
      %v1379 = vrcp.pop %v1315
      %v1380 = vrcp.pop %v1318
      %v1381 = vrcp.pop %v1321
      %v1382 = vrcp.pop %v1324
      %v1383 = vrcp.pop %v1327
      %v1384 = vrcp.pop %v1330
      %v1385 = vrcp.pop %v1333
      %v1386 = vrcp.pop %v1336
      %v1387 = vrcp.pop %v1339
      %v1388 = vrcp.pop %v1342
      %v1389 = vrcp.pop %v1345
      %v1390 = vrcp.pop %v1348
      %v1391 = vrcp.pop %v1351
      %v1392 = vrcp.pop %v1354
      %v1393 = vrcp.pop %v1357
      %v1394 = vrcp.pop %v1360
      %v1395 = vrcp.pop %v1363
      %v1396 = vmul.f32 %v1205, %v1364
      %v1397 = vmul.f32 %v1207, %v1365
      %v1398 = vmul.f32 %v1209, %v1366
      %v1399 = vmul.f32 %v1211, %v1367
      %v1400 = vmul.f32 %v1213, %v1368
      %v1401 = vmul.f32 %v1215, %v1369
      %v1402 = vmul.f32 %v1217, %v1370
      %v1403 = vmul.f32 %v1219, %v1371
      %v1404 = vmul.f32 %v1221, %v1372
      %v1405 = vmul.f32 %v1223, %v1373
      %v1406 = vmul.f32 %v1225, %v1374
      %v1407 = vmul.f32 %v1227, %v1375
      %v1408 = vmul.f32 %v1229, %v1376
      %v1409 = vmul.f32 %v1231, %v1377
      %v1410 = vmul.f32 %v1233, %v1378
      %v1411 = vmul.f32 %v1235, %v1379
      %v1412 = vmul.f32 %v1237, %v1380
      %v1413 = vmul.f32 %v1239, %v1381
      %v1414 = vmul.f32 %v1241, %v1382
      %v1415 = vmul.f32 %v1243, %v1383
      %v1416 = vmul.f32 %v1245, %v1384
      %v1417 = vmul.f32 %v1247, %v1385
      %v1418 = vmul.f32 %v1249, %v1386
      %v1419 = vmul.f32 %v1251, %v1387
      %v1420 = vmul.f32 %v1253, %v1388
      %v1421 = vmul.f32 %v1255, %v1389
      %v1422 = vmul.f32 %v1257, %v1390
      %v1423 = vmul.f32 %v1259, %v1391
      %v1424 = vmul.f32 %v1261, %v1392
      %v1425 = vmul.f32 %v1263, %v1393
      %v1426 = vmul.f32 %v1265, %v1394
      %v1427 = vmul.f32 %v1267, %v1395
      %1428 = vrot.lane.b32.xlu0 %v383, 64
      %v1429 = vpop.permute.xlu0 %1428
      %1430 = vrot.lane.b32.xlu0 %v386, 64
      %v1431 = vpop.permute.xlu0 %1430
      %v1435 = vsel %vm1075, %v1396, 0
      %v1438 = vsel %vm1075, %v1397, 0
      %1440 = vmatpush.msra.mxu0 0.0
      %1441 = vmatpush.msra.mxu0 0.0
      %1442 = vmatpush.msra.mxu0 0.0
      %1443 = vmatpush.msra.mxu0 0.0
      %1444 = vmatpush.msra.mxu0 0.0
      %1445 = vmatpush.msra.mxu0 0.0
      %1446 = vmatpush.msra.mxu0 0.0
      %1447 = vmatpush.msra.mxu0 0.0
      %1448 = vmatpush.msra.mxu0 0.0
      %1449 = vmatpush.msra.mxu0 0.0
      %1450 = vmatpush.msra.mxu0 0.0
      %1451 = vmatpush.msra.mxu0 0.0
      %1452 = vmatpush.msra.mxu0 0.0
      %1453 = vmatpush.msra.mxu0 0.0
      %1454 = vmatpush.msra.mxu0 %v1431
      %1455 = vmatpush.msra.mxu0 %v1429
      %1456 = vmatmul.f32.gmra.mxu0 %v1435
      %v1457 = vpop.f32.mrf.mxu0
      %v1458 = vadd.f32 0.0, %v1457
      %1459 = vmatmul.f32.gmra.mxu0 %v1438
      %v1460 = vpop.f32.mrf.mxu0
      %v1461 = vadd.f32 0.0, %v1460
      %1462 = vdwg.mxu0
      %1463 = vrot.lane.b32.xlu0 %v389, 64
      %v1464 = vpop.permute.xlu0 %1463
      %1465 = vrot.lane.b32.xlu0 %v392, 64
      %v1466 = vpop.permute.xlu0 %1465
      %v1470 = vsel %vm1075, %v1398, 0
      %v1473 = vsel %vm1075, %v1399, 0
      %1475 = vmatpush.msra.mxu0 0.0
      %1476 = vmatpush.msra.mxu0 0.0
      %1477 = vmatpush.msra.mxu0 0.0
      %1478 = vmatpush.msra.mxu0 0.0
      %1479 = vmatpush.msra.mxu0 0.0
      %1480 = vmatpush.msra.mxu0 0.0
      %1481 = vmatpush.msra.mxu0 0.0
      %1482 = vmatpush.msra.mxu0 0.0
      %1483 = vmatpush.msra.mxu0 0.0
      %1484 = vmatpush.msra.mxu0 0.0
      %1485 = vmatpush.msra.mxu0 0.0
      %1486 = vmatpush.msra.mxu0 0.0
      %1487 = vmatpush.msra.mxu0 0.0
      %1488 = vmatpush.msra.mxu0 0.0
      %1489 = vmatpush.msra.mxu0 %v1466
      %1490 = vmatpush.msra.mxu0 %v1464
      %1491 = vmatmul.f32.gmra.mxu0 %v1470
      %v1492 = vpop.f32.mrf.mxu0
      %v1493 = vadd.f32 0.0, %v1492
      %1494 = vmatmul.f32.gmra.mxu0 %v1473
      %v1495 = vpop.f32.mrf.mxu0
      %v1496 = vadd.f32 0.0, %v1495
      %1497 = vdwg.mxu0
      %1498 = vrot.lane.b32.xlu0 %v395, 64
      %v1499 = vpop.permute.xlu0 %1498
      %1500 = vrot.lane.b32.xlu0 %v398, 64
      %v1501 = vpop.permute.xlu0 %1500
      %v1505 = vsel %vm1075, %v1400, 0
      %v1508 = vsel %vm1075, %v1401, 0
      %1510 = vmatpush.msra.mxu0 0.0
      %1511 = vmatpush.msra.mxu0 0.0
      %1512 = vmatpush.msra.mxu0 0.0
      %1513 = vmatpush.msra.mxu0 0.0
      %1514 = vmatpush.msra.mxu0 0.0
      %1515 = vmatpush.msra.mxu0 0.0
      %1516 = vmatpush.msra.mxu0 0.0
      %1517 = vmatpush.msra.mxu0 0.0
      %1518 = vmatpush.msra.mxu0 0.0
      %1519 = vmatpush.msra.mxu0 0.0
      %1520 = vmatpush.msra.mxu0 0.0
      %1521 = vmatpush.msra.mxu0 0.0
      %1522 = vmatpush.msra.mxu0 0.0
      %1523 = vmatpush.msra.mxu0 0.0
      %1524 = vmatpush.msra.mxu0 %v1501
      %1525 = vmatpush.msra.mxu0 %v1499
      %1526 = vmatmul.f32.gmra.mxu0 %v1505
      %v1527 = vpop.f32.mrf.mxu0
      %v1528 = vadd.f32 0.0, %v1527
      %1529 = vmatmul.f32.gmra.mxu0 %v1508
      %v1530 = vpop.f32.mrf.mxu0
      %v1531 = vadd.f32 0.0, %v1530
      %1532 = vdwg.mxu0
      %1533 = vrot.lane.b32.xlu0 %v401, 64
      %v1534 = vpop.permute.xlu0 %1533
      %1535 = vrot.lane.b32.xlu0 %v404, 64
      %v1536 = vpop.permute.xlu0 %1535
      %v1540 = vsel %vm1075, %v1402, 0
      %v1543 = vsel %vm1075, %v1403, 0
      %1545 = vmatpush.msra.mxu0 0.0
      %1546 = vmatpush.msra.mxu0 0.0
      %1547 = vmatpush.msra.mxu0 0.0
      %1548 = vmatpush.msra.mxu0 0.0
      %1549 = vmatpush.msra.mxu0 0.0
      %1550 = vmatpush.msra.mxu0 0.0
      %1551 = vmatpush.msra.mxu0 0.0
      %1552 = vmatpush.msra.mxu0 0.0
      %1553 = vmatpush.msra.mxu0 0.0
      %1554 = vmatpush.msra.mxu0 0.0
      %1555 = vmatpush.msra.mxu0 0.0
      %1556 = vmatpush.msra.mxu0 0.0
      %1557 = vmatpush.msra.mxu0 0.0
      %1558 = vmatpush.msra.mxu0 0.0
      %1559 = vmatpush.msra.mxu0 %v1536
      %1560 = vmatpush.msra.mxu0 %v1534
      %1561 = vmatmul.f32.gmra.mxu0 %v1540
      %v1562 = vpop.f32.mrf.mxu0
      %v1563 = vadd.f32 0.0, %v1562
      %1564 = vmatmul.f32.gmra.mxu0 %v1543
      %v1565 = vpop.f32.mrf.mxu0
      %v1566 = vadd.f32 0.0, %v1565
      %1567 = vdwg.mxu0
      %1568 = vrot.lane.b32.xlu0 %v407, 64
      %v1569 = vpop.permute.xlu0 %1568
      %1570 = vrot.lane.b32.xlu0 %v410, 64
      %v1571 = vpop.permute.xlu0 %1570
      %v1575 = vsel %vm1075, %v1404, 0
      %v1578 = vsel %vm1075, %v1405, 0
      %1580 = vmatpush.msra.mxu0 0.0
      %1581 = vmatpush.msra.mxu0 0.0
      %1582 = vmatpush.msra.mxu0 0.0
      %1583 = vmatpush.msra.mxu0 0.0
      %1584 = vmatpush.msra.mxu0 0.0
      %1585 = vmatpush.msra.mxu0 0.0
      %1586 = vmatpush.msra.mxu0 0.0
      %1587 = vmatpush.msra.mxu0 0.0
      %1588 = vmatpush.msra.mxu0 0.0
      %1589 = vmatpush.msra.mxu0 0.0
      %1590 = vmatpush.msra.mxu0 0.0
      %1591 = vmatpush.msra.mxu0 0.0
      %1592 = vmatpush.msra.mxu0 0.0
      %1593 = vmatpush.msra.mxu0 0.0
      %1594 = vmatpush.msra.mxu0 %v1571
      %1595 = vmatpush.msra.mxu0 %v1569
      %1596 = vmatmul.f32.gmra.mxu0 %v1575
      %v1597 = vpop.f32.mrf.mxu0
      %v1598 = vadd.f32 0.0, %v1597
      %1599 = vmatmul.f32.gmra.mxu0 %v1578
      %v1600 = vpop.f32.mrf.mxu0
      %v1601 = vadd.f32 0.0, %v1600
      %1602 = vdwg.mxu0
      %1603 = vrot.lane.b32.xlu0 %v413, 64
      %v1604 = vpop.permute.xlu0 %1603
      %1605 = vrot.lane.b32.xlu0 %v416, 64
      %v1606 = vpop.permute.xlu0 %1605
      %v1610 = vsel %vm1075, %v1406, 0
      %v1613 = vsel %vm1075, %v1407, 0
      %1615 = vmatpush.msra.mxu0 0.0
      %1616 = vmatpush.msra.mxu0 0.0
      %1617 = vmatpush.msra.mxu0 0.0
      %1618 = vmatpush.msra.mxu0 0.0
      %1619 = vmatpush.msra.mxu0 0.0
      %1620 = vmatpush.msra.mxu0 0.0
      %1621 = vmatpush.msra.mxu0 0.0
      %1622 = vmatpush.msra.mxu0 0.0
      %1623 = vmatpush.msra.mxu0 0.0
      %1624 = vmatpush.msra.mxu0 0.0
      %1625 = vmatpush.msra.mxu0 0.0
      %1626 = vmatpush.msra.mxu0 0.0
      %1627 = vmatpush.msra.mxu0 0.0
      %1628 = vmatpush.msra.mxu0 0.0
      %1629 = vmatpush.msra.mxu0 %v1606
      %1630 = vmatpush.msra.mxu0 %v1604
      %1631 = vmatmul.f32.gmra.mxu0 %v1610
      %v1632 = vpop.f32.mrf.mxu0
      %v1633 = vadd.f32 0.0, %v1632
      %1634 = vmatmul.f32.gmra.mxu0 %v1613
      %v1635 = vpop.f32.mrf.mxu0
      %v1636 = vadd.f32 0.0, %v1635
      %1637 = vdwg.mxu0
      %1638 = vrot.lane.b32.xlu0 %v419, 64
      %v1639 = vpop.permute.xlu0 %1638
      %1640 = vrot.lane.b32.xlu0 %v422, 64
      %v1641 = vpop.permute.xlu0 %1640
      %v1645 = vsel %vm1075, %v1408, 0
      %v1648 = vsel %vm1075, %v1409, 0
      %1650 = vmatpush.msra.mxu0 0.0
      %1651 = vmatpush.msra.mxu0 0.0
      %1652 = vmatpush.msra.mxu0 0.0
      %1653 = vmatpush.msra.mxu0 0.0
      %1654 = vmatpush.msra.mxu0 0.0
      %1655 = vmatpush.msra.mxu0 0.0
      %1656 = vmatpush.msra.mxu0 0.0
      %1657 = vmatpush.msra.mxu0 0.0
      %1658 = vmatpush.msra.mxu0 0.0
      %1659 = vmatpush.msra.mxu0 0.0
      %1660 = vmatpush.msra.mxu0 0.0
      %1661 = vmatpush.msra.mxu0 0.0
      %1662 = vmatpush.msra.mxu0 0.0
      %1663 = vmatpush.msra.mxu0 0.0
      %1664 = vmatpush.msra.mxu0 %v1641
      %1665 = vmatpush.msra.mxu0 %v1639
      %1666 = vmatmul.f32.gmra.mxu0 %v1645
      %v1667 = vpop.f32.mrf.mxu0
      %v1668 = vadd.f32 0.0, %v1667
      %1669 = vmatmul.f32.gmra.mxu0 %v1648
      %v1670 = vpop.f32.mrf.mxu0
      %v1671 = vadd.f32 0.0, %v1670
      %1672 = vdwg.mxu0
      %1673 = vrot.lane.b32.xlu0 %v425, 64
      %v1674 = vpop.permute.xlu0 %1673
      %1675 = vrot.lane.b32.xlu0 %v428, 64
      %v1676 = vpop.permute.xlu0 %1675
      %v1680 = vsel %vm1075, %v1410, 0
      %v1683 = vsel %vm1075, %v1411, 0
      %1685 = vmatpush.msra.mxu0 0.0
      %1686 = vmatpush.msra.mxu0 0.0
      %1687 = vmatpush.msra.mxu0 0.0
      %1688 = vmatpush.msra.mxu0 0.0
      %1689 = vmatpush.msra.mxu0 0.0
      %1690 = vmatpush.msra.mxu0 0.0
      %1691 = vmatpush.msra.mxu0 0.0
      %1692 = vmatpush.msra.mxu0 0.0
      %1693 = vmatpush.msra.mxu0 0.0
      %1694 = vmatpush.msra.mxu0 0.0
      %1695 = vmatpush.msra.mxu0 0.0
      %1696 = vmatpush.msra.mxu0 0.0
      %1697 = vmatpush.msra.mxu0 0.0
      %1698 = vmatpush.msra.mxu0 0.0
      %1699 = vmatpush.msra.mxu0 %v1676
      %1700 = vmatpush.msra.mxu0 %v1674
      %1701 = vmatmul.f32.gmra.mxu0 %v1680
      %v1702 = vpop.f32.mrf.mxu0
      %v1703 = vadd.f32 0.0, %v1702
      %1704 = vmatmul.f32.gmra.mxu0 %v1683
      %v1705 = vpop.f32.mrf.mxu0
      %v1706 = vadd.f32 0.0, %v1705
      %1707 = vdwg.mxu0
      %1708 = vrot.lane.b32.xlu0 %v431, 64
      %v1709 = vpop.permute.xlu0 %1708
      %1710 = vrot.lane.b32.xlu0 %v434, 64
      %v1711 = vpop.permute.xlu0 %1710
      %v1715 = vsel %vm1075, %v1412, 0
      %v1718 = vsel %vm1075, %v1413, 0
      %1720 = vmatpush.msra.mxu0 0.0
      %1721 = vmatpush.msra.mxu0 0.0
      %1722 = vmatpush.msra.mxu0 0.0
      %1723 = vmatpush.msra.mxu0 0.0
      %1724 = vmatpush.msra.mxu0 0.0
      %1725 = vmatpush.msra.mxu0 0.0
      %1726 = vmatpush.msra.mxu0 0.0
      %1727 = vmatpush.msra.mxu0 0.0
      %1728 = vmatpush.msra.mxu0 0.0
      %1729 = vmatpush.msra.mxu0 0.0
      %1730 = vmatpush.msra.mxu0 0.0
      %1731 = vmatpush.msra.mxu0 0.0
      %1732 = vmatpush.msra.mxu0 0.0
      %1733 = vmatpush.msra.mxu0 0.0
      %1734 = vmatpush.msra.mxu0 %v1711
      %1735 = vmatpush.msra.mxu0 %v1709
      %1736 = vmatmul.f32.gmra.mxu0 %v1715
      %v1737 = vpop.f32.mrf.mxu0
      %v1738 = vadd.f32 0.0, %v1737
      %1739 = vmatmul.f32.gmra.mxu0 %v1718
      %v1740 = vpop.f32.mrf.mxu0
      %v1741 = vadd.f32 0.0, %v1740
      %1742 = vdwg.mxu0
      %1743 = vrot.lane.b32.xlu0 %v437, 64
      %v1744 = vpop.permute.xlu0 %1743
      %1745 = vrot.lane.b32.xlu0 %v440, 64
      %v1746 = vpop.permute.xlu0 %1745
      %v1750 = vsel %vm1075, %v1414, 0
      %v1753 = vsel %vm1075, %v1415, 0
      %1755 = vmatpush.msra.mxu0 0.0
      %1756 = vmatpush.msra.mxu0 0.0
      %1757 = vmatpush.msra.mxu0 0.0
      %1758 = vmatpush.msra.mxu0 0.0
      %1759 = vmatpush.msra.mxu0 0.0
      %1760 = vmatpush.msra.mxu0 0.0
      %1761 = vmatpush.msra.mxu0 0.0
      %1762 = vmatpush.msra.mxu0 0.0
      %1763 = vmatpush.msra.mxu0 0.0
      %1764 = vmatpush.msra.mxu0 0.0
      %1765 = vmatpush.msra.mxu0 0.0
      %1766 = vmatpush.msra.mxu0 0.0
      %1767 = vmatpush.msra.mxu0 0.0
      %1768 = vmatpush.msra.mxu0 0.0
      %1769 = vmatpush.msra.mxu0 %v1746
      %1770 = vmatpush.msra.mxu0 %v1744
      %1771 = vmatmul.f32.gmra.mxu0 %v1750
      %v1772 = vpop.f32.mrf.mxu0
      %v1773 = vadd.f32 0.0, %v1772
      %1774 = vmatmul.f32.gmra.mxu0 %v1753
      %v1775 = vpop.f32.mrf.mxu0
      %v1776 = vadd.f32 0.0, %v1775
      %1777 = vdwg.mxu0
      %1778 = vrot.lane.b32.xlu0 %v443, 64
      %v1779 = vpop.permute.xlu0 %1778
      %1780 = vrot.lane.b32.xlu0 %v446, 64
      %v1781 = vpop.permute.xlu0 %1780
      %v1785 = vsel %vm1075, %v1416, 0
      %v1788 = vsel %vm1075, %v1417, 0
      %1790 = vmatpush.msra.mxu0 0.0
      %1791 = vmatpush.msra.mxu0 0.0
      %1792 = vmatpush.msra.mxu0 0.0
      %1793 = vmatpush.msra.mxu0 0.0
      %1794 = vmatpush.msra.mxu0 0.0
      %1795 = vmatpush.msra.mxu0 0.0
      %1796 = vmatpush.msra.mxu0 0.0
      %1797 = vmatpush.msra.mxu0 0.0
      %1798 = vmatpush.msra.mxu0 0.0
      %1799 = vmatpush.msra.mxu0 0.0
      %1800 = vmatpush.msra.mxu0 0.0
      %1801 = vmatpush.msra.mxu0 0.0
      %1802 = vmatpush.msra.mxu0 0.0
      %1803 = vmatpush.msra.mxu0 0.0
      %1804 = vmatpush.msra.mxu0 %v1781
      %1805 = vmatpush.msra.mxu0 %v1779
      %1806 = vmatmul.f32.gmra.mxu0 %v1785
      %v1807 = vpop.f32.mrf.mxu0
      %v1808 = vadd.f32 0.0, %v1807
      %1809 = vmatmul.f32.gmra.mxu0 %v1788
      %v1810 = vpop.f32.mrf.mxu0
      %v1811 = vadd.f32 0.0, %v1810
      %1812 = vdwg.mxu0
      %1813 = vrot.lane.b32.xlu0 %v449, 64
      %v1814 = vpop.permute.xlu0 %1813
      %1815 = vrot.lane.b32.xlu0 %v452, 64
      %v1816 = vpop.permute.xlu0 %1815
      %v1820 = vsel %vm1075, %v1418, 0
      %v1823 = vsel %vm1075, %v1419, 0
      %1825 = vmatpush.msra.mxu0 0.0
      %1826 = vmatpush.msra.mxu0 0.0
      %1827 = vmatpush.msra.mxu0 0.0
      %1828 = vmatpush.msra.mxu0 0.0
      %1829 = vmatpush.msra.mxu0 0.0
      %1830 = vmatpush.msra.mxu0 0.0
      %1831 = vmatpush.msra.mxu0 0.0
      %1832 = vmatpush.msra.mxu0 0.0
      %1833 = vmatpush.msra.mxu0 0.0
      %1834 = vmatpush.msra.mxu0 0.0
      %1835 = vmatpush.msra.mxu0 0.0
      %1836 = vmatpush.msra.mxu0 0.0
      %1837 = vmatpush.msra.mxu0 0.0
      %1838 = vmatpush.msra.mxu0 0.0
      %1839 = vmatpush.msra.mxu0 %v1816
      %1840 = vmatpush.msra.mxu0 %v1814
      %1841 = vmatmul.f32.gmra.mxu0 %v1820
      %v1842 = vpop.f32.mrf.mxu0
      %v1843 = vadd.f32 0.0, %v1842
      %1844 = vmatmul.f32.gmra.mxu0 %v1823
      %v1845 = vpop.f32.mrf.mxu0
      %v1846 = vadd.f32 0.0, %v1845
      %1847 = vdwg.mxu0
      %1848 = vrot.lane.b32.xlu0 %v455, 64
      %v1849 = vpop.permute.xlu0 %1848
      %1850 = vrot.lane.b32.xlu0 %v458, 64
      %v1851 = vpop.permute.xlu0 %1850
      %v1855 = vsel %vm1075, %v1420, 0
      %v1858 = vsel %vm1075, %v1421, 0
      %1860 = vmatpush.msra.mxu0 0.0
      %1861 = vmatpush.msra.mxu0 0.0
      %1862 = vmatpush.msra.mxu0 0.0
      %1863 = vmatpush.msra.mxu0 0.0
      %1864 = vmatpush.msra.mxu0 0.0
      %1865 = vmatpush.msra.mxu0 0.0
      %1866 = vmatpush.msra.mxu0 0.0
      %1867 = vmatpush.msra.mxu0 0.0
      %1868 = vmatpush.msra.mxu0 0.0
      %1869 = vmatpush.msra.mxu0 0.0
      %1870 = vmatpush.msra.mxu0 0.0
      %1871 = vmatpush.msra.mxu0 0.0
      %1872 = vmatpush.msra.mxu0 0.0
      %1873 = vmatpush.msra.mxu0 0.0
      %1874 = vmatpush.msra.mxu0 %v1851
      %1875 = vmatpush.msra.mxu0 %v1849
      %1876 = vmatmul.f32.gmra.mxu0 %v1855
      %v1877 = vpop.f32.mrf.mxu0
      %v1878 = vadd.f32 0.0, %v1877
      %1879 = vmatmul.f32.gmra.mxu0 %v1858
      %v1880 = vpop.f32.mrf.mxu0
      %v1881 = vadd.f32 0.0, %v1880
      %1882 = vdwg.mxu0
      %1883 = vrot.lane.b32.xlu0 %v461, 64
      %v1884 = vpop.permute.xlu0 %1883
      %1885 = vrot.lane.b32.xlu0 %v464, 64
      %v1886 = vpop.permute.xlu0 %1885
      %v1890 = vsel %vm1075, %v1422, 0
      %v1893 = vsel %vm1075, %v1423, 0
      %1895 = vmatpush.msra.mxu0 0.0
      %1896 = vmatpush.msra.mxu0 0.0
      %1897 = vmatpush.msra.mxu0 0.0
      %1898 = vmatpush.msra.mxu0 0.0
      %1899 = vmatpush.msra.mxu0 0.0
      %1900 = vmatpush.msra.mxu0 0.0
      %1901 = vmatpush.msra.mxu0 0.0
      %1902 = vmatpush.msra.mxu0 0.0
      %1903 = vmatpush.msra.mxu0 0.0
      %1904 = vmatpush.msra.mxu0 0.0
      %1905 = vmatpush.msra.mxu0 0.0
      %1906 = vmatpush.msra.mxu0 0.0
      %1907 = vmatpush.msra.mxu0 0.0
      %1908 = vmatpush.msra.mxu0 0.0
      %1909 = vmatpush.msra.mxu0 %v1886
      %1910 = vmatpush.msra.mxu0 %v1884
      %1911 = vmatmul.f32.gmra.mxu0 %v1890
      %v1912 = vpop.f32.mrf.mxu0
      %v1913 = vadd.f32 0.0, %v1912
      %1914 = vmatmul.f32.gmra.mxu0 %v1893
      %v1915 = vpop.f32.mrf.mxu0
      %v1916 = vadd.f32 0.0, %v1915
      %1917 = vdwg.mxu0
      %1918 = vrot.lane.b32.xlu0 %v467, 64
      %v1919 = vpop.permute.xlu0 %1918
      %1920 = vrot.lane.b32.xlu0 %v470, 64
      %v1921 = vpop.permute.xlu0 %1920
      %v1925 = vsel %vm1075, %v1424, 0
      %v1928 = vsel %vm1075, %v1425, 0
      %1930 = vmatpush.msra.mxu0 0.0
      %1931 = vmatpush.msra.mxu0 0.0
      %1932 = vmatpush.msra.mxu0 0.0
      %1933 = vmatpush.msra.mxu0 0.0
      %1934 = vmatpush.msra.mxu0 0.0
      %1935 = vmatpush.msra.mxu0 0.0
      %1936 = vmatpush.msra.mxu0 0.0
      %1937 = vmatpush.msra.mxu0 0.0
      %1938 = vmatpush.msra.mxu0 0.0
      %1939 = vmatpush.msra.mxu0 0.0
      %1940 = vmatpush.msra.mxu0 0.0
      %1941 = vmatpush.msra.mxu0 0.0
      %1942 = vmatpush.msra.mxu0 0.0
      %1943 = vmatpush.msra.mxu0 0.0
      %1944 = vmatpush.msra.mxu0 %v1921
      %1945 = vmatpush.msra.mxu0 %v1919
      %1946 = vmatmul.f32.gmra.mxu0 %v1925
      %v1947 = vpop.f32.mrf.mxu0
      %v1948 = vadd.f32 0.0, %v1947
      %1949 = vmatmul.f32.gmra.mxu0 %v1928
      %v1950 = vpop.f32.mrf.mxu0
      %v1951 = vadd.f32 0.0, %v1950
      %1952 = vdwg.mxu0
      %1953 = vrot.lane.b32.xlu0 %v473, 64
      %v1954 = vpop.permute.xlu0 %1953
      %1955 = vrot.lane.b32.xlu0 %v476, 64
      %v1956 = vpop.permute.xlu0 %1955
      %v1960 = vsel %vm1075, %v1426, 0
      %v1963 = vsel %vm1075, %v1427, 0
      %1965 = vmatpush.msra.mxu0 0.0
      %1966 = vmatpush.msra.mxu0 0.0
      %1967 = vmatpush.msra.mxu0 0.0
      %1968 = vmatpush.msra.mxu0 0.0
      %1969 = vmatpush.msra.mxu0 0.0
      %1970 = vmatpush.msra.mxu0 0.0
      %1971 = vmatpush.msra.mxu0 0.0
      %1972 = vmatpush.msra.mxu0 0.0
      %1973 = vmatpush.msra.mxu0 0.0
      %1974 = vmatpush.msra.mxu0 0.0
      %1975 = vmatpush.msra.mxu0 0.0
      %1976 = vmatpush.msra.mxu0 0.0
      %1977 = vmatpush.msra.mxu0 0.0
      %1978 = vmatpush.msra.mxu0 0.0
      %1979 = vmatpush.msra.mxu0 %v1956
      %1980 = vmatpush.msra.mxu0 %v1954
      %1981 = vmatmul.f32.gmra.mxu0 %v1960
      %v1982 = vpop.f32.mrf.mxu0
      %v1983 = vadd.f32 0.0, %v1982
      %1984 = vmatmul.f32.gmra.mxu0 %v1963
      %v1985 = vpop.f32.mrf.mxu0
      %v1986 = vadd.f32 0.0, %v1985
      %1987 = vdwg.mxu0
      %1988 = vrot.lane.b32.xlu0 %v383, 120
      %v1989 = vpop.permute.xlu0 %1988
      %1990 = vrot.lane.b32.xlu0 %v386, 120
      %v1991 = vpop.permute.xlu0 %1990
      %1992 = vrot.lane.b32.xlu0 %v383, 88
      %v1993 = vpop.permute.xlu0 %1992
      %1994 = vrot.lane.b32.xlu0 %v386, 88
      %v1995 = vpop.permute.xlu0 %1994
      %v1996 = vsel %vm488, %v1989, 0
      %v1998 = vsel %vm488, %v1991, 0
      %v2000 = vsel %vm488, %v1993, 0
      %v2002 = vsel %vm488, %v1995, 0
      %2004 = vmatpush.xpose.msra.mxu0 0.0
      %2005 = vmatpush.xpose.msra.mxu0 0.0
      %2006 = vmatpush.xpose.msra.mxu0 0.0
      %2007 = vmatpush.xpose.msra.mxu0 0.0
      %2008 = vmatpush.xpose.msra.mxu0 0.0
      %2009 = vmatpush.xpose.msra.mxu0 0.0
      %2010 = vmatpush.xpose.msra.mxu0 0.0
      %2011 = vmatpush.xpose.msra.mxu0 0.0
      %2012 = vmatpush.xpose.msra.mxu0 0.0
      %2013 = vmatpush.xpose.msra.mxu0 0.0
      %2014 = vmatpush.xpose.msra.mxu0 0.0
      %2015 = vmatpush.xpose.msra.mxu0 0.0
      %2016 = vmatpush.xpose.msra.mxu0 0.0
      %2017 = vmatpush.xpose.msra.mxu0 0.0
      %2018 = vmatpush.xpose.msra.mxu0 %v2002
      %2019 = vmatpush.xpose.msra.mxu0 %v2000
      %2020 = vmatmul.f32.gmra.mxu0 %v1996
      %v2021 = vpop.f32.mrf.mxu0
      %v2022 = vadd.f32 0.0, %v2021
      %2023 = vmatmul.f32.gmra.mxu0 %v1998
      %v2024 = vpop.f32.mrf.mxu0
      %v2025 = vadd.f32 0.0, %v2024
      %2026 = vdwg.mxu0
      %2027 = vrot.lane.b32.xlu0 %v389, 120
      %v2028 = vpop.permute.xlu0 %2027
      %2029 = vrot.lane.b32.xlu0 %v392, 120
      %v2030 = vpop.permute.xlu0 %2029
      %2031 = vrot.lane.b32.xlu0 %v389, 88
      %v2032 = vpop.permute.xlu0 %2031
      %2033 = vrot.lane.b32.xlu0 %v392, 88
      %v2034 = vpop.permute.xlu0 %2033
      %v2035 = vsel %vm488, %v2028, 0
      %v2037 = vsel %vm488, %v2030, 0
      %v2039 = vsel %vm488, %v2032, 0
      %v2041 = vsel %vm488, %v2034, 0
      %2043 = vmatpush.xpose.msra.mxu0 0.0
      %2044 = vmatpush.xpose.msra.mxu0 0.0
      %2045 = vmatpush.xpose.msra.mxu0 0.0
      %2046 = vmatpush.xpose.msra.mxu0 0.0
      %2047 = vmatpush.xpose.msra.mxu0 0.0
      %2048 = vmatpush.xpose.msra.mxu0 0.0
      %2049 = vmatpush.xpose.msra.mxu0 0.0
      %2050 = vmatpush.xpose.msra.mxu0 0.0
      %2051 = vmatpush.xpose.msra.mxu0 0.0
      %2052 = vmatpush.xpose.msra.mxu0 0.0
      %2053 = vmatpush.xpose.msra.mxu0 0.0
      %2054 = vmatpush.xpose.msra.mxu0 0.0
      %2055 = vmatpush.xpose.msra.mxu0 0.0
      %2056 = vmatpush.xpose.msra.mxu0 0.0
      %2057 = vmatpush.xpose.msra.mxu0 %v2041
      %2058 = vmatpush.xpose.msra.mxu0 %v2039
      %2059 = vmatmul.f32.gmra.mxu0 %v2035
      %v2060 = vpop.f32.mrf.mxu0
      %v2061 = vadd.f32 0.0, %v2060
      %2062 = vmatmul.f32.gmra.mxu0 %v2037
      %v2063 = vpop.f32.mrf.mxu0
      %v2064 = vadd.f32 0.0, %v2063
      %2065 = vdwg.mxu0
      %2066 = vrot.lane.b32.xlu0 %v395, 120
      %v2067 = vpop.permute.xlu0 %2066
      %2068 = vrot.lane.b32.xlu0 %v398, 120
      %v2069 = vpop.permute.xlu0 %2068
      %2070 = vrot.lane.b32.xlu0 %v395, 88
      %v2071 = vpop.permute.xlu0 %2070
      %2072 = vrot.lane.b32.xlu0 %v398, 88
      %v2073 = vpop.permute.xlu0 %2072
      %v2074 = vsel %vm488, %v2067, 0
      %v2076 = vsel %vm488, %v2069, 0
      %v2078 = vsel %vm488, %v2071, 0
      %v2080 = vsel %vm488, %v2073, 0
      %2082 = vmatpush.xpose.msra.mxu0 0.0
      %2083 = vmatpush.xpose.msra.mxu0 0.0
      %2084 = vmatpush.xpose.msra.mxu0 0.0
      %2085 = vmatpush.xpose.msra.mxu0 0.0
      %2086 = vmatpush.xpose.msra.mxu0 0.0
      %2087 = vmatpush.xpose.msra.mxu0 0.0
      %2088 = vmatpush.xpose.msra.mxu0 0.0
      %2089 = vmatpush.xpose.msra.mxu0 0.0
      %2090 = vmatpush.xpose.msra.mxu0 0.0
      %2091 = vmatpush.xpose.msra.mxu0 0.0
      %2092 = vmatpush.xpose.msra.mxu0 0.0
      %2093 = vmatpush.xpose.msra.mxu0 0.0
      %2094 = vmatpush.xpose.msra.mxu0 0.0
      %2095 = vmatpush.xpose.msra.mxu0 0.0
      %2096 = vmatpush.xpose.msra.mxu0 %v2080
      %2097 = vmatpush.xpose.msra.mxu0 %v2078
      %2098 = vmatmul.f32.gmra.mxu0 %v2074
      %v2099 = vpop.f32.mrf.mxu0
      %v2100 = vadd.f32 0.0, %v2099
      %2101 = vmatmul.f32.gmra.mxu0 %v2076
      %v2102 = vpop.f32.mrf.mxu0
      %v2103 = vadd.f32 0.0, %v2102
      %2104 = vdwg.mxu0
      %2105 = vrot.lane.b32.xlu0 %v401, 120
      %v2106 = vpop.permute.xlu0 %2105
      %2107 = vrot.lane.b32.xlu0 %v404, 120
      %v2108 = vpop.permute.xlu0 %2107
      %2109 = vrot.lane.b32.xlu0 %v401, 88
      %v2110 = vpop.permute.xlu0 %2109
      %2111 = vrot.lane.b32.xlu0 %v404, 88
      %v2112 = vpop.permute.xlu0 %2111
      %v2113 = vsel %vm488, %v2106, 0
      %v2115 = vsel %vm488, %v2108, 0
      %v2117 = vsel %vm488, %v2110, 0
      %v2119 = vsel %vm488, %v2112, 0
      %2121 = vmatpush.xpose.msra.mxu0 0.0
      %2122 = vmatpush.xpose.msra.mxu0 0.0
      %2123 = vmatpush.xpose.msra.mxu0 0.0
      %2124 = vmatpush.xpose.msra.mxu0 0.0
      %2125 = vmatpush.xpose.msra.mxu0 0.0
      %2126 = vmatpush.xpose.msra.mxu0 0.0
      %2127 = vmatpush.xpose.msra.mxu0 0.0
      %2128 = vmatpush.xpose.msra.mxu0 0.0
      %2129 = vmatpush.xpose.msra.mxu0 0.0
      %2130 = vmatpush.xpose.msra.mxu0 0.0
      %2131 = vmatpush.xpose.msra.mxu0 0.0
      %2132 = vmatpush.xpose.msra.mxu0 0.0
      %2133 = vmatpush.xpose.msra.mxu0 0.0
      %2134 = vmatpush.xpose.msra.mxu0 0.0
      %2135 = vmatpush.xpose.msra.mxu0 %v2119
      %2136 = vmatpush.xpose.msra.mxu0 %v2117
      %2137 = vmatmul.f32.gmra.mxu0 %v2113
      %v2138 = vpop.f32.mrf.mxu0
      %v2139 = vadd.f32 0.0, %v2138
      %2140 = vmatmul.f32.gmra.mxu0 %v2115
      %v2141 = vpop.f32.mrf.mxu0
      %v2142 = vadd.f32 0.0, %v2141
      %2143 = vdwg.mxu0
      %2144 = vrot.lane.b32.xlu0 %v407, 120
      %v2145 = vpop.permute.xlu0 %2144
      %2146 = vrot.lane.b32.xlu0 %v410, 120
      %v2147 = vpop.permute.xlu0 %2146
      %2148 = vrot.lane.b32.xlu0 %v407, 88
      %v2149 = vpop.permute.xlu0 %2148
      %2150 = vrot.lane.b32.xlu0 %v410, 88
      %v2151 = vpop.permute.xlu0 %2150
      %v2152 = vsel %vm488, %v2145, 0
      %v2154 = vsel %vm488, %v2147, 0
      %v2156 = vsel %vm488, %v2149, 0
      %v2158 = vsel %vm488, %v2151, 0
      %2160 = vmatpush.xpose.msra.mxu0 0.0
      %2161 = vmatpush.xpose.msra.mxu0 0.0
      %2162 = vmatpush.xpose.msra.mxu0 0.0
      %2163 = vmatpush.xpose.msra.mxu0 0.0
      %2164 = vmatpush.xpose.msra.mxu0 0.0
      %2165 = vmatpush.xpose.msra.mxu0 0.0
      %2166 = vmatpush.xpose.msra.mxu0 0.0
      %2167 = vmatpush.xpose.msra.mxu0 0.0
      %2168 = vmatpush.xpose.msra.mxu0 0.0
      %2169 = vmatpush.xpose.msra.mxu0 0.0
      %2170 = vmatpush.xpose.msra.mxu0 0.0
      %2171 = vmatpush.xpose.msra.mxu0 0.0
      %2172 = vmatpush.xpose.msra.mxu0 0.0
      %2173 = vmatpush.xpose.msra.mxu0 0.0
      %2174 = vmatpush.xpose.msra.mxu0 %v2158
      %2175 = vmatpush.xpose.msra.mxu0 %v2156
      %2176 = vmatmul.f32.gmra.mxu0 %v2152
      %v2177 = vpop.f32.mrf.mxu0
      %v2178 = vadd.f32 0.0, %v2177
      %2179 = vmatmul.f32.gmra.mxu0 %v2154
      %v2180 = vpop.f32.mrf.mxu0
      %v2181 = vadd.f32 0.0, %v2180
      %2182 = vdwg.mxu0
      %2183 = vrot.lane.b32.xlu0 %v413, 120
      %v2184 = vpop.permute.xlu0 %2183
      %2185 = vrot.lane.b32.xlu0 %v416, 120
      %v2186 = vpop.permute.xlu0 %2185
      %2187 = vrot.lane.b32.xlu0 %v413, 88
      %v2188 = vpop.permute.xlu0 %2187
      %2189 = vrot.lane.b32.xlu0 %v416, 88
      %v2190 = vpop.permute.xlu0 %2189
      %v2191 = vsel %vm488, %v2184, 0
      %v2193 = vsel %vm488, %v2186, 0
      %v2195 = vsel %vm488, %v2188, 0
      %v2197 = vsel %vm488, %v2190, 0
      %2199 = vmatpush.xpose.msra.mxu0 0.0
      %2200 = vmatpush.xpose.msra.mxu0 0.0
      %2201 = vmatpush.xpose.msra.mxu0 0.0
      %2202 = vmatpush.xpose.msra.mxu0 0.0
      %2203 = vmatpush.xpose.msra.mxu0 0.0
      %2204 = vmatpush.xpose.msra.mxu0 0.0
      %2205 = vmatpush.xpose.msra.mxu0 0.0
      %2206 = vmatpush.xpose.msra.mxu0 0.0
      %2207 = vmatpush.xpose.msra.mxu0 0.0
      %2208 = vmatpush.xpose.msra.mxu0 0.0
      %2209 = vmatpush.xpose.msra.mxu0 0.0
      %2210 = vmatpush.xpose.msra.mxu0 0.0
      %2211 = vmatpush.xpose.msra.mxu0 0.0
      %2212 = vmatpush.xpose.msra.mxu0 0.0
      %2213 = vmatpush.xpose.msra.mxu0 %v2197
      %2214 = vmatpush.xpose.msra.mxu0 %v2195
      %2215 = vmatmul.f32.gmra.mxu0 %v2191
      %v2216 = vpop.f32.mrf.mxu0
      %v2217 = vadd.f32 0.0, %v2216
      %2218 = vmatmul.f32.gmra.mxu0 %v2193
      %v2219 = vpop.f32.mrf.mxu0
      %v2220 = vadd.f32 0.0, %v2219
      %2221 = vdwg.mxu0
      %2222 = vrot.lane.b32.xlu0 %v419, 120
      %v2223 = vpop.permute.xlu0 %2222
      %2224 = vrot.lane.b32.xlu0 %v422, 120
      %v2225 = vpop.permute.xlu0 %2224
      %2226 = vrot.lane.b32.xlu0 %v419, 88
      %v2227 = vpop.permute.xlu0 %2226
      %2228 = vrot.lane.b32.xlu0 %v422, 88
      %v2229 = vpop.permute.xlu0 %2228
      %v2230 = vsel %vm488, %v2223, 0
      %v2232 = vsel %vm488, %v2225, 0
      %v2234 = vsel %vm488, %v2227, 0
      %v2236 = vsel %vm488, %v2229, 0
      %2238 = vmatpush.xpose.msra.mxu0 0.0
      %2239 = vmatpush.xpose.msra.mxu0 0.0
      %2240 = vmatpush.xpose.msra.mxu0 0.0
      %2241 = vmatpush.xpose.msra.mxu0 0.0
      %2242 = vmatpush.xpose.msra.mxu0 0.0
      %2243 = vmatpush.xpose.msra.mxu0 0.0
      %2244 = vmatpush.xpose.msra.mxu0 0.0
      %2245 = vmatpush.xpose.msra.mxu0 0.0
      %2246 = vmatpush.xpose.msra.mxu0 0.0
      %2247 = vmatpush.xpose.msra.mxu0 0.0
      %2248 = vmatpush.xpose.msra.mxu0 0.0
      %2249 = vmatpush.xpose.msra.mxu0 0.0
      %2250 = vmatpush.xpose.msra.mxu0 0.0
      %2251 = vmatpush.xpose.msra.mxu0 0.0
      %2252 = vmatpush.xpose.msra.mxu0 %v2236
      %2253 = vmatpush.xpose.msra.mxu0 %v2234
      %2254 = vmatmul.f32.gmra.mxu0 %v2230
      %v2255 = vpop.f32.mrf.mxu0
      %v2256 = vadd.f32 0.0, %v2255
      %2257 = vmatmul.f32.gmra.mxu0 %v2232
      %v2258 = vpop.f32.mrf.mxu0
      %v2259 = vadd.f32 0.0, %v2258
      %2260 = vdwg.mxu0
      %2261 = vrot.lane.b32.xlu0 %v425, 120
      %v2262 = vpop.permute.xlu0 %2261
      %2263 = vrot.lane.b32.xlu0 %v428, 120
      %v2264 = vpop.permute.xlu0 %2263
      %2265 = vrot.lane.b32.xlu0 %v425, 88
      %v2266 = vpop.permute.xlu0 %2265
      %2267 = vrot.lane.b32.xlu0 %v428, 88
      %v2268 = vpop.permute.xlu0 %2267
      %v2269 = vsel %vm488, %v2262, 0
      %v2271 = vsel %vm488, %v2264, 0
      %v2273 = vsel %vm488, %v2266, 0
      %v2275 = vsel %vm488, %v2268, 0
      %2277 = vmatpush.xpose.msra.mxu0 0.0
      %2278 = vmatpush.xpose.msra.mxu0 0.0
      %2279 = vmatpush.xpose.msra.mxu0 0.0
      %2280 = vmatpush.xpose.msra.mxu0 0.0
      %2281 = vmatpush.xpose.msra.mxu0 0.0
      %2282 = vmatpush.xpose.msra.mxu0 0.0
      %2283 = vmatpush.xpose.msra.mxu0 0.0
      %2284 = vmatpush.xpose.msra.mxu0 0.0
      %2285 = vmatpush.xpose.msra.mxu0 0.0
      %2286 = vmatpush.xpose.msra.mxu0 0.0
      %2287 = vmatpush.xpose.msra.mxu0 0.0
      %2288 = vmatpush.xpose.msra.mxu0 0.0
      %2289 = vmatpush.xpose.msra.mxu0 0.0
      %2290 = vmatpush.xpose.msra.mxu0 0.0
      %2291 = vmatpush.xpose.msra.mxu0 %v2275
      %2292 = vmatpush.xpose.msra.mxu0 %v2273
      %2293 = vmatmul.f32.gmra.mxu0 %v2269
      %v2294 = vpop.f32.mrf.mxu0
      %v2295 = vadd.f32 0.0, %v2294
      %2296 = vmatmul.f32.gmra.mxu0 %v2271
      %v2297 = vpop.f32.mrf.mxu0
      %v2298 = vadd.f32 0.0, %v2297
      %2299 = vdwg.mxu0
      %2300 = vrot.lane.b32.xlu0 %v431, 120
      %v2301 = vpop.permute.xlu0 %2300
      %2302 = vrot.lane.b32.xlu0 %v434, 120
      %v2303 = vpop.permute.xlu0 %2302
      %2304 = vrot.lane.b32.xlu0 %v431, 88
      %v2305 = vpop.permute.xlu0 %2304
      %2306 = vrot.lane.b32.xlu0 %v434, 88
      %v2307 = vpop.permute.xlu0 %2306
      %v2308 = vsel %vm488, %v2301, 0
      %v2310 = vsel %vm488, %v2303, 0
      %v2312 = vsel %vm488, %v2305, 0
      %v2314 = vsel %vm488, %v2307, 0
      %2316 = vmatpush.xpose.msra.mxu0 0.0
      %2317 = vmatpush.xpose.msra.mxu0 0.0
      %2318 = vmatpush.xpose.msra.mxu0 0.0
      %2319 = vmatpush.xpose.msra.mxu0 0.0
      %2320 = vmatpush.xpose.msra.mxu0 0.0
      %2321 = vmatpush.xpose.msra.mxu0 0.0
      %2322 = vmatpush.xpose.msra.mxu0 0.0
      %2323 = vmatpush.xpose.msra.mxu0 0.0
      %2324 = vmatpush.xpose.msra.mxu0 0.0
      %2325 = vmatpush.xpose.msra.mxu0 0.0
      %2326 = vmatpush.xpose.msra.mxu0 0.0
      %2327 = vmatpush.xpose.msra.mxu0 0.0
      %2328 = vmatpush.xpose.msra.mxu0 0.0
      %2329 = vmatpush.xpose.msra.mxu0 0.0
      %2330 = vmatpush.xpose.msra.mxu0 %v2314
      %2331 = vmatpush.xpose.msra.mxu0 %v2312
      %2332 = vmatmul.f32.gmra.mxu0 %v2308
      %v2333 = vpop.f32.mrf.mxu0
      %v2334 = vadd.f32 0.0, %v2333
      %2335 = vmatmul.f32.gmra.mxu0 %v2310
      %v2336 = vpop.f32.mrf.mxu0
      %v2337 = vadd.f32 0.0, %v2336
      %2338 = vdwg.mxu0
      %2339 = vrot.lane.b32.xlu0 %v437, 120
      %v2340 = vpop.permute.xlu0 %2339
      %2341 = vrot.lane.b32.xlu0 %v440, 120
      %v2342 = vpop.permute.xlu0 %2341
      %2343 = vrot.lane.b32.xlu0 %v437, 88
      %v2344 = vpop.permute.xlu0 %2343
      %2345 = vrot.lane.b32.xlu0 %v440, 88
      %v2346 = vpop.permute.xlu0 %2345
      %v2347 = vsel %vm488, %v2340, 0
      %v2349 = vsel %vm488, %v2342, 0
      %v2351 = vsel %vm488, %v2344, 0
      %v2353 = vsel %vm488, %v2346, 0
      %2355 = vmatpush.xpose.msra.mxu0 0.0
      %2356 = vmatpush.xpose.msra.mxu0 0.0
      %2357 = vmatpush.xpose.msra.mxu0 0.0
      %2358 = vmatpush.xpose.msra.mxu0 0.0
      %2359 = vmatpush.xpose.msra.mxu0 0.0
      %2360 = vmatpush.xpose.msra.mxu0 0.0
      %2361 = vmatpush.xpose.msra.mxu0 0.0
      %2362 = vmatpush.xpose.msra.mxu0 0.0
      %2363 = vmatpush.xpose.msra.mxu0 0.0
      %2364 = vmatpush.xpose.msra.mxu0 0.0
      %2365 = vmatpush.xpose.msra.mxu0 0.0
      %2366 = vmatpush.xpose.msra.mxu0 0.0
      %2367 = vmatpush.xpose.msra.mxu0 0.0
      %2368 = vmatpush.xpose.msra.mxu0 0.0
      %2369 = vmatpush.xpose.msra.mxu0 %v2353
      %2370 = vmatpush.xpose.msra.mxu0 %v2351
      %2371 = vmatmul.f32.gmra.mxu0 %v2347
      %v2372 = vpop.f32.mrf.mxu0
      %v2373 = vadd.f32 0.0, %v2372
      %2374 = vmatmul.f32.gmra.mxu0 %v2349
      %v2375 = vpop.f32.mrf.mxu0
      %v2376 = vadd.f32 0.0, %v2375
      %2377 = vdwg.mxu0
      %2378 = vrot.lane.b32.xlu0 %v443, 120
      %v2379 = vpop.permute.xlu0 %2378
      %2380 = vrot.lane.b32.xlu0 %v446, 120
      %v2381 = vpop.permute.xlu0 %2380
      %2382 = vrot.lane.b32.xlu0 %v443, 88
      %v2383 = vpop.permute.xlu0 %2382
      %2384 = vrot.lane.b32.xlu0 %v446, 88
      %v2385 = vpop.permute.xlu0 %2384
      %v2386 = vsel %vm488, %v2379, 0
      %v2388 = vsel %vm488, %v2381, 0
      %v2390 = vsel %vm488, %v2383, 0
      %v2392 = vsel %vm488, %v2385, 0
      %2394 = vmatpush.xpose.msra.mxu0 0.0
      %2395 = vmatpush.xpose.msra.mxu0 0.0
      %2396 = vmatpush.xpose.msra.mxu0 0.0
      %2397 = vmatpush.xpose.msra.mxu0 0.0
      %2398 = vmatpush.xpose.msra.mxu0 0.0
      %2399 = vmatpush.xpose.msra.mxu0 0.0
      %2400 = vmatpush.xpose.msra.mxu0 0.0
      %2401 = vmatpush.xpose.msra.mxu0 0.0
      %2402 = vmatpush.xpose.msra.mxu0 0.0
      %2403 = vmatpush.xpose.msra.mxu0 0.0
      %2404 = vmatpush.xpose.msra.mxu0 0.0
      %2405 = vmatpush.xpose.msra.mxu0 0.0
      %2406 = vmatpush.xpose.msra.mxu0 0.0
      %2407 = vmatpush.xpose.msra.mxu0 0.0
      %2408 = vmatpush.xpose.msra.mxu0 %v2392
      %2409 = vmatpush.xpose.msra.mxu0 %v2390
      %2410 = vmatmul.f32.gmra.mxu0 %v2386
      %v2411 = vpop.f32.mrf.mxu0
      %v2412 = vadd.f32 0.0, %v2411
      %2413 = vmatmul.f32.gmra.mxu0 %v2388
      %v2414 = vpop.f32.mrf.mxu0
      %v2415 = vadd.f32 0.0, %v2414
      %2416 = vdwg.mxu0
      %2417 = vrot.lane.b32.xlu0 %v449, 120
      %v2418 = vpop.permute.xlu0 %2417
      %2419 = vrot.lane.b32.xlu0 %v452, 120
      %v2420 = vpop.permute.xlu0 %2419
      %2421 = vrot.lane.b32.xlu0 %v449, 88
      %v2422 = vpop.permute.xlu0 %2421
      %2423 = vrot.lane.b32.xlu0 %v452, 88
      %v2424 = vpop.permute.xlu0 %2423
      %v2425 = vsel %vm488, %v2418, 0
      %v2427 = vsel %vm488, %v2420, 0
      %v2429 = vsel %vm488, %v2422, 0
      %v2431 = vsel %vm488, %v2424, 0
      %2433 = vmatpush.xpose.msra.mxu0 0.0
      %2434 = vmatpush.xpose.msra.mxu0 0.0
      %2435 = vmatpush.xpose.msra.mxu0 0.0
      %2436 = vmatpush.xpose.msra.mxu0 0.0
      %2437 = vmatpush.xpose.msra.mxu0 0.0
      %2438 = vmatpush.xpose.msra.mxu0 0.0
      %2439 = vmatpush.xpose.msra.mxu0 0.0
      %2440 = vmatpush.xpose.msra.mxu0 0.0
      %2441 = vmatpush.xpose.msra.mxu0 0.0
      %2442 = vmatpush.xpose.msra.mxu0 0.0
      %2443 = vmatpush.xpose.msra.mxu0 0.0
      %2444 = vmatpush.xpose.msra.mxu0 0.0
      %2445 = vmatpush.xpose.msra.mxu0 0.0
      %2446 = vmatpush.xpose.msra.mxu0 0.0
      %2447 = vmatpush.xpose.msra.mxu0 %v2431
      %2448 = vmatpush.xpose.msra.mxu0 %v2429
      %2449 = vmatmul.f32.gmra.mxu0 %v2425
      %v2450 = vpop.f32.mrf.mxu0
      %v2451 = vadd.f32 0.0, %v2450
      %2452 = vmatmul.f32.gmra.mxu0 %v2427
      %v2453 = vpop.f32.mrf.mxu0
      %v2454 = vadd.f32 0.0, %v2453
      %2455 = vdwg.mxu0
      %2456 = vrot.lane.b32.xlu0 %v455, 120
      %v2457 = vpop.permute.xlu0 %2456
      %2458 = vrot.lane.b32.xlu0 %v458, 120
      %v2459 = vpop.permute.xlu0 %2458
      %2460 = vrot.lane.b32.xlu0 %v455, 88
      %v2461 = vpop.permute.xlu0 %2460
      %2462 = vrot.lane.b32.xlu0 %v458, 88
      %v2463 = vpop.permute.xlu0 %2462
      %v2464 = vsel %vm488, %v2457, 0
      %v2466 = vsel %vm488, %v2459, 0
      %v2468 = vsel %vm488, %v2461, 0
      %v2470 = vsel %vm488, %v2463, 0
      %2472 = vmatpush.xpose.msra.mxu0 0.0
      %2473 = vmatpush.xpose.msra.mxu0 0.0
      %2474 = vmatpush.xpose.msra.mxu0 0.0
      %2475 = vmatpush.xpose.msra.mxu0 0.0
      %2476 = vmatpush.xpose.msra.mxu0 0.0
      %2477 = vmatpush.xpose.msra.mxu0 0.0
      %2478 = vmatpush.xpose.msra.mxu0 0.0
      %2479 = vmatpush.xpose.msra.mxu0 0.0
      %2480 = vmatpush.xpose.msra.mxu0 0.0
      %2481 = vmatpush.xpose.msra.mxu0 0.0
      %2482 = vmatpush.xpose.msra.mxu0 0.0
      %2483 = vmatpush.xpose.msra.mxu0 0.0
      %2484 = vmatpush.xpose.msra.mxu0 0.0
      %2485 = vmatpush.xpose.msra.mxu0 0.0
      %2486 = vmatpush.xpose.msra.mxu0 %v2470
      %2487 = vmatpush.xpose.msra.mxu0 %v2468
      %2488 = vmatmul.f32.gmra.mxu0 %v2464
      %v2489 = vpop.f32.mrf.mxu0
      %v2490 = vadd.f32 0.0, %v2489
      %2491 = vmatmul.f32.gmra.mxu0 %v2466
      %v2492 = vpop.f32.mrf.mxu0
      %v2493 = vadd.f32 0.0, %v2492
      %2494 = vdwg.mxu0
      %2495 = vrot.lane.b32.xlu0 %v461, 120
      %v2496 = vpop.permute.xlu0 %2495
      %2497 = vrot.lane.b32.xlu0 %v464, 120
      %v2498 = vpop.permute.xlu0 %2497
      %2499 = vrot.lane.b32.xlu0 %v461, 88
      %v2500 = vpop.permute.xlu0 %2499
      %2501 = vrot.lane.b32.xlu0 %v464, 88
      %v2502 = vpop.permute.xlu0 %2501
      %v2503 = vsel %vm488, %v2496, 0
      %v2505 = vsel %vm488, %v2498, 0
      %v2507 = vsel %vm488, %v2500, 0
      %v2509 = vsel %vm488, %v2502, 0
      %2511 = vmatpush.xpose.msra.mxu0 0.0
      %2512 = vmatpush.xpose.msra.mxu0 0.0
      %2513 = vmatpush.xpose.msra.mxu0 0.0
      %2514 = vmatpush.xpose.msra.mxu0 0.0
      %2515 = vmatpush.xpose.msra.mxu0 0.0
      %2516 = vmatpush.xpose.msra.mxu0 0.0
      %2517 = vmatpush.xpose.msra.mxu0 0.0
      %2518 = vmatpush.xpose.msra.mxu0 0.0
      %2519 = vmatpush.xpose.msra.mxu0 0.0
      %2520 = vmatpush.xpose.msra.mxu0 0.0
      %2521 = vmatpush.xpose.msra.mxu0 0.0
      %2522 = vmatpush.xpose.msra.mxu0 0.0
      %2523 = vmatpush.xpose.msra.mxu0 0.0
      %2524 = vmatpush.xpose.msra.mxu0 0.0
      %2525 = vmatpush.xpose.msra.mxu0 %v2509
      %2526 = vmatpush.xpose.msra.mxu0 %v2507
      %2527 = vmatmul.f32.gmra.mxu0 %v2503
      %v2528 = vpop.f32.mrf.mxu0
      %v2529 = vadd.f32 0.0, %v2528
      %2530 = vmatmul.f32.gmra.mxu0 %v2505
      %v2531 = vpop.f32.mrf.mxu0
      %v2532 = vadd.f32 0.0, %v2531
      %2533 = vdwg.mxu0
      %2534 = vrot.lane.b32.xlu0 %v467, 120
      %v2535 = vpop.permute.xlu0 %2534
      %2536 = vrot.lane.b32.xlu0 %v470, 120
      %v2537 = vpop.permute.xlu0 %2536
      %2538 = vrot.lane.b32.xlu0 %v467, 88
      %v2539 = vpop.permute.xlu0 %2538
      %2540 = vrot.lane.b32.xlu0 %v470, 88
      %v2541 = vpop.permute.xlu0 %2540
      %v2542 = vsel %vm488, %v2535, 0
      %v2544 = vsel %vm488, %v2537, 0
      %v2546 = vsel %vm488, %v2539, 0
      %v2548 = vsel %vm488, %v2541, 0
      %2550 = vmatpush.xpose.msra.mxu0 0.0
      %2551 = vmatpush.xpose.msra.mxu0 0.0
      %2552 = vmatpush.xpose.msra.mxu0 0.0
      %2553 = vmatpush.xpose.msra.mxu0 0.0
      %2554 = vmatpush.xpose.msra.mxu0 0.0
      %2555 = vmatpush.xpose.msra.mxu0 0.0
      %2556 = vmatpush.xpose.msra.mxu0 0.0
      %2557 = vmatpush.xpose.msra.mxu0 0.0
      %2558 = vmatpush.xpose.msra.mxu0 0.0
      %2559 = vmatpush.xpose.msra.mxu0 0.0
      %2560 = vmatpush.xpose.msra.mxu0 0.0
      %2561 = vmatpush.xpose.msra.mxu0 0.0
      %2562 = vmatpush.xpose.msra.mxu0 0.0
      %2563 = vmatpush.xpose.msra.mxu0 0.0
      %2564 = vmatpush.xpose.msra.mxu0 %v2548
      %2565 = vmatpush.xpose.msra.mxu0 %v2546
      %2566 = vmatmul.f32.gmra.mxu0 %v2542
      %v2567 = vpop.f32.mrf.mxu0
      %v2568 = vadd.f32 0.0, %v2567
      %2569 = vmatmul.f32.gmra.mxu0 %v2544
      %v2570 = vpop.f32.mrf.mxu0
      %v2571 = vadd.f32 0.0, %v2570
      %2572 = vdwg.mxu0
      %2573 = vrot.lane.b32.xlu0 %v473, 120
      %v2574 = vpop.permute.xlu0 %2573
      %2575 = vrot.lane.b32.xlu0 %v476, 120
      %v2576 = vpop.permute.xlu0 %2575
      %2577 = vrot.lane.b32.xlu0 %v473, 88
      %v2578 = vpop.permute.xlu0 %2577
      %2579 = vrot.lane.b32.xlu0 %v476, 88
      %v2580 = vpop.permute.xlu0 %2579
      %v2581 = vsel %vm488, %v2574, 0
      %v2583 = vsel %vm488, %v2576, 0
      %v2585 = vsel %vm488, %v2578, 0
      %v2587 = vsel %vm488, %v2580, 0
      %2589 = vmatpush.xpose.msra.mxu0 0.0
      %2590 = vmatpush.xpose.msra.mxu0 0.0
      %2591 = vmatpush.xpose.msra.mxu0 0.0
      %2592 = vmatpush.xpose.msra.mxu0 0.0
      %2593 = vmatpush.xpose.msra.mxu0 0.0
      %2594 = vmatpush.xpose.msra.mxu0 0.0
      %2595 = vmatpush.xpose.msra.mxu0 0.0
      %2596 = vmatpush.xpose.msra.mxu0 0.0
      %2597 = vmatpush.xpose.msra.mxu0 0.0
      %2598 = vmatpush.xpose.msra.mxu0 0.0
      %2599 = vmatpush.xpose.msra.mxu0 0.0
      %2600 = vmatpush.xpose.msra.mxu0 0.0
      %2601 = vmatpush.xpose.msra.mxu0 0.0
      %2602 = vmatpush.xpose.msra.mxu0 0.0
      %2603 = vmatpush.xpose.msra.mxu0 %v2587
      %2604 = vmatpush.xpose.msra.mxu0 %v2585
      %2605 = vmatmul.f32.gmra.mxu0 %v2581
      %v2606 = vpop.f32.mrf.mxu0
      %v2607 = vadd.f32 0.0, %v2606
      %2608 = vmatmul.f32.gmra.mxu0 %v2583
      %v2609 = vpop.f32.mrf.mxu0
      %v2610 = vadd.f32 0.0, %v2609
      %2611 = vdwg.mxu0
      %v2612 = vsel %vm1075, %v2022, -inf
      %2613 = vmax.xlane.f32.xlu0 %v2612
      %v2614 = vpop.xlane.xlu0 %2613
      %v2615 = vsel %vm1075, %v2025, -inf
      %2616 = vmax.xlane.f32.xlu0 %v2615
      %v2617 = vpop.xlane.xlu0 %2616
      %v2618 = vsel %vm1075, %v2061, -inf
      %2619 = vmax.xlane.f32.xlu0 %v2618
      %v2620 = vpop.xlane.xlu0 %2619
      %v2621 = vsel %vm1075, %v2064, -inf
      %2622 = vmax.xlane.f32.xlu0 %v2621
      %v2623 = vpop.xlane.xlu0 %2622
      %v2624 = vsel %vm1075, %v2100, -inf
      %2625 = vmax.xlane.f32.xlu0 %v2624
      %v2626 = vpop.xlane.xlu0 %2625
      %v2627 = vsel %vm1075, %v2103, -inf
      %2628 = vmax.xlane.f32.xlu0 %v2627
      %v2629 = vpop.xlane.xlu0 %2628
      %v2630 = vsel %vm1075, %v2139, -inf
      %2631 = vmax.xlane.f32.xlu0 %v2630
      %v2632 = vpop.xlane.xlu0 %2631
      %v2633 = vsel %vm1075, %v2142, -inf
      %2634 = vmax.xlane.f32.xlu0 %v2633
      %v2635 = vpop.xlane.xlu0 %2634
      %v2636 = vsel %vm1075, %v2178, -inf
      %2637 = vmax.xlane.f32.xlu0 %v2636
      %v2638 = vpop.xlane.xlu0 %2637
      %v2639 = vsel %vm1075, %v2181, -inf
      %2640 = vmax.xlane.f32.xlu0 %v2639
      %v2641 = vpop.xlane.xlu0 %2640
      %v2642 = vsel %vm1075, %v2217, -inf
      %2643 = vmax.xlane.f32.xlu0 %v2642
      %v2644 = vpop.xlane.xlu0 %2643
      %v2645 = vsel %vm1075, %v2220, -inf
      %2646 = vmax.xlane.f32.xlu0 %v2645
      %v2647 = vpop.xlane.xlu0 %2646
      %v2648 = vsel %vm1075, %v2256, -inf
      %2649 = vmax.xlane.f32.xlu0 %v2648
      %v2650 = vpop.xlane.xlu0 %2649
      %v2651 = vsel %vm1075, %v2259, -inf
      %2652 = vmax.xlane.f32.xlu0 %v2651
      %v2653 = vpop.xlane.xlu0 %2652
      %v2654 = vsel %vm1075, %v2295, -inf
      %2655 = vmax.xlane.f32.xlu0 %v2654
      %v2656 = vpop.xlane.xlu0 %2655
      %v2657 = vsel %vm1075, %v2298, -inf
      %2658 = vmax.xlane.f32.xlu0 %v2657
      %v2659 = vpop.xlane.xlu0 %2658
      %v2660 = vsel %vm1075, %v2334, -inf
      %2661 = vmax.xlane.f32.xlu0 %v2660
      %v2662 = vpop.xlane.xlu0 %2661
      %v2663 = vsel %vm1075, %v2337, -inf
      %2664 = vmax.xlane.f32.xlu0 %v2663
      %v2665 = vpop.xlane.xlu0 %2664
      %v2666 = vsel %vm1075, %v2373, -inf
      %2667 = vmax.xlane.f32.xlu0 %v2666
      %v2668 = vpop.xlane.xlu0 %2667
      %v2669 = vsel %vm1075, %v2376, -inf
      %2670 = vmax.xlane.f32.xlu0 %v2669
      %v2671 = vpop.xlane.xlu0 %2670
      %v2672 = vsel %vm1075, %v2412, -inf
      %2673 = vmax.xlane.f32.xlu0 %v2672
      %v2674 = vpop.xlane.xlu0 %2673
      %v2675 = vsel %vm1075, %v2415, -inf
      %2676 = vmax.xlane.f32.xlu0 %v2675
      %v2677 = vpop.xlane.xlu0 %2676
      %v2678 = vsel %vm1075, %v2451, -inf
      %2679 = vmax.xlane.f32.xlu0 %v2678
      %v2680 = vpop.xlane.xlu0 %2679
      %v2681 = vsel %vm1075, %v2454, -inf
      %2682 = vmax.xlane.f32.xlu0 %v2681
      %v2683 = vpop.xlane.xlu0 %2682
      %v2684 = vsel %vm1075, %v2490, -inf
      %2685 = vmax.xlane.f32.xlu0 %v2684
      %v2686 = vpop.xlane.xlu0 %2685
      %v2687 = vsel %vm1075, %v2493, -inf
      %2688 = vmax.xlane.f32.xlu0 %v2687
      %v2689 = vpop.xlane.xlu0 %2688
      %v2690 = vsel %vm1075, %v2529, -inf
      %2691 = vmax.xlane.f32.xlu0 %v2690
      %v2692 = vpop.xlane.xlu0 %2691
      %v2693 = vsel %vm1075, %v2532, -inf
      %2694 = vmax.xlane.f32.xlu0 %v2693
      %v2695 = vpop.xlane.xlu0 %2694
      %v2696 = vsel %vm1075, %v2568, -inf
      %2697 = vmax.xlane.f32.xlu0 %v2696
      %v2698 = vpop.xlane.xlu0 %2697
      %v2699 = vsel %vm1075, %v2571, -inf
      %2700 = vmax.xlane.f32.xlu0 %v2699
      %v2701 = vpop.xlane.xlu0 %2700
      %v2702 = vsel %vm1075, %v2607, -inf
      %2703 = vmax.xlane.f32.xlu0 %v2702
      %v2704 = vpop.xlane.xlu0 %2703
      %v2705 = vsel %vm1075, %v2610, -inf
      %2706 = vmax.xlane.f32.xlu0 %v2705
      %v2707 = vpop.xlane.xlu0 %2706
      %v2708 = vsub.f32 %v2022, %v2614
      %v2709 = vsub.f32 %v2025, %v2617
      %v2710 = vsub.f32 %v2061, %v2620
      %v2711 = vsub.f32 %v2064, %v2623
      %v2712 = vsub.f32 %v2100, %v2626
      %v2713 = vsub.f32 %v2103, %v2629
      %v2714 = vsub.f32 %v2139, %v2632
      %v2715 = vsub.f32 %v2142, %v2635
      %v2716 = vsub.f32 %v2178, %v2638
      %v2717 = vsub.f32 %v2181, %v2641
      %v2718 = vsub.f32 %v2217, %v2644
      %v2719 = vsub.f32 %v2220, %v2647
      %v2720 = vsub.f32 %v2256, %v2650
      %v2721 = vsub.f32 %v2259, %v2653
      %v2722 = vsub.f32 %v2295, %v2656
      %v2723 = vsub.f32 %v2298, %v2659
      %v2724 = vsub.f32 %v2334, %v2662
      %v2725 = vsub.f32 %v2337, %v2665
      %v2726 = vsub.f32 %v2373, %v2668
      %v2727 = vsub.f32 %v2376, %v2671
      %v2728 = vsub.f32 %v2412, %v2674
      %v2729 = vsub.f32 %v2415, %v2677
      %v2730 = vsub.f32 %v2451, %v2680
      %v2731 = vsub.f32 %v2454, %v2683
      %v2732 = vsub.f32 %v2490, %v2686
      %v2733 = vsub.f32 %v2493, %v2689
      %v2734 = vsub.f32 %v2529, %v2692
      %v2735 = vsub.f32 %v2532, %v2695
      %v2736 = vsub.f32 %v2568, %v2698
      %v2737 = vsub.f32 %v2571, %v2701
      %v2738 = vsub.f32 %v2607, %v2704
      %v2739 = vsub.f32 %v2610, %v2707
      %v2740 = vmul.f32 %v2708, 1.442695
      %v2741 = vpow.pop %v2740
      %v2742 = vmul.f32 %v2709, 1.442695
      %v2743 = vpow.pop %v2742
      %v2744 = vmul.f32 %v2710, 1.442695
      %v2745 = vpow.pop %v2744
      %v2746 = vmul.f32 %v2711, 1.442695
      %v2747 = vpow.pop %v2746
      %v2748 = vmul.f32 %v2712, 1.442695
      %v2749 = vpow.pop %v2748
      %v2750 = vmul.f32 %v2713, 1.442695
      %v2751 = vpow.pop %v2750
      %v2752 = vmul.f32 %v2714, 1.442695
      %v2753 = vpow.pop %v2752
      %v2754 = vmul.f32 %v2715, 1.442695
      %v2755 = vpow.pop %v2754
      %v2756 = vmul.f32 %v2716, 1.442695
      %v2757 = vpow.pop %v2756
      %v2758 = vmul.f32 %v2717, 1.442695
      %v2759 = vpow.pop %v2758
      %v2760 = vmul.f32 %v2718, 1.442695
      %v2761 = vpow.pop %v2760
      %v2762 = vmul.f32 %v2719, 1.442695
      %v2763 = vpow.pop %v2762
      %v2764 = vmul.f32 %v2720, 1.442695
      %v2765 = vpow.pop %v2764
      %v2766 = vmul.f32 %v2721, 1.442695
      %v2767 = vpow.pop %v2766
      %v2768 = vmul.f32 %v2722, 1.442695
      %v2769 = vpow.pop %v2768
      %v2770 = vmul.f32 %v2723, 1.442695
      %v2771 = vpow.pop %v2770
      %v2772 = vmul.f32 %v2724, 1.442695
      %v2773 = vpow.pop %v2772
      %v2774 = vmul.f32 %v2725, 1.442695
      %v2775 = vpow.pop %v2774
      %v2776 = vmul.f32 %v2726, 1.442695
      %v2777 = vpow.pop %v2776
      %v2778 = vmul.f32 %v2727, 1.442695
      %v2779 = vpow.pop %v2778
      %v2780 = vmul.f32 %v2728, 1.442695
      %v2781 = vpow.pop %v2780
      %v2782 = vmul.f32 %v2729, 1.442695
      %v2783 = vpow.pop %v2782
      %v2784 = vmul.f32 %v2730, 1.442695
      %v2785 = vpow.pop %v2784
      %v2786 = vmul.f32 %v2731, 1.442695
      %v2787 = vpow.pop %v2786
      %v2788 = vmul.f32 %v2732, 1.442695
      %v2789 = vpow.pop %v2788
      %v2790 = vmul.f32 %v2733, 1.442695
      %v2791 = vpow.pop %v2790
      %v2792 = vmul.f32 %v2734, 1.442695
      %v2793 = vpow.pop %v2792
      %v2794 = vmul.f32 %v2735, 1.442695
      %v2795 = vpow.pop %v2794
      %v2796 = vmul.f32 %v2736, 1.442695
      %v2797 = vpow.pop %v2796
      %v2798 = vmul.f32 %v2737, 1.442695
      %v2799 = vpow.pop %v2798
      %v2800 = vmul.f32 %v2738, 1.442695
      %v2801 = vpow.pop %v2800
      %v2802 = vmul.f32 %v2739, 1.442695
      %v2803 = vpow.pop %v2802
      %v2804 = vsel %vm1075, %v2741, 0.0
      %2805 = vadd.xlane.f32.xlu0 %v2804
      %v2806 = vpop.xlane.xlu0 %2805
      %v2807 = vsel %vm1075, %v2743, 0.0
      %2808 = vadd.xlane.f32.xlu0 %v2807
      %v2809 = vpop.xlane.xlu0 %2808
      %v2810 = vsel %vm1075, %v2745, 0.0
      %2811 = vadd.xlane.f32.xlu0 %v2810
      %v2812 = vpop.xlane.xlu0 %2811
      %v2813 = vsel %vm1075, %v2747, 0.0
      %2814 = vadd.xlane.f32.xlu0 %v2813
      %v2815 = vpop.xlane.xlu0 %2814
      %v2816 = vsel %vm1075, %v2749, 0.0
      %2817 = vadd.xlane.f32.xlu0 %v2816
      %v2818 = vpop.xlane.xlu0 %2817
      %v2819 = vsel %vm1075, %v2751, 0.0
      %2820 = vadd.xlane.f32.xlu0 %v2819
      %v2821 = vpop.xlane.xlu0 %2820
      %v2822 = vsel %vm1075, %v2753, 0.0
      %2823 = vadd.xlane.f32.xlu0 %v2822
      %v2824 = vpop.xlane.xlu0 %2823
      %v2825 = vsel %vm1075, %v2755, 0.0
      %2826 = vadd.xlane.f32.xlu0 %v2825
      %v2827 = vpop.xlane.xlu0 %2826
      %v2828 = vsel %vm1075, %v2757, 0.0
      %2829 = vadd.xlane.f32.xlu0 %v2828
      %v2830 = vpop.xlane.xlu0 %2829
      %v2831 = vsel %vm1075, %v2759, 0.0
      %2832 = vadd.xlane.f32.xlu0 %v2831
      %v2833 = vpop.xlane.xlu0 %2832
      %v2834 = vsel %vm1075, %v2761, 0.0
      %2835 = vadd.xlane.f32.xlu0 %v2834
      %v2836 = vpop.xlane.xlu0 %2835
      %v2837 = vsel %vm1075, %v2763, 0.0
      %2838 = vadd.xlane.f32.xlu0 %v2837
      %v2839 = vpop.xlane.xlu0 %2838
      %v2840 = vsel %vm1075, %v2765, 0.0
      %2841 = vadd.xlane.f32.xlu0 %v2840
      %v2842 = vpop.xlane.xlu0 %2841
      %v2843 = vsel %vm1075, %v2767, 0.0
      %2844 = vadd.xlane.f32.xlu0 %v2843
      %v2845 = vpop.xlane.xlu0 %2844
      %v2846 = vsel %vm1075, %v2769, 0.0
      %2847 = vadd.xlane.f32.xlu0 %v2846
      %v2848 = vpop.xlane.xlu0 %2847
      %v2849 = vsel %vm1075, %v2771, 0.0
      %2850 = vadd.xlane.f32.xlu0 %v2849
      %v2851 = vpop.xlane.xlu0 %2850
      %v2852 = vsel %vm1075, %v2773, 0.0
      %2853 = vadd.xlane.f32.xlu0 %v2852
      %v2854 = vpop.xlane.xlu0 %2853
      %v2855 = vsel %vm1075, %v2775, 0.0
      %2856 = vadd.xlane.f32.xlu0 %v2855
      %v2857 = vpop.xlane.xlu0 %2856
      %v2858 = vsel %vm1075, %v2777, 0.0
      %2859 = vadd.xlane.f32.xlu0 %v2858
      %v2860 = vpop.xlane.xlu0 %2859
      %v2861 = vsel %vm1075, %v2779, 0.0
      %2862 = vadd.xlane.f32.xlu0 %v2861
      %v2863 = vpop.xlane.xlu0 %2862
      %v2864 = vsel %vm1075, %v2781, 0.0
      %2865 = vadd.xlane.f32.xlu0 %v2864
      %v2866 = vpop.xlane.xlu0 %2865
      %v2867 = vsel %vm1075, %v2783, 0.0
      %2868 = vadd.xlane.f32.xlu0 %v2867
      %v2869 = vpop.xlane.xlu0 %2868
      %v2870 = vsel %vm1075, %v2785, 0.0
      %2871 = vadd.xlane.f32.xlu0 %v2870
      %v2872 = vpop.xlane.xlu0 %2871
      %v2873 = vsel %vm1075, %v2787, 0.0
      %2874 = vadd.xlane.f32.xlu0 %v2873
      %v2875 = vpop.xlane.xlu0 %2874
      %v2876 = vsel %vm1075, %v2789, 0.0
      %2877 = vadd.xlane.f32.xlu0 %v2876
      %v2878 = vpop.xlane.xlu0 %2877
      %v2879 = vsel %vm1075, %v2791, 0.0
      %2880 = vadd.xlane.f32.xlu0 %v2879
      %v2881 = vpop.xlane.xlu0 %2880
      %v2882 = vsel %vm1075, %v2793, 0.0
      %2883 = vadd.xlane.f32.xlu0 %v2882
      %v2884 = vpop.xlane.xlu0 %2883
      %v2885 = vsel %vm1075, %v2795, 0.0
      %2886 = vadd.xlane.f32.xlu0 %v2885
      %v2887 = vpop.xlane.xlu0 %2886
      %v2888 = vsel %vm1075, %v2797, 0.0
      %2889 = vadd.xlane.f32.xlu0 %v2888
      %v2890 = vpop.xlane.xlu0 %2889
      %v2891 = vsel %vm1075, %v2799, 0.0
      %2892 = vadd.xlane.f32.xlu0 %v2891
      %v2893 = vpop.xlane.xlu0 %2892
      %v2894 = vsel %vm1075, %v2801, 0.0
      %2895 = vadd.xlane.f32.xlu0 %v2894
      %v2896 = vpop.xlane.xlu0 %2895
      %v2897 = vsel %vm1075, %v2803, 0.0
      %2898 = vadd.xlane.f32.xlu0 %v2897
      %v2899 = vpop.xlane.xlu0 %2898
      %v2900 = vrcp.pop %v2806
      %v2901 = vrcp.pop %v2809
      %v2902 = vrcp.pop %v2812
      %v2903 = vrcp.pop %v2815
      %v2904 = vrcp.pop %v2818
      %v2905 = vrcp.pop %v2821
      %v2906 = vrcp.pop %v2824
      %v2907 = vrcp.pop %v2827
      %v2908 = vrcp.pop %v2830
      %v2909 = vrcp.pop %v2833
      %v2910 = vrcp.pop %v2836
      %v2911 = vrcp.pop %v2839
      %v2912 = vrcp.pop %v2842
      %v2913 = vrcp.pop %v2845
      %v2914 = vrcp.pop %v2848
      %v2915 = vrcp.pop %v2851
      %v2916 = vrcp.pop %v2854
      %v2917 = vrcp.pop %v2857
      %v2918 = vrcp.pop %v2860
      %v2919 = vrcp.pop %v2863
      %v2920 = vrcp.pop %v2866
      %v2921 = vrcp.pop %v2869
      %v2922 = vrcp.pop %v2872
      %v2923 = vrcp.pop %v2875
      %v2924 = vrcp.pop %v2878
      %v2925 = vrcp.pop %v2881
      %v2926 = vrcp.pop %v2884
      %v2927 = vrcp.pop %v2887
      %v2928 = vrcp.pop %v2890
      %v2929 = vrcp.pop %v2893
      %v2930 = vrcp.pop %v2896
      %v2931 = vrcp.pop %v2899
      %v2932 = vmul.f32 %v2741, %v2900
      %v2933 = vmul.f32 %v2743, %v2901
      %v2934 = vmul.f32 %v2745, %v2902
      %v2935 = vmul.f32 %v2747, %v2903
      %v2936 = vmul.f32 %v2749, %v2904
      %v2937 = vmul.f32 %v2751, %v2905
      %v2938 = vmul.f32 %v2753, %v2906
      %v2939 = vmul.f32 %v2755, %v2907
      %v2940 = vmul.f32 %v2757, %v2908
      %v2941 = vmul.f32 %v2759, %v2909
      %v2942 = vmul.f32 %v2761, %v2910
      %v2943 = vmul.f32 %v2763, %v2911
      %v2944 = vmul.f32 %v2765, %v2912
      %v2945 = vmul.f32 %v2767, %v2913
      %v2946 = vmul.f32 %v2769, %v2914
      %v2947 = vmul.f32 %v2771, %v2915
      %v2948 = vmul.f32 %v2773, %v2916
      %v2949 = vmul.f32 %v2775, %v2917
      %v2950 = vmul.f32 %v2777, %v2918
      %v2951 = vmul.f32 %v2779, %v2919
      %v2952 = vmul.f32 %v2781, %v2920
      %v2953 = vmul.f32 %v2783, %v2921
      %v2954 = vmul.f32 %v2785, %v2922
      %v2955 = vmul.f32 %v2787, %v2923
      %v2956 = vmul.f32 %v2789, %v2924
      %v2957 = vmul.f32 %v2791, %v2925
      %v2958 = vmul.f32 %v2793, %v2926
      %v2959 = vmul.f32 %v2795, %v2927
      %v2960 = vmul.f32 %v2797, %v2928
      %v2961 = vmul.f32 %v2799, %v2929
      %v2962 = vmul.f32 %v2801, %v2930
      %v2963 = vmul.f32 %v2803, %v2931
      %2964 = vrot.lane.b32.xlu0 %v383, 56
      %v2965 = vpop.permute.xlu0 %2964
      %2966 = vrot.lane.b32.xlu0 %v386, 56
      %v2967 = vpop.permute.xlu0 %2966
      %v2971 = vsel %vm1075, %v2932, 0
      %v2974 = vsel %vm1075, %v2933, 0
      %2976 = vmatpush.msra.mxu0 0.0
      %2977 = vmatpush.msra.mxu0 0.0
      %2978 = vmatpush.msra.mxu0 0.0
      %2979 = vmatpush.msra.mxu0 0.0
      %2980 = vmatpush.msra.mxu0 0.0
      %2981 = vmatpush.msra.mxu0 0.0
      %2982 = vmatpush.msra.mxu0 0.0
      %2983 = vmatpush.msra.mxu0 0.0
      %2984 = vmatpush.msra.mxu0 0.0
      %2985 = vmatpush.msra.mxu0 0.0
      %2986 = vmatpush.msra.mxu0 0.0
      %2987 = vmatpush.msra.mxu0 0.0
      %2988 = vmatpush.msra.mxu0 0.0
      %2989 = vmatpush.msra.mxu0 0.0
      %2990 = vmatpush.msra.mxu0 %v2967
      %2991 = vmatpush.msra.mxu0 %v2965
      %2992 = vmatmul.f32.gmra.mxu0 %v2971
      %v2993 = vpop.f32.mrf.mxu0
      %v2994 = vadd.f32 0.0, %v2993
      %2995 = vmatmul.f32.gmra.mxu0 %v2974
      %v2996 = vpop.f32.mrf.mxu0
      %v2997 = vadd.f32 0.0, %v2996
      %2998 = vdwg.mxu0
      %2999 = vrot.lane.b32.xlu0 %v389, 56
      %v3000 = vpop.permute.xlu0 %2999
      %3001 = vrot.lane.b32.xlu0 %v392, 56
      %v3002 = vpop.permute.xlu0 %3001
      %v3006 = vsel %vm1075, %v2934, 0
      %v3009 = vsel %vm1075, %v2935, 0
      %3011 = vmatpush.msra.mxu0 0.0
      %3012 = vmatpush.msra.mxu0 0.0
      %3013 = vmatpush.msra.mxu0 0.0
      %3014 = vmatpush.msra.mxu0 0.0
      %3015 = vmatpush.msra.mxu0 0.0
      %3016 = vmatpush.msra.mxu0 0.0
      %3017 = vmatpush.msra.mxu0 0.0
      %3018 = vmatpush.msra.mxu0 0.0
      %3019 = vmatpush.msra.mxu0 0.0
      %3020 = vmatpush.msra.mxu0 0.0
      %3021 = vmatpush.msra.mxu0 0.0
      %3022 = vmatpush.msra.mxu0 0.0
      %3023 = vmatpush.msra.mxu0 0.0
      %3024 = vmatpush.msra.mxu0 0.0
      %3025 = vmatpush.msra.mxu0 %v3002
      %3026 = vmatpush.msra.mxu0 %v3000
      %3027 = vmatmul.f32.gmra.mxu0 %v3006
      %v3028 = vpop.f32.mrf.mxu0
      %v3029 = vadd.f32 0.0, %v3028
      %3030 = vmatmul.f32.gmra.mxu0 %v3009
      %v3031 = vpop.f32.mrf.mxu0
      %v3032 = vadd.f32 0.0, %v3031
      %3033 = vdwg.mxu0
      %3034 = vrot.lane.b32.xlu0 %v395, 56
      %v3035 = vpop.permute.xlu0 %3034
      %3036 = vrot.lane.b32.xlu0 %v398, 56
      %v3037 = vpop.permute.xlu0 %3036
      %v3041 = vsel %vm1075, %v2936, 0
      %v3044 = vsel %vm1075, %v2937, 0
      %3046 = vmatpush.msra.mxu0 0.0
      %3047 = vmatpush.msra.mxu0 0.0
      %3048 = vmatpush.msra.mxu0 0.0
      %3049 = vmatpush.msra.mxu0 0.0
      %3050 = vmatpush.msra.mxu0 0.0
      %3051 = vmatpush.msra.mxu0 0.0
      %3052 = vmatpush.msra.mxu0 0.0
      %3053 = vmatpush.msra.mxu0 0.0
      %3054 = vmatpush.msra.mxu0 0.0
      %3055 = vmatpush.msra.mxu0 0.0
      %3056 = vmatpush.msra.mxu0 0.0
      %3057 = vmatpush.msra.mxu0 0.0
      %3058 = vmatpush.msra.mxu0 0.0
      %3059 = vmatpush.msra.mxu0 0.0
      %3060 = vmatpush.msra.mxu0 %v3037
      %3061 = vmatpush.msra.mxu0 %v3035
      %3062 = vmatmul.f32.gmra.mxu0 %v3041
      %v3063 = vpop.f32.mrf.mxu0
      %v3064 = vadd.f32 0.0, %v3063
      %3065 = vmatmul.f32.gmra.mxu0 %v3044
      %v3066 = vpop.f32.mrf.mxu0
      %v3067 = vadd.f32 0.0, %v3066
      %3068 = vdwg.mxu0
      %3069 = vrot.lane.b32.xlu0 %v401, 56
      %v3070 = vpop.permute.xlu0 %3069
      %3071 = vrot.lane.b32.xlu0 %v404, 56
      %v3072 = vpop.permute.xlu0 %3071
      %v3076 = vsel %vm1075, %v2938, 0
      %v3079 = vsel %vm1075, %v2939, 0
      %3081 = vmatpush.msra.mxu0 0.0
      %3082 = vmatpush.msra.mxu0 0.0
      %3083 = vmatpush.msra.mxu0 0.0
      %3084 = vmatpush.msra.mxu0 0.0
      %3085 = vmatpush.msra.mxu0 0.0
      %3086 = vmatpush.msra.mxu0 0.0
      %3087 = vmatpush.msra.mxu0 0.0
      %3088 = vmatpush.msra.mxu0 0.0
      %3089 = vmatpush.msra.mxu0 0.0
      %3090 = vmatpush.msra.mxu0 0.0
      %3091 = vmatpush.msra.mxu0 0.0
      %3092 = vmatpush.msra.mxu0 0.0
      %3093 = vmatpush.msra.mxu0 0.0
      %3094 = vmatpush.msra.mxu0 0.0
      %3095 = vmatpush.msra.mxu0 %v3072
      %3096 = vmatpush.msra.mxu0 %v3070
      %3097 = vmatmul.f32.gmra.mxu0 %v3076
      %v3098 = vpop.f32.mrf.mxu0
      %v3099 = vadd.f32 0.0, %v3098
      %3100 = vmatmul.f32.gmra.mxu0 %v3079
      %v3101 = vpop.f32.mrf.mxu0
      %v3102 = vadd.f32 0.0, %v3101
      %3103 = vdwg.mxu0
      %3104 = vrot.lane.b32.xlu0 %v407, 56
      %v3105 = vpop.permute.xlu0 %3104
      %3106 = vrot.lane.b32.xlu0 %v410, 56
      %v3107 = vpop.permute.xlu0 %3106
      %v3111 = vsel %vm1075, %v2940, 0
      %v3114 = vsel %vm1075, %v2941, 0
      %3116 = vmatpush.msra.mxu0 0.0
      %3117 = vmatpush.msra.mxu0 0.0
      %3118 = vmatpush.msra.mxu0 0.0
      %3119 = vmatpush.msra.mxu0 0.0
      %3120 = vmatpush.msra.mxu0 0.0
      %3121 = vmatpush.msra.mxu0 0.0
      %3122 = vmatpush.msra.mxu0 0.0
      %3123 = vmatpush.msra.mxu0 0.0
      %3124 = vmatpush.msra.mxu0 0.0
      %3125 = vmatpush.msra.mxu0 0.0
      %3126 = vmatpush.msra.mxu0 0.0
      %3127 = vmatpush.msra.mxu0 0.0
      %3128 = vmatpush.msra.mxu0 0.0
      %3129 = vmatpush.msra.mxu0 0.0
      %3130 = vmatpush.msra.mxu0 %v3107
      %3131 = vmatpush.msra.mxu0 %v3105
      %3132 = vmatmul.f32.gmra.mxu0 %v3111
      %v3133 = vpop.f32.mrf.mxu0
      %v3134 = vadd.f32 0.0, %v3133
      %3135 = vmatmul.f32.gmra.mxu0 %v3114
      %v3136 = vpop.f32.mrf.mxu0
      %v3137 = vadd.f32 0.0, %v3136
      %3138 = vdwg.mxu0
      %3139 = vrot.lane.b32.xlu0 %v413, 56
      %v3140 = vpop.permute.xlu0 %3139
      %3141 = vrot.lane.b32.xlu0 %v416, 56
      %v3142 = vpop.permute.xlu0 %3141
      %v3146 = vsel %vm1075, %v2942, 0
      %v3149 = vsel %vm1075, %v2943, 0
      %3151 = vmatpush.msra.mxu0 0.0
      %3152 = vmatpush.msra.mxu0 0.0
      %3153 = vmatpush.msra.mxu0 0.0
      %3154 = vmatpush.msra.mxu0 0.0
      %3155 = vmatpush.msra.mxu0 0.0
      %3156 = vmatpush.msra.mxu0 0.0
      %3157 = vmatpush.msra.mxu0 0.0
      %3158 = vmatpush.msra.mxu0 0.0
      %3159 = vmatpush.msra.mxu0 0.0
      %3160 = vmatpush.msra.mxu0 0.0
      %3161 = vmatpush.msra.mxu0 0.0
      %3162 = vmatpush.msra.mxu0 0.0
      %3163 = vmatpush.msra.mxu0 0.0
      %3164 = vmatpush.msra.mxu0 0.0
      %3165 = vmatpush.msra.mxu0 %v3142
      %3166 = vmatpush.msra.mxu0 %v3140
      %3167 = vmatmul.f32.gmra.mxu0 %v3146
      %v3168 = vpop.f32.mrf.mxu0
      %v3169 = vadd.f32 0.0, %v3168
      %3170 = vmatmul.f32.gmra.mxu0 %v3149
      %v3171 = vpop.f32.mrf.mxu0
      %v3172 = vadd.f32 0.0, %v3171
      %3173 = vdwg.mxu0
      %3174 = vrot.lane.b32.xlu0 %v419, 56
      %v3175 = vpop.permute.xlu0 %3174
      %3176 = vrot.lane.b32.xlu0 %v422, 56
      %v3177 = vpop.permute.xlu0 %3176
      %v3181 = vsel %vm1075, %v2944, 0
      %v3184 = vsel %vm1075, %v2945, 0
      %3186 = vmatpush.msra.mxu0 0.0
      %3187 = vmatpush.msra.mxu0 0.0
      %3188 = vmatpush.msra.mxu0 0.0
      %3189 = vmatpush.msra.mxu0 0.0
      %3190 = vmatpush.msra.mxu0 0.0
      %3191 = vmatpush.msra.mxu0 0.0
      %3192 = vmatpush.msra.mxu0 0.0
      %3193 = vmatpush.msra.mxu0 0.0
      %3194 = vmatpush.msra.mxu0 0.0
      %3195 = vmatpush.msra.mxu0 0.0
      %3196 = vmatpush.msra.mxu0 0.0
      %3197 = vmatpush.msra.mxu0 0.0
      %3198 = vmatpush.msra.mxu0 0.0
      %3199 = vmatpush.msra.mxu0 0.0
      %3200 = vmatpush.msra.mxu0 %v3177
      %3201 = vmatpush.msra.mxu0 %v3175
      %3202 = vmatmul.f32.gmra.mxu0 %v3181
      %v3203 = vpop.f32.mrf.mxu0
      %v3204 = vadd.f32 0.0, %v3203
      %3205 = vmatmul.f32.gmra.mxu0 %v3184
      %v3206 = vpop.f32.mrf.mxu0
      %v3207 = vadd.f32 0.0, %v3206
      %3208 = vdwg.mxu0
      %3209 = vrot.lane.b32.xlu0 %v425, 56
      %v3210 = vpop.permute.xlu0 %3209
      %3211 = vrot.lane.b32.xlu0 %v428, 56
      %v3212 = vpop.permute.xlu0 %3211
      %v3216 = vsel %vm1075, %v2946, 0
      %v3219 = vsel %vm1075, %v2947, 0
      %3221 = vmatpush.msra.mxu0 0.0
      %3222 = vmatpush.msra.mxu0 0.0
      %3223 = vmatpush.msra.mxu0 0.0
      %3224 = vmatpush.msra.mxu0 0.0
      %3225 = vmatpush.msra.mxu0 0.0
      %3226 = vmatpush.msra.mxu0 0.0
      %3227 = vmatpush.msra.mxu0 0.0
      %3228 = vmatpush.msra.mxu0 0.0
      %3229 = vmatpush.msra.mxu0 0.0
      %3230 = vmatpush.msra.mxu0 0.0
      %3231 = vmatpush.msra.mxu0 0.0
      %3232 = vmatpush.msra.mxu0 0.0
      %3233 = vmatpush.msra.mxu0 0.0
      %3234 = vmatpush.msra.mxu0 0.0
      %3235 = vmatpush.msra.mxu0 %v3212
      %3236 = vmatpush.msra.mxu0 %v3210
      %3237 = vmatmul.f32.gmra.mxu0 %v3216
      %v3238 = vpop.f32.mrf.mxu0
      %v3239 = vadd.f32 0.0, %v3238
      %3240 = vmatmul.f32.gmra.mxu0 %v3219
      %v3241 = vpop.f32.mrf.mxu0
      %v3242 = vadd.f32 0.0, %v3241
      %3243 = vdwg.mxu0
      %3244 = vrot.lane.b32.xlu0 %v431, 56
      %v3245 = vpop.permute.xlu0 %3244
      %3246 = vrot.lane.b32.xlu0 %v434, 56
      %v3247 = vpop.permute.xlu0 %3246
      %v3251 = vsel %vm1075, %v2948, 0
      %v3254 = vsel %vm1075, %v2949, 0
      %3256 = vmatpush.msra.mxu0 0.0
      %3257 = vmatpush.msra.mxu0 0.0
      %3258 = vmatpush.msra.mxu0 0.0
      %3259 = vmatpush.msra.mxu0 0.0
      %3260 = vmatpush.msra.mxu0 0.0
      %3261 = vmatpush.msra.mxu0 0.0
      %3262 = vmatpush.msra.mxu0 0.0
      %3263 = vmatpush.msra.mxu0 0.0
      %3264 = vmatpush.msra.mxu0 0.0
      %3265 = vmatpush.msra.mxu0 0.0
      %3266 = vmatpush.msra.mxu0 0.0
      %3267 = vmatpush.msra.mxu0 0.0
      %3268 = vmatpush.msra.mxu0 0.0
      %3269 = vmatpush.msra.mxu0 0.0
      %3270 = vmatpush.msra.mxu0 %v3247
      %3271 = vmatpush.msra.mxu0 %v3245
      %3272 = vmatmul.f32.gmra.mxu0 %v3251
      %v3273 = vpop.f32.mrf.mxu0
      %v3274 = vadd.f32 0.0, %v3273
      %3275 = vmatmul.f32.gmra.mxu0 %v3254
      %v3276 = vpop.f32.mrf.mxu0
      %v3277 = vadd.f32 0.0, %v3276
      %3278 = vdwg.mxu0
      %3279 = vrot.lane.b32.xlu0 %v437, 56
      %v3280 = vpop.permute.xlu0 %3279
      %3281 = vrot.lane.b32.xlu0 %v440, 56
      %v3282 = vpop.permute.xlu0 %3281
      %v3286 = vsel %vm1075, %v2950, 0
      %v3289 = vsel %vm1075, %v2951, 0
      %3291 = vmatpush.msra.mxu0 0.0
      %3292 = vmatpush.msra.mxu0 0.0
      %3293 = vmatpush.msra.mxu0 0.0
      %3294 = vmatpush.msra.mxu0 0.0
      %3295 = vmatpush.msra.mxu0 0.0
      %3296 = vmatpush.msra.mxu0 0.0
      %3297 = vmatpush.msra.mxu0 0.0
      %3298 = vmatpush.msra.mxu0 0.0
      %3299 = vmatpush.msra.mxu0 0.0
      %3300 = vmatpush.msra.mxu0 0.0
      %3301 = vmatpush.msra.mxu0 0.0
      %3302 = vmatpush.msra.mxu0 0.0
      %3303 = vmatpush.msra.mxu0 0.0
      %3304 = vmatpush.msra.mxu0 0.0
      %3305 = vmatpush.msra.mxu0 %v3282
      %3306 = vmatpush.msra.mxu0 %v3280
      %3307 = vmatmul.f32.gmra.mxu0 %v3286
      %v3308 = vpop.f32.mrf.mxu0
      %v3309 = vadd.f32 0.0, %v3308
      %3310 = vmatmul.f32.gmra.mxu0 %v3289
      %v3311 = vpop.f32.mrf.mxu0
      %v3312 = vadd.f32 0.0, %v3311
      %3313 = vdwg.mxu0
      %3314 = vrot.lane.b32.xlu0 %v443, 56
      %v3315 = vpop.permute.xlu0 %3314
      %3316 = vrot.lane.b32.xlu0 %v446, 56
      %v3317 = vpop.permute.xlu0 %3316
      %v3321 = vsel %vm1075, %v2952, 0
      %v3324 = vsel %vm1075, %v2953, 0
      %3326 = vmatpush.msra.mxu0 0.0
      %3327 = vmatpush.msra.mxu0 0.0
      %3328 = vmatpush.msra.mxu0 0.0
      %3329 = vmatpush.msra.mxu0 0.0
      %3330 = vmatpush.msra.mxu0 0.0
      %3331 = vmatpush.msra.mxu0 0.0
      %3332 = vmatpush.msra.mxu0 0.0
      %3333 = vmatpush.msra.mxu0 0.0
      %3334 = vmatpush.msra.mxu0 0.0
      %3335 = vmatpush.msra.mxu0 0.0
      %3336 = vmatpush.msra.mxu0 0.0
      %3337 = vmatpush.msra.mxu0 0.0
      %3338 = vmatpush.msra.mxu0 0.0
      %3339 = vmatpush.msra.mxu0 0.0
      %3340 = vmatpush.msra.mxu0 %v3317
      %3341 = vmatpush.msra.mxu0 %v3315
      %3342 = vmatmul.f32.gmra.mxu0 %v3321
      %v3343 = vpop.f32.mrf.mxu0
      %v3344 = vadd.f32 0.0, %v3343
      %3345 = vmatmul.f32.gmra.mxu0 %v3324
      %v3346 = vpop.f32.mrf.mxu0
      %v3347 = vadd.f32 0.0, %v3346
      %3348 = vdwg.mxu0
      %3349 = vrot.lane.b32.xlu0 %v449, 56
      %v3350 = vpop.permute.xlu0 %3349
      %3351 = vrot.lane.b32.xlu0 %v452, 56
      %v3352 = vpop.permute.xlu0 %3351
      %v3356 = vsel %vm1075, %v2954, 0
      %v3359 = vsel %vm1075, %v2955, 0
      %3361 = vmatpush.msra.mxu0 0.0
      %3362 = vmatpush.msra.mxu0 0.0
      %3363 = vmatpush.msra.mxu0 0.0
      %3364 = vmatpush.msra.mxu0 0.0
      %3365 = vmatpush.msra.mxu0 0.0
      %3366 = vmatpush.msra.mxu0 0.0
      %3367 = vmatpush.msra.mxu0 0.0
      %3368 = vmatpush.msra.mxu0 0.0
      %3369 = vmatpush.msra.mxu0 0.0
      %3370 = vmatpush.msra.mxu0 0.0
      %3371 = vmatpush.msra.mxu0 0.0
      %3372 = vmatpush.msra.mxu0 0.0
      %3373 = vmatpush.msra.mxu0 0.0
      %3374 = vmatpush.msra.mxu0 0.0
      %3375 = vmatpush.msra.mxu0 %v3352
      %3376 = vmatpush.msra.mxu0 %v3350
      %3377 = vmatmul.f32.gmra.mxu0 %v3356
      %v3378 = vpop.f32.mrf.mxu0
      %v3379 = vadd.f32 0.0, %v3378
      %3380 = vmatmul.f32.gmra.mxu0 %v3359
      %v3381 = vpop.f32.mrf.mxu0
      %v3382 = vadd.f32 0.0, %v3381
      %3383 = vdwg.mxu0
      %3384 = vrot.lane.b32.xlu0 %v455, 56
      %v3385 = vpop.permute.xlu0 %3384
      %3386 = vrot.lane.b32.xlu0 %v458, 56
      %v3387 = vpop.permute.xlu0 %3386
      %v3391 = vsel %vm1075, %v2956, 0
      %v3394 = vsel %vm1075, %v2957, 0
      %3396 = vmatpush.msra.mxu0 0.0
      %3397 = vmatpush.msra.mxu0 0.0
      %3398 = vmatpush.msra.mxu0 0.0
      %3399 = vmatpush.msra.mxu0 0.0
      %3400 = vmatpush.msra.mxu0 0.0
      %3401 = vmatpush.msra.mxu0 0.0
      %3402 = vmatpush.msra.mxu0 0.0
      %3403 = vmatpush.msra.mxu0 0.0
      %3404 = vmatpush.msra.mxu0 0.0
      %3405 = vmatpush.msra.mxu0 0.0
      %3406 = vmatpush.msra.mxu0 0.0
      %3407 = vmatpush.msra.mxu0 0.0
      %3408 = vmatpush.msra.mxu0 0.0
      %3409 = vmatpush.msra.mxu0 0.0
      %3410 = vmatpush.msra.mxu0 %v3387
      %3411 = vmatpush.msra.mxu0 %v3385
      %3412 = vmatmul.f32.gmra.mxu0 %v3391
      %v3413 = vpop.f32.mrf.mxu0
      %v3414 = vadd.f32 0.0, %v3413
      %3415 = vmatmul.f32.gmra.mxu0 %v3394
      %v3416 = vpop.f32.mrf.mxu0
      %v3417 = vadd.f32 0.0, %v3416
      %3418 = vdwg.mxu0
      %3419 = vrot.lane.b32.xlu0 %v461, 56
      %v3420 = vpop.permute.xlu0 %3419
      %3421 = vrot.lane.b32.xlu0 %v464, 56
      %v3422 = vpop.permute.xlu0 %3421
      %v3426 = vsel %vm1075, %v2958, 0
      %v3429 = vsel %vm1075, %v2959, 0
      %3431 = vmatpush.msra.mxu0 0.0
      %3432 = vmatpush.msra.mxu0 0.0
      %3433 = vmatpush.msra.mxu0 0.0
      %3434 = vmatpush.msra.mxu0 0.0
      %3435 = vmatpush.msra.mxu0 0.0
      %3436 = vmatpush.msra.mxu0 0.0
      %3437 = vmatpush.msra.mxu0 0.0
      %3438 = vmatpush.msra.mxu0 0.0
      %3439 = vmatpush.msra.mxu0 0.0
      %3440 = vmatpush.msra.mxu0 0.0
      %3441 = vmatpush.msra.mxu0 0.0
      %3442 = vmatpush.msra.mxu0 0.0
      %3443 = vmatpush.msra.mxu0 0.0
      %3444 = vmatpush.msra.mxu0 0.0
      %3445 = vmatpush.msra.mxu0 %v3422
      %3446 = vmatpush.msra.mxu0 %v3420
      %3447 = vmatmul.f32.gmra.mxu0 %v3426
      %v3448 = vpop.f32.mrf.mxu0
      %v3449 = vadd.f32 0.0, %v3448
      %3450 = vmatmul.f32.gmra.mxu0 %v3429
      %v3451 = vpop.f32.mrf.mxu0
      %v3452 = vadd.f32 0.0, %v3451
      %3453 = vdwg.mxu0
      %3454 = vrot.lane.b32.xlu0 %v467, 56
      %v3455 = vpop.permute.xlu0 %3454
      %3456 = vrot.lane.b32.xlu0 %v470, 56
      %v3457 = vpop.permute.xlu0 %3456
      %v3461 = vsel %vm1075, %v2960, 0
      %v3464 = vsel %vm1075, %v2961, 0
      %3466 = vmatpush.msra.mxu0 0.0
      %3467 = vmatpush.msra.mxu0 0.0
      %3468 = vmatpush.msra.mxu0 0.0
      %3469 = vmatpush.msra.mxu0 0.0
      %3470 = vmatpush.msra.mxu0 0.0
      %3471 = vmatpush.msra.mxu0 0.0
      %3472 = vmatpush.msra.mxu0 0.0
      %3473 = vmatpush.msra.mxu0 0.0
      %3474 = vmatpush.msra.mxu0 0.0
      %3475 = vmatpush.msra.mxu0 0.0
      %3476 = vmatpush.msra.mxu0 0.0
      %3477 = vmatpush.msra.mxu0 0.0
      %3478 = vmatpush.msra.mxu0 0.0
      %3479 = vmatpush.msra.mxu0 0.0
      %3480 = vmatpush.msra.mxu0 %v3457
      %3481 = vmatpush.msra.mxu0 %v3455
      %3482 = vmatmul.f32.gmra.mxu0 %v3461
      %v3483 = vpop.f32.mrf.mxu0
      %v3484 = vadd.f32 0.0, %v3483
      %3485 = vmatmul.f32.gmra.mxu0 %v3464
      %v3486 = vpop.f32.mrf.mxu0
      %v3487 = vadd.f32 0.0, %v3486
      %3488 = vdwg.mxu0
      %3489 = vrot.lane.b32.xlu0 %v473, 56
      %v3490 = vpop.permute.xlu0 %3489
      %3491 = vrot.lane.b32.xlu0 %v476, 56
      %v3492 = vpop.permute.xlu0 %3491
      %v3496 = vsel %vm1075, %v2962, 0
      %v3499 = vsel %vm1075, %v2963, 0
      %3501 = vmatpush.msra.mxu0 0.0
      %3502 = vmatpush.msra.mxu0 0.0
      %3503 = vmatpush.msra.mxu0 0.0
      %3504 = vmatpush.msra.mxu0 0.0
      %3505 = vmatpush.msra.mxu0 0.0
      %3506 = vmatpush.msra.mxu0 0.0
      %3507 = vmatpush.msra.mxu0 0.0
      %3508 = vmatpush.msra.mxu0 0.0
      %3509 = vmatpush.msra.mxu0 0.0
      %3510 = vmatpush.msra.mxu0 0.0
      %3511 = vmatpush.msra.mxu0 0.0
      %3512 = vmatpush.msra.mxu0 0.0
      %3513 = vmatpush.msra.mxu0 0.0
      %3514 = vmatpush.msra.mxu0 0.0
      %3515 = vmatpush.msra.mxu0 %v3492
      %3516 = vmatpush.msra.mxu0 %v3490
      %3517 = vmatmul.f32.gmra.mxu0 %v3496
      %v3518 = vpop.f32.mrf.mxu0
      %v3519 = vadd.f32 0.0, %v3518
      %3520 = vmatmul.f32.gmra.mxu0 %v3499
      %v3521 = vpop.f32.mrf.mxu0
      %v3522 = vadd.f32 0.0, %v3521
      %3523 = vdwg.mxu0
      %v3525 = vsel %vm488, %v2994, 0
      %v3528 = vsel %vm488, %v2997, 0
      %v3531 = vsel %vm488, %v3029, 0
      %v3534 = vsel %vm488, %v3032, 0
      %v3537 = vsel %vm488, %v3064, 0
      %v3540 = vsel %vm488, %v3067, 0
      %v3543 = vsel %vm488, %v3099, 0
      %v3546 = vsel %vm488, %v3102, 0
      %v3549 = vsel %vm488, %v3134, 0
      %v3552 = vsel %vm488, %v3137, 0
      %v3555 = vsel %vm488, %v3169, 0
      %v3558 = vsel %vm488, %v3172, 0
      %v3561 = vsel %vm488, %v3204, 0
      %v3564 = vsel %vm488, %v3207, 0
      %v3567 = vsel %vm488, %v3239, 0
      %v3570 = vsel %vm488, %v3242, 0
      %v3573 = vsel %vm488, %v3274, 0
      %v3576 = vsel %vm488, %v3277, 0
      %v3579 = vsel %vm488, %v3309, 0
      %v3582 = vsel %vm488, %v3312, 0
      %v3585 = vsel %vm488, %v3344, 0
      %v3588 = vsel %vm488, %v3347, 0
      %v3591 = vsel %vm488, %v3379, 0
      %v3594 = vsel %vm488, %v3382, 0
      %v3597 = vsel %vm488, %v3414, 0
      %v3600 = vsel %vm488, %v3417, 0
      %v3603 = vsel %vm488, %v3449, 0
      %v3606 = vsel %vm488, %v3452, 0
      %v3609 = vsel %vm488, %v3484, 0
      %v3612 = vsel %vm488, %v3487, 0
      %v3615 = vsel %vm488, %v3519, 0
      %v3618 = vsel %vm488, %v3522, 0
      %3620 = vmatpush.msra.mxu0 0.0
      %3621 = vmatpush.msra.mxu0 0.0
      %3622 = vmatpush.msra.mxu0 0.0
      %3623 = vmatpush.msra.mxu0 0.0
      %3624 = vmatpush.msra.mxu0 0.0
      %3625 = vmatpush.msra.mxu0 0.0
      %3626 = vmatpush.msra.mxu0 0.0
      %3627 = vmatpush.msra.mxu0 0.0
      %3628 = vmatpush.msra.mxu0 0.0
      %3629 = vmatpush.msra.mxu0 0.0
      %3630 = vmatpush.msra.mxu0 0.0
      %3631 = vmatpush.msra.mxu0 0.0
      %3632 = vmatpush.msra.mxu0 0.0
      %3633 = vmatpush.msra.mxu0 0.0
      %3634 = vmatpush.msra.mxu0 0.0
      %3635 = vmatpush.msra.mxu0 %v479
      %3636 = vmatmul.f32.gmra.mxu0 %v3525
      %v3637 = vpop.f32.mrf.mxu0
      %v3638 = vadd.f32 0.0, %v3637
      %3639 = vmatmul.f32.gmra.mxu0 %v3528
      %v3640 = vpop.f32.mrf.mxu0
      %v3641 = vadd.f32 0.0, %v3640
      %3642 = vmatmul.f32.gmra.mxu0 %v3531
      %v3643 = vpop.f32.mrf.mxu0
      %v3644 = vadd.f32 0.0, %v3643
      %3645 = vmatmul.f32.gmra.mxu0 %v3534
      %v3646 = vpop.f32.mrf.mxu0
      %v3647 = vadd.f32 0.0, %v3646
      %3648 = vmatmul.f32.gmra.mxu0 %v3537
      %v3649 = vpop.f32.mrf.mxu0
      %v3650 = vadd.f32 0.0, %v3649
      %3651 = vmatmul.f32.gmra.mxu0 %v3540
      %v3652 = vpop.f32.mrf.mxu0
      %v3653 = vadd.f32 0.0, %v3652
      %3654 = vmatmul.f32.gmra.mxu0 %v3543
      %v3655 = vpop.f32.mrf.mxu0
      %v3656 = vadd.f32 0.0, %v3655
      %3657 = vmatmul.f32.gmra.mxu0 %v3546
      %v3658 = vpop.f32.mrf.mxu0
      %v3659 = vadd.f32 0.0, %v3658
      %3660 = vmatmul.f32.gmra.mxu0 %v3549
      %v3661 = vpop.f32.mrf.mxu0
      %v3662 = vadd.f32 0.0, %v3661
      %3663 = vmatmul.f32.gmra.mxu0 %v3552
      %v3664 = vpop.f32.mrf.mxu0
      %v3665 = vadd.f32 0.0, %v3664
      %3666 = vmatmul.f32.gmra.mxu0 %v3555
      %v3667 = vpop.f32.mrf.mxu0
      %v3668 = vadd.f32 0.0, %v3667
      %3669 = vmatmul.f32.gmra.mxu0 %v3558
      %v3670 = vpop.f32.mrf.mxu0
      %v3671 = vadd.f32 0.0, %v3670
      %3672 = vmatmul.f32.gmra.mxu0 %v3561
      %v3673 = vpop.f32.mrf.mxu0
      %v3674 = vadd.f32 0.0, %v3673
      %3675 = vmatmul.f32.gmra.mxu0 %v3564
      %v3676 = vpop.f32.mrf.mxu0
      %v3677 = vadd.f32 0.0, %v3676
      %3678 = vmatmul.f32.gmra.mxu0 %v3567
      %v3679 = vpop.f32.mrf.mxu0
      %v3680 = vadd.f32 0.0, %v3679
      %3681 = vmatmul.f32.gmra.mxu0 %v3570
      %v3682 = vpop.f32.mrf.mxu0
      %v3683 = vadd.f32 0.0, %v3682
      %3684 = vmatmul.f32.gmra.mxu0 %v3573
      %v3685 = vpop.f32.mrf.mxu0
      %v3686 = vadd.f32 0.0, %v3685
      %3687 = vmatmul.f32.gmra.mxu0 %v3576
      %v3688 = vpop.f32.mrf.mxu0
      %v3689 = vadd.f32 0.0, %v3688
      %3690 = vmatmul.f32.gmra.mxu0 %v3579
      %v3691 = vpop.f32.mrf.mxu0
      %v3692 = vadd.f32 0.0, %v3691
      %3693 = vmatmul.f32.gmra.mxu0 %v3582
      %v3694 = vpop.f32.mrf.mxu0
      %v3695 = vadd.f32 0.0, %v3694
      %3696 = vmatmul.f32.gmra.mxu0 %v3585
      %v3697 = vpop.f32.mrf.mxu0
      %v3698 = vadd.f32 0.0, %v3697
      %3699 = vmatmul.f32.gmra.mxu0 %v3588
      %v3700 = vpop.f32.mrf.mxu0
      %v3701 = vadd.f32 0.0, %v3700
      %3702 = vmatmul.f32.gmra.mxu0 %v3591
      %v3703 = vpop.f32.mrf.mxu0
      %v3704 = vadd.f32 0.0, %v3703
      %3705 = vmatmul.f32.gmra.mxu0 %v3594
      %v3706 = vpop.f32.mrf.mxu0
      %v3707 = vadd.f32 0.0, %v3706
      %3708 = vmatmul.f32.gmra.mxu0 %v3597
      %v3709 = vpop.f32.mrf.mxu0
      %v3710 = vadd.f32 0.0, %v3709
      %3711 = vmatmul.f32.gmra.mxu0 %v3600
      %v3712 = vpop.f32.mrf.mxu0
      %v3713 = vadd.f32 0.0, %v3712
      %3714 = vmatmul.f32.gmra.mxu0 %v3603
      %v3715 = vpop.f32.mrf.mxu0
      %v3716 = vadd.f32 0.0, %v3715
      %3717 = vmatmul.f32.gmra.mxu0 %v3606
      %v3718 = vpop.f32.mrf.mxu0
      %v3719 = vadd.f32 0.0, %v3718
      %3720 = vmatmul.f32.gmra.mxu0 %v3609
      %v3721 = vpop.f32.mrf.mxu0
      %v3722 = vadd.f32 0.0, %v3721
      %3723 = vmatmul.f32.gmra.mxu0 %v3612
      %v3724 = vpop.f32.mrf.mxu0
      %v3725 = vadd.f32 0.0, %v3724
      %3726 = vmatmul.f32.gmra.mxu0 %v3615
      %v3727 = vpop.f32.mrf.mxu0
      %v3728 = vadd.f32 0.0, %v3727
      %3729 = vmatmul.f32.gmra.mxu0 %v3618
      %v3730 = vpop.f32.mrf.mxu0
      %v3731 = vadd.f32 0.0, %v3730
      %3732 = vdwg.mxu0
      %v3734 = vsel %vm488, %v1458, 0
      %v3737 = vsel %vm488, %v1461, 0
      %v3740 = vsel %vm488, %v1493, 0
      %v3743 = vsel %vm488, %v1496, 0
      %v3746 = vsel %vm488, %v1528, 0
      %v3749 = vsel %vm488, %v1531, 0
      %v3752 = vsel %vm488, %v1563, 0
      %v3755 = vsel %vm488, %v1566, 0
      %v3758 = vsel %vm488, %v1598, 0
      %v3761 = vsel %vm488, %v1601, 0
      %v3764 = vsel %vm488, %v1633, 0
      %v3767 = vsel %vm488, %v1636, 0
      %v3770 = vsel %vm488, %v1668, 0
      %v3773 = vsel %vm488, %v1671, 0
      %v3776 = vsel %vm488, %v1703, 0
      %v3779 = vsel %vm488, %v1706, 0
      %v3782 = vsel %vm488, %v1738, 0
      %v3785 = vsel %vm488, %v1741, 0
      %v3788 = vsel %vm488, %v1773, 0
      %v3791 = vsel %vm488, %v1776, 0
      %v3794 = vsel %vm488, %v1808, 0
      %v3797 = vsel %vm488, %v1811, 0
      %v3800 = vsel %vm488, %v1843, 0
      %v3803 = vsel %vm488, %v1846, 0
      %v3806 = vsel %vm488, %v1878, 0
      %v3809 = vsel %vm488, %v1881, 0
      %v3812 = vsel %vm488, %v1913, 0
      %v3815 = vsel %vm488, %v1916, 0
      %v3818 = vsel %vm488, %v1948, 0
      %v3821 = vsel %vm488, %v1951, 0
      %v3824 = vsel %vm488, %v1983, 0
      %v3827 = vsel %vm488, %v1986, 0
      %3829 = vmatpush.msra.mxu0 0.0
      %3830 = vmatpush.msra.mxu0 0.0
      %3831 = vmatpush.msra.mxu0 0.0
      %3832 = vmatpush.msra.mxu0 0.0
      %3833 = vmatpush.msra.mxu0 0.0
      %3834 = vmatpush.msra.mxu0 0.0
      %3835 = vmatpush.msra.mxu0 0.0
      %3836 = vmatpush.msra.mxu0 0.0
      %3837 = vmatpush.msra.mxu0 0.0
      %3838 = vmatpush.msra.mxu0 0.0
      %3839 = vmatpush.msra.mxu0 0.0
      %3840 = vmatpush.msra.mxu0 0.0
      %3841 = vmatpush.msra.mxu0 0.0
      %3842 = vmatpush.msra.mxu0 0.0
      %3843 = vmatpush.msra.mxu0 0.0
      %3844 = vmatpush.msra.mxu0 %v478
      %3845 = vmatmul.f32.gmra.mxu0 %v3734
      %v3846 = vpop.f32.mrf.mxu0
      %v3847 = vadd.f32 %v3638, %v3846
      %3848 = vmatmul.f32.gmra.mxu0 %v3737
      %v3849 = vpop.f32.mrf.mxu0
      %v3850 = vadd.f32 %v3641, %v3849
      %3851 = vmatmul.f32.gmra.mxu0 %v3740
      %v3852 = vpop.f32.mrf.mxu0
      %v3853 = vadd.f32 %v3644, %v3852
      %3854 = vmatmul.f32.gmra.mxu0 %v3743
      %v3855 = vpop.f32.mrf.mxu0
      %v3856 = vadd.f32 %v3647, %v3855
      %3857 = vmatmul.f32.gmra.mxu0 %v3746
      %v3858 = vpop.f32.mrf.mxu0
      %v3859 = vadd.f32 %v3650, %v3858
      %3860 = vmatmul.f32.gmra.mxu0 %v3749
      %v3861 = vpop.f32.mrf.mxu0
      %v3862 = vadd.f32 %v3653, %v3861
      %3863 = vmatmul.f32.gmra.mxu0 %v3752
      %v3864 = vpop.f32.mrf.mxu0
      %v3865 = vadd.f32 %v3656, %v3864
      %3866 = vmatmul.f32.gmra.mxu0 %v3755
      %v3867 = vpop.f32.mrf.mxu0
      %v3868 = vadd.f32 %v3659, %v3867
      %3869 = vmatmul.f32.gmra.mxu0 %v3758
      %v3870 = vpop.f32.mrf.mxu0
      %v3871 = vadd.f32 %v3662, %v3870
      %3872 = vmatmul.f32.gmra.mxu0 %v3761
      %v3873 = vpop.f32.mrf.mxu0
      %v3874 = vadd.f32 %v3665, %v3873
      %3875 = vmatmul.f32.gmra.mxu0 %v3764
      %v3876 = vpop.f32.mrf.mxu0
      %v3877 = vadd.f32 %v3668, %v3876
      %3878 = vmatmul.f32.gmra.mxu0 %v3767
      %v3879 = vpop.f32.mrf.mxu0
      %v3880 = vadd.f32 %v3671, %v3879
      %3881 = vmatmul.f32.gmra.mxu0 %v3770
      %v3882 = vpop.f32.mrf.mxu0
      %v3883 = vadd.f32 %v3674, %v3882
      %3884 = vmatmul.f32.gmra.mxu0 %v3773
      %v3885 = vpop.f32.mrf.mxu0
      %v3886 = vadd.f32 %v3677, %v3885
      %3887 = vmatmul.f32.gmra.mxu0 %v3776
      %v3888 = vpop.f32.mrf.mxu0
      %v3889 = vadd.f32 %v3680, %v3888
      %3890 = vmatmul.f32.gmra.mxu0 %v3779
      %v3891 = vpop.f32.mrf.mxu0
      %v3892 = vadd.f32 %v3683, %v3891
      %3893 = vmatmul.f32.gmra.mxu0 %v3782
      %v3894 = vpop.f32.mrf.mxu0
      %v3895 = vadd.f32 %v3686, %v3894
      %3896 = vmatmul.f32.gmra.mxu0 %v3785
      %v3897 = vpop.f32.mrf.mxu0
      %v3898 = vadd.f32 %v3689, %v3897
      %3899 = vmatmul.f32.gmra.mxu0 %v3788
      %v3900 = vpop.f32.mrf.mxu0
      %v3901 = vadd.f32 %v3692, %v3900
      %3902 = vmatmul.f32.gmra.mxu0 %v3791
      %v3903 = vpop.f32.mrf.mxu0
      %v3904 = vadd.f32 %v3695, %v3903
      %3905 = vmatmul.f32.gmra.mxu0 %v3794
      %v3906 = vpop.f32.mrf.mxu0
      %v3907 = vadd.f32 %v3698, %v3906
      %3908 = vmatmul.f32.gmra.mxu0 %v3797
      %v3909 = vpop.f32.mrf.mxu0
      %v3910 = vadd.f32 %v3701, %v3909
      %3911 = vmatmul.f32.gmra.mxu0 %v3800
      %v3912 = vpop.f32.mrf.mxu0
      %v3913 = vadd.f32 %v3704, %v3912
      %3914 = vmatmul.f32.gmra.mxu0 %v3803
      %v3915 = vpop.f32.mrf.mxu0
      %v3916 = vadd.f32 %v3707, %v3915
      %3917 = vmatmul.f32.gmra.mxu0 %v3806
      %v3918 = vpop.f32.mrf.mxu0
      %v3919 = vadd.f32 %v3710, %v3918
      %3920 = vmatmul.f32.gmra.mxu0 %v3809
      %v3921 = vpop.f32.mrf.mxu0
      %v3922 = vadd.f32 %v3713, %v3921
      %3923 = vmatmul.f32.gmra.mxu0 %v3812
      %v3924 = vpop.f32.mrf.mxu0
      %v3925 = vadd.f32 %v3716, %v3924
      %3926 = vmatmul.f32.gmra.mxu0 %v3815
      %v3927 = vpop.f32.mrf.mxu0
      %v3928 = vadd.f32 %v3719, %v3927
      %3929 = vmatmul.f32.gmra.mxu0 %v3818
      %v3930 = vpop.f32.mrf.mxu0
      %v3931 = vadd.f32 %v3722, %v3930
      %3932 = vmatmul.f32.gmra.mxu0 %v3821
      %v3933 = vpop.f32.mrf.mxu0
      %v3934 = vadd.f32 %v3725, %v3933
      %3935 = vmatmul.f32.gmra.mxu0 %v3824
      %v3936 = vpop.f32.mrf.mxu0
      %v3937 = vadd.f32 %v3728, %v3936
      %3938 = vmatmul.f32.gmra.mxu0 %v3827
      %v3939 = vpop.f32.mrf.mxu0
      %v3940 = vadd.f32 %v3731, %v3939
      %3941 = vdwg.mxu0
      %3942 = vrot.lane.b32.xlu0 %v383, 112
      %v3943 = vpop.permute.xlu0 %3942
      %3944 = vrot.lane.b32.xlu0 %v386, 112
      %v3945 = vpop.permute.xlu0 %3944
      %3946 = vrot.lane.b32.xlu0 %v383, 80
      %v3947 = vpop.permute.xlu0 %3946
      %3948 = vrot.lane.b32.xlu0 %v386, 80
      %v3949 = vpop.permute.xlu0 %3948
      %v3950 = vsel %vm488, %v3943, 0
      %v3952 = vsel %vm488, %v3945, 0
      %v3954 = vsel %vm488, %v3947, 0
      %v3956 = vsel %vm488, %v3949, 0
      %3958 = vmatpush.xpose.msra.mxu0 0.0
      %3959 = vmatpush.xpose.msra.mxu0 0.0
      %3960 = vmatpush.xpose.msra.mxu0 0.0
      %3961 = vmatpush.xpose.msra.mxu0 0.0
      %3962 = vmatpush.xpose.msra.mxu0 0.0
      %3963 = vmatpush.xpose.msra.mxu0 0.0
      %3964 = vmatpush.xpose.msra.mxu0 0.0
      %3965 = vmatpush.xpose.msra.mxu0 0.0
      %3966 = vmatpush.xpose.msra.mxu0 0.0
      %3967 = vmatpush.xpose.msra.mxu0 0.0
      %3968 = vmatpush.xpose.msra.mxu0 0.0
      %3969 = vmatpush.xpose.msra.mxu0 0.0
      %3970 = vmatpush.xpose.msra.mxu0 0.0
      %3971 = vmatpush.xpose.msra.mxu0 0.0
      %3972 = vmatpush.xpose.msra.mxu0 %v3956
      %3973 = vmatpush.xpose.msra.mxu0 %v3954
      %3974 = vmatmul.f32.gmra.mxu0 %v3950
      %v3975 = vpop.f32.mrf.mxu0
      %v3976 = vadd.f32 0.0, %v3975
      %3977 = vmatmul.f32.gmra.mxu0 %v3952
      %v3978 = vpop.f32.mrf.mxu0
      %v3979 = vadd.f32 0.0, %v3978
      %3980 = vdwg.mxu0
      %3981 = vrot.lane.b32.xlu0 %v389, 112
      %v3982 = vpop.permute.xlu0 %3981
      %3983 = vrot.lane.b32.xlu0 %v392, 112
      %v3984 = vpop.permute.xlu0 %3983
      %3985 = vrot.lane.b32.xlu0 %v389, 80
      %v3986 = vpop.permute.xlu0 %3985
      %3987 = vrot.lane.b32.xlu0 %v392, 80
      %v3988 = vpop.permute.xlu0 %3987
      %v3989 = vsel %vm488, %v3982, 0
      %v3991 = vsel %vm488, %v3984, 0
      %v3993 = vsel %vm488, %v3986, 0
      %v3995 = vsel %vm488, %v3988, 0
      %3997 = vmatpush.xpose.msra.mxu0 0.0
      %3998 = vmatpush.xpose.msra.mxu0 0.0
      %3999 = vmatpush.xpose.msra.mxu0 0.0
      %4000 = vmatpush.xpose.msra.mxu0 0.0
      %4001 = vmatpush.xpose.msra.mxu0 0.0
      %4002 = vmatpush.xpose.msra.mxu0 0.0
      %4003 = vmatpush.xpose.msra.mxu0 0.0
      %4004 = vmatpush.xpose.msra.mxu0 0.0
      %4005 = vmatpush.xpose.msra.mxu0 0.0
      %4006 = vmatpush.xpose.msra.mxu0 0.0
      %4007 = vmatpush.xpose.msra.mxu0 0.0
      %4008 = vmatpush.xpose.msra.mxu0 0.0
      %4009 = vmatpush.xpose.msra.mxu0 0.0
      %4010 = vmatpush.xpose.msra.mxu0 0.0
      %4011 = vmatpush.xpose.msra.mxu0 %v3995
      %4012 = vmatpush.xpose.msra.mxu0 %v3993
      %4013 = vmatmul.f32.gmra.mxu0 %v3989
      %v4014 = vpop.f32.mrf.mxu0
      %v4015 = vadd.f32 0.0, %v4014
      %4016 = vmatmul.f32.gmra.mxu0 %v3991
      %v4017 = vpop.f32.mrf.mxu0
      %v4018 = vadd.f32 0.0, %v4017
      %4019 = vdwg.mxu0
      %4020 = vrot.lane.b32.xlu0 %v395, 112
      %v4021 = vpop.permute.xlu0 %4020
      %4022 = vrot.lane.b32.xlu0 %v398, 112
      %v4023 = vpop.permute.xlu0 %4022
      %4024 = vrot.lane.b32.xlu0 %v395, 80
      %v4025 = vpop.permute.xlu0 %4024
      %4026 = vrot.lane.b32.xlu0 %v398, 80
      %v4027 = vpop.permute.xlu0 %4026
      %v4028 = vsel %vm488, %v4021, 0
      %v4030 = vsel %vm488, %v4023, 0
      %v4032 = vsel %vm488, %v4025, 0
      %v4034 = vsel %vm488, %v4027, 0
      %4036 = vmatpush.xpose.msra.mxu0 0.0
      %4037 = vmatpush.xpose.msra.mxu0 0.0
      %4038 = vmatpush.xpose.msra.mxu0 0.0
      %4039 = vmatpush.xpose.msra.mxu0 0.0
      %4040 = vmatpush.xpose.msra.mxu0 0.0
      %4041 = vmatpush.xpose.msra.mxu0 0.0
      %4042 = vmatpush.xpose.msra.mxu0 0.0
      %4043 = vmatpush.xpose.msra.mxu0 0.0
      %4044 = vmatpush.xpose.msra.mxu0 0.0
      %4045 = vmatpush.xpose.msra.mxu0 0.0
      %4046 = vmatpush.xpose.msra.mxu0 0.0
      %4047 = vmatpush.xpose.msra.mxu0 0.0
      %4048 = vmatpush.xpose.msra.mxu0 0.0
      %4049 = vmatpush.xpose.msra.mxu0 0.0
      %4050 = vmatpush.xpose.msra.mxu0 %v4034
      %4051 = vmatpush.xpose.msra.mxu0 %v4032
      %4052 = vmatmul.f32.gmra.mxu0 %v4028
      %v4053 = vpop.f32.mrf.mxu0
      %v4054 = vadd.f32 0.0, %v4053
      %4055 = vmatmul.f32.gmra.mxu0 %v4030
      %v4056 = vpop.f32.mrf.mxu0
      %v4057 = vadd.f32 0.0, %v4056
      %4058 = vdwg.mxu0
      %4059 = vrot.lane.b32.xlu0 %v401, 112
      %v4060 = vpop.permute.xlu0 %4059
      %4061 = vrot.lane.b32.xlu0 %v404, 112
      %v4062 = vpop.permute.xlu0 %4061
      %4063 = vrot.lane.b32.xlu0 %v401, 80
      %v4064 = vpop.permute.xlu0 %4063
      %4065 = vrot.lane.b32.xlu0 %v404, 80
      %v4066 = vpop.permute.xlu0 %4065
      %v4067 = vsel %vm488, %v4060, 0
      %v4069 = vsel %vm488, %v4062, 0
      %v4071 = vsel %vm488, %v4064, 0
      %v4073 = vsel %vm488, %v4066, 0
      %4075 = vmatpush.xpose.msra.mxu0 0.0
      %4076 = vmatpush.xpose.msra.mxu0 0.0
      %4077 = vmatpush.xpose.msra.mxu0 0.0
      %4078 = vmatpush.xpose.msra.mxu0 0.0
      %4079 = vmatpush.xpose.msra.mxu0 0.0
      %4080 = vmatpush.xpose.msra.mxu0 0.0
      %4081 = vmatpush.xpose.msra.mxu0 0.0
      %4082 = vmatpush.xpose.msra.mxu0 0.0
      %4083 = vmatpush.xpose.msra.mxu0 0.0
      %4084 = vmatpush.xpose.msra.mxu0 0.0
      %4085 = vmatpush.xpose.msra.mxu0 0.0
      %4086 = vmatpush.xpose.msra.mxu0 0.0
      %4087 = vmatpush.xpose.msra.mxu0 0.0
      %4088 = vmatpush.xpose.msra.mxu0 0.0
      %4089 = vmatpush.xpose.msra.mxu0 %v4073
      %4090 = vmatpush.xpose.msra.mxu0 %v4071
      %4091 = vmatmul.f32.gmra.mxu0 %v4067
      %v4092 = vpop.f32.mrf.mxu0
      %v4093 = vadd.f32 0.0, %v4092
      %4094 = vmatmul.f32.gmra.mxu0 %v4069
      %v4095 = vpop.f32.mrf.mxu0
      %v4096 = vadd.f32 0.0, %v4095
      %4097 = vdwg.mxu0
      %4098 = vrot.lane.b32.xlu0 %v407, 112
      %v4099 = vpop.permute.xlu0 %4098
      %4100 = vrot.lane.b32.xlu0 %v410, 112
      %v4101 = vpop.permute.xlu0 %4100
      %4102 = vrot.lane.b32.xlu0 %v407, 80
      %v4103 = vpop.permute.xlu0 %4102
      %4104 = vrot.lane.b32.xlu0 %v410, 80
      %v4105 = vpop.permute.xlu0 %4104
      %v4106 = vsel %vm488, %v4099, 0
      %v4108 = vsel %vm488, %v4101, 0
      %v4110 = vsel %vm488, %v4103, 0
      %v4112 = vsel %vm488, %v4105, 0
      %4114 = vmatpush.xpose.msra.mxu0 0.0
      %4115 = vmatpush.xpose.msra.mxu0 0.0
      %4116 = vmatpush.xpose.msra.mxu0 0.0
      %4117 = vmatpush.xpose.msra.mxu0 0.0
      %4118 = vmatpush.xpose.msra.mxu0 0.0
      %4119 = vmatpush.xpose.msra.mxu0 0.0
      %4120 = vmatpush.xpose.msra.mxu0 0.0
      %4121 = vmatpush.xpose.msra.mxu0 0.0
      %4122 = vmatpush.xpose.msra.mxu0 0.0
      %4123 = vmatpush.xpose.msra.mxu0 0.0
      %4124 = vmatpush.xpose.msra.mxu0 0.0
      %4125 = vmatpush.xpose.msra.mxu0 0.0
      %4126 = vmatpush.xpose.msra.mxu0 0.0
      %4127 = vmatpush.xpose.msra.mxu0 0.0
      %4128 = vmatpush.xpose.msra.mxu0 %v4112
      %4129 = vmatpush.xpose.msra.mxu0 %v4110
      %4130 = vmatmul.f32.gmra.mxu0 %v4106
      %v4131 = vpop.f32.mrf.mxu0
      %v4132 = vadd.f32 0.0, %v4131
      %4133 = vmatmul.f32.gmra.mxu0 %v4108
      %v4134 = vpop.f32.mrf.mxu0
      %v4135 = vadd.f32 0.0, %v4134
      %4136 = vdwg.mxu0
      %4137 = vrot.lane.b32.xlu0 %v413, 112
      %v4138 = vpop.permute.xlu0 %4137
      %4139 = vrot.lane.b32.xlu0 %v416, 112
      %v4140 = vpop.permute.xlu0 %4139
      %4141 = vrot.lane.b32.xlu0 %v413, 80
      %v4142 = vpop.permute.xlu0 %4141
      %4143 = vrot.lane.b32.xlu0 %v416, 80
      %v4144 = vpop.permute.xlu0 %4143
      %v4145 = vsel %vm488, %v4138, 0
      %v4147 = vsel %vm488, %v4140, 0
      %v4149 = vsel %vm488, %v4142, 0
      %v4151 = vsel %vm488, %v4144, 0
      %4153 = vmatpush.xpose.msra.mxu0 0.0
      %4154 = vmatpush.xpose.msra.mxu0 0.0
      %4155 = vmatpush.xpose.msra.mxu0 0.0
      %4156 = vmatpush.xpose.msra.mxu0 0.0
      %4157 = vmatpush.xpose.msra.mxu0 0.0
      %4158 = vmatpush.xpose.msra.mxu0 0.0
      %4159 = vmatpush.xpose.msra.mxu0 0.0
      %4160 = vmatpush.xpose.msra.mxu0 0.0
      %4161 = vmatpush.xpose.msra.mxu0 0.0
      %4162 = vmatpush.xpose.msra.mxu0 0.0
      %4163 = vmatpush.xpose.msra.mxu0 0.0
      %4164 = vmatpush.xpose.msra.mxu0 0.0
      %4165 = vmatpush.xpose.msra.mxu0 0.0
      %4166 = vmatpush.xpose.msra.mxu0 0.0
      %4167 = vmatpush.xpose.msra.mxu0 %v4151
      %4168 = vmatpush.xpose.msra.mxu0 %v4149
      %4169 = vmatmul.f32.gmra.mxu0 %v4145
      %v4170 = vpop.f32.mrf.mxu0
      %v4171 = vadd.f32 0.0, %v4170
      %4172 = vmatmul.f32.gmra.mxu0 %v4147
      %v4173 = vpop.f32.mrf.mxu0
      %v4174 = vadd.f32 0.0, %v4173
      %4175 = vdwg.mxu0
      %4176 = vrot.lane.b32.xlu0 %v419, 112
      %v4177 = vpop.permute.xlu0 %4176
      %4178 = vrot.lane.b32.xlu0 %v422, 112
      %v4179 = vpop.permute.xlu0 %4178
      %4180 = vrot.lane.b32.xlu0 %v419, 80
      %v4181 = vpop.permute.xlu0 %4180
      %4182 = vrot.lane.b32.xlu0 %v422, 80
      %v4183 = vpop.permute.xlu0 %4182
      %v4184 = vsel %vm488, %v4177, 0
      %v4186 = vsel %vm488, %v4179, 0
      %v4188 = vsel %vm488, %v4181, 0
      %v4190 = vsel %vm488, %v4183, 0
      %4192 = vmatpush.xpose.msra.mxu0 0.0
      %4193 = vmatpush.xpose.msra.mxu0 0.0
      %4194 = vmatpush.xpose.msra.mxu0 0.0
      %4195 = vmatpush.xpose.msra.mxu0 0.0
      %4196 = vmatpush.xpose.msra.mxu0 0.0
      %4197 = vmatpush.xpose.msra.mxu0 0.0
      %4198 = vmatpush.xpose.msra.mxu0 0.0
      %4199 = vmatpush.xpose.msra.mxu0 0.0
      %4200 = vmatpush.xpose.msra.mxu0 0.0
      %4201 = vmatpush.xpose.msra.mxu0 0.0
      %4202 = vmatpush.xpose.msra.mxu0 0.0
      %4203 = vmatpush.xpose.msra.mxu0 0.0
      %4204 = vmatpush.xpose.msra.mxu0 0.0
      %4205 = vmatpush.xpose.msra.mxu0 0.0
      %4206 = vmatpush.xpose.msra.mxu0 %v4190
      %4207 = vmatpush.xpose.msra.mxu0 %v4188
      %4208 = vmatmul.f32.gmra.mxu0 %v4184
      %v4209 = vpop.f32.mrf.mxu0
      %v4210 = vadd.f32 0.0, %v4209
      %4211 = vmatmul.f32.gmra.mxu0 %v4186
      %v4212 = vpop.f32.mrf.mxu0
      %v4213 = vadd.f32 0.0, %v4212
      %4214 = vdwg.mxu0
      %4215 = vrot.lane.b32.xlu0 %v425, 112
      %v4216 = vpop.permute.xlu0 %4215
      %4217 = vrot.lane.b32.xlu0 %v428, 112
      %v4218 = vpop.permute.xlu0 %4217
      %4219 = vrot.lane.b32.xlu0 %v425, 80
      %v4220 = vpop.permute.xlu0 %4219
      %4221 = vrot.lane.b32.xlu0 %v428, 80
      %v4222 = vpop.permute.xlu0 %4221
      %v4223 = vsel %vm488, %v4216, 0
      %v4225 = vsel %vm488, %v4218, 0
      %v4227 = vsel %vm488, %v4220, 0
      %v4229 = vsel %vm488, %v4222, 0
      %4231 = vmatpush.xpose.msra.mxu0 0.0
      %4232 = vmatpush.xpose.msra.mxu0 0.0
      %4233 = vmatpush.xpose.msra.mxu0 0.0
      %4234 = vmatpush.xpose.msra.mxu0 0.0
      %4235 = vmatpush.xpose.msra.mxu0 0.0
      %4236 = vmatpush.xpose.msra.mxu0 0.0
      %4237 = vmatpush.xpose.msra.mxu0 0.0
      %4238 = vmatpush.xpose.msra.mxu0 0.0
      %4239 = vmatpush.xpose.msra.mxu0 0.0
      %4240 = vmatpush.xpose.msra.mxu0 0.0
      %4241 = vmatpush.xpose.msra.mxu0 0.0
      %4242 = vmatpush.xpose.msra.mxu0 0.0
      %4243 = vmatpush.xpose.msra.mxu0 0.0
      %4244 = vmatpush.xpose.msra.mxu0 0.0
      %4245 = vmatpush.xpose.msra.mxu0 %v4229
      %4246 = vmatpush.xpose.msra.mxu0 %v4227
      %4247 = vmatmul.f32.gmra.mxu0 %v4223
      %v4248 = vpop.f32.mrf.mxu0
      %v4249 = vadd.f32 0.0, %v4248
      %4250 = vmatmul.f32.gmra.mxu0 %v4225
      %v4251 = vpop.f32.mrf.mxu0
      %v4252 = vadd.f32 0.0, %v4251
      %4253 = vdwg.mxu0
      %4254 = vrot.lane.b32.xlu0 %v431, 112
      %v4255 = vpop.permute.xlu0 %4254
      %4256 = vrot.lane.b32.xlu0 %v434, 112
      %v4257 = vpop.permute.xlu0 %4256
      %4258 = vrot.lane.b32.xlu0 %v431, 80
      %v4259 = vpop.permute.xlu0 %4258
      %4260 = vrot.lane.b32.xlu0 %v434, 80
      %v4261 = vpop.permute.xlu0 %4260
      %v4262 = vsel %vm488, %v4255, 0
      %v4264 = vsel %vm488, %v4257, 0
      %v4266 = vsel %vm488, %v4259, 0
      %v4268 = vsel %vm488, %v4261, 0
      %4270 = vmatpush.xpose.msra.mxu0 0.0
      %4271 = vmatpush.xpose.msra.mxu0 0.0
      %4272 = vmatpush.xpose.msra.mxu0 0.0
      %4273 = vmatpush.xpose.msra.mxu0 0.0
      %4274 = vmatpush.xpose.msra.mxu0 0.0
      %4275 = vmatpush.xpose.msra.mxu0 0.0
      %4276 = vmatpush.xpose.msra.mxu0 0.0
      %4277 = vmatpush.xpose.msra.mxu0 0.0
      %4278 = vmatpush.xpose.msra.mxu0 0.0
      %4279 = vmatpush.xpose.msra.mxu0 0.0
      %4280 = vmatpush.xpose.msra.mxu0 0.0
      %4281 = vmatpush.xpose.msra.mxu0 0.0
      %4282 = vmatpush.xpose.msra.mxu0 0.0
      %4283 = vmatpush.xpose.msra.mxu0 0.0
      %4284 = vmatpush.xpose.msra.mxu0 %v4268
      %4285 = vmatpush.xpose.msra.mxu0 %v4266
      %4286 = vmatmul.f32.gmra.mxu0 %v4262
      %v4287 = vpop.f32.mrf.mxu0
      %v4288 = vadd.f32 0.0, %v4287
      %4289 = vmatmul.f32.gmra.mxu0 %v4264
      %v4290 = vpop.f32.mrf.mxu0
      %v4291 = vadd.f32 0.0, %v4290
      %4292 = vdwg.mxu0
      %4293 = vrot.lane.b32.xlu0 %v437, 112
      %v4294 = vpop.permute.xlu0 %4293
      %4295 = vrot.lane.b32.xlu0 %v440, 112
      %v4296 = vpop.permute.xlu0 %4295
      %4297 = vrot.lane.b32.xlu0 %v437, 80
      %v4298 = vpop.permute.xlu0 %4297
      %4299 = vrot.lane.b32.xlu0 %v440, 80
      %v4300 = vpop.permute.xlu0 %4299
      %v4301 = vsel %vm488, %v4294, 0
      %v4303 = vsel %vm488, %v4296, 0
      %v4305 = vsel %vm488, %v4298, 0
      %v4307 = vsel %vm488, %v4300, 0
      %4309 = vmatpush.xpose.msra.mxu0 0.0
      %4310 = vmatpush.xpose.msra.mxu0 0.0
      %4311 = vmatpush.xpose.msra.mxu0 0.0
      %4312 = vmatpush.xpose.msra.mxu0 0.0
      %4313 = vmatpush.xpose.msra.mxu0 0.0
      %4314 = vmatpush.xpose.msra.mxu0 0.0
      %4315 = vmatpush.xpose.msra.mxu0 0.0
      %4316 = vmatpush.xpose.msra.mxu0 0.0
      %4317 = vmatpush.xpose.msra.mxu0 0.0
      %4318 = vmatpush.xpose.msra.mxu0 0.0
      %4319 = vmatpush.xpose.msra.mxu0 0.0
      %4320 = vmatpush.xpose.msra.mxu0 0.0
      %4321 = vmatpush.xpose.msra.mxu0 0.0
      %4322 = vmatpush.xpose.msra.mxu0 0.0
      %4323 = vmatpush.xpose.msra.mxu0 %v4307
      %4324 = vmatpush.xpose.msra.mxu0 %v4305
      %4325 = vmatmul.f32.gmra.mxu0 %v4301
      %v4326 = vpop.f32.mrf.mxu0
      %v4327 = vadd.f32 0.0, %v4326
      %4328 = vmatmul.f32.gmra.mxu0 %v4303
      %v4329 = vpop.f32.mrf.mxu0
      %v4330 = vadd.f32 0.0, %v4329
      %4331 = vdwg.mxu0
      %4332 = vrot.lane.b32.xlu0 %v443, 112
      %v4333 = vpop.permute.xlu0 %4332
      %4334 = vrot.lane.b32.xlu0 %v446, 112
      %v4335 = vpop.permute.xlu0 %4334
      %4336 = vrot.lane.b32.xlu0 %v443, 80
      %v4337 = vpop.permute.xlu0 %4336
      %4338 = vrot.lane.b32.xlu0 %v446, 80
      %v4339 = vpop.permute.xlu0 %4338
      %v4340 = vsel %vm488, %v4333, 0
      %v4342 = vsel %vm488, %v4335, 0
      %v4344 = vsel %vm488, %v4337, 0
      %v4346 = vsel %vm488, %v4339, 0
      %4348 = vmatpush.xpose.msra.mxu0 0.0
      %4349 = vmatpush.xpose.msra.mxu0 0.0
      %4350 = vmatpush.xpose.msra.mxu0 0.0
      %4351 = vmatpush.xpose.msra.mxu0 0.0
      %4352 = vmatpush.xpose.msra.mxu0 0.0
      %4353 = vmatpush.xpose.msra.mxu0 0.0
      %4354 = vmatpush.xpose.msra.mxu0 0.0
      %4355 = vmatpush.xpose.msra.mxu0 0.0
      %4356 = vmatpush.xpose.msra.mxu0 0.0
      %4357 = vmatpush.xpose.msra.mxu0 0.0
      %4358 = vmatpush.xpose.msra.mxu0 0.0
      %4359 = vmatpush.xpose.msra.mxu0 0.0
      %4360 = vmatpush.xpose.msra.mxu0 0.0
      %4361 = vmatpush.xpose.msra.mxu0 0.0
      %4362 = vmatpush.xpose.msra.mxu0 %v4346
      %4363 = vmatpush.xpose.msra.mxu0 %v4344
      %4364 = vmatmul.f32.gmra.mxu0 %v4340
      %v4365 = vpop.f32.mrf.mxu0
      %v4366 = vadd.f32 0.0, %v4365
      %4367 = vmatmul.f32.gmra.mxu0 %v4342
      %v4368 = vpop.f32.mrf.mxu0
      %v4369 = vadd.f32 0.0, %v4368
      %4370 = vdwg.mxu0
      %4371 = vrot.lane.b32.xlu0 %v449, 112
      %v4372 = vpop.permute.xlu0 %4371
      %4373 = vrot.lane.b32.xlu0 %v452, 112
      %v4374 = vpop.permute.xlu0 %4373
      %4375 = vrot.lane.b32.xlu0 %v449, 80
      %v4376 = vpop.permute.xlu0 %4375
      %4377 = vrot.lane.b32.xlu0 %v452, 80
      %v4378 = vpop.permute.xlu0 %4377
      %v4379 = vsel %vm488, %v4372, 0
      %v4381 = vsel %vm488, %v4374, 0
      %v4383 = vsel %vm488, %v4376, 0
      %v4385 = vsel %vm488, %v4378, 0
      %4387 = vmatpush.xpose.msra.mxu0 0.0
      %4388 = vmatpush.xpose.msra.mxu0 0.0
      %4389 = vmatpush.xpose.msra.mxu0 0.0
      %4390 = vmatpush.xpose.msra.mxu0 0.0
      %4391 = vmatpush.xpose.msra.mxu0 0.0
      %4392 = vmatpush.xpose.msra.mxu0 0.0
      %4393 = vmatpush.xpose.msra.mxu0 0.0
      %4394 = vmatpush.xpose.msra.mxu0 0.0
      %4395 = vmatpush.xpose.msra.mxu0 0.0
      %4396 = vmatpush.xpose.msra.mxu0 0.0
      %4397 = vmatpush.xpose.msra.mxu0 0.0
      %4398 = vmatpush.xpose.msra.mxu0 0.0
      %4399 = vmatpush.xpose.msra.mxu0 0.0
      %4400 = vmatpush.xpose.msra.mxu0 0.0
      %4401 = vmatpush.xpose.msra.mxu0 %v4385
      %4402 = vmatpush.xpose.msra.mxu0 %v4383
      %4403 = vmatmul.f32.gmra.mxu0 %v4379
      %v4404 = vpop.f32.mrf.mxu0
      %v4405 = vadd.f32 0.0, %v4404
      %4406 = vmatmul.f32.gmra.mxu0 %v4381
      %v4407 = vpop.f32.mrf.mxu0
      %v4408 = vadd.f32 0.0, %v4407
      %4409 = vdwg.mxu0
      %4410 = vrot.lane.b32.xlu0 %v455, 112
      %v4411 = vpop.permute.xlu0 %4410
      %4412 = vrot.lane.b32.xlu0 %v458, 112
      %v4413 = vpop.permute.xlu0 %4412
      %4414 = vrot.lane.b32.xlu0 %v455, 80
      %v4415 = vpop.permute.xlu0 %4414
      %4416 = vrot.lane.b32.xlu0 %v458, 80
      %v4417 = vpop.permute.xlu0 %4416
      %v4418 = vsel %vm488, %v4411, 0
      %v4420 = vsel %vm488, %v4413, 0
      %v4422 = vsel %vm488, %v4415, 0
      %v4424 = vsel %vm488, %v4417, 0
      %4426 = vmatpush.xpose.msra.mxu0 0.0
      %4427 = vmatpush.xpose.msra.mxu0 0.0
      %4428 = vmatpush.xpose.msra.mxu0 0.0
      %4429 = vmatpush.xpose.msra.mxu0 0.0
      %4430 = vmatpush.xpose.msra.mxu0 0.0
      %4431 = vmatpush.xpose.msra.mxu0 0.0
      %4432 = vmatpush.xpose.msra.mxu0 0.0
      %4433 = vmatpush.xpose.msra.mxu0 0.0
      %4434 = vmatpush.xpose.msra.mxu0 0.0
      %4435 = vmatpush.xpose.msra.mxu0 0.0
      %4436 = vmatpush.xpose.msra.mxu0 0.0
      %4437 = vmatpush.xpose.msra.mxu0 0.0
      %4438 = vmatpush.xpose.msra.mxu0 0.0
      %4439 = vmatpush.xpose.msra.mxu0 0.0
      %4440 = vmatpush.xpose.msra.mxu0 %v4424
      %4441 = vmatpush.xpose.msra.mxu0 %v4422
      %4442 = vmatmul.f32.gmra.mxu0 %v4418
      %v4443 = vpop.f32.mrf.mxu0
      %v4444 = vadd.f32 0.0, %v4443
      %4445 = vmatmul.f32.gmra.mxu0 %v4420
      %v4446 = vpop.f32.mrf.mxu0
      %v4447 = vadd.f32 0.0, %v4446
      %4448 = vdwg.mxu0
      %4449 = vrot.lane.b32.xlu0 %v461, 112
      %v4450 = vpop.permute.xlu0 %4449
      %4451 = vrot.lane.b32.xlu0 %v464, 112
      %v4452 = vpop.permute.xlu0 %4451
      %4453 = vrot.lane.b32.xlu0 %v461, 80
      %v4454 = vpop.permute.xlu0 %4453
      %4455 = vrot.lane.b32.xlu0 %v464, 80
      %v4456 = vpop.permute.xlu0 %4455
      %v4457 = vsel %vm488, %v4450, 0
      %v4459 = vsel %vm488, %v4452, 0
      %v4461 = vsel %vm488, %v4454, 0
      %v4463 = vsel %vm488, %v4456, 0
      %4465 = vmatpush.xpose.msra.mxu0 0.0
      %4466 = vmatpush.xpose.msra.mxu0 0.0
      %4467 = vmatpush.xpose.msra.mxu0 0.0
      %4468 = vmatpush.xpose.msra.mxu0 0.0
      %4469 = vmatpush.xpose.msra.mxu0 0.0
      %4470 = vmatpush.xpose.msra.mxu0 0.0
      %4471 = vmatpush.xpose.msra.mxu0 0.0
      %4472 = vmatpush.xpose.msra.mxu0 0.0
      %4473 = vmatpush.xpose.msra.mxu0 0.0
      %4474 = vmatpush.xpose.msra.mxu0 0.0
      %4475 = vmatpush.xpose.msra.mxu0 0.0
      %4476 = vmatpush.xpose.msra.mxu0 0.0
      %4477 = vmatpush.xpose.msra.mxu0 0.0
      %4478 = vmatpush.xpose.msra.mxu0 0.0
      %4479 = vmatpush.xpose.msra.mxu0 %v4463
      %4480 = vmatpush.xpose.msra.mxu0 %v4461
      %4481 = vmatmul.f32.gmra.mxu0 %v4457
      %v4482 = vpop.f32.mrf.mxu0
      %v4483 = vadd.f32 0.0, %v4482
      %4484 = vmatmul.f32.gmra.mxu0 %v4459
      %v4485 = vpop.f32.mrf.mxu0
      %v4486 = vadd.f32 0.0, %v4485
      %4487 = vdwg.mxu0
      %4488 = vrot.lane.b32.xlu0 %v467, 112
      %v4489 = vpop.permute.xlu0 %4488
      %4490 = vrot.lane.b32.xlu0 %v470, 112
      %v4491 = vpop.permute.xlu0 %4490
      %4492 = vrot.lane.b32.xlu0 %v467, 80
      %v4493 = vpop.permute.xlu0 %4492
      %4494 = vrot.lane.b32.xlu0 %v470, 80
      %v4495 = vpop.permute.xlu0 %4494
      %v4496 = vsel %vm488, %v4489, 0
      %v4498 = vsel %vm488, %v4491, 0
      %v4500 = vsel %vm488, %v4493, 0
      %v4502 = vsel %vm488, %v4495, 0
      %4504 = vmatpush.xpose.msra.mxu0 0.0
      %4505 = vmatpush.xpose.msra.mxu0 0.0
      %4506 = vmatpush.xpose.msra.mxu0 0.0
      %4507 = vmatpush.xpose.msra.mxu0 0.0
      %4508 = vmatpush.xpose.msra.mxu0 0.0
      %4509 = vmatpush.xpose.msra.mxu0 0.0
      %4510 = vmatpush.xpose.msra.mxu0 0.0
      %4511 = vmatpush.xpose.msra.mxu0 0.0
      %4512 = vmatpush.xpose.msra.mxu0 0.0
      %4513 = vmatpush.xpose.msra.mxu0 0.0
      %4514 = vmatpush.xpose.msra.mxu0 0.0
      %4515 = vmatpush.xpose.msra.mxu0 0.0
      %4516 = vmatpush.xpose.msra.mxu0 0.0
      %4517 = vmatpush.xpose.msra.mxu0 0.0
      %4518 = vmatpush.xpose.msra.mxu0 %v4502
      %4519 = vmatpush.xpose.msra.mxu0 %v4500
      %4520 = vmatmul.f32.gmra.mxu0 %v4496
      %v4521 = vpop.f32.mrf.mxu0
      %v4522 = vadd.f32 0.0, %v4521
      %4523 = vmatmul.f32.gmra.mxu0 %v4498
      %v4524 = vpop.f32.mrf.mxu0
      %v4525 = vadd.f32 0.0, %v4524
      %4526 = vdwg.mxu0
      %4527 = vrot.lane.b32.xlu0 %v473, 112
      %v4528 = vpop.permute.xlu0 %4527
      %4529 = vrot.lane.b32.xlu0 %v476, 112
      %v4530 = vpop.permute.xlu0 %4529
      %4531 = vrot.lane.b32.xlu0 %v473, 80
      %v4532 = vpop.permute.xlu0 %4531
      %4533 = vrot.lane.b32.xlu0 %v476, 80
      %v4534 = vpop.permute.xlu0 %4533
      %v4535 = vsel %vm488, %v4528, 0
      %v4537 = vsel %vm488, %v4530, 0
      %v4539 = vsel %vm488, %v4532, 0
      %v4541 = vsel %vm488, %v4534, 0
      %4543 = vmatpush.xpose.msra.mxu0 0.0
      %4544 = vmatpush.xpose.msra.mxu0 0.0
      %4545 = vmatpush.xpose.msra.mxu0 0.0
      %4546 = vmatpush.xpose.msra.mxu0 0.0
      %4547 = vmatpush.xpose.msra.mxu0 0.0
      %4548 = vmatpush.xpose.msra.mxu0 0.0
      %4549 = vmatpush.xpose.msra.mxu0 0.0
      %4550 = vmatpush.xpose.msra.mxu0 0.0
      %4551 = vmatpush.xpose.msra.mxu0 0.0
      %4552 = vmatpush.xpose.msra.mxu0 0.0
      %4553 = vmatpush.xpose.msra.mxu0 0.0
      %4554 = vmatpush.xpose.msra.mxu0 0.0
      %4555 = vmatpush.xpose.msra.mxu0 0.0
      %4556 = vmatpush.xpose.msra.mxu0 0.0
      %4557 = vmatpush.xpose.msra.mxu0 %v4541
      %4558 = vmatpush.xpose.msra.mxu0 %v4539
      %4559 = vmatmul.f32.gmra.mxu0 %v4535
      %v4560 = vpop.f32.mrf.mxu0
      %v4561 = vadd.f32 0.0, %v4560
      %4562 = vmatmul.f32.gmra.mxu0 %v4537
      %v4563 = vpop.f32.mrf.mxu0
      %v4564 = vadd.f32 0.0, %v4563
      %4565 = vdwg.mxu0
      %v4566 = vsel %vm1075, %v3976, -inf
      %4567 = vmax.xlane.f32.xlu0 %v4566
      %v4568 = vpop.xlane.xlu0 %4567
      %v4569 = vsel %vm1075, %v3979, -inf
      %4570 = vmax.xlane.f32.xlu0 %v4569
      %v4571 = vpop.xlane.xlu0 %4570
      %v4572 = vsel %vm1075, %v4015, -inf
      %4573 = vmax.xlane.f32.xlu0 %v4572
      %v4574 = vpop.xlane.xlu0 %4573
      %v4575 = vsel %vm1075, %v4018, -inf
      %4576 = vmax.xlane.f32.xlu0 %v4575
      %v4577 = vpop.xlane.xlu0 %4576
      %v4578 = vsel %vm1075, %v4054, -inf
      %4579 = vmax.xlane.f32.xlu0 %v4578
      %v4580 = vpop.xlane.xlu0 %4579
      %v4581 = vsel %vm1075, %v4057, -inf
      %4582 = vmax.xlane.f32.xlu0 %v4581
      %v4583 = vpop.xlane.xlu0 %4582
      %v4584 = vsel %vm1075, %v4093, -inf
      %4585 = vmax.xlane.f32.xlu0 %v4584
      %v4586 = vpop.xlane.xlu0 %4585
      %v4587 = vsel %vm1075, %v4096, -inf
      %4588 = vmax.xlane.f32.xlu0 %v4587
      %v4589 = vpop.xlane.xlu0 %4588
      %v4590 = vsel %vm1075, %v4132, -inf
      %4591 = vmax.xlane.f32.xlu0 %v4590
      %v4592 = vpop.xlane.xlu0 %4591
      %v4593 = vsel %vm1075, %v4135, -inf
      %4594 = vmax.xlane.f32.xlu0 %v4593
      %v4595 = vpop.xlane.xlu0 %4594
      %v4596 = vsel %vm1075, %v4171, -inf
      %4597 = vmax.xlane.f32.xlu0 %v4596
      %v4598 = vpop.xlane.xlu0 %4597
      %v4599 = vsel %vm1075, %v4174, -inf
      %4600 = vmax.xlane.f32.xlu0 %v4599
      %v4601 = vpop.xlane.xlu0 %4600
      %v4602 = vsel %vm1075, %v4210, -inf
      %4603 = vmax.xlane.f32.xlu0 %v4602
      %v4604 = vpop.xlane.xlu0 %4603
      %v4605 = vsel %vm1075, %v4213, -inf
      %4606 = vmax.xlane.f32.xlu0 %v4605
      %v4607 = vpop.xlane.xlu0 %4606
      %v4608 = vsel %vm1075, %v4249, -inf
      %4609 = vmax.xlane.f32.xlu0 %v4608
      %v4610 = vpop.xlane.xlu0 %4609
      %v4611 = vsel %vm1075, %v4252, -inf
      %4612 = vmax.xlane.f32.xlu0 %v4611
      %v4613 = vpop.xlane.xlu0 %4612
      %v4614 = vsel %vm1075, %v4288, -inf
      %4615 = vmax.xlane.f32.xlu0 %v4614
      %v4616 = vpop.xlane.xlu0 %4615
      %v4617 = vsel %vm1075, %v4291, -inf
      %4618 = vmax.xlane.f32.xlu0 %v4617
      %v4619 = vpop.xlane.xlu0 %4618
      %v4620 = vsel %vm1075, %v4327, -inf
      %4621 = vmax.xlane.f32.xlu0 %v4620
      %v4622 = vpop.xlane.xlu0 %4621
      %v4623 = vsel %vm1075, %v4330, -inf
      %4624 = vmax.xlane.f32.xlu0 %v4623
      %v4625 = vpop.xlane.xlu0 %4624
      %v4626 = vsel %vm1075, %v4366, -inf
      %4627 = vmax.xlane.f32.xlu0 %v4626
      %v4628 = vpop.xlane.xlu0 %4627
      %v4629 = vsel %vm1075, %v4369, -inf
      %4630 = vmax.xlane.f32.xlu0 %v4629
      %v4631 = vpop.xlane.xlu0 %4630
      %v4632 = vsel %vm1075, %v4405, -inf
      %4633 = vmax.xlane.f32.xlu0 %v4632
      %v4634 = vpop.xlane.xlu0 %4633
      %v4635 = vsel %vm1075, %v4408, -inf
      %4636 = vmax.xlane.f32.xlu0 %v4635
      %v4637 = vpop.xlane.xlu0 %4636
      %v4638 = vsel %vm1075, %v4444, -inf
      %4639 = vmax.xlane.f32.xlu0 %v4638
      %v4640 = vpop.xlane.xlu0 %4639
      %v4641 = vsel %vm1075, %v4447, -inf
      %4642 = vmax.xlane.f32.xlu0 %v4641
      %v4643 = vpop.xlane.xlu0 %4642
      %v4644 = vsel %vm1075, %v4483, -inf
      %4645 = vmax.xlane.f32.xlu0 %v4644
      %v4646 = vpop.xlane.xlu0 %4645
      %v4647 = vsel %vm1075, %v4486, -inf
      %4648 = vmax.xlane.f32.xlu0 %v4647
      %v4649 = vpop.xlane.xlu0 %4648
      %v4650 = vsel %vm1075, %v4522, -inf
      %4651 = vmax.xlane.f32.xlu0 %v4650
      %v4652 = vpop.xlane.xlu0 %4651
      %v4653 = vsel %vm1075, %v4525, -inf
      %4654 = vmax.xlane.f32.xlu0 %v4653
      %v4655 = vpop.xlane.xlu0 %4654
      %v4656 = vsel %vm1075, %v4561, -inf
      %4657 = vmax.xlane.f32.xlu0 %v4656
      %v4658 = vpop.xlane.xlu0 %4657
      %v4659 = vsel %vm1075, %v4564, -inf
      %4660 = vmax.xlane.f32.xlu0 %v4659
      %v4661 = vpop.xlane.xlu0 %4660
      %v4662 = vsub.f32 %v3976, %v4568
      %v4663 = vsub.f32 %v3979, %v4571
      %v4664 = vsub.f32 %v4015, %v4574
      %v4665 = vsub.f32 %v4018, %v4577
      %v4666 = vsub.f32 %v4054, %v4580
      %v4667 = vsub.f32 %v4057, %v4583
      %v4668 = vsub.f32 %v4093, %v4586
      %v4669 = vsub.f32 %v4096, %v4589
      %v4670 = vsub.f32 %v4132, %v4592
      %v4671 = vsub.f32 %v4135, %v4595
      %v4672 = vsub.f32 %v4171, %v4598
      %v4673 = vsub.f32 %v4174, %v4601
      %v4674 = vsub.f32 %v4210, %v4604
      %v4675 = vsub.f32 %v4213, %v4607
      %v4676 = vsub.f32 %v4249, %v4610
      %v4677 = vsub.f32 %v4252, %v4613
      %v4678 = vsub.f32 %v4288, %v4616
      %v4679 = vsub.f32 %v4291, %v4619
      %v4680 = vsub.f32 %v4327, %v4622
      %v4681 = vsub.f32 %v4330, %v4625
      %v4682 = vsub.f32 %v4366, %v4628
      %v4683 = vsub.f32 %v4369, %v4631
      %v4684 = vsub.f32 %v4405, %v4634
      %v4685 = vsub.f32 %v4408, %v4637
      %v4686 = vsub.f32 %v4444, %v4640
      %v4687 = vsub.f32 %v4447, %v4643
      %v4688 = vsub.f32 %v4483, %v4646
      %v4689 = vsub.f32 %v4486, %v4649
      %v4690 = vsub.f32 %v4522, %v4652
      %v4691 = vsub.f32 %v4525, %v4655
      %v4692 = vsub.f32 %v4561, %v4658
      %v4693 = vsub.f32 %v4564, %v4661
      %v4694 = vmul.f32 %v4662, 1.442695
      %v4695 = vpow.pop %v4694
      %v4696 = vmul.f32 %v4663, 1.442695
      %v4697 = vpow.pop %v4696
      %v4698 = vmul.f32 %v4664, 1.442695
      %v4699 = vpow.pop %v4698
      %v4700 = vmul.f32 %v4665, 1.442695
      %v4701 = vpow.pop %v4700
      %v4702 = vmul.f32 %v4666, 1.442695
      %v4703 = vpow.pop %v4702
      %v4704 = vmul.f32 %v4667, 1.442695
      %v4705 = vpow.pop %v4704
      %v4706 = vmul.f32 %v4668, 1.442695
      %v4707 = vpow.pop %v4706
      %v4708 = vmul.f32 %v4669, 1.442695
      %v4709 = vpow.pop %v4708
      %v4710 = vmul.f32 %v4670, 1.442695
      %v4711 = vpow.pop %v4710
      %v4712 = vmul.f32 %v4671, 1.442695
      %v4713 = vpow.pop %v4712
      %v4714 = vmul.f32 %v4672, 1.442695
      %v4715 = vpow.pop %v4714
      %v4716 = vmul.f32 %v4673, 1.442695
      %v4717 = vpow.pop %v4716
      %v4718 = vmul.f32 %v4674, 1.442695
      %v4719 = vpow.pop %v4718
      %v4720 = vmul.f32 %v4675, 1.442695
      %v4721 = vpow.pop %v4720
      %v4722 = vmul.f32 %v4676, 1.442695
      %v4723 = vpow.pop %v4722
      %v4724 = vmul.f32 %v4677, 1.442695
      %v4725 = vpow.pop %v4724
      %v4726 = vmul.f32 %v4678, 1.442695
      %v4727 = vpow.pop %v4726
      %v4728 = vmul.f32 %v4679, 1.442695
      %v4729 = vpow.pop %v4728
      %v4730 = vmul.f32 %v4680, 1.442695
      %v4731 = vpow.pop %v4730
      %v4732 = vmul.f32 %v4681, 1.442695
      %v4733 = vpow.pop %v4732
      %v4734 = vmul.f32 %v4682, 1.442695
      %v4735 = vpow.pop %v4734
      %v4736 = vmul.f32 %v4683, 1.442695
      %v4737 = vpow.pop %v4736
      %v4738 = vmul.f32 %v4684, 1.442695
      %v4739 = vpow.pop %v4738
      %v4740 = vmul.f32 %v4685, 1.442695
      %v4741 = vpow.pop %v4740
      %v4742 = vmul.f32 %v4686, 1.442695
      %v4743 = vpow.pop %v4742
      %v4744 = vmul.f32 %v4687, 1.442695
      %v4745 = vpow.pop %v4744
      %v4746 = vmul.f32 %v4688, 1.442695
      %v4747 = vpow.pop %v4746
      %v4748 = vmul.f32 %v4689, 1.442695
      %v4749 = vpow.pop %v4748
      %v4750 = vmul.f32 %v4690, 1.442695
      %v4751 = vpow.pop %v4750
      %v4752 = vmul.f32 %v4691, 1.442695
      %v4753 = vpow.pop %v4752
      %v4754 = vmul.f32 %v4692, 1.442695
      %v4755 = vpow.pop %v4754
      %v4756 = vmul.f32 %v4693, 1.442695
      %v4757 = vpow.pop %v4756
      %v4758 = vsel %vm1075, %v4695, 0.0
      %4759 = vadd.xlane.f32.xlu0 %v4758
      %v4760 = vpop.xlane.xlu0 %4759
      %v4761 = vsel %vm1075, %v4697, 0.0
      %4762 = vadd.xlane.f32.xlu0 %v4761
      %v4763 = vpop.xlane.xlu0 %4762
      %v4764 = vsel %vm1075, %v4699, 0.0
      %4765 = vadd.xlane.f32.xlu0 %v4764
      %v4766 = vpop.xlane.xlu0 %4765
      %v4767 = vsel %vm1075, %v4701, 0.0
      %4768 = vadd.xlane.f32.xlu0 %v4767
      %v4769 = vpop.xlane.xlu0 %4768
      %v4770 = vsel %vm1075, %v4703, 0.0
      %4771 = vadd.xlane.f32.xlu0 %v4770
      %v4772 = vpop.xlane.xlu0 %4771
      %v4773 = vsel %vm1075, %v4705, 0.0
      %4774 = vadd.xlane.f32.xlu0 %v4773
      %v4775 = vpop.xlane.xlu0 %4774
      %v4776 = vsel %vm1075, %v4707, 0.0
      %4777 = vadd.xlane.f32.xlu0 %v4776
      %v4778 = vpop.xlane.xlu0 %4777
      %v4779 = vsel %vm1075, %v4709, 0.0
      %4780 = vadd.xlane.f32.xlu0 %v4779
      %v4781 = vpop.xlane.xlu0 %4780
      %v4782 = vsel %vm1075, %v4711, 0.0
      %4783 = vadd.xlane.f32.xlu0 %v4782
      %v4784 = vpop.xlane.xlu0 %4783
      %v4785 = vsel %vm1075, %v4713, 0.0
      %4786 = vadd.xlane.f32.xlu0 %v4785
      %v4787 = vpop.xlane.xlu0 %4786
      %v4788 = vsel %vm1075, %v4715, 0.0
      %4789 = vadd.xlane.f32.xlu0 %v4788
      %v4790 = vpop.xlane.xlu0 %4789
      %v4791 = vsel %vm1075, %v4717, 0.0
      %4792 = vadd.xlane.f32.xlu0 %v4791
      %v4793 = vpop.xlane.xlu0 %4792
      %v4794 = vsel %vm1075, %v4719, 0.0
      %4795 = vadd.xlane.f32.xlu0 %v4794
      %v4796 = vpop.xlane.xlu0 %4795
      %v4797 = vsel %vm1075, %v4721, 0.0
      %4798 = vadd.xlane.f32.xlu0 %v4797
      %v4799 = vpop.xlane.xlu0 %4798
      %v4800 = vsel %vm1075, %v4723, 0.0
      %4801 = vadd.xlane.f32.xlu0 %v4800
      %v4802 = vpop.xlane.xlu0 %4801
      %v4803 = vsel %vm1075, %v4725, 0.0
      %4804 = vadd.xlane.f32.xlu0 %v4803
      %v4805 = vpop.xlane.xlu0 %4804
      %v4806 = vsel %vm1075, %v4727, 0.0
      %4807 = vadd.xlane.f32.xlu0 %v4806
      %v4808 = vpop.xlane.xlu0 %4807
      %v4809 = vsel %vm1075, %v4729, 0.0
      %4810 = vadd.xlane.f32.xlu0 %v4809
      %v4811 = vpop.xlane.xlu0 %4810
      %v4812 = vsel %vm1075, %v4731, 0.0
      %4813 = vadd.xlane.f32.xlu0 %v4812
      %v4814 = vpop.xlane.xlu0 %4813
      %v4815 = vsel %vm1075, %v4733, 0.0
      %4816 = vadd.xlane.f32.xlu0 %v4815
      %v4817 = vpop.xlane.xlu0 %4816
      %v4818 = vsel %vm1075, %v4735, 0.0
      %4819 = vadd.xlane.f32.xlu0 %v4818
      %v4820 = vpop.xlane.xlu0 %4819
      %v4821 = vsel %vm1075, %v4737, 0.0
      %4822 = vadd.xlane.f32.xlu0 %v4821
      %v4823 = vpop.xlane.xlu0 %4822
      %v4824 = vsel %vm1075, %v4739, 0.0
      %4825 = vadd.xlane.f32.xlu0 %v4824
      %v4826 = vpop.xlane.xlu0 %4825
      %v4827 = vsel %vm1075, %v4741, 0.0
      %4828 = vadd.xlane.f32.xlu0 %v4827
      %v4829 = vpop.xlane.xlu0 %4828
      %v4830 = vsel %vm1075, %v4743, 0.0
      %4831 = vadd.xlane.f32.xlu0 %v4830
      %v4832 = vpop.xlane.xlu0 %4831
      %v4833 = vsel %vm1075, %v4745, 0.0
      %4834 = vadd.xlane.f32.xlu0 %v4833
      %v4835 = vpop.xlane.xlu0 %4834
      %v4836 = vsel %vm1075, %v4747, 0.0
      %4837 = vadd.xlane.f32.xlu0 %v4836
      %v4838 = vpop.xlane.xlu0 %4837
      %v4839 = vsel %vm1075, %v4749, 0.0
      %4840 = vadd.xlane.f32.xlu0 %v4839
      %v4841 = vpop.xlane.xlu0 %4840
      %v4842 = vsel %vm1075, %v4751, 0.0
      %4843 = vadd.xlane.f32.xlu0 %v4842
      %v4844 = vpop.xlane.xlu0 %4843
      %v4845 = vsel %vm1075, %v4753, 0.0
      %4846 = vadd.xlane.f32.xlu0 %v4845
      %v4847 = vpop.xlane.xlu0 %4846
      %v4848 = vsel %vm1075, %v4755, 0.0
      %4849 = vadd.xlane.f32.xlu0 %v4848
      %v4850 = vpop.xlane.xlu0 %4849
      %v4851 = vsel %vm1075, %v4757, 0.0
      %4852 = vadd.xlane.f32.xlu0 %v4851
      %v4853 = vpop.xlane.xlu0 %4852
      %v4854 = vrcp.pop %v4760
      %v4855 = vrcp.pop %v4763
      %v4856 = vrcp.pop %v4766
      %v4857 = vrcp.pop %v4769
      %v4858 = vrcp.pop %v4772
      %v4859 = vrcp.pop %v4775
      %v4860 = vrcp.pop %v4778
      %v4861 = vrcp.pop %v4781
      %v4862 = vrcp.pop %v4784
      %v4863 = vrcp.pop %v4787
      %v4864 = vrcp.pop %v4790
      %v4865 = vrcp.pop %v4793
      %v4866 = vrcp.pop %v4796
      %v4867 = vrcp.pop %v4799
      %v4868 = vrcp.pop %v4802
      %v4869 = vrcp.pop %v4805
      %v4870 = vrcp.pop %v4808
      %v4871 = vrcp.pop %v4811
      %v4872 = vrcp.pop %v4814
      %v4873 = vrcp.pop %v4817
      %v4874 = vrcp.pop %v4820
      %v4875 = vrcp.pop %v4823
      %v4876 = vrcp.pop %v4826
      %v4877 = vrcp.pop %v4829
      %v4878 = vrcp.pop %v4832
      %v4879 = vrcp.pop %v4835
      %v4880 = vrcp.pop %v4838
      %v4881 = vrcp.pop %v4841
      %v4882 = vrcp.pop %v4844
      %v4883 = vrcp.pop %v4847
      %v4884 = vrcp.pop %v4850
      %v4885 = vrcp.pop %v4853
      %v4886 = vmul.f32 %v4695, %v4854
      %v4887 = vmul.f32 %v4697, %v4855
      %v4888 = vmul.f32 %v4699, %v4856
      %v4889 = vmul.f32 %v4701, %v4857
      %v4890 = vmul.f32 %v4703, %v4858
      %v4891 = vmul.f32 %v4705, %v4859
      %v4892 = vmul.f32 %v4707, %v4860
      %v4893 = vmul.f32 %v4709, %v4861
      %v4894 = vmul.f32 %v4711, %v4862
      %v4895 = vmul.f32 %v4713, %v4863
      %v4896 = vmul.f32 %v4715, %v4864
      %v4897 = vmul.f32 %v4717, %v4865
      %v4898 = vmul.f32 %v4719, %v4866
      %v4899 = vmul.f32 %v4721, %v4867
      %v4900 = vmul.f32 %v4723, %v4868
      %v4901 = vmul.f32 %v4725, %v4869
      %v4902 = vmul.f32 %v4727, %v4870
      %v4903 = vmul.f32 %v4729, %v4871
      %v4904 = vmul.f32 %v4731, %v4872
      %v4905 = vmul.f32 %v4733, %v4873
      %v4906 = vmul.f32 %v4735, %v4874
      %v4907 = vmul.f32 %v4737, %v4875
      %v4908 = vmul.f32 %v4739, %v4876
      %v4909 = vmul.f32 %v4741, %v4877
      %v4910 = vmul.f32 %v4743, %v4878
      %v4911 = vmul.f32 %v4745, %v4879
      %v4912 = vmul.f32 %v4747, %v4880
      %v4913 = vmul.f32 %v4749, %v4881
      %v4914 = vmul.f32 %v4751, %v4882
      %v4915 = vmul.f32 %v4753, %v4883
      %v4916 = vmul.f32 %v4755, %v4884
      %v4917 = vmul.f32 %v4757, %v4885
      %4918 = vrot.lane.b32.xlu0 %v383, 48
      %v4919 = vpop.permute.xlu0 %4918
      %4920 = vrot.lane.b32.xlu0 %v386, 48
      %v4921 = vpop.permute.xlu0 %4920
      %v4925 = vsel %vm1075, %v4886, 0
      %v4928 = vsel %vm1075, %v4887, 0
      %4930 = vmatpush.msra.mxu0 0.0
      %4931 = vmatpush.msra.mxu0 0.0
      %4932 = vmatpush.msra.mxu0 0.0
      %4933 = vmatpush.msra.mxu0 0.0
      %4934 = vmatpush.msra.mxu0 0.0
      %4935 = vmatpush.msra.mxu0 0.0
      %4936 = vmatpush.msra.mxu0 0.0
      %4937 = vmatpush.msra.mxu0 0.0
      %4938 = vmatpush.msra.mxu0 0.0
      %4939 = vmatpush.msra.mxu0 0.0
      %4940 = vmatpush.msra.mxu0 0.0
      %4941 = vmatpush.msra.mxu0 0.0
      %4942 = vmatpush.msra.mxu0 0.0
      %4943 = vmatpush.msra.mxu0 0.0
      %4944 = vmatpush.msra.mxu0 %v4921
      %4945 = vmatpush.msra.mxu0 %v4919
      %4946 = vmatmul.f32.gmra.mxu0 %v4925
      %v4947 = vpop.f32.mrf.mxu0
      %v4948 = vadd.f32 0.0, %v4947
      %4949 = vmatmul.f32.gmra.mxu0 %v4928
      %v4950 = vpop.f32.mrf.mxu0
      %v4951 = vadd.f32 0.0, %v4950
      %4952 = vdwg.mxu0
      %4953 = vrot.lane.b32.xlu0 %v389, 48
      %v4954 = vpop.permute.xlu0 %4953
      %4955 = vrot.lane.b32.xlu0 %v392, 48
      %v4956 = vpop.permute.xlu0 %4955
      %v4960 = vsel %vm1075, %v4888, 0
      %v4963 = vsel %vm1075, %v4889, 0
      %4965 = vmatpush.msra.mxu0 0.0
      %4966 = vmatpush.msra.mxu0 0.0
      %4967 = vmatpush.msra.mxu0 0.0
      %4968 = vmatpush.msra.mxu0 0.0
      %4969 = vmatpush.msra.mxu0 0.0
      %4970 = vmatpush.msra.mxu0 0.0
      %4971 = vmatpush.msra.mxu0 0.0
      %4972 = vmatpush.msra.mxu0 0.0
      %4973 = vmatpush.msra.mxu0 0.0
      %4974 = vmatpush.msra.mxu0 0.0
      %4975 = vmatpush.msra.mxu0 0.0
      %4976 = vmatpush.msra.mxu0 0.0
      %4977 = vmatpush.msra.mxu0 0.0
      %4978 = vmatpush.msra.mxu0 0.0
      %4979 = vmatpush.msra.mxu0 %v4956
      %4980 = vmatpush.msra.mxu0 %v4954
      %4981 = vmatmul.f32.gmra.mxu0 %v4960
      %v4982 = vpop.f32.mrf.mxu0
      %v4983 = vadd.f32 0.0, %v4982
      %4984 = vmatmul.f32.gmra.mxu0 %v4963
      %v4985 = vpop.f32.mrf.mxu0
      %v4986 = vadd.f32 0.0, %v4985
      %4987 = vdwg.mxu0
      %4988 = vrot.lane.b32.xlu0 %v395, 48
      %v4989 = vpop.permute.xlu0 %4988
      %4990 = vrot.lane.b32.xlu0 %v398, 48
      %v4991 = vpop.permute.xlu0 %4990
      %v4995 = vsel %vm1075, %v4890, 0
      %v4998 = vsel %vm1075, %v4891, 0
      %5000 = vmatpush.msra.mxu0 0.0
      %5001 = vmatpush.msra.mxu0 0.0
      %5002 = vmatpush.msra.mxu0 0.0
      %5003 = vmatpush.msra.mxu0 0.0
      %5004 = vmatpush.msra.mxu0 0.0
      %5005 = vmatpush.msra.mxu0 0.0
      %5006 = vmatpush.msra.mxu0 0.0
      %5007 = vmatpush.msra.mxu0 0.0
      %5008 = vmatpush.msra.mxu0 0.0
      %5009 = vmatpush.msra.mxu0 0.0
      %5010 = vmatpush.msra.mxu0 0.0
      %5011 = vmatpush.msra.mxu0 0.0
      %5012 = vmatpush.msra.mxu0 0.0
      %5013 = vmatpush.msra.mxu0 0.0
      %5014 = vmatpush.msra.mxu0 %v4991
      %5015 = vmatpush.msra.mxu0 %v4989
      %5016 = vmatmul.f32.gmra.mxu0 %v4995
      %v5017 = vpop.f32.mrf.mxu0
      %v5018 = vadd.f32 0.0, %v5017
      %5019 = vmatmul.f32.gmra.mxu0 %v4998
      %v5020 = vpop.f32.mrf.mxu0
      %v5021 = vadd.f32 0.0, %v5020
      %5022 = vdwg.mxu0
      %5023 = vrot.lane.b32.xlu0 %v401, 48
      %v5024 = vpop.permute.xlu0 %5023
      %5025 = vrot.lane.b32.xlu0 %v404, 48
      %v5026 = vpop.permute.xlu0 %5025
      %v5030 = vsel %vm1075, %v4892, 0
      %v5033 = vsel %vm1075, %v4893, 0
      %5035 = vmatpush.msra.mxu0 0.0
      %5036 = vmatpush.msra.mxu0 0.0
      %5037 = vmatpush.msra.mxu0 0.0
      %5038 = vmatpush.msra.mxu0 0.0
      %5039 = vmatpush.msra.mxu0 0.0
      %5040 = vmatpush.msra.mxu0 0.0
      %5041 = vmatpush.msra.mxu0 0.0
      %5042 = vmatpush.msra.mxu0 0.0
      %5043 = vmatpush.msra.mxu0 0.0
      %5044 = vmatpush.msra.mxu0 0.0
      %5045 = vmatpush.msra.mxu0 0.0
      %5046 = vmatpush.msra.mxu0 0.0
      %5047 = vmatpush.msra.mxu0 0.0
      %5048 = vmatpush.msra.mxu0 0.0
      %5049 = vmatpush.msra.mxu0 %v5026
      %5050 = vmatpush.msra.mxu0 %v5024
      %5051 = vmatmul.f32.gmra.mxu0 %v5030
      %v5052 = vpop.f32.mrf.mxu0
      %v5053 = vadd.f32 0.0, %v5052
      %5054 = vmatmul.f32.gmra.mxu0 %v5033
      %v5055 = vpop.f32.mrf.mxu0
      %v5056 = vadd.f32 0.0, %v5055
      %5057 = vdwg.mxu0
      %5058 = vrot.lane.b32.xlu0 %v407, 48
      %v5059 = vpop.permute.xlu0 %5058
      %5060 = vrot.lane.b32.xlu0 %v410, 48
      %v5061 = vpop.permute.xlu0 %5060
      %v5065 = vsel %vm1075, %v4894, 0
      %v5068 = vsel %vm1075, %v4895, 0
      %5070 = vmatpush.msra.mxu0 0.0
      %5071 = vmatpush.msra.mxu0 0.0
      %5072 = vmatpush.msra.mxu0 0.0
      %5073 = vmatpush.msra.mxu0 0.0
      %5074 = vmatpush.msra.mxu0 0.0
      %5075 = vmatpush.msra.mxu0 0.0
      %5076 = vmatpush.msra.mxu0 0.0
      %5077 = vmatpush.msra.mxu0 0.0
      %5078 = vmatpush.msra.mxu0 0.0
      %5079 = vmatpush.msra.mxu0 0.0
      %5080 = vmatpush.msra.mxu0 0.0
      %5081 = vmatpush.msra.mxu0 0.0
      %5082 = vmatpush.msra.mxu0 0.0
      %5083 = vmatpush.msra.mxu0 0.0
      %5084 = vmatpush.msra.mxu0 %v5061
      %5085 = vmatpush.msra.mxu0 %v5059
      %5086 = vmatmul.f32.gmra.mxu0 %v5065
      %v5087 = vpop.f32.mrf.mxu0
      %v5088 = vadd.f32 0.0, %v5087
      %5089 = vmatmul.f32.gmra.mxu0 %v5068
      %v5090 = vpop.f32.mrf.mxu0
      %v5091 = vadd.f32 0.0, %v5090
      %5092 = vdwg.mxu0
      %5093 = vrot.lane.b32.xlu0 %v413, 48
      %v5094 = vpop.permute.xlu0 %5093
      %5095 = vrot.lane.b32.xlu0 %v416, 48
      %v5096 = vpop.permute.xlu0 %5095
      %v5100 = vsel %vm1075, %v4896, 0
      %v5103 = vsel %vm1075, %v4897, 0
      %5105 = vmatpush.msra.mxu0 0.0
      %5106 = vmatpush.msra.mxu0 0.0
      %5107 = vmatpush.msra.mxu0 0.0
      %5108 = vmatpush.msra.mxu0 0.0
      %5109 = vmatpush.msra.mxu0 0.0
      %5110 = vmatpush.msra.mxu0 0.0
      %5111 = vmatpush.msra.mxu0 0.0
      %5112 = vmatpush.msra.mxu0 0.0
      %5113 = vmatpush.msra.mxu0 0.0
      %5114 = vmatpush.msra.mxu0 0.0
      %5115 = vmatpush.msra.mxu0 0.0
      %5116 = vmatpush.msra.mxu0 0.0
      %5117 = vmatpush.msra.mxu0 0.0
      %5118 = vmatpush.msra.mxu0 0.0
      %5119 = vmatpush.msra.mxu0 %v5096
      %5120 = vmatpush.msra.mxu0 %v5094
      %5121 = vmatmul.f32.gmra.mxu0 %v5100
      %v5122 = vpop.f32.mrf.mxu0
      %v5123 = vadd.f32 0.0, %v5122
      %5124 = vmatmul.f32.gmra.mxu0 %v5103
      %v5125 = vpop.f32.mrf.mxu0
      %v5126 = vadd.f32 0.0, %v5125
      %5127 = vdwg.mxu0
      %5128 = vrot.lane.b32.xlu0 %v419, 48
      %v5129 = vpop.permute.xlu0 %5128
      %5130 = vrot.lane.b32.xlu0 %v422, 48
      %v5131 = vpop.permute.xlu0 %5130
      %v5135 = vsel %vm1075, %v4898, 0
      %v5138 = vsel %vm1075, %v4899, 0
      %5140 = vmatpush.msra.mxu0 0.0
      %5141 = vmatpush.msra.mxu0 0.0
      %5142 = vmatpush.msra.mxu0 0.0
      %5143 = vmatpush.msra.mxu0 0.0
      %5144 = vmatpush.msra.mxu0 0.0
      %5145 = vmatpush.msra.mxu0 0.0
      %5146 = vmatpush.msra.mxu0 0.0
      %5147 = vmatpush.msra.mxu0 0.0
      %5148 = vmatpush.msra.mxu0 0.0
      %5149 = vmatpush.msra.mxu0 0.0
      %5150 = vmatpush.msra.mxu0 0.0
      %5151 = vmatpush.msra.mxu0 0.0
      %5152 = vmatpush.msra.mxu0 0.0
      %5153 = vmatpush.msra.mxu0 0.0
      %5154 = vmatpush.msra.mxu0 %v5131
      %5155 = vmatpush.msra.mxu0 %v5129
      %5156 = vmatmul.f32.gmra.mxu0 %v5135
      %v5157 = vpop.f32.mrf.mxu0
      %v5158 = vadd.f32 0.0, %v5157
      %5159 = vmatmul.f32.gmra.mxu0 %v5138
      %v5160 = vpop.f32.mrf.mxu0
      %v5161 = vadd.f32 0.0, %v5160
      %5162 = vdwg.mxu0
      %5163 = vrot.lane.b32.xlu0 %v425, 48
      %v5164 = vpop.permute.xlu0 %5163
      %5165 = vrot.lane.b32.xlu0 %v428, 48
      %v5166 = vpop.permute.xlu0 %5165
      %v5170 = vsel %vm1075, %v4900, 0
      %v5173 = vsel %vm1075, %v4901, 0
      %5175 = vmatpush.msra.mxu0 0.0
      %5176 = vmatpush.msra.mxu0 0.0
      %5177 = vmatpush.msra.mxu0 0.0
      %5178 = vmatpush.msra.mxu0 0.0
      %5179 = vmatpush.msra.mxu0 0.0
      %5180 = vmatpush.msra.mxu0 0.0
      %5181 = vmatpush.msra.mxu0 0.0
      %5182 = vmatpush.msra.mxu0 0.0
      %5183 = vmatpush.msra.mxu0 0.0
      %5184 = vmatpush.msra.mxu0 0.0
      %5185 = vmatpush.msra.mxu0 0.0
      %5186 = vmatpush.msra.mxu0 0.0
      %5187 = vmatpush.msra.mxu0 0.0
      %5188 = vmatpush.msra.mxu0 0.0
      %5189 = vmatpush.msra.mxu0 %v5166
      %5190 = vmatpush.msra.mxu0 %v5164
      %5191 = vmatmul.f32.gmra.mxu0 %v5170
      %v5192 = vpop.f32.mrf.mxu0
      %v5193 = vadd.f32 0.0, %v5192
      %5194 = vmatmul.f32.gmra.mxu0 %v5173
      %v5195 = vpop.f32.mrf.mxu0
      %v5196 = vadd.f32 0.0, %v5195
      %5197 = vdwg.mxu0
      %5198 = vrot.lane.b32.xlu0 %v431, 48
      %v5199 = vpop.permute.xlu0 %5198
      %5200 = vrot.lane.b32.xlu0 %v434, 48
      %v5201 = vpop.permute.xlu0 %5200
      %v5205 = vsel %vm1075, %v4902, 0
      %v5208 = vsel %vm1075, %v4903, 0
      %5210 = vmatpush.msra.mxu0 0.0
      %5211 = vmatpush.msra.mxu0 0.0
      %5212 = vmatpush.msra.mxu0 0.0
      %5213 = vmatpush.msra.mxu0 0.0
      %5214 = vmatpush.msra.mxu0 0.0
      %5215 = vmatpush.msra.mxu0 0.0
      %5216 = vmatpush.msra.mxu0 0.0
      %5217 = vmatpush.msra.mxu0 0.0
      %5218 = vmatpush.msra.mxu0 0.0
      %5219 = vmatpush.msra.mxu0 0.0
      %5220 = vmatpush.msra.mxu0 0.0
      %5221 = vmatpush.msra.mxu0 0.0
      %5222 = vmatpush.msra.mxu0 0.0
      %5223 = vmatpush.msra.mxu0 0.0
      %5224 = vmatpush.msra.mxu0 %v5201
      %5225 = vmatpush.msra.mxu0 %v5199
      %5226 = vmatmul.f32.gmra.mxu0 %v5205
      %v5227 = vpop.f32.mrf.mxu0
      %v5228 = vadd.f32 0.0, %v5227
      %5229 = vmatmul.f32.gmra.mxu0 %v5208
      %v5230 = vpop.f32.mrf.mxu0
      %v5231 = vadd.f32 0.0, %v5230
      %5232 = vdwg.mxu0
      %5233 = vrot.lane.b32.xlu0 %v437, 48
      %v5234 = vpop.permute.xlu0 %5233
      %5235 = vrot.lane.b32.xlu0 %v440, 48
      %v5236 = vpop.permute.xlu0 %5235
      %v5240 = vsel %vm1075, %v4904, 0
      %v5243 = vsel %vm1075, %v4905, 0
      %5245 = vmatpush.msra.mxu0 0.0
      %5246 = vmatpush.msra.mxu0 0.0
      %5247 = vmatpush.msra.mxu0 0.0
      %5248 = vmatpush.msra.mxu0 0.0
      %5249 = vmatpush.msra.mxu0 0.0
      %5250 = vmatpush.msra.mxu0 0.0
      %5251 = vmatpush.msra.mxu0 0.0
      %5252 = vmatpush.msra.mxu0 0.0
      %5253 = vmatpush.msra.mxu0 0.0
      %5254 = vmatpush.msra.mxu0 0.0
      %5255 = vmatpush.msra.mxu0 0.0
      %5256 = vmatpush.msra.mxu0 0.0
      %5257 = vmatpush.msra.mxu0 0.0
      %5258 = vmatpush.msra.mxu0 0.0
      %5259 = vmatpush.msra.mxu0 %v5236
      %5260 = vmatpush.msra.mxu0 %v5234
      %5261 = vmatmul.f32.gmra.mxu0 %v5240
      %v5262 = vpop.f32.mrf.mxu0
      %v5263 = vadd.f32 0.0, %v5262
      %5264 = vmatmul.f32.gmra.mxu0 %v5243
      %v5265 = vpop.f32.mrf.mxu0
      %v5266 = vadd.f32 0.0, %v5265
      %5267 = vdwg.mxu0
      %5268 = vrot.lane.b32.xlu0 %v443, 48
      %v5269 = vpop.permute.xlu0 %5268
      %5270 = vrot.lane.b32.xlu0 %v446, 48
      %v5271 = vpop.permute.xlu0 %5270
      %v5275 = vsel %vm1075, %v4906, 0
      %v5278 = vsel %vm1075, %v4907, 0
      %5280 = vmatpush.msra.mxu0 0.0
      %5281 = vmatpush.msra.mxu0 0.0
      %5282 = vmatpush.msra.mxu0 0.0
      %5283 = vmatpush.msra.mxu0 0.0
      %5284 = vmatpush.msra.mxu0 0.0
      %5285 = vmatpush.msra.mxu0 0.0
      %5286 = vmatpush.msra.mxu0 0.0
      %5287 = vmatpush.msra.mxu0 0.0
      %5288 = vmatpush.msra.mxu0 0.0
      %5289 = vmatpush.msra.mxu0 0.0
      %5290 = vmatpush.msra.mxu0 0.0
      %5291 = vmatpush.msra.mxu0 0.0
      %5292 = vmatpush.msra.mxu0 0.0
      %5293 = vmatpush.msra.mxu0 0.0
      %5294 = vmatpush.msra.mxu0 %v5271
      %5295 = vmatpush.msra.mxu0 %v5269
      %5296 = vmatmul.f32.gmra.mxu0 %v5275
      %v5297 = vpop.f32.mrf.mxu0
      %v5298 = vadd.f32 0.0, %v5297
      %5299 = vmatmul.f32.gmra.mxu0 %v5278
      %v5300 = vpop.f32.mrf.mxu0
      %v5301 = vadd.f32 0.0, %v5300
      %5302 = vdwg.mxu0
      %5303 = vrot.lane.b32.xlu0 %v449, 48
      %v5304 = vpop.permute.xlu0 %5303
      %5305 = vrot.lane.b32.xlu0 %v452, 48
      %v5306 = vpop.permute.xlu0 %5305
      %v5310 = vsel %vm1075, %v4908, 0
      %v5313 = vsel %vm1075, %v4909, 0
      %5315 = vmatpush.msra.mxu0 0.0
      %5316 = vmatpush.msra.mxu0 0.0
      %5317 = vmatpush.msra.mxu0 0.0
      %5318 = vmatpush.msra.mxu0 0.0
      %5319 = vmatpush.msra.mxu0 0.0
      %5320 = vmatpush.msra.mxu0 0.0
      %5321 = vmatpush.msra.mxu0 0.0
      %5322 = vmatpush.msra.mxu0 0.0
      %5323 = vmatpush.msra.mxu0 0.0
      %5324 = vmatpush.msra.mxu0 0.0
      %5325 = vmatpush.msra.mxu0 0.0
      %5326 = vmatpush.msra.mxu0 0.0
      %5327 = vmatpush.msra.mxu0 0.0
      %5328 = vmatpush.msra.mxu0 0.0
      %5329 = vmatpush.msra.mxu0 %v5306
      %5330 = vmatpush.msra.mxu0 %v5304
      %5331 = vmatmul.f32.gmra.mxu0 %v5310
      %v5332 = vpop.f32.mrf.mxu0
      %v5333 = vadd.f32 0.0, %v5332
      %5334 = vmatmul.f32.gmra.mxu0 %v5313
      %v5335 = vpop.f32.mrf.mxu0
      %v5336 = vadd.f32 0.0, %v5335
      %5337 = vdwg.mxu0
      %5338 = vrot.lane.b32.xlu0 %v455, 48
      %v5339 = vpop.permute.xlu0 %5338
      %5340 = vrot.lane.b32.xlu0 %v458, 48
      %v5341 = vpop.permute.xlu0 %5340
      %v5345 = vsel %vm1075, %v4910, 0
      %v5348 = vsel %vm1075, %v4911, 0
      %5350 = vmatpush.msra.mxu0 0.0
      %5351 = vmatpush.msra.mxu0 0.0
      %5352 = vmatpush.msra.mxu0 0.0
      %5353 = vmatpush.msra.mxu0 0.0
      %5354 = vmatpush.msra.mxu0 0.0
      %5355 = vmatpush.msra.mxu0 0.0
      %5356 = vmatpush.msra.mxu0 0.0
      %5357 = vmatpush.msra.mxu0 0.0
      %5358 = vmatpush.msra.mxu0 0.0
      %5359 = vmatpush.msra.mxu0 0.0
      %5360 = vmatpush.msra.mxu0 0.0
      %5361 = vmatpush.msra.mxu0 0.0
      %5362 = vmatpush.msra.mxu0 0.0
      %5363 = vmatpush.msra.mxu0 0.0
      %5364 = vmatpush.msra.mxu0 %v5341
      %5365 = vmatpush.msra.mxu0 %v5339
      %5366 = vmatmul.f32.gmra.mxu0 %v5345
      %v5367 = vpop.f32.mrf.mxu0
      %v5368 = vadd.f32 0.0, %v5367
      %5369 = vmatmul.f32.gmra.mxu0 %v5348
      %v5370 = vpop.f32.mrf.mxu0
      %v5371 = vadd.f32 0.0, %v5370
      %5372 = vdwg.mxu0
      %5373 = vrot.lane.b32.xlu0 %v461, 48
      %v5374 = vpop.permute.xlu0 %5373
      %5375 = vrot.lane.b32.xlu0 %v464, 48
      %v5376 = vpop.permute.xlu0 %5375
      %v5380 = vsel %vm1075, %v4912, 0
      %v5383 = vsel %vm1075, %v4913, 0
      %5385 = vmatpush.msra.mxu0 0.0
      %5386 = vmatpush.msra.mxu0 0.0
      %5387 = vmatpush.msra.mxu0 0.0
      %5388 = vmatpush.msra.mxu0 0.0
      %5389 = vmatpush.msra.mxu0 0.0
      %5390 = vmatpush.msra.mxu0 0.0
      %5391 = vmatpush.msra.mxu0 0.0
      %5392 = vmatpush.msra.mxu0 0.0
      %5393 = vmatpush.msra.mxu0 0.0
      %5394 = vmatpush.msra.mxu0 0.0
      %5395 = vmatpush.msra.mxu0 0.0
      %5396 = vmatpush.msra.mxu0 0.0
      %5397 = vmatpush.msra.mxu0 0.0
      %5398 = vmatpush.msra.mxu0 0.0
      %5399 = vmatpush.msra.mxu0 %v5376
      %5400 = vmatpush.msra.mxu0 %v5374
      %5401 = vmatmul.f32.gmra.mxu0 %v5380
      %v5402 = vpop.f32.mrf.mxu0
      %v5403 = vadd.f32 0.0, %v5402
      %5404 = vmatmul.f32.gmra.mxu0 %v5383
      %v5405 = vpop.f32.mrf.mxu0
      %v5406 = vadd.f32 0.0, %v5405
      %5407 = vdwg.mxu0
      %5408 = vrot.lane.b32.xlu0 %v467, 48
      %v5409 = vpop.permute.xlu0 %5408
      %5410 = vrot.lane.b32.xlu0 %v470, 48
      %v5411 = vpop.permute.xlu0 %5410
      %v5415 = vsel %vm1075, %v4914, 0
      %v5418 = vsel %vm1075, %v4915, 0
      %5420 = vmatpush.msra.mxu0 0.0
      %5421 = vmatpush.msra.mxu0 0.0
      %5422 = vmatpush.msra.mxu0 0.0
      %5423 = vmatpush.msra.mxu0 0.0
      %5424 = vmatpush.msra.mxu0 0.0
      %5425 = vmatpush.msra.mxu0 0.0
      %5426 = vmatpush.msra.mxu0 0.0
      %5427 = vmatpush.msra.mxu0 0.0
      %5428 = vmatpush.msra.mxu0 0.0
      %5429 = vmatpush.msra.mxu0 0.0
      %5430 = vmatpush.msra.mxu0 0.0
      %5431 = vmatpush.msra.mxu0 0.0
      %5432 = vmatpush.msra.mxu0 0.0
      %5433 = vmatpush.msra.mxu0 0.0
      %5434 = vmatpush.msra.mxu0 %v5411
      %5435 = vmatpush.msra.mxu0 %v5409
      %5436 = vmatmul.f32.gmra.mxu0 %v5415
      %v5437 = vpop.f32.mrf.mxu0
      %v5438 = vadd.f32 0.0, %v5437
      %5439 = vmatmul.f32.gmra.mxu0 %v5418
      %v5440 = vpop.f32.mrf.mxu0
      %v5441 = vadd.f32 0.0, %v5440
      %5442 = vdwg.mxu0
      %5443 = vrot.lane.b32.xlu0 %v473, 48
      %v5444 = vpop.permute.xlu0 %5443
      %5445 = vrot.lane.b32.xlu0 %v476, 48
      %v5446 = vpop.permute.xlu0 %5445
      %v5450 = vsel %vm1075, %v4916, 0
      %v5453 = vsel %vm1075, %v4917, 0
      %5455 = vmatpush.msra.mxu0 0.0
      %5456 = vmatpush.msra.mxu0 0.0
      %5457 = vmatpush.msra.mxu0 0.0
      %5458 = vmatpush.msra.mxu0 0.0
      %5459 = vmatpush.msra.mxu0 0.0
      %5460 = vmatpush.msra.mxu0 0.0
      %5461 = vmatpush.msra.mxu0 0.0
      %5462 = vmatpush.msra.mxu0 0.0
      %5463 = vmatpush.msra.mxu0 0.0
      %5464 = vmatpush.msra.mxu0 0.0
      %5465 = vmatpush.msra.mxu0 0.0
      %5466 = vmatpush.msra.mxu0 0.0
      %5467 = vmatpush.msra.mxu0 0.0
      %5468 = vmatpush.msra.mxu0 0.0
      %5469 = vmatpush.msra.mxu0 %v5446
      %5470 = vmatpush.msra.mxu0 %v5444
      %5471 = vmatmul.f32.gmra.mxu0 %v5450
      %v5472 = vpop.f32.mrf.mxu0
      %v5473 = vadd.f32 0.0, %v5472
      %5474 = vmatmul.f32.gmra.mxu0 %v5453
      %v5475 = vpop.f32.mrf.mxu0
      %v5476 = vadd.f32 0.0, %v5475
      %5477 = vdwg.mxu0
      %v5479 = vsel %vm488, %v4948, 0
      %v5482 = vsel %vm488, %v4951, 0
      %v5485 = vsel %vm488, %v4983, 0
      %v5488 = vsel %vm488, %v4986, 0
      %v5491 = vsel %vm488, %v5018, 0
      %v5494 = vsel %vm488, %v5021, 0
      %v5497 = vsel %vm488, %v5053, 0
      %v5500 = vsel %vm488, %v5056, 0
      %v5503 = vsel %vm488, %v5088, 0
      %v5506 = vsel %vm488, %v5091, 0
      %v5509 = vsel %vm488, %v5123, 0
      %v5512 = vsel %vm488, %v5126, 0
      %v5515 = vsel %vm488, %v5158, 0
      %v5518 = vsel %vm488, %v5161, 0
      %v5521 = vsel %vm488, %v5193, 0
      %v5524 = vsel %vm488, %v5196, 0
      %v5527 = vsel %vm488, %v5228, 0
      %v5530 = vsel %vm488, %v5231, 0
      %v5533 = vsel %vm488, %v5263, 0
      %v5536 = vsel %vm488, %v5266, 0
      %v5539 = vsel %vm488, %v5298, 0
      %v5542 = vsel %vm488, %v5301, 0
      %v5545 = vsel %vm488, %v5333, 0
      %v5548 = vsel %vm488, %v5336, 0
      %v5551 = vsel %vm488, %v5368, 0
      %v5554 = vsel %vm488, %v5371, 0
      %v5557 = vsel %vm488, %v5403, 0
      %v5560 = vsel %vm488, %v5406, 0
      %v5563 = vsel %vm488, %v5438, 0
      %v5566 = vsel %vm488, %v5441, 0
      %v5569 = vsel %vm488, %v5473, 0
      %v5572 = vsel %vm488, %v5476, 0
      %5574 = vmatpush.msra.mxu0 0.0
      %5575 = vmatpush.msra.mxu0 0.0
      %5576 = vmatpush.msra.mxu0 0.0
      %5577 = vmatpush.msra.mxu0 0.0
      %5578 = vmatpush.msra.mxu0 0.0
      %5579 = vmatpush.msra.mxu0 0.0
      %5580 = vmatpush.msra.mxu0 0.0
      %5581 = vmatpush.msra.mxu0 0.0
      %5582 = vmatpush.msra.mxu0 0.0
      %5583 = vmatpush.msra.mxu0 0.0
      %5584 = vmatpush.msra.mxu0 0.0
      %5585 = vmatpush.msra.mxu0 0.0
      %5586 = vmatpush.msra.mxu0 0.0
      %5587 = vmatpush.msra.mxu0 0.0
      %5588 = vmatpush.msra.mxu0 0.0
      %5589 = vmatpush.msra.mxu0 %v480
      %5590 = vmatmul.f32.gmra.mxu0 %v5479
      %v5591 = vpop.f32.mrf.mxu0
      %v5592 = vadd.f32 0.0, %v5591
      %5593 = vmatmul.f32.gmra.mxu0 %v5482
      %v5594 = vpop.f32.mrf.mxu0
      %v5595 = vadd.f32 0.0, %v5594
      %5596 = vmatmul.f32.gmra.mxu0 %v5485
      %v5597 = vpop.f32.mrf.mxu0
      %v5598 = vadd.f32 0.0, %v5597
      %5599 = vmatmul.f32.gmra.mxu0 %v5488
      %v5600 = vpop.f32.mrf.mxu0
      %v5601 = vadd.f32 0.0, %v5600
      %5602 = vmatmul.f32.gmra.mxu0 %v5491
      %v5603 = vpop.f32.mrf.mxu0
      %v5604 = vadd.f32 0.0, %v5603
      %5605 = vmatmul.f32.gmra.mxu0 %v5494
      %v5606 = vpop.f32.mrf.mxu0
      %v5607 = vadd.f32 0.0, %v5606
      %5608 = vmatmul.f32.gmra.mxu0 %v5497
      %v5609 = vpop.f32.mrf.mxu0
      %v5610 = vadd.f32 0.0, %v5609
      %5611 = vmatmul.f32.gmra.mxu0 %v5500
      %v5612 = vpop.f32.mrf.mxu0
      %v5613 = vadd.f32 0.0, %v5612
      %5614 = vmatmul.f32.gmra.mxu0 %v5503
      %v5615 = vpop.f32.mrf.mxu0
      %v5616 = vadd.f32 0.0, %v5615
      %5617 = vmatmul.f32.gmra.mxu0 %v5506
      %v5618 = vpop.f32.mrf.mxu0
      %v5619 = vadd.f32 0.0, %v5618
      %5620 = vmatmul.f32.gmra.mxu0 %v5509
      %v5621 = vpop.f32.mrf.mxu0
      %v5622 = vadd.f32 0.0, %v5621
      %5623 = vmatmul.f32.gmra.mxu0 %v5512
      %v5624 = vpop.f32.mrf.mxu0
      %v5625 = vadd.f32 0.0, %v5624
      %5626 = vmatmul.f32.gmra.mxu0 %v5515
      %v5627 = vpop.f32.mrf.mxu0
      %v5628 = vadd.f32 0.0, %v5627
      %5629 = vmatmul.f32.gmra.mxu0 %v5518
      %v5630 = vpop.f32.mrf.mxu0
      %v5631 = vadd.f32 0.0, %v5630
      %5632 = vmatmul.f32.gmra.mxu0 %v5521
      %v5633 = vpop.f32.mrf.mxu0
      %v5634 = vadd.f32 0.0, %v5633
      %5635 = vmatmul.f32.gmra.mxu0 %v5524
      %v5636 = vpop.f32.mrf.mxu0
      %v5637 = vadd.f32 0.0, %v5636
      %5638 = vmatmul.f32.gmra.mxu0 %v5527
      %v5639 = vpop.f32.mrf.mxu0
      %v5640 = vadd.f32 0.0, %v5639
      %5641 = vmatmul.f32.gmra.mxu0 %v5530
      %v5642 = vpop.f32.mrf.mxu0
      %v5643 = vadd.f32 0.0, %v5642
      %5644 = vmatmul.f32.gmra.mxu0 %v5533
      %v5645 = vpop.f32.mrf.mxu0
      %v5646 = vadd.f32 0.0, %v5645
      %5647 = vmatmul.f32.gmra.mxu0 %v5536
      %v5648 = vpop.f32.mrf.mxu0
      %v5649 = vadd.f32 0.0, %v5648
      %5650 = vmatmul.f32.gmra.mxu0 %v5539
      %v5651 = vpop.f32.mrf.mxu0
      %v5652 = vadd.f32 0.0, %v5651
      %5653 = vmatmul.f32.gmra.mxu0 %v5542
      %v5654 = vpop.f32.mrf.mxu0
      %v5655 = vadd.f32 0.0, %v5654
      %5656 = vmatmul.f32.gmra.mxu0 %v5545
      %v5657 = vpop.f32.mrf.mxu0
      %v5658 = vadd.f32 0.0, %v5657
      %5659 = vmatmul.f32.gmra.mxu0 %v5548
      %v5660 = vpop.f32.mrf.mxu0
      %v5661 = vadd.f32 0.0, %v5660
      %5662 = vmatmul.f32.gmra.mxu0 %v5551
      %v5663 = vpop.f32.mrf.mxu0
      %v5664 = vadd.f32 0.0, %v5663
      %5665 = vmatmul.f32.gmra.mxu0 %v5554
      %v5666 = vpop.f32.mrf.mxu0
      %v5667 = vadd.f32 0.0, %v5666
      %5668 = vmatmul.f32.gmra.mxu0 %v5557
      %v5669 = vpop.f32.mrf.mxu0
      %v5670 = vadd.f32 0.0, %v5669
      %5671 = vmatmul.f32.gmra.mxu0 %v5560
      %v5672 = vpop.f32.mrf.mxu0
      %v5673 = vadd.f32 0.0, %v5672
      %5674 = vmatmul.f32.gmra.mxu0 %v5563
      %v5675 = vpop.f32.mrf.mxu0
      %v5676 = vadd.f32 0.0, %v5675
      %5677 = vmatmul.f32.gmra.mxu0 %v5566
      %v5678 = vpop.f32.mrf.mxu0
      %v5679 = vadd.f32 0.0, %v5678
      %5680 = vmatmul.f32.gmra.mxu0 %v5569
      %v5681 = vpop.f32.mrf.mxu0
      %v5682 = vadd.f32 0.0, %v5681
      %5683 = vmatmul.f32.gmra.mxu0 %v5572
      %v5684 = vpop.f32.mrf.mxu0
      %v5685 = vadd.f32 0.0, %v5684
      %5686 = vdwg.mxu0
      %v5687 = vadd.f32 %v3847, %v5592
      %v5688 = vadd.f32 %v3850, %v5595
      %v5689 = vadd.f32 %v3853, %v5598
      %v5690 = vadd.f32 %v3856, %v5601
      %v5691 = vadd.f32 %v3859, %v5604
      %v5692 = vadd.f32 %v3862, %v5607
      %v5693 = vadd.f32 %v3865, %v5610
      %v5694 = vadd.f32 %v3868, %v5613
      %v5695 = vadd.f32 %v3871, %v5616
      %v5696 = vadd.f32 %v3874, %v5619
      %v5697 = vadd.f32 %v3877, %v5622
      %v5698 = vadd.f32 %v3880, %v5625
      %v5699 = vadd.f32 %v3883, %v5628
      %v5700 = vadd.f32 %v3886, %v5631
      %v5701 = vadd.f32 %v3889, %v5634
      %v5702 = vadd.f32 %v3892, %v5637
      %v5703 = vadd.f32 %v3895, %v5640
      %v5704 = vadd.f32 %v3898, %v5643
      %v5705 = vadd.f32 %v3901, %v5646
      %v5706 = vadd.f32 %v3904, %v5649
      %v5707 = vadd.f32 %v3907, %v5652
      %v5708 = vadd.f32 %v3910, %v5655
      %v5709 = vadd.f32 %v3913, %v5658
      %v5710 = vadd.f32 %v3916, %v5661
      %v5711 = vadd.f32 %v3919, %v5664
      %v5712 = vadd.f32 %v3922, %v5667
      %v5713 = vadd.f32 %v3925, %v5670
      %v5714 = vadd.f32 %v3928, %v5673
      %v5715 = vadd.f32 %v3931, %v5676
      %v5716 = vadd.f32 %v3934, %v5679
      %v5717 = vadd.f32 %v3937, %v5682
      %v5718 = vadd.f32 %v3940, %v5685
      %5719 = vrot.lane.b32.xlu0 %v383, 104
      %v5720 = vpop.permute.xlu0 %5719
      %5721 = vrot.lane.b32.xlu0 %v386, 104
      %v5722 = vpop.permute.xlu0 %5721
      %5723 = vrot.lane.b32.xlu0 %v383, 72
      %v5724 = vpop.permute.xlu0 %5723
      %5725 = vrot.lane.b32.xlu0 %v386, 72
      %v5726 = vpop.permute.xlu0 %5725
      %v5727 = vsel %vm488, %v5720, 0
      %v5729 = vsel %vm488, %v5722, 0
      %v5731 = vsel %vm488, %v5724, 0
      %v5733 = vsel %vm488, %v5726, 0
      %5735 = vmatpush.xpose.msra.mxu0 0.0
      %5736 = vmatpush.xpose.msra.mxu0 0.0
      %5737 = vmatpush.xpose.msra.mxu0 0.0
      %5738 = vmatpush.xpose.msra.mxu0 0.0
      %5739 = vmatpush.xpose.msra.mxu0 0.0
      %5740 = vmatpush.xpose.msra.mxu0 0.0
      %5741 = vmatpush.xpose.msra.mxu0 0.0
      %5742 = vmatpush.xpose.msra.mxu0 0.0
      %5743 = vmatpush.xpose.msra.mxu0 0.0
      %5744 = vmatpush.xpose.msra.mxu0 0.0
      %5745 = vmatpush.xpose.msra.mxu0 0.0
      %5746 = vmatpush.xpose.msra.mxu0 0.0
      %5747 = vmatpush.xpose.msra.mxu0 0.0
      %5748 = vmatpush.xpose.msra.mxu0 0.0
      %5749 = vmatpush.xpose.msra.mxu0 %v5733
      %5750 = vmatpush.xpose.msra.mxu0 %v5731
      %5751 = vmatmul.f32.gmra.mxu0 %v5727
      %v5752 = vpop.f32.mrf.mxu0
      %v5753 = vadd.f32 0.0, %v5752
      %5754 = vmatmul.f32.gmra.mxu0 %v5729
      %v5755 = vpop.f32.mrf.mxu0
      %v5756 = vadd.f32 0.0, %v5755
      %5757 = vdwg.mxu0
      %5758 = vrot.lane.b32.xlu0 %v389, 104
      %v5759 = vpop.permute.xlu0 %5758
      %5760 = vrot.lane.b32.xlu0 %v392, 104
      %v5761 = vpop.permute.xlu0 %5760
      %5762 = vrot.lane.b32.xlu0 %v389, 72
      %v5763 = vpop.permute.xlu0 %5762
      %5764 = vrot.lane.b32.xlu0 %v392, 72
      %v5765 = vpop.permute.xlu0 %5764
      %v5766 = vsel %vm488, %v5759, 0
      %v5768 = vsel %vm488, %v5761, 0
      %v5770 = vsel %vm488, %v5763, 0
      %v5772 = vsel %vm488, %v5765, 0
      %5774 = vmatpush.xpose.msra.mxu0 0.0
      %5775 = vmatpush.xpose.msra.mxu0 0.0
      %5776 = vmatpush.xpose.msra.mxu0 0.0
      %5777 = vmatpush.xpose.msra.mxu0 0.0
      %5778 = vmatpush.xpose.msra.mxu0 0.0
      %5779 = vmatpush.xpose.msra.mxu0 0.0
      %5780 = vmatpush.xpose.msra.mxu0 0.0
      %5781 = vmatpush.xpose.msra.mxu0 0.0
      %5782 = vmatpush.xpose.msra.mxu0 0.0
      %5783 = vmatpush.xpose.msra.mxu0 0.0
      %5784 = vmatpush.xpose.msra.mxu0 0.0
      %5785 = vmatpush.xpose.msra.mxu0 0.0
      %5786 = vmatpush.xpose.msra.mxu0 0.0
      %5787 = vmatpush.xpose.msra.mxu0 0.0
      %5788 = vmatpush.xpose.msra.mxu0 %v5772
      %5789 = vmatpush.xpose.msra.mxu0 %v5770
      %5790 = vmatmul.f32.gmra.mxu0 %v5766
      %v5791 = vpop.f32.mrf.mxu0
      %v5792 = vadd.f32 0.0, %v5791
      %5793 = vmatmul.f32.gmra.mxu0 %v5768
      %v5794 = vpop.f32.mrf.mxu0
      %v5795 = vadd.f32 0.0, %v5794
      %5796 = vdwg.mxu0
      %5797 = vrot.lane.b32.xlu0 %v395, 104
      %v5798 = vpop.permute.xlu0 %5797
      %5799 = vrot.lane.b32.xlu0 %v398, 104
      %v5800 = vpop.permute.xlu0 %5799
      %5801 = vrot.lane.b32.xlu0 %v395, 72
      %v5802 = vpop.permute.xlu0 %5801
      %5803 = vrot.lane.b32.xlu0 %v398, 72
      %v5804 = vpop.permute.xlu0 %5803
      %v5805 = vsel %vm488, %v5798, 0
      %v5807 = vsel %vm488, %v5800, 0
      %v5809 = vsel %vm488, %v5802, 0
      %v5811 = vsel %vm488, %v5804, 0
      %5813 = vmatpush.xpose.msra.mxu0 0.0
      %5814 = vmatpush.xpose.msra.mxu0 0.0
      %5815 = vmatpush.xpose.msra.mxu0 0.0
      %5816 = vmatpush.xpose.msra.mxu0 0.0
      %5817 = vmatpush.xpose.msra.mxu0 0.0
      %5818 = vmatpush.xpose.msra.mxu0 0.0
      %5819 = vmatpush.xpose.msra.mxu0 0.0
      %5820 = vmatpush.xpose.msra.mxu0 0.0
      %5821 = vmatpush.xpose.msra.mxu0 0.0
      %5822 = vmatpush.xpose.msra.mxu0 0.0
      %5823 = vmatpush.xpose.msra.mxu0 0.0
      %5824 = vmatpush.xpose.msra.mxu0 0.0
      %5825 = vmatpush.xpose.msra.mxu0 0.0
      %5826 = vmatpush.xpose.msra.mxu0 0.0
      %5827 = vmatpush.xpose.msra.mxu0 %v5811
      %5828 = vmatpush.xpose.msra.mxu0 %v5809
      %5829 = vmatmul.f32.gmra.mxu0 %v5805
      %v5830 = vpop.f32.mrf.mxu0
      %v5831 = vadd.f32 0.0, %v5830
      %5832 = vmatmul.f32.gmra.mxu0 %v5807
      %v5833 = vpop.f32.mrf.mxu0
      %v5834 = vadd.f32 0.0, %v5833
      %5835 = vdwg.mxu0
      %5836 = vrot.lane.b32.xlu0 %v401, 104
      %v5837 = vpop.permute.xlu0 %5836
      %5838 = vrot.lane.b32.xlu0 %v404, 104
      %v5839 = vpop.permute.xlu0 %5838
      %5840 = vrot.lane.b32.xlu0 %v401, 72
      %v5841 = vpop.permute.xlu0 %5840
      %5842 = vrot.lane.b32.xlu0 %v404, 72
      %v5843 = vpop.permute.xlu0 %5842
      %v5844 = vsel %vm488, %v5837, 0
      %v5846 = vsel %vm488, %v5839, 0
      %v5848 = vsel %vm488, %v5841, 0
      %v5850 = vsel %vm488, %v5843, 0
      %5852 = vmatpush.xpose.msra.mxu0 0.0
      %5853 = vmatpush.xpose.msra.mxu0 0.0
      %5854 = vmatpush.xpose.msra.mxu0 0.0
      %5855 = vmatpush.xpose.msra.mxu0 0.0
      %5856 = vmatpush.xpose.msra.mxu0 0.0
      %5857 = vmatpush.xpose.msra.mxu0 0.0
      %5858 = vmatpush.xpose.msra.mxu0 0.0
      %5859 = vmatpush.xpose.msra.mxu0 0.0
      %5860 = vmatpush.xpose.msra.mxu0 0.0
      %5861 = vmatpush.xpose.msra.mxu0 0.0
      %5862 = vmatpush.xpose.msra.mxu0 0.0
      %5863 = vmatpush.xpose.msra.mxu0 0.0
      %5864 = vmatpush.xpose.msra.mxu0 0.0
      %5865 = vmatpush.xpose.msra.mxu0 0.0
      %5866 = vmatpush.xpose.msra.mxu0 %v5850
      %5867 = vmatpush.xpose.msra.mxu0 %v5848
      %5868 = vmatmul.f32.gmra.mxu0 %v5844
      %v5869 = vpop.f32.mrf.mxu0
      %v5870 = vadd.f32 0.0, %v5869
      %5871 = vmatmul.f32.gmra.mxu0 %v5846
      %v5872 = vpop.f32.mrf.mxu0
      %v5873 = vadd.f32 0.0, %v5872
      %5874 = vdwg.mxu0
      %5875 = vrot.lane.b32.xlu0 %v407, 104
      %v5876 = vpop.permute.xlu0 %5875
      %5877 = vrot.lane.b32.xlu0 %v410, 104
      %v5878 = vpop.permute.xlu0 %5877
      %5879 = vrot.lane.b32.xlu0 %v407, 72
      %v5880 = vpop.permute.xlu0 %5879
      %5881 = vrot.lane.b32.xlu0 %v410, 72
      %v5882 = vpop.permute.xlu0 %5881
      %v5883 = vsel %vm488, %v5876, 0
      %v5885 = vsel %vm488, %v5878, 0
      %v5887 = vsel %vm488, %v5880, 0
      %v5889 = vsel %vm488, %v5882, 0
      %5891 = vmatpush.xpose.msra.mxu0 0.0
      %5892 = vmatpush.xpose.msra.mxu0 0.0
      %5893 = vmatpush.xpose.msra.mxu0 0.0
      %5894 = vmatpush.xpose.msra.mxu0 0.0
      %5895 = vmatpush.xpose.msra.mxu0 0.0
      %5896 = vmatpush.xpose.msra.mxu0 0.0
      %5897 = vmatpush.xpose.msra.mxu0 0.0
      %5898 = vmatpush.xpose.msra.mxu0 0.0
      %5899 = vmatpush.xpose.msra.mxu0 0.0
      %5900 = vmatpush.xpose.msra.mxu0 0.0
      %5901 = vmatpush.xpose.msra.mxu0 0.0
      %5902 = vmatpush.xpose.msra.mxu0 0.0
      %5903 = vmatpush.xpose.msra.mxu0 0.0
      %5904 = vmatpush.xpose.msra.mxu0 0.0
      %5905 = vmatpush.xpose.msra.mxu0 %v5889
      %5906 = vmatpush.xpose.msra.mxu0 %v5887
      %5907 = vmatmul.f32.gmra.mxu0 %v5883
      %v5908 = vpop.f32.mrf.mxu0
      %v5909 = vadd.f32 0.0, %v5908
      %5910 = vmatmul.f32.gmra.mxu0 %v5885
      %v5911 = vpop.f32.mrf.mxu0
      %v5912 = vadd.f32 0.0, %v5911
      %5913 = vdwg.mxu0
      %5914 = vrot.lane.b32.xlu0 %v413, 104
      %v5915 = vpop.permute.xlu0 %5914
      %5916 = vrot.lane.b32.xlu0 %v416, 104
      %v5917 = vpop.permute.xlu0 %5916
      %5918 = vrot.lane.b32.xlu0 %v413, 72
      %v5919 = vpop.permute.xlu0 %5918
      %5920 = vrot.lane.b32.xlu0 %v416, 72
      %v5921 = vpop.permute.xlu0 %5920
      %v5922 = vsel %vm488, %v5915, 0
      %v5924 = vsel %vm488, %v5917, 0
      %v5926 = vsel %vm488, %v5919, 0
      %v5928 = vsel %vm488, %v5921, 0
      %5930 = vmatpush.xpose.msra.mxu0 0.0
      %5931 = vmatpush.xpose.msra.mxu0 0.0
      %5932 = vmatpush.xpose.msra.mxu0 0.0
      %5933 = vmatpush.xpose.msra.mxu0 0.0
      %5934 = vmatpush.xpose.msra.mxu0 0.0
      %5935 = vmatpush.xpose.msra.mxu0 0.0
      %5936 = vmatpush.xpose.msra.mxu0 0.0
      %5937 = vmatpush.xpose.msra.mxu0 0.0
      %5938 = vmatpush.xpose.msra.mxu0 0.0
      %5939 = vmatpush.xpose.msra.mxu0 0.0
      %5940 = vmatpush.xpose.msra.mxu0 0.0
      %5941 = vmatpush.xpose.msra.mxu0 0.0
      %5942 = vmatpush.xpose.msra.mxu0 0.0
      %5943 = vmatpush.xpose.msra.mxu0 0.0
      %5944 = vmatpush.xpose.msra.mxu0 %v5928
      %5945 = vmatpush.xpose.msra.mxu0 %v5926
      %5946 = vmatmul.f32.gmra.mxu0 %v5922
      %v5947 = vpop.f32.mrf.mxu0
      %v5948 = vadd.f32 0.0, %v5947
      %5949 = vmatmul.f32.gmra.mxu0 %v5924
      %v5950 = vpop.f32.mrf.mxu0
      %v5951 = vadd.f32 0.0, %v5950
      %5952 = vdwg.mxu0
      %5953 = vrot.lane.b32.xlu0 %v419, 104
      %v5954 = vpop.permute.xlu0 %5953
      %5955 = vrot.lane.b32.xlu0 %v422, 104
      %v5956 = vpop.permute.xlu0 %5955
      %5957 = vrot.lane.b32.xlu0 %v419, 72
      %v5958 = vpop.permute.xlu0 %5957
      %5959 = vrot.lane.b32.xlu0 %v422, 72
      %v5960 = vpop.permute.xlu0 %5959
      %v5961 = vsel %vm488, %v5954, 0
      %v5963 = vsel %vm488, %v5956, 0
      %v5965 = vsel %vm488, %v5958, 0
      %v5967 = vsel %vm488, %v5960, 0
      %5969 = vmatpush.xpose.msra.mxu0 0.0
      %5970 = vmatpush.xpose.msra.mxu0 0.0
      %5971 = vmatpush.xpose.msra.mxu0 0.0
      %5972 = vmatpush.xpose.msra.mxu0 0.0
      %5973 = vmatpush.xpose.msra.mxu0 0.0
      %5974 = vmatpush.xpose.msra.mxu0 0.0
      %5975 = vmatpush.xpose.msra.mxu0 0.0
      %5976 = vmatpush.xpose.msra.mxu0 0.0
      %5977 = vmatpush.xpose.msra.mxu0 0.0
      %5978 = vmatpush.xpose.msra.mxu0 0.0
      %5979 = vmatpush.xpose.msra.mxu0 0.0
      %5980 = vmatpush.xpose.msra.mxu0 0.0
      %5981 = vmatpush.xpose.msra.mxu0 0.0
      %5982 = vmatpush.xpose.msra.mxu0 0.0
      %5983 = vmatpush.xpose.msra.mxu0 %v5967
      %5984 = vmatpush.xpose.msra.mxu0 %v5965
      %5985 = vmatmul.f32.gmra.mxu0 %v5961
      %v5986 = vpop.f32.mrf.mxu0
      %v5987 = vadd.f32 0.0, %v5986
      %5988 = vmatmul.f32.gmra.mxu0 %v5963
      %v5989 = vpop.f32.mrf.mxu0
      %v5990 = vadd.f32 0.0, %v5989
      %5991 = vdwg.mxu0
      %5992 = vrot.lane.b32.xlu0 %v425, 104
      %v5993 = vpop.permute.xlu0 %5992
      %5994 = vrot.lane.b32.xlu0 %v428, 104
      %v5995 = vpop.permute.xlu0 %5994
      %5996 = vrot.lane.b32.xlu0 %v425, 72
      %v5997 = vpop.permute.xlu0 %5996
      %5998 = vrot.lane.b32.xlu0 %v428, 72
      %v5999 = vpop.permute.xlu0 %5998
      %v6000 = vsel %vm488, %v5993, 0
      %v6002 = vsel %vm488, %v5995, 0
      %v6004 = vsel %vm488, %v5997, 0
      %v6006 = vsel %vm488, %v5999, 0
      %6008 = vmatpush.xpose.msra.mxu0 0.0
      %6009 = vmatpush.xpose.msra.mxu0 0.0
      %6010 = vmatpush.xpose.msra.mxu0 0.0
      %6011 = vmatpush.xpose.msra.mxu0 0.0
      %6012 = vmatpush.xpose.msra.mxu0 0.0
      %6013 = vmatpush.xpose.msra.mxu0 0.0
      %6014 = vmatpush.xpose.msra.mxu0 0.0
      %6015 = vmatpush.xpose.msra.mxu0 0.0
      %6016 = vmatpush.xpose.msra.mxu0 0.0
      %6017 = vmatpush.xpose.msra.mxu0 0.0
      %6018 = vmatpush.xpose.msra.mxu0 0.0
      %6019 = vmatpush.xpose.msra.mxu0 0.0
      %6020 = vmatpush.xpose.msra.mxu0 0.0
      %6021 = vmatpush.xpose.msra.mxu0 0.0
      %6022 = vmatpush.xpose.msra.mxu0 %v6006
      %6023 = vmatpush.xpose.msra.mxu0 %v6004
      %6024 = vmatmul.f32.gmra.mxu0 %v6000
      %v6025 = vpop.f32.mrf.mxu0
      %v6026 = vadd.f32 0.0, %v6025
      %6027 = vmatmul.f32.gmra.mxu0 %v6002
      %v6028 = vpop.f32.mrf.mxu0
      %v6029 = vadd.f32 0.0, %v6028
      %6030 = vdwg.mxu0
      %6031 = vrot.lane.b32.xlu0 %v431, 104
      %v6032 = vpop.permute.xlu0 %6031
      %6033 = vrot.lane.b32.xlu0 %v434, 104
      %v6034 = vpop.permute.xlu0 %6033
      %6035 = vrot.lane.b32.xlu0 %v431, 72
      %v6036 = vpop.permute.xlu0 %6035
      %6037 = vrot.lane.b32.xlu0 %v434, 72
      %v6038 = vpop.permute.xlu0 %6037
      %v6039 = vsel %vm488, %v6032, 0
      %v6041 = vsel %vm488, %v6034, 0
      %v6043 = vsel %vm488, %v6036, 0
      %v6045 = vsel %vm488, %v6038, 0
      %6047 = vmatpush.xpose.msra.mxu0 0.0
      %6048 = vmatpush.xpose.msra.mxu0 0.0
      %6049 = vmatpush.xpose.msra.mxu0 0.0
      %6050 = vmatpush.xpose.msra.mxu0 0.0
      %6051 = vmatpush.xpose.msra.mxu0 0.0
      %6052 = vmatpush.xpose.msra.mxu0 0.0
      %6053 = vmatpush.xpose.msra.mxu0 0.0
      %6054 = vmatpush.xpose.msra.mxu0 0.0
      %6055 = vmatpush.xpose.msra.mxu0 0.0
      %6056 = vmatpush.xpose.msra.mxu0 0.0
      %6057 = vmatpush.xpose.msra.mxu0 0.0
      %6058 = vmatpush.xpose.msra.mxu0 0.0
      %6059 = vmatpush.xpose.msra.mxu0 0.0
      %6060 = vmatpush.xpose.msra.mxu0 0.0
      %6061 = vmatpush.xpose.msra.mxu0 %v6045
      %6062 = vmatpush.xpose.msra.mxu0 %v6043
      %6063 = vmatmul.f32.gmra.mxu0 %v6039
      %v6064 = vpop.f32.mrf.mxu0
      %v6065 = vadd.f32 0.0, %v6064
      %6066 = vmatmul.f32.gmra.mxu0 %v6041
      %v6067 = vpop.f32.mrf.mxu0
      %v6068 = vadd.f32 0.0, %v6067
      %6069 = vdwg.mxu0
      %6070 = vrot.lane.b32.xlu0 %v437, 104
      %v6071 = vpop.permute.xlu0 %6070
      %6072 = vrot.lane.b32.xlu0 %v440, 104
      %v6073 = vpop.permute.xlu0 %6072
      %6074 = vrot.lane.b32.xlu0 %v437, 72
      %v6075 = vpop.permute.xlu0 %6074
      %6076 = vrot.lane.b32.xlu0 %v440, 72
      %v6077 = vpop.permute.xlu0 %6076
      %v6078 = vsel %vm488, %v6071, 0
      %v6080 = vsel %vm488, %v6073, 0
      %v6082 = vsel %vm488, %v6075, 0
      %v6084 = vsel %vm488, %v6077, 0
      %6086 = vmatpush.xpose.msra.mxu0 0.0
      %6087 = vmatpush.xpose.msra.mxu0 0.0
      %6088 = vmatpush.xpose.msra.mxu0 0.0
      %6089 = vmatpush.xpose.msra.mxu0 0.0
      %6090 = vmatpush.xpose.msra.mxu0 0.0
      %6091 = vmatpush.xpose.msra.mxu0 0.0
      %6092 = vmatpush.xpose.msra.mxu0 0.0
      %6093 = vmatpush.xpose.msra.mxu0 0.0
      %6094 = vmatpush.xpose.msra.mxu0 0.0
      %6095 = vmatpush.xpose.msra.mxu0 0.0
      %6096 = vmatpush.xpose.msra.mxu0 0.0
      %6097 = vmatpush.xpose.msra.mxu0 0.0
      %6098 = vmatpush.xpose.msra.mxu0 0.0
      %6099 = vmatpush.xpose.msra.mxu0 0.0
      %6100 = vmatpush.xpose.msra.mxu0 %v6084
      %6101 = vmatpush.xpose.msra.mxu0 %v6082
      %6102 = vmatmul.f32.gmra.mxu0 %v6078
      %v6103 = vpop.f32.mrf.mxu0
      %v6104 = vadd.f32 0.0, %v6103
      %6105 = vmatmul.f32.gmra.mxu0 %v6080
      %v6106 = vpop.f32.mrf.mxu0
      %v6107 = vadd.f32 0.0, %v6106
      %6108 = vdwg.mxu0
      %6109 = vrot.lane.b32.xlu0 %v443, 104
      %v6110 = vpop.permute.xlu0 %6109
      %6111 = vrot.lane.b32.xlu0 %v446, 104
      %v6112 = vpop.permute.xlu0 %6111
      %6113 = vrot.lane.b32.xlu0 %v443, 72
      %v6114 = vpop.permute.xlu0 %6113
      %6115 = vrot.lane.b32.xlu0 %v446, 72
      %v6116 = vpop.permute.xlu0 %6115
      %v6117 = vsel %vm488, %v6110, 0
      %v6119 = vsel %vm488, %v6112, 0
      %v6121 = vsel %vm488, %v6114, 0
      %v6123 = vsel %vm488, %v6116, 0
      %6125 = vmatpush.xpose.msra.mxu0 0.0
      %6126 = vmatpush.xpose.msra.mxu0 0.0
      %6127 = vmatpush.xpose.msra.mxu0 0.0
      %6128 = vmatpush.xpose.msra.mxu0 0.0
      %6129 = vmatpush.xpose.msra.mxu0 0.0
      %6130 = vmatpush.xpose.msra.mxu0 0.0
      %6131 = vmatpush.xpose.msra.mxu0 0.0
      %6132 = vmatpush.xpose.msra.mxu0 0.0
      %6133 = vmatpush.xpose.msra.mxu0 0.0
      %6134 = vmatpush.xpose.msra.mxu0 0.0
      %6135 = vmatpush.xpose.msra.mxu0 0.0
      %6136 = vmatpush.xpose.msra.mxu0 0.0
      %6137 = vmatpush.xpose.msra.mxu0 0.0
      %6138 = vmatpush.xpose.msra.mxu0 0.0
      %6139 = vmatpush.xpose.msra.mxu0 %v6123
      %6140 = vmatpush.xpose.msra.mxu0 %v6121
      %6141 = vmatmul.f32.gmra.mxu0 %v6117
      %v6142 = vpop.f32.mrf.mxu0
      %v6143 = vadd.f32 0.0, %v6142
      %6144 = vmatmul.f32.gmra.mxu0 %v6119
      %v6145 = vpop.f32.mrf.mxu0
      %v6146 = vadd.f32 0.0, %v6145
      %6147 = vdwg.mxu0
      %6148 = vrot.lane.b32.xlu0 %v449, 104
      %v6149 = vpop.permute.xlu0 %6148
      %6150 = vrot.lane.b32.xlu0 %v452, 104
      %v6151 = vpop.permute.xlu0 %6150
      %6152 = vrot.lane.b32.xlu0 %v449, 72
      %v6153 = vpop.permute.xlu0 %6152
      %6154 = vrot.lane.b32.xlu0 %v452, 72
      %v6155 = vpop.permute.xlu0 %6154
      %v6156 = vsel %vm488, %v6149, 0
      %v6158 = vsel %vm488, %v6151, 0
      %v6160 = vsel %vm488, %v6153, 0
      %v6162 = vsel %vm488, %v6155, 0
      %6164 = vmatpush.xpose.msra.mxu0 0.0
      %6165 = vmatpush.xpose.msra.mxu0 0.0
      %6166 = vmatpush.xpose.msra.mxu0 0.0
      %6167 = vmatpush.xpose.msra.mxu0 0.0
      %6168 = vmatpush.xpose.msra.mxu0 0.0
      %6169 = vmatpush.xpose.msra.mxu0 0.0
      %6170 = vmatpush.xpose.msra.mxu0 0.0
      %6171 = vmatpush.xpose.msra.mxu0 0.0
      %6172 = vmatpush.xpose.msra.mxu0 0.0
      %6173 = vmatpush.xpose.msra.mxu0 0.0
      %6174 = vmatpush.xpose.msra.mxu0 0.0
      %6175 = vmatpush.xpose.msra.mxu0 0.0
      %6176 = vmatpush.xpose.msra.mxu0 0.0
      %6177 = vmatpush.xpose.msra.mxu0 0.0
      %6178 = vmatpush.xpose.msra.mxu0 %v6162
      %6179 = vmatpush.xpose.msra.mxu0 %v6160
      %6180 = vmatmul.f32.gmra.mxu0 %v6156
      %v6181 = vpop.f32.mrf.mxu0
      %v6182 = vadd.f32 0.0, %v6181
      %6183 = vmatmul.f32.gmra.mxu0 %v6158
      %v6184 = vpop.f32.mrf.mxu0
      %v6185 = vadd.f32 0.0, %v6184
      %6186 = vdwg.mxu0
      %6187 = vrot.lane.b32.xlu0 %v455, 104
      %v6188 = vpop.permute.xlu0 %6187
      %6189 = vrot.lane.b32.xlu0 %v458, 104
      %v6190 = vpop.permute.xlu0 %6189
      %6191 = vrot.lane.b32.xlu0 %v455, 72
      %v6192 = vpop.permute.xlu0 %6191
      %6193 = vrot.lane.b32.xlu0 %v458, 72
      %v6194 = vpop.permute.xlu0 %6193
      %v6195 = vsel %vm488, %v6188, 0
      %v6197 = vsel %vm488, %v6190, 0
      %v6199 = vsel %vm488, %v6192, 0
      %v6201 = vsel %vm488, %v6194, 0
      %6203 = vmatpush.xpose.msra.mxu0 0.0
      %6204 = vmatpush.xpose.msra.mxu0 0.0
      %6205 = vmatpush.xpose.msra.mxu0 0.0
      %6206 = vmatpush.xpose.msra.mxu0 0.0
      %6207 = vmatpush.xpose.msra.mxu0 0.0
      %6208 = vmatpush.xpose.msra.mxu0 0.0
      %6209 = vmatpush.xpose.msra.mxu0 0.0
      %6210 = vmatpush.xpose.msra.mxu0 0.0
      %6211 = vmatpush.xpose.msra.mxu0 0.0
      %6212 = vmatpush.xpose.msra.mxu0 0.0
      %6213 = vmatpush.xpose.msra.mxu0 0.0
      %6214 = vmatpush.xpose.msra.mxu0 0.0
      %6215 = vmatpush.xpose.msra.mxu0 0.0
      %6216 = vmatpush.xpose.msra.mxu0 0.0
      %6217 = vmatpush.xpose.msra.mxu0 %v6201
      %6218 = vmatpush.xpose.msra.mxu0 %v6199
      %6219 = vmatmul.f32.gmra.mxu0 %v6195
      %v6220 = vpop.f32.mrf.mxu0
      %v6221 = vadd.f32 0.0, %v6220
      %6222 = vmatmul.f32.gmra.mxu0 %v6197
      %v6223 = vpop.f32.mrf.mxu0
      %v6224 = vadd.f32 0.0, %v6223
      %6225 = vdwg.mxu0
      %6226 = vrot.lane.b32.xlu0 %v461, 104
      %v6227 = vpop.permute.xlu0 %6226
      %6228 = vrot.lane.b32.xlu0 %v464, 104
      %v6229 = vpop.permute.xlu0 %6228
      %6230 = vrot.lane.b32.xlu0 %v461, 72
      %v6231 = vpop.permute.xlu0 %6230
      %6232 = vrot.lane.b32.xlu0 %v464, 72
      %v6233 = vpop.permute.xlu0 %6232
      %v6234 = vsel %vm488, %v6227, 0
      %v6236 = vsel %vm488, %v6229, 0
      %v6238 = vsel %vm488, %v6231, 0
      %v6240 = vsel %vm488, %v6233, 0
      %6242 = vmatpush.xpose.msra.mxu0 0.0
      %6243 = vmatpush.xpose.msra.mxu0 0.0
      %6244 = vmatpush.xpose.msra.mxu0 0.0
      %6245 = vmatpush.xpose.msra.mxu0 0.0
      %6246 = vmatpush.xpose.msra.mxu0 0.0
      %6247 = vmatpush.xpose.msra.mxu0 0.0
      %6248 = vmatpush.xpose.msra.mxu0 0.0
      %6249 = vmatpush.xpose.msra.mxu0 0.0
      %6250 = vmatpush.xpose.msra.mxu0 0.0
      %6251 = vmatpush.xpose.msra.mxu0 0.0
      %6252 = vmatpush.xpose.msra.mxu0 0.0
      %6253 = vmatpush.xpose.msra.mxu0 0.0
      %6254 = vmatpush.xpose.msra.mxu0 0.0
      %6255 = vmatpush.xpose.msra.mxu0 0.0
      %6256 = vmatpush.xpose.msra.mxu0 %v6240
      %6257 = vmatpush.xpose.msra.mxu0 %v6238
      %6258 = vmatmul.f32.gmra.mxu0 %v6234
      %v6259 = vpop.f32.mrf.mxu0
      %v6260 = vadd.f32 0.0, %v6259
      %6261 = vmatmul.f32.gmra.mxu0 %v6236
      %v6262 = vpop.f32.mrf.mxu0
      %v6263 = vadd.f32 0.0, %v6262
      %6264 = vdwg.mxu0
      %6265 = vrot.lane.b32.xlu0 %v467, 104
      %v6266 = vpop.permute.xlu0 %6265
      %6267 = vrot.lane.b32.xlu0 %v470, 104
      %v6268 = vpop.permute.xlu0 %6267
      %6269 = vrot.lane.b32.xlu0 %v467, 72
      %v6270 = vpop.permute.xlu0 %6269
      %6271 = vrot.lane.b32.xlu0 %v470, 72
      %v6272 = vpop.permute.xlu0 %6271
      %v6273 = vsel %vm488, %v6266, 0
      %v6275 = vsel %vm488, %v6268, 0
      %v6277 = vsel %vm488, %v6270, 0
      %v6279 = vsel %vm488, %v6272, 0
      %6281 = vmatpush.xpose.msra.mxu0 0.0
      %6282 = vmatpush.xpose.msra.mxu0 0.0
      %6283 = vmatpush.xpose.msra.mxu0 0.0
      %6284 = vmatpush.xpose.msra.mxu0 0.0
      %6285 = vmatpush.xpose.msra.mxu0 0.0
      %6286 = vmatpush.xpose.msra.mxu0 0.0
      %6287 = vmatpush.xpose.msra.mxu0 0.0
      %6288 = vmatpush.xpose.msra.mxu0 0.0
      %6289 = vmatpush.xpose.msra.mxu0 0.0
      %6290 = vmatpush.xpose.msra.mxu0 0.0
      %6291 = vmatpush.xpose.msra.mxu0 0.0
      %6292 = vmatpush.xpose.msra.mxu0 0.0
      %6293 = vmatpush.xpose.msra.mxu0 0.0
      %6294 = vmatpush.xpose.msra.mxu0 0.0
      %6295 = vmatpush.xpose.msra.mxu0 %v6279
      %6296 = vmatpush.xpose.msra.mxu0 %v6277
      %6297 = vmatmul.f32.gmra.mxu0 %v6273
      %v6298 = vpop.f32.mrf.mxu0
      %v6299 = vadd.f32 0.0, %v6298
      %6300 = vmatmul.f32.gmra.mxu0 %v6275
      %v6301 = vpop.f32.mrf.mxu0
      %v6302 = vadd.f32 0.0, %v6301
      %6303 = vdwg.mxu0
      %6304 = vrot.lane.b32.xlu0 %v473, 104
      %v6305 = vpop.permute.xlu0 %6304
      %6306 = vrot.lane.b32.xlu0 %v476, 104
      %v6307 = vpop.permute.xlu0 %6306
      %6308 = vrot.lane.b32.xlu0 %v473, 72
      %v6309 = vpop.permute.xlu0 %6308
      %6310 = vrot.lane.b32.xlu0 %v476, 72
      %v6311 = vpop.permute.xlu0 %6310
      %v6312 = vsel %vm488, %v6305, 0
      %v6314 = vsel %vm488, %v6307, 0
      %v6316 = vsel %vm488, %v6309, 0
      %v6318 = vsel %vm488, %v6311, 0
      %6320 = vmatpush.xpose.msra.mxu0 0.0
      %6321 = vmatpush.xpose.msra.mxu0 0.0
      %6322 = vmatpush.xpose.msra.mxu0 0.0
      %6323 = vmatpush.xpose.msra.mxu0 0.0
      %6324 = vmatpush.xpose.msra.mxu0 0.0
      %6325 = vmatpush.xpose.msra.mxu0 0.0
      %6326 = vmatpush.xpose.msra.mxu0 0.0
      %6327 = vmatpush.xpose.msra.mxu0 0.0
      %6328 = vmatpush.xpose.msra.mxu0 0.0
      %6329 = vmatpush.xpose.msra.mxu0 0.0
      %6330 = vmatpush.xpose.msra.mxu0 0.0
      %6331 = vmatpush.xpose.msra.mxu0 0.0
      %6332 = vmatpush.xpose.msra.mxu0 0.0
      %6333 = vmatpush.xpose.msra.mxu0 0.0
      %6334 = vmatpush.xpose.msra.mxu0 %v6318
      %6335 = vmatpush.xpose.msra.mxu0 %v6316
      %6336 = vmatmul.f32.gmra.mxu0 %v6312
      %v6337 = vpop.f32.mrf.mxu0
      %v6338 = vadd.f32 0.0, %v6337
      %6339 = vmatmul.f32.gmra.mxu0 %v6314
      %v6340 = vpop.f32.mrf.mxu0
      %v6341 = vadd.f32 0.0, %v6340
      %6342 = vdwg.mxu0
      %v6343 = vsel %vm1075, %v5753, -inf
      %6344 = vmax.xlane.f32.xlu0 %v6343
      %v6345 = vpop.xlane.xlu0 %6344
      %v6346 = vsel %vm1075, %v5756, -inf
      %6347 = vmax.xlane.f32.xlu0 %v6346
      %v6348 = vpop.xlane.xlu0 %6347
      %v6349 = vsel %vm1075, %v5792, -inf
      %6350 = vmax.xlane.f32.xlu0 %v6349
      %v6351 = vpop.xlane.xlu0 %6350
      %v6352 = vsel %vm1075, %v5795, -inf
      %6353 = vmax.xlane.f32.xlu0 %v6352
      %v6354 = vpop.xlane.xlu0 %6353
      %v6355 = vsel %vm1075, %v5831, -inf
      %6356 = vmax.xlane.f32.xlu0 %v6355
      %v6357 = vpop.xlane.xlu0 %6356
      %v6358 = vsel %vm1075, %v5834, -inf
      %6359 = vmax.xlane.f32.xlu0 %v6358
      %v6360 = vpop.xlane.xlu0 %6359
      %v6361 = vsel %vm1075, %v5870, -inf
      %6362 = vmax.xlane.f32.xlu0 %v6361
      %v6363 = vpop.xlane.xlu0 %6362
      %v6364 = vsel %vm1075, %v5873, -inf
      %6365 = vmax.xlane.f32.xlu0 %v6364
      %v6366 = vpop.xlane.xlu0 %6365
      %v6367 = vsel %vm1075, %v5909, -inf
      %6368 = vmax.xlane.f32.xlu0 %v6367
      %v6369 = vpop.xlane.xlu0 %6368
      %v6370 = vsel %vm1075, %v5912, -inf
      %6371 = vmax.xlane.f32.xlu0 %v6370
      %v6372 = vpop.xlane.xlu0 %6371
      %v6373 = vsel %vm1075, %v5948, -inf
      %6374 = vmax.xlane.f32.xlu0 %v6373
      %v6375 = vpop.xlane.xlu0 %6374
      %v6376 = vsel %vm1075, %v5951, -inf
      %6377 = vmax.xlane.f32.xlu0 %v6376
      %v6378 = vpop.xlane.xlu0 %6377
      %v6379 = vsel %vm1075, %v5987, -inf
      %6380 = vmax.xlane.f32.xlu0 %v6379
      %v6381 = vpop.xlane.xlu0 %6380
      %v6382 = vsel %vm1075, %v5990, -inf
      %6383 = vmax.xlane.f32.xlu0 %v6382
      %v6384 = vpop.xlane.xlu0 %6383
      %v6385 = vsel %vm1075, %v6026, -inf
      %6386 = vmax.xlane.f32.xlu0 %v6385
      %v6387 = vpop.xlane.xlu0 %6386
      %v6388 = vsel %vm1075, %v6029, -inf
      %6389 = vmax.xlane.f32.xlu0 %v6388
      %v6390 = vpop.xlane.xlu0 %6389
      %v6391 = vsel %vm1075, %v6065, -inf
      %6392 = vmax.xlane.f32.xlu0 %v6391
      %v6393 = vpop.xlane.xlu0 %6392
      %v6394 = vsel %vm1075, %v6068, -inf
      %6395 = vmax.xlane.f32.xlu0 %v6394
      %v6396 = vpop.xlane.xlu0 %6395
      %v6397 = vsel %vm1075, %v6104, -inf
      %6398 = vmax.xlane.f32.xlu0 %v6397
      %v6399 = vpop.xlane.xlu0 %6398
      %v6400 = vsel %vm1075, %v6107, -inf
      %6401 = vmax.xlane.f32.xlu0 %v6400
      %v6402 = vpop.xlane.xlu0 %6401
      %v6403 = vsel %vm1075, %v6143, -inf
      %6404 = vmax.xlane.f32.xlu0 %v6403
      %v6405 = vpop.xlane.xlu0 %6404
      %v6406 = vsel %vm1075, %v6146, -inf
      %6407 = vmax.xlane.f32.xlu0 %v6406
      %v6408 = vpop.xlane.xlu0 %6407
      %v6409 = vsel %vm1075, %v6182, -inf
      %6410 = vmax.xlane.f32.xlu0 %v6409
      %v6411 = vpop.xlane.xlu0 %6410
      %v6412 = vsel %vm1075, %v6185, -inf
      %6413 = vmax.xlane.f32.xlu0 %v6412
      %v6414 = vpop.xlane.xlu0 %6413
      %v6415 = vsel %vm1075, %v6221, -inf
      %6416 = vmax.xlane.f32.xlu0 %v6415
      %v6417 = vpop.xlane.xlu0 %6416
      %v6418 = vsel %vm1075, %v6224, -inf
      %6419 = vmax.xlane.f32.xlu0 %v6418
      %v6420 = vpop.xlane.xlu0 %6419
      %v6421 = vsel %vm1075, %v6260, -inf
      %6422 = vmax.xlane.f32.xlu0 %v6421
      %v6423 = vpop.xlane.xlu0 %6422
      %v6424 = vsel %vm1075, %v6263, -inf
      %6425 = vmax.xlane.f32.xlu0 %v6424
      %v6426 = vpop.xlane.xlu0 %6425
      %v6427 = vsel %vm1075, %v6299, -inf
      %6428 = vmax.xlane.f32.xlu0 %v6427
      %v6429 = vpop.xlane.xlu0 %6428
      %v6430 = vsel %vm1075, %v6302, -inf
      %6431 = vmax.xlane.f32.xlu0 %v6430
      %v6432 = vpop.xlane.xlu0 %6431
      %v6433 = vsel %vm1075, %v6338, -inf
      %6434 = vmax.xlane.f32.xlu0 %v6433
      %v6435 = vpop.xlane.xlu0 %6434
      %v6436 = vsel %vm1075, %v6341, -inf
      %6437 = vmax.xlane.f32.xlu0 %v6436
      %v6438 = vpop.xlane.xlu0 %6437
      %v6439 = vsub.f32 %v5753, %v6345
      %v6440 = vsub.f32 %v5756, %v6348
      %v6441 = vsub.f32 %v5792, %v6351
      %v6442 = vsub.f32 %v5795, %v6354
      %v6443 = vsub.f32 %v5831, %v6357
      %v6444 = vsub.f32 %v5834, %v6360
      %v6445 = vsub.f32 %v5870, %v6363
      %v6446 = vsub.f32 %v5873, %v6366
      %v6447 = vsub.f32 %v5909, %v6369
      %v6448 = vsub.f32 %v5912, %v6372
      %v6449 = vsub.f32 %v5948, %v6375
      %v6450 = vsub.f32 %v5951, %v6378
      %v6451 = vsub.f32 %v5987, %v6381
      %v6452 = vsub.f32 %v5990, %v6384
      %v6453 = vsub.f32 %v6026, %v6387
      %v6454 = vsub.f32 %v6029, %v6390
      %v6455 = vsub.f32 %v6065, %v6393
      %v6456 = vsub.f32 %v6068, %v6396
      %v6457 = vsub.f32 %v6104, %v6399
      %v6458 = vsub.f32 %v6107, %v6402
      %v6459 = vsub.f32 %v6143, %v6405
      %v6460 = vsub.f32 %v6146, %v6408
      %v6461 = vsub.f32 %v6182, %v6411
      %v6462 = vsub.f32 %v6185, %v6414
      %v6463 = vsub.f32 %v6221, %v6417
      %v6464 = vsub.f32 %v6224, %v6420
      %v6465 = vsub.f32 %v6260, %v6423
      %v6466 = vsub.f32 %v6263, %v6426
      %v6467 = vsub.f32 %v6299, %v6429
      %v6468 = vsub.f32 %v6302, %v6432
      %v6469 = vsub.f32 %v6338, %v6435
      %v6470 = vsub.f32 %v6341, %v6438
      %v6471 = vmul.f32 %v6439, 1.442695
      %v6472 = vpow.pop %v6471
      %v6473 = vmul.f32 %v6440, 1.442695
      %v6474 = vpow.pop %v6473
      %v6475 = vmul.f32 %v6441, 1.442695
      %v6476 = vpow.pop %v6475
      %v6477 = vmul.f32 %v6442, 1.442695
      %v6478 = vpow.pop %v6477
      %v6479 = vmul.f32 %v6443, 1.442695
      %v6480 = vpow.pop %v6479
      %v6481 = vmul.f32 %v6444, 1.442695
      %v6482 = vpow.pop %v6481
      %v6483 = vmul.f32 %v6445, 1.442695
      %v6484 = vpow.pop %v6483
      %v6485 = vmul.f32 %v6446, 1.442695
      %v6486 = vpow.pop %v6485
      %v6487 = vmul.f32 %v6447, 1.442695
      %v6488 = vpow.pop %v6487
      %v6489 = vmul.f32 %v6448, 1.442695
      %v6490 = vpow.pop %v6489
      %v6491 = vmul.f32 %v6449, 1.442695
      %v6492 = vpow.pop %v6491
      %v6493 = vmul.f32 %v6450, 1.442695
      %v6494 = vpow.pop %v6493
      %v6495 = vmul.f32 %v6451, 1.442695
      %v6496 = vpow.pop %v6495
      %v6497 = vmul.f32 %v6452, 1.442695
      %v6498 = vpow.pop %v6497
      %v6499 = vmul.f32 %v6453, 1.442695
      %v6500 = vpow.pop %v6499
      %v6501 = vmul.f32 %v6454, 1.442695
      %v6502 = vpow.pop %v6501
      %v6503 = vmul.f32 %v6455, 1.442695
      %v6504 = vpow.pop %v6503
      %v6505 = vmul.f32 %v6456, 1.442695
      %v6506 = vpow.pop %v6505
      %v6507 = vmul.f32 %v6457, 1.442695
      %v6508 = vpow.pop %v6507
      %v6509 = vmul.f32 %v6458, 1.442695
      %v6510 = vpow.pop %v6509
      %v6511 = vmul.f32 %v6459, 1.442695
      %v6512 = vpow.pop %v6511
      %v6513 = vmul.f32 %v6460, 1.442695
      %v6514 = vpow.pop %v6513
      %v6515 = vmul.f32 %v6461, 1.442695
      %v6516 = vpow.pop %v6515
      %v6517 = vmul.f32 %v6462, 1.442695
      %v6518 = vpow.pop %v6517
      %v6519 = vmul.f32 %v6463, 1.442695
      %v6520 = vpow.pop %v6519
      %v6521 = vmul.f32 %v6464, 1.442695
      %v6522 = vpow.pop %v6521
      %v6523 = vmul.f32 %v6465, 1.442695
      %v6524 = vpow.pop %v6523
      %v6525 = vmul.f32 %v6466, 1.442695
      %v6526 = vpow.pop %v6525
      %v6527 = vmul.f32 %v6467, 1.442695
      %v6528 = vpow.pop %v6527
      %v6529 = vmul.f32 %v6468, 1.442695
      %v6530 = vpow.pop %v6529
      %v6531 = vmul.f32 %v6469, 1.442695
      %v6532 = vpow.pop %v6531
      %v6533 = vmul.f32 %v6470, 1.442695
      %v6534 = vpow.pop %v6533
      %v6535 = vsel %vm1075, %v6472, 0.0
      %6536 = vadd.xlane.f32.xlu0 %v6535
      %v6537 = vpop.xlane.xlu0 %6536
      %v6538 = vsel %vm1075, %v6474, 0.0
      %6539 = vadd.xlane.f32.xlu0 %v6538
      %v6540 = vpop.xlane.xlu0 %6539
      %v6541 = vsel %vm1075, %v6476, 0.0
      %6542 = vadd.xlane.f32.xlu0 %v6541
      %v6543 = vpop.xlane.xlu0 %6542
      %v6544 = vsel %vm1075, %v6478, 0.0
      %6545 = vadd.xlane.f32.xlu0 %v6544
      %v6546 = vpop.xlane.xlu0 %6545
      %v6547 = vsel %vm1075, %v6480, 0.0
      %6548 = vadd.xlane.f32.xlu0 %v6547
      %v6549 = vpop.xlane.xlu0 %6548
      %v6550 = vsel %vm1075, %v6482, 0.0
      %6551 = vadd.xlane.f32.xlu0 %v6550
      %v6552 = vpop.xlane.xlu0 %6551
      %v6553 = vsel %vm1075, %v6484, 0.0
      %6554 = vadd.xlane.f32.xlu0 %v6553
      %v6555 = vpop.xlane.xlu0 %6554
      %v6556 = vsel %vm1075, %v6486, 0.0
      %6557 = vadd.xlane.f32.xlu0 %v6556
      %v6558 = vpop.xlane.xlu0 %6557
      %v6559 = vsel %vm1075, %v6488, 0.0
      %6560 = vadd.xlane.f32.xlu0 %v6559
      %v6561 = vpop.xlane.xlu0 %6560
      %v6562 = vsel %vm1075, %v6490, 0.0
      %6563 = vadd.xlane.f32.xlu0 %v6562
      %v6564 = vpop.xlane.xlu0 %6563
      %v6565 = vsel %vm1075, %v6492, 0.0
      %6566 = vadd.xlane.f32.xlu0 %v6565
      %v6567 = vpop.xlane.xlu0 %6566
      %v6568 = vsel %vm1075, %v6494, 0.0
      %6569 = vadd.xlane.f32.xlu0 %v6568
      %v6570 = vpop.xlane.xlu0 %6569
      %v6571 = vsel %vm1075, %v6496, 0.0
      %6572 = vadd.xlane.f32.xlu0 %v6571
      %v6573 = vpop.xlane.xlu0 %6572
      %v6574 = vsel %vm1075, %v6498, 0.0
      %6575 = vadd.xlane.f32.xlu0 %v6574
      %v6576 = vpop.xlane.xlu0 %6575
      %v6577 = vsel %vm1075, %v6500, 0.0
      %6578 = vadd.xlane.f32.xlu0 %v6577
      %v6579 = vpop.xlane.xlu0 %6578
      %v6580 = vsel %vm1075, %v6502, 0.0
      %6581 = vadd.xlane.f32.xlu0 %v6580
      %v6582 = vpop.xlane.xlu0 %6581
      %v6583 = vsel %vm1075, %v6504, 0.0
      %6584 = vadd.xlane.f32.xlu0 %v6583
      %v6585 = vpop.xlane.xlu0 %6584
      %v6586 = vsel %vm1075, %v6506, 0.0
      %6587 = vadd.xlane.f32.xlu0 %v6586
      %v6588 = vpop.xlane.xlu0 %6587
      %v6589 = vsel %vm1075, %v6508, 0.0
      %6590 = vadd.xlane.f32.xlu0 %v6589
      %v6591 = vpop.xlane.xlu0 %6590
      %v6592 = vsel %vm1075, %v6510, 0.0
      %6593 = vadd.xlane.f32.xlu0 %v6592
      %v6594 = vpop.xlane.xlu0 %6593
      %v6595 = vsel %vm1075, %v6512, 0.0
      %6596 = vadd.xlane.f32.xlu0 %v6595
      %v6597 = vpop.xlane.xlu0 %6596
      %v6598 = vsel %vm1075, %v6514, 0.0
      %6599 = vadd.xlane.f32.xlu0 %v6598
      %v6600 = vpop.xlane.xlu0 %6599
      %v6601 = vsel %vm1075, %v6516, 0.0
      %6602 = vadd.xlane.f32.xlu0 %v6601
      %v6603 = vpop.xlane.xlu0 %6602
      %v6604 = vsel %vm1075, %v6518, 0.0
      %6605 = vadd.xlane.f32.xlu0 %v6604
      %v6606 = vpop.xlane.xlu0 %6605
      %v6607 = vsel %vm1075, %v6520, 0.0
      %6608 = vadd.xlane.f32.xlu0 %v6607
      %v6609 = vpop.xlane.xlu0 %6608
      %v6610 = vsel %vm1075, %v6522, 0.0
      %6611 = vadd.xlane.f32.xlu0 %v6610
      %v6612 = vpop.xlane.xlu0 %6611
      %v6613 = vsel %vm1075, %v6524, 0.0
      %6614 = vadd.xlane.f32.xlu0 %v6613
      %v6615 = vpop.xlane.xlu0 %6614
      %v6616 = vsel %vm1075, %v6526, 0.0
      %6617 = vadd.xlane.f32.xlu0 %v6616
      %v6618 = vpop.xlane.xlu0 %6617
      %v6619 = vsel %vm1075, %v6528, 0.0
      %6620 = vadd.xlane.f32.xlu0 %v6619
      %v6621 = vpop.xlane.xlu0 %6620
      %v6622 = vsel %vm1075, %v6530, 0.0
      %6623 = vadd.xlane.f32.xlu0 %v6622
      %v6624 = vpop.xlane.xlu0 %6623
      %v6625 = vsel %vm1075, %v6532, 0.0
      %6626 = vadd.xlane.f32.xlu0 %v6625
      %v6627 = vpop.xlane.xlu0 %6626
      %v6628 = vsel %vm1075, %v6534, 0.0
      %6629 = vadd.xlane.f32.xlu0 %v6628
      %v6630 = vpop.xlane.xlu0 %6629
      %v6631 = vrcp.pop %v6537
      %v6632 = vrcp.pop %v6540
      %v6633 = vrcp.pop %v6543
      %v6634 = vrcp.pop %v6546
      %v6635 = vrcp.pop %v6549
      %v6636 = vrcp.pop %v6552
      %v6637 = vrcp.pop %v6555
      %v6638 = vrcp.pop %v6558
      %v6639 = vrcp.pop %v6561
      %v6640 = vrcp.pop %v6564
      %v6641 = vrcp.pop %v6567
      %v6642 = vrcp.pop %v6570
      %v6643 = vrcp.pop %v6573
      %v6644 = vrcp.pop %v6576
      %v6645 = vrcp.pop %v6579
      %v6646 = vrcp.pop %v6582
      %v6647 = vrcp.pop %v6585
      %v6648 = vrcp.pop %v6588
      %v6649 = vrcp.pop %v6591
      %v6650 = vrcp.pop %v6594
      %v6651 = vrcp.pop %v6597
      %v6652 = vrcp.pop %v6600
      %v6653 = vrcp.pop %v6603
      %v6654 = vrcp.pop %v6606
      %v6655 = vrcp.pop %v6609
      %v6656 = vrcp.pop %v6612
      %v6657 = vrcp.pop %v6615
      %v6658 = vrcp.pop %v6618
      %v6659 = vrcp.pop %v6621
      %v6660 = vrcp.pop %v6624
      %v6661 = vrcp.pop %v6627
      %v6662 = vrcp.pop %v6630
      %v6663 = vmul.f32 %v6472, %v6631
      %v6664 = vmul.f32 %v6474, %v6632
      %v6665 = vmul.f32 %v6476, %v6633
      %v6666 = vmul.f32 %v6478, %v6634
      %v6667 = vmul.f32 %v6480, %v6635
      %v6668 = vmul.f32 %v6482, %v6636
      %v6669 = vmul.f32 %v6484, %v6637
      %v6670 = vmul.f32 %v6486, %v6638
      %v6671 = vmul.f32 %v6488, %v6639
      %v6672 = vmul.f32 %v6490, %v6640
      %v6673 = vmul.f32 %v6492, %v6641
      %v6674 = vmul.f32 %v6494, %v6642
      %v6675 = vmul.f32 %v6496, %v6643
      %v6676 = vmul.f32 %v6498, %v6644
      %v6677 = vmul.f32 %v6500, %v6645
      %v6678 = vmul.f32 %v6502, %v6646
      %v6679 = vmul.f32 %v6504, %v6647
      %v6680 = vmul.f32 %v6506, %v6648
      %v6681 = vmul.f32 %v6508, %v6649
      %v6682 = vmul.f32 %v6510, %v6650
      %v6683 = vmul.f32 %v6512, %v6651
      %v6684 = vmul.f32 %v6514, %v6652
      %v6685 = vmul.f32 %v6516, %v6653
      %v6686 = vmul.f32 %v6518, %v6654
      %v6687 = vmul.f32 %v6520, %v6655
      %v6688 = vmul.f32 %v6522, %v6656
      %v6689 = vmul.f32 %v6524, %v6657
      %v6690 = vmul.f32 %v6526, %v6658
      %v6691 = vmul.f32 %v6528, %v6659
      %v6692 = vmul.f32 %v6530, %v6660
      %v6693 = vmul.f32 %v6532, %v6661
      %v6694 = vmul.f32 %v6534, %v6662
      %6695 = vrot.lane.b32.xlu0 %v383, 40
      %v6696 = vpop.permute.xlu0 %6695
      %6697 = vrot.lane.b32.xlu0 %v386, 40
      %v6698 = vpop.permute.xlu0 %6697
      %v6702 = vsel %vm1075, %v6663, 0
      %v6705 = vsel %vm1075, %v6664, 0
      %6707 = vmatpush.msra.mxu0 0.0
      %6708 = vmatpush.msra.mxu0 0.0
      %6709 = vmatpush.msra.mxu0 0.0
      %6710 = vmatpush.msra.mxu0 0.0
      %6711 = vmatpush.msra.mxu0 0.0
      %6712 = vmatpush.msra.mxu0 0.0
      %6713 = vmatpush.msra.mxu0 0.0
      %6714 = vmatpush.msra.mxu0 0.0
      %6715 = vmatpush.msra.mxu0 0.0
      %6716 = vmatpush.msra.mxu0 0.0
      %6717 = vmatpush.msra.mxu0 0.0
      %6718 = vmatpush.msra.mxu0 0.0
      %6719 = vmatpush.msra.mxu0 0.0
      %6720 = vmatpush.msra.mxu0 0.0
      %6721 = vmatpush.msra.mxu0 %v6698
      %6722 = vmatpush.msra.mxu0 %v6696
      %6723 = vmatmul.f32.gmra.mxu0 %v6702
      %v6724 = vpop.f32.mrf.mxu0
      %v6725 = vadd.f32 0.0, %v6724
      %6726 = vmatmul.f32.gmra.mxu0 %v6705
      %v6727 = vpop.f32.mrf.mxu0
      %v6728 = vadd.f32 0.0, %v6727
      %6729 = vdwg.mxu0
      %6730 = vrot.lane.b32.xlu0 %v389, 40
      %v6731 = vpop.permute.xlu0 %6730
      %6732 = vrot.lane.b32.xlu0 %v392, 40
      %v6733 = vpop.permute.xlu0 %6732
      %v6737 = vsel %vm1075, %v6665, 0
      %v6740 = vsel %vm1075, %v6666, 0
      %6742 = vmatpush.msra.mxu0 0.0
      %6743 = vmatpush.msra.mxu0 0.0
      %6744 = vmatpush.msra.mxu0 0.0
      %6745 = vmatpush.msra.mxu0 0.0
      %6746 = vmatpush.msra.mxu0 0.0
      %6747 = vmatpush.msra.mxu0 0.0
      %6748 = vmatpush.msra.mxu0 0.0
      %6749 = vmatpush.msra.mxu0 0.0
      %6750 = vmatpush.msra.mxu0 0.0
      %6751 = vmatpush.msra.mxu0 0.0
      %6752 = vmatpush.msra.mxu0 0.0
      %6753 = vmatpush.msra.mxu0 0.0
      %6754 = vmatpush.msra.mxu0 0.0
      %6755 = vmatpush.msra.mxu0 0.0
      %6756 = vmatpush.msra.mxu0 %v6733
      %6757 = vmatpush.msra.mxu0 %v6731
      %6758 = vmatmul.f32.gmra.mxu0 %v6737
      %v6759 = vpop.f32.mrf.mxu0
      %v6760 = vadd.f32 0.0, %v6759
      %6761 = vmatmul.f32.gmra.mxu0 %v6740
      %v6762 = vpop.f32.mrf.mxu0
      %v6763 = vadd.f32 0.0, %v6762
      %6764 = vdwg.mxu0
      %6765 = vrot.lane.b32.xlu0 %v395, 40
      %v6766 = vpop.permute.xlu0 %6765
      %6767 = vrot.lane.b32.xlu0 %v398, 40
      %v6768 = vpop.permute.xlu0 %6767
      %v6772 = vsel %vm1075, %v6667, 0
      %v6775 = vsel %vm1075, %v6668, 0
      %6777 = vmatpush.msra.mxu0 0.0
      %6778 = vmatpush.msra.mxu0 0.0
      %6779 = vmatpush.msra.mxu0 0.0
      %6780 = vmatpush.msra.mxu0 0.0
      %6781 = vmatpush.msra.mxu0 0.0
      %6782 = vmatpush.msra.mxu0 0.0
      %6783 = vmatpush.msra.mxu0 0.0
      %6784 = vmatpush.msra.mxu0 0.0
      %6785 = vmatpush.msra.mxu0 0.0
      %6786 = vmatpush.msra.mxu0 0.0
      %6787 = vmatpush.msra.mxu0 0.0
      %6788 = vmatpush.msra.mxu0 0.0
      %6789 = vmatpush.msra.mxu0 0.0
      %6790 = vmatpush.msra.mxu0 0.0
      %6791 = vmatpush.msra.mxu0 %v6768
      %6792 = vmatpush.msra.mxu0 %v6766
      %6793 = vmatmul.f32.gmra.mxu0 %v6772
      %v6794 = vpop.f32.mrf.mxu0
      %v6795 = vadd.f32 0.0, %v6794
      %6796 = vmatmul.f32.gmra.mxu0 %v6775
      %v6797 = vpop.f32.mrf.mxu0
      %v6798 = vadd.f32 0.0, %v6797
      %6799 = vdwg.mxu0
      %6800 = vrot.lane.b32.xlu0 %v401, 40
      %v6801 = vpop.permute.xlu0 %6800
      %6802 = vrot.lane.b32.xlu0 %v404, 40
      %v6803 = vpop.permute.xlu0 %6802
      %v6807 = vsel %vm1075, %v6669, 0
      %v6810 = vsel %vm1075, %v6670, 0
      %6812 = vmatpush.msra.mxu0 0.0
      %6813 = vmatpush.msra.mxu0 0.0
      %6814 = vmatpush.msra.mxu0 0.0
      %6815 = vmatpush.msra.mxu0 0.0
      %6816 = vmatpush.msra.mxu0 0.0
      %6817 = vmatpush.msra.mxu0 0.0
      %6818 = vmatpush.msra.mxu0 0.0
      %6819 = vmatpush.msra.mxu0 0.0
      %6820 = vmatpush.msra.mxu0 0.0
      %6821 = vmatpush.msra.mxu0 0.0
      %6822 = vmatpush.msra.mxu0 0.0
      %6823 = vmatpush.msra.mxu0 0.0
      %6824 = vmatpush.msra.mxu0 0.0
      %6825 = vmatpush.msra.mxu0 0.0
      %6826 = vmatpush.msra.mxu0 %v6803
      %6827 = vmatpush.msra.mxu0 %v6801
      %6828 = vmatmul.f32.gmra.mxu0 %v6807
      %v6829 = vpop.f32.mrf.mxu0
      %v6830 = vadd.f32 0.0, %v6829
      %6831 = vmatmul.f32.gmra.mxu0 %v6810
      %v6832 = vpop.f32.mrf.mxu0
      %v6833 = vadd.f32 0.0, %v6832
      %6834 = vdwg.mxu0
      %6835 = vrot.lane.b32.xlu0 %v407, 40
      %v6836 = vpop.permute.xlu0 %6835
      %6837 = vrot.lane.b32.xlu0 %v410, 40
      %v6838 = vpop.permute.xlu0 %6837
      %v6842 = vsel %vm1075, %v6671, 0
      %v6845 = vsel %vm1075, %v6672, 0
      %6847 = vmatpush.msra.mxu0 0.0
      %6848 = vmatpush.msra.mxu0 0.0
      %6849 = vmatpush.msra.mxu0 0.0
      %6850 = vmatpush.msra.mxu0 0.0
      %6851 = vmatpush.msra.mxu0 0.0
      %6852 = vmatpush.msra.mxu0 0.0
      %6853 = vmatpush.msra.mxu0 0.0
      %6854 = vmatpush.msra.mxu0 0.0
      %6855 = vmatpush.msra.mxu0 0.0
      %6856 = vmatpush.msra.mxu0 0.0
      %6857 = vmatpush.msra.mxu0 0.0
      %6858 = vmatpush.msra.mxu0 0.0
      %6859 = vmatpush.msra.mxu0 0.0
      %6860 = vmatpush.msra.mxu0 0.0
      %6861 = vmatpush.msra.mxu0 %v6838
      %6862 = vmatpush.msra.mxu0 %v6836
      %6863 = vmatmul.f32.gmra.mxu0 %v6842
      %v6864 = vpop.f32.mrf.mxu0
      %v6865 = vadd.f32 0.0, %v6864
      %6866 = vmatmul.f32.gmra.mxu0 %v6845
      %v6867 = vpop.f32.mrf.mxu0
      %v6868 = vadd.f32 0.0, %v6867
      %6869 = vdwg.mxu0
      %6870 = vrot.lane.b32.xlu0 %v413, 40
      %v6871 = vpop.permute.xlu0 %6870
      %6872 = vrot.lane.b32.xlu0 %v416, 40
      %v6873 = vpop.permute.xlu0 %6872
      %v6877 = vsel %vm1075, %v6673, 0
      %v6880 = vsel %vm1075, %v6674, 0
      %6882 = vmatpush.msra.mxu0 0.0
      %6883 = vmatpush.msra.mxu0 0.0
      %6884 = vmatpush.msra.mxu0 0.0
      %6885 = vmatpush.msra.mxu0 0.0
      %6886 = vmatpush.msra.mxu0 0.0
      %6887 = vmatpush.msra.mxu0 0.0
      %6888 = vmatpush.msra.mxu0 0.0
      %6889 = vmatpush.msra.mxu0 0.0
      %6890 = vmatpush.msra.mxu0 0.0
      %6891 = vmatpush.msra.mxu0 0.0
      %6892 = vmatpush.msra.mxu0 0.0
      %6893 = vmatpush.msra.mxu0 0.0
      %6894 = vmatpush.msra.mxu0 0.0
      %6895 = vmatpush.msra.mxu0 0.0
      %6896 = vmatpush.msra.mxu0 %v6873
      %6897 = vmatpush.msra.mxu0 %v6871
      %6898 = vmatmul.f32.gmra.mxu0 %v6877
      %v6899 = vpop.f32.mrf.mxu0
      %v6900 = vadd.f32 0.0, %v6899
      %6901 = vmatmul.f32.gmra.mxu0 %v6880
      %v6902 = vpop.f32.mrf.mxu0
      %v6903 = vadd.f32 0.0, %v6902
      %6904 = vdwg.mxu0
      %6905 = vrot.lane.b32.xlu0 %v419, 40
      %v6906 = vpop.permute.xlu0 %6905
      %6907 = vrot.lane.b32.xlu0 %v422, 40
      %v6908 = vpop.permute.xlu0 %6907
      %v6912 = vsel %vm1075, %v6675, 0
      %v6915 = vsel %vm1075, %v6676, 0
      %6917 = vmatpush.msra.mxu0 0.0
      %6918 = vmatpush.msra.mxu0 0.0
      %6919 = vmatpush.msra.mxu0 0.0
      %6920 = vmatpush.msra.mxu0 0.0
      %6921 = vmatpush.msra.mxu0 0.0
      %6922 = vmatpush.msra.mxu0 0.0
      %6923 = vmatpush.msra.mxu0 0.0
      %6924 = vmatpush.msra.mxu0 0.0
      %6925 = vmatpush.msra.mxu0 0.0
      %6926 = vmatpush.msra.mxu0 0.0
      %6927 = vmatpush.msra.mxu0 0.0
      %6928 = vmatpush.msra.mxu0 0.0
      %6929 = vmatpush.msra.mxu0 0.0
      %6930 = vmatpush.msra.mxu0 0.0
      %6931 = vmatpush.msra.mxu0 %v6908
      %6932 = vmatpush.msra.mxu0 %v6906
      %6933 = vmatmul.f32.gmra.mxu0 %v6912
      %v6934 = vpop.f32.mrf.mxu0
      %v6935 = vadd.f32 0.0, %v6934
      %6936 = vmatmul.f32.gmra.mxu0 %v6915
      %v6937 = vpop.f32.mrf.mxu0
      %v6938 = vadd.f32 0.0, %v6937
      %6939 = vdwg.mxu0
      %6940 = vrot.lane.b32.xlu0 %v425, 40
      %v6941 = vpop.permute.xlu0 %6940
      %6942 = vrot.lane.b32.xlu0 %v428, 40
      %v6943 = vpop.permute.xlu0 %6942
      %v6947 = vsel %vm1075, %v6677, 0
      %v6950 = vsel %vm1075, %v6678, 0
      %6952 = vmatpush.msra.mxu0 0.0
      %6953 = vmatpush.msra.mxu0 0.0
      %6954 = vmatpush.msra.mxu0 0.0
      %6955 = vmatpush.msra.mxu0 0.0
      %6956 = vmatpush.msra.mxu0 0.0
      %6957 = vmatpush.msra.mxu0 0.0
      %6958 = vmatpush.msra.mxu0 0.0
      %6959 = vmatpush.msra.mxu0 0.0
      %6960 = vmatpush.msra.mxu0 0.0
      %6961 = vmatpush.msra.mxu0 0.0
      %6962 = vmatpush.msra.mxu0 0.0
      %6963 = vmatpush.msra.mxu0 0.0
      %6964 = vmatpush.msra.mxu0 0.0
      %6965 = vmatpush.msra.mxu0 0.0
      %6966 = vmatpush.msra.mxu0 %v6943
      %6967 = vmatpush.msra.mxu0 %v6941
      %6968 = vmatmul.f32.gmra.mxu0 %v6947
      %v6969 = vpop.f32.mrf.mxu0
      %v6970 = vadd.f32 0.0, %v6969
      %6971 = vmatmul.f32.gmra.mxu0 %v6950
      %v6972 = vpop.f32.mrf.mxu0
      %v6973 = vadd.f32 0.0, %v6972
      %6974 = vdwg.mxu0
      %6975 = vrot.lane.b32.xlu0 %v431, 40
      %v6976 = vpop.permute.xlu0 %6975
      %6977 = vrot.lane.b32.xlu0 %v434, 40
      %v6978 = vpop.permute.xlu0 %6977
      %v6982 = vsel %vm1075, %v6679, 0
      %v6985 = vsel %vm1075, %v6680, 0
      %6987 = vmatpush.msra.mxu0 0.0
      %6988 = vmatpush.msra.mxu0 0.0
      %6989 = vmatpush.msra.mxu0 0.0
      %6990 = vmatpush.msra.mxu0 0.0
      %6991 = vmatpush.msra.mxu0 0.0
      %6992 = vmatpush.msra.mxu0 0.0
      %6993 = vmatpush.msra.mxu0 0.0
      %6994 = vmatpush.msra.mxu0 0.0
      %6995 = vmatpush.msra.mxu0 0.0
      %6996 = vmatpush.msra.mxu0 0.0
      %6997 = vmatpush.msra.mxu0 0.0
      %6998 = vmatpush.msra.mxu0 0.0
      %6999 = vmatpush.msra.mxu0 0.0
      %7000 = vmatpush.msra.mxu0 0.0
      %7001 = vmatpush.msra.mxu0 %v6978
      %7002 = vmatpush.msra.mxu0 %v6976
      %7003 = vmatmul.f32.gmra.mxu0 %v6982
      %v7004 = vpop.f32.mrf.mxu0
      %v7005 = vadd.f32 0.0, %v7004
      %7006 = vmatmul.f32.gmra.mxu0 %v6985
      %v7007 = vpop.f32.mrf.mxu0
      %v7008 = vadd.f32 0.0, %v7007
      %7009 = vdwg.mxu0
      %7010 = vrot.lane.b32.xlu0 %v437, 40
      %v7011 = vpop.permute.xlu0 %7010
      %7012 = vrot.lane.b32.xlu0 %v440, 40
      %v7013 = vpop.permute.xlu0 %7012
      %v7017 = vsel %vm1075, %v6681, 0
      %v7020 = vsel %vm1075, %v6682, 0
      %7022 = vmatpush.msra.mxu0 0.0
      %7023 = vmatpush.msra.mxu0 0.0
      %7024 = vmatpush.msra.mxu0 0.0
      %7025 = vmatpush.msra.mxu0 0.0
      %7026 = vmatpush.msra.mxu0 0.0
      %7027 = vmatpush.msra.mxu0 0.0
      %7028 = vmatpush.msra.mxu0 0.0
      %7029 = vmatpush.msra.mxu0 0.0
      %7030 = vmatpush.msra.mxu0 0.0
      %7031 = vmatpush.msra.mxu0 0.0
      %7032 = vmatpush.msra.mxu0 0.0
      %7033 = vmatpush.msra.mxu0 0.0
      %7034 = vmatpush.msra.mxu0 0.0
      %7035 = vmatpush.msra.mxu0 0.0
      %7036 = vmatpush.msra.mxu0 %v7013
      %7037 = vmatpush.msra.mxu0 %v7011
      %7038 = vmatmul.f32.gmra.mxu0 %v7017
      %v7039 = vpop.f32.mrf.mxu0
      %v7040 = vadd.f32 0.0, %v7039
      %7041 = vmatmul.f32.gmra.mxu0 %v7020
      %v7042 = vpop.f32.mrf.mxu0
      %v7043 = vadd.f32 0.0, %v7042
      %7044 = vdwg.mxu0
      %7045 = vrot.lane.b32.xlu0 %v443, 40
      %v7046 = vpop.permute.xlu0 %7045
      %7047 = vrot.lane.b32.xlu0 %v446, 40
      %v7048 = vpop.permute.xlu0 %7047
      %v7052 = vsel %vm1075, %v6683, 0
      %v7055 = vsel %vm1075, %v6684, 0
      %7057 = vmatpush.msra.mxu0 0.0
      %7058 = vmatpush.msra.mxu0 0.0
      %7059 = vmatpush.msra.mxu0 0.0
      %7060 = vmatpush.msra.mxu0 0.0
      %7061 = vmatpush.msra.mxu0 0.0
      %7062 = vmatpush.msra.mxu0 0.0
      %7063 = vmatpush.msra.mxu0 0.0
      %7064 = vmatpush.msra.mxu0 0.0
      %7065 = vmatpush.msra.mxu0 0.0
      %7066 = vmatpush.msra.mxu0 0.0
      %7067 = vmatpush.msra.mxu0 0.0
      %7068 = vmatpush.msra.mxu0 0.0
      %7069 = vmatpush.msra.mxu0 0.0
      %7070 = vmatpush.msra.mxu0 0.0
      %7071 = vmatpush.msra.mxu0 %v7048
      %7072 = vmatpush.msra.mxu0 %v7046
      %7073 = vmatmul.f32.gmra.mxu0 %v7052
      %v7074 = vpop.f32.mrf.mxu0
      %v7075 = vadd.f32 0.0, %v7074
      %7076 = vmatmul.f32.gmra.mxu0 %v7055
      %v7077 = vpop.f32.mrf.mxu0
      %v7078 = vadd.f32 0.0, %v7077
      %7079 = vdwg.mxu0
      %7080 = vrot.lane.b32.xlu0 %v449, 40
      %v7081 = vpop.permute.xlu0 %7080
      %7082 = vrot.lane.b32.xlu0 %v452, 40
      %v7083 = vpop.permute.xlu0 %7082
      %v7087 = vsel %vm1075, %v6685, 0
      %v7090 = vsel %vm1075, %v6686, 0
      %7092 = vmatpush.msra.mxu0 0.0
      %7093 = vmatpush.msra.mxu0 0.0
      %7094 = vmatpush.msra.mxu0 0.0
      %7095 = vmatpush.msra.mxu0 0.0
      %7096 = vmatpush.msra.mxu0 0.0
      %7097 = vmatpush.msra.mxu0 0.0
      %7098 = vmatpush.msra.mxu0 0.0
      %7099 = vmatpush.msra.mxu0 0.0
      %7100 = vmatpush.msra.mxu0 0.0
      %7101 = vmatpush.msra.mxu0 0.0
      %7102 = vmatpush.msra.mxu0 0.0
      %7103 = vmatpush.msra.mxu0 0.0
      %7104 = vmatpush.msra.mxu0 0.0
      %7105 = vmatpush.msra.mxu0 0.0
      %7106 = vmatpush.msra.mxu0 %v7083
      %7107 = vmatpush.msra.mxu0 %v7081
      %7108 = vmatmul.f32.gmra.mxu0 %v7087
      %v7109 = vpop.f32.mrf.mxu0
      %v7110 = vadd.f32 0.0, %v7109
      %7111 = vmatmul.f32.gmra.mxu0 %v7090
      %v7112 = vpop.f32.mrf.mxu0
      %v7113 = vadd.f32 0.0, %v7112
      %7114 = vdwg.mxu0
      %7115 = vrot.lane.b32.xlu0 %v455, 40
      %v7116 = vpop.permute.xlu0 %7115
      %7117 = vrot.lane.b32.xlu0 %v458, 40
      %v7118 = vpop.permute.xlu0 %7117
      %v7122 = vsel %vm1075, %v6687, 0
      %v7125 = vsel %vm1075, %v6688, 0
      %7127 = vmatpush.msra.mxu0 0.0
      %7128 = vmatpush.msra.mxu0 0.0
      %7129 = vmatpush.msra.mxu0 0.0
      %7130 = vmatpush.msra.mxu0 0.0
      %7131 = vmatpush.msra.mxu0 0.0
      %7132 = vmatpush.msra.mxu0 0.0
      %7133 = vmatpush.msra.mxu0 0.0
      %7134 = vmatpush.msra.mxu0 0.0
      %7135 = vmatpush.msra.mxu0 0.0
      %7136 = vmatpush.msra.mxu0 0.0
      %7137 = vmatpush.msra.mxu0 0.0
      %7138 = vmatpush.msra.mxu0 0.0
      %7139 = vmatpush.msra.mxu0 0.0
      %7140 = vmatpush.msra.mxu0 0.0
      %7141 = vmatpush.msra.mxu0 %v7118
      %7142 = vmatpush.msra.mxu0 %v7116
      %7143 = vmatmul.f32.gmra.mxu0 %v7122
      %v7144 = vpop.f32.mrf.mxu0
      %v7145 = vadd.f32 0.0, %v7144
      %7146 = vmatmul.f32.gmra.mxu0 %v7125
      %v7147 = vpop.f32.mrf.mxu0
      %v7148 = vadd.f32 0.0, %v7147
      %7149 = vdwg.mxu0
      %7150 = vrot.lane.b32.xlu0 %v461, 40
      %v7151 = vpop.permute.xlu0 %7150
      %7152 = vrot.lane.b32.xlu0 %v464, 40
      %v7153 = vpop.permute.xlu0 %7152
      %v7157 = vsel %vm1075, %v6689, 0
      %v7160 = vsel %vm1075, %v6690, 0
      %7162 = vmatpush.msra.mxu0 0.0
      %7163 = vmatpush.msra.mxu0 0.0
      %7164 = vmatpush.msra.mxu0 0.0
      %7165 = vmatpush.msra.mxu0 0.0
      %7166 = vmatpush.msra.mxu0 0.0
      %7167 = vmatpush.msra.mxu0 0.0
      %7168 = vmatpush.msra.mxu0 0.0
      %7169 = vmatpush.msra.mxu0 0.0
      %7170 = vmatpush.msra.mxu0 0.0
      %7171 = vmatpush.msra.mxu0 0.0
      %7172 = vmatpush.msra.mxu0 0.0
      %7173 = vmatpush.msra.mxu0 0.0
      %7174 = vmatpush.msra.mxu0 0.0
      %7175 = vmatpush.msra.mxu0 0.0
      %7176 = vmatpush.msra.mxu0 %v7153
      %7177 = vmatpush.msra.mxu0 %v7151
      %7178 = vmatmul.f32.gmra.mxu0 %v7157
      %v7179 = vpop.f32.mrf.mxu0
      %v7180 = vadd.f32 0.0, %v7179
      %7181 = vmatmul.f32.gmra.mxu0 %v7160
      %v7182 = vpop.f32.mrf.mxu0
      %v7183 = vadd.f32 0.0, %v7182
      %7184 = vdwg.mxu0
      %7185 = vrot.lane.b32.xlu0 %v467, 40
      %v7186 = vpop.permute.xlu0 %7185
      %7187 = vrot.lane.b32.xlu0 %v470, 40
      %v7188 = vpop.permute.xlu0 %7187
      %v7192 = vsel %vm1075, %v6691, 0
      %v7195 = vsel %vm1075, %v6692, 0
      %7197 = vmatpush.msra.mxu0 0.0
      %7198 = vmatpush.msra.mxu0 0.0
      %7199 = vmatpush.msra.mxu0 0.0
      %7200 = vmatpush.msra.mxu0 0.0
      %7201 = vmatpush.msra.mxu0 0.0
      %7202 = vmatpush.msra.mxu0 0.0
      %7203 = vmatpush.msra.mxu0 0.0
      %7204 = vmatpush.msra.mxu0 0.0
      %7205 = vmatpush.msra.mxu0 0.0
      %7206 = vmatpush.msra.mxu0 0.0
      %7207 = vmatpush.msra.mxu0 0.0
      %7208 = vmatpush.msra.mxu0 0.0
      %7209 = vmatpush.msra.mxu0 0.0
      %7210 = vmatpush.msra.mxu0 0.0
      %7211 = vmatpush.msra.mxu0 %v7188
      %7212 = vmatpush.msra.mxu0 %v7186
      %7213 = vmatmul.f32.gmra.mxu0 %v7192
      %v7214 = vpop.f32.mrf.mxu0
      %v7215 = vadd.f32 0.0, %v7214
      %7216 = vmatmul.f32.gmra.mxu0 %v7195
      %v7217 = vpop.f32.mrf.mxu0
      %v7218 = vadd.f32 0.0, %v7217
      %7219 = vdwg.mxu0
      %7220 = vrot.lane.b32.xlu0 %v473, 40
      %v7221 = vpop.permute.xlu0 %7220
      %7222 = vrot.lane.b32.xlu0 %v476, 40
      %v7223 = vpop.permute.xlu0 %7222
      %v7227 = vsel %vm1075, %v6693, 0
      %v7230 = vsel %vm1075, %v6694, 0
      %7232 = vmatpush.msra.mxu0 0.0
      %7233 = vmatpush.msra.mxu0 0.0
      %7234 = vmatpush.msra.mxu0 0.0
      %7235 = vmatpush.msra.mxu0 0.0
      %7236 = vmatpush.msra.mxu0 0.0
      %7237 = vmatpush.msra.mxu0 0.0
      %7238 = vmatpush.msra.mxu0 0.0
      %7239 = vmatpush.msra.mxu0 0.0
      %7240 = vmatpush.msra.mxu0 0.0
      %7241 = vmatpush.msra.mxu0 0.0
      %7242 = vmatpush.msra.mxu0 0.0
      %7243 = vmatpush.msra.mxu0 0.0
      %7244 = vmatpush.msra.mxu0 0.0
      %7245 = vmatpush.msra.mxu0 0.0
      %7246 = vmatpush.msra.mxu0 %v7223
      %7247 = vmatpush.msra.mxu0 %v7221
      %7248 = vmatmul.f32.gmra.mxu0 %v7227
      %v7249 = vpop.f32.mrf.mxu0
      %v7250 = vadd.f32 0.0, %v7249
      %7251 = vmatmul.f32.gmra.mxu0 %v7230
      %v7252 = vpop.f32.mrf.mxu0
      %v7253 = vadd.f32 0.0, %v7252
      %7254 = vdwg.mxu0
      %v7256 = vsel %vm488, %v6725, 0
      %v7259 = vsel %vm488, %v6728, 0
      %v7262 = vsel %vm488, %v6760, 0
      %v7265 = vsel %vm488, %v6763, 0
      %v7268 = vsel %vm488, %v6795, 0
      %v7271 = vsel %vm488, %v6798, 0
      %v7274 = vsel %vm488, %v6830, 0
      %v7277 = vsel %vm488, %v6833, 0
      %v7280 = vsel %vm488, %v6865, 0
      %v7283 = vsel %vm488, %v6868, 0
      %v7286 = vsel %vm488, %v6900, 0
      %v7289 = vsel %vm488, %v6903, 0
      %v7292 = vsel %vm488, %v6935, 0
      %v7295 = vsel %vm488, %v6938, 0
      %v7298 = vsel %vm488, %v6970, 0
      %v7301 = vsel %vm488, %v6973, 0
      %v7304 = vsel %vm488, %v7005, 0
      %v7307 = vsel %vm488, %v7008, 0
      %v7310 = vsel %vm488, %v7040, 0
      %v7313 = vsel %vm488, %v7043, 0
      %v7316 = vsel %vm488, %v7075, 0
      %v7319 = vsel %vm488, %v7078, 0
      %v7322 = vsel %vm488, %v7110, 0
      %v7325 = vsel %vm488, %v7113, 0
      %v7328 = vsel %vm488, %v7145, 0
      %v7331 = vsel %vm488, %v7148, 0
      %v7334 = vsel %vm488, %v7180, 0
      %v7337 = vsel %vm488, %v7183, 0
      %v7340 = vsel %vm488, %v7215, 0
      %v7343 = vsel %vm488, %v7218, 0
      %v7346 = vsel %vm488, %v7250, 0
      %v7349 = vsel %vm488, %v7253, 0
      %7351 = vmatpush.msra.mxu0 0.0
      %7352 = vmatpush.msra.mxu0 0.0
      %7353 = vmatpush.msra.mxu0 0.0
      %7354 = vmatpush.msra.mxu0 0.0
      %7355 = vmatpush.msra.mxu0 0.0
      %7356 = vmatpush.msra.mxu0 0.0
      %7357 = vmatpush.msra.mxu0 0.0
      %7358 = vmatpush.msra.mxu0 0.0
      %7359 = vmatpush.msra.mxu0 0.0
      %7360 = vmatpush.msra.mxu0 0.0
      %7361 = vmatpush.msra.mxu0 0.0
      %7362 = vmatpush.msra.mxu0 0.0
      %7363 = vmatpush.msra.mxu0 0.0
      %7364 = vmatpush.msra.mxu0 0.0
      %7365 = vmatpush.msra.mxu0 0.0
      %7366 = vmatpush.msra.mxu0 %v481
      %7367 = vmatmul.f32.gmra.mxu0 %v7256
      %v7368 = vpop.f32.mrf.mxu0
      %v7369 = vadd.f32 0.0, %v7368
      %7370 = vmatmul.f32.gmra.mxu0 %v7259
      %v7371 = vpop.f32.mrf.mxu0
      %v7372 = vadd.f32 0.0, %v7371
      %7373 = vmatmul.f32.gmra.mxu0 %v7262
      %v7374 = vpop.f32.mrf.mxu0
      %v7375 = vadd.f32 0.0, %v7374
      %7376 = vmatmul.f32.gmra.mxu0 %v7265
      %v7377 = vpop.f32.mrf.mxu0
      %v7378 = vadd.f32 0.0, %v7377
      %7379 = vmatmul.f32.gmra.mxu0 %v7268
      %v7380 = vpop.f32.mrf.mxu0
      %v7381 = vadd.f32 0.0, %v7380
      %7382 = vmatmul.f32.gmra.mxu0 %v7271
      %v7383 = vpop.f32.mrf.mxu0
      %v7384 = vadd.f32 0.0, %v7383
      %7385 = vmatmul.f32.gmra.mxu0 %v7274
      %v7386 = vpop.f32.mrf.mxu0
      %v7387 = vadd.f32 0.0, %v7386
      %7388 = vmatmul.f32.gmra.mxu0 %v7277
      %v7389 = vpop.f32.mrf.mxu0
      %v7390 = vadd.f32 0.0, %v7389
      %7391 = vmatmul.f32.gmra.mxu0 %v7280
      %v7392 = vpop.f32.mrf.mxu0
      %v7393 = vadd.f32 0.0, %v7392
      %7394 = vmatmul.f32.gmra.mxu0 %v7283
      %v7395 = vpop.f32.mrf.mxu0
      %v7396 = vadd.f32 0.0, %v7395
      %7397 = vmatmul.f32.gmra.mxu0 %v7286
      %v7398 = vpop.f32.mrf.mxu0
      %v7399 = vadd.f32 0.0, %v7398
      %7400 = vmatmul.f32.gmra.mxu0 %v7289
      %v7401 = vpop.f32.mrf.mxu0
      %v7402 = vadd.f32 0.0, %v7401
      %7403 = vmatmul.f32.gmra.mxu0 %v7292
      %v7404 = vpop.f32.mrf.mxu0
      %v7405 = vadd.f32 0.0, %v7404
      %7406 = vmatmul.f32.gmra.mxu0 %v7295
      %v7407 = vpop.f32.mrf.mxu0
      %v7408 = vadd.f32 0.0, %v7407
      %7409 = vmatmul.f32.gmra.mxu0 %v7298
      %v7410 = vpop.f32.mrf.mxu0
      %v7411 = vadd.f32 0.0, %v7410
      %7412 = vmatmul.f32.gmra.mxu0 %v7301
      %v7413 = vpop.f32.mrf.mxu0
      %v7414 = vadd.f32 0.0, %v7413
      %7415 = vmatmul.f32.gmra.mxu0 %v7304
      %v7416 = vpop.f32.mrf.mxu0
      %v7417 = vadd.f32 0.0, %v7416
      %7418 = vmatmul.f32.gmra.mxu0 %v7307
      %v7419 = vpop.f32.mrf.mxu0
      %v7420 = vadd.f32 0.0, %v7419
      %7421 = vmatmul.f32.gmra.mxu0 %v7310
      %v7422 = vpop.f32.mrf.mxu0
      %v7423 = vadd.f32 0.0, %v7422
      %7424 = vmatmul.f32.gmra.mxu0 %v7313
      %v7425 = vpop.f32.mrf.mxu0
      %v7426 = vadd.f32 0.0, %v7425
      %7427 = vmatmul.f32.gmra.mxu0 %v7316
      %v7428 = vpop.f32.mrf.mxu0
      %v7429 = vadd.f32 0.0, %v7428
      %7430 = vmatmul.f32.gmra.mxu0 %v7319
      %v7431 = vpop.f32.mrf.mxu0
      %v7432 = vadd.f32 0.0, %v7431
      %7433 = vmatmul.f32.gmra.mxu0 %v7322
      %v7434 = vpop.f32.mrf.mxu0
      %v7435 = vadd.f32 0.0, %v7434
      %7436 = vmatmul.f32.gmra.mxu0 %v7325
      %v7437 = vpop.f32.mrf.mxu0
      %v7438 = vadd.f32 0.0, %v7437
      %7439 = vmatmul.f32.gmra.mxu0 %v7328
      %v7440 = vpop.f32.mrf.mxu0
      %v7441 = vadd.f32 0.0, %v7440
      %7442 = vmatmul.f32.gmra.mxu0 %v7331
      %v7443 = vpop.f32.mrf.mxu0
      %v7444 = vadd.f32 0.0, %v7443
      %7445 = vmatmul.f32.gmra.mxu0 %v7334
      %v7446 = vpop.f32.mrf.mxu0
      %v7447 = vadd.f32 0.0, %v7446
      %7448 = vmatmul.f32.gmra.mxu0 %v7337
      %v7449 = vpop.f32.mrf.mxu0
      %v7450 = vadd.f32 0.0, %v7449
      %7451 = vmatmul.f32.gmra.mxu0 %v7340
      %v7452 = vpop.f32.mrf.mxu0
      %v7453 = vadd.f32 0.0, %v7452
      %7454 = vmatmul.f32.gmra.mxu0 %v7343
      %v7455 = vpop.f32.mrf.mxu0
      %v7456 = vadd.f32 0.0, %v7455
      %7457 = vmatmul.f32.gmra.mxu0 %v7346
      %v7458 = vpop.f32.mrf.mxu0
      %v7459 = vadd.f32 0.0, %v7458
      %7460 = vmatmul.f32.gmra.mxu0 %v7349
      %v7461 = vpop.f32.mrf.mxu0
      %v7462 = vadd.f32 0.0, %v7461
      %7463 = vdwg.mxu0
      %v7464 = vadd.f32 %v5687, %v7369
      %v7465 = vadd.f32 %v5688, %v7372
      %v7466 = vadd.f32 %v5689, %v7375
      %v7467 = vadd.f32 %v5690, %v7378
      %v7468 = vadd.f32 %v5691, %v7381
      %v7469 = vadd.f32 %v5692, %v7384
      %v7470 = vadd.f32 %v5693, %v7387
      %v7471 = vadd.f32 %v5694, %v7390
      %v7472 = vadd.f32 %v5695, %v7393
      %v7473 = vadd.f32 %v5696, %v7396
      %v7474 = vadd.f32 %v5697, %v7399
      %v7475 = vadd.f32 %v5698, %v7402
      %v7476 = vadd.f32 %v5699, %v7405
      %v7477 = vadd.f32 %v5700, %v7408
      %v7478 = vadd.f32 %v5701, %v7411
      %v7479 = vadd.f32 %v5702, %v7414
      %v7480 = vadd.f32 %v5703, %v7417
      %v7481 = vadd.f32 %v5704, %v7420
      %v7482 = vadd.f32 %v5705, %v7423
      %v7483 = vadd.f32 %v5706, %v7426
      %v7484 = vadd.f32 %v5707, %v7429
      %v7485 = vadd.f32 %v5708, %v7432
      %v7486 = vadd.f32 %v5709, %v7435
      %v7487 = vadd.f32 %v5710, %v7438
      %v7488 = vadd.f32 %v5711, %v7441
      %v7489 = vadd.f32 %v5712, %v7444
      %v7490 = vadd.f32 %v5713, %v7447
      %v7491 = vadd.f32 %v5714, %v7450
      %v7492 = vadd.f32 %v5715, %v7453
      %v7493 = vadd.f32 %v5716, %v7456
      %v7494 = vadd.f32 %v5717, %v7459
      %v7495 = vadd.f32 %v5718, %v7462
      %v7496 = vld [vmem:[%s4] sm:$0x1]
      %v7498 = vperm.slane %v7496, 0
      %v7500 = vadd.f32 %v7464, %v7498
      %v7501 = vadd.f32 %v7465, %v7498
      %v7502 = vadd.f32 %v7466, %v7498
      %v7503 = vadd.f32 %v7467, %v7498
      %v7504 = vadd.f32 %v7468, %v7498
      %v7505 = vadd.f32 %v7469, %v7498
      %v7506 = vadd.f32 %v7470, %v7498
      %v7507 = vadd.f32 %v7471, %v7498
      %v7508 = vadd.f32 %v7472, %v7498
      %v7509 = vadd.f32 %v7473, %v7498
      %v7510 = vadd.f32 %v7474, %v7498
      %v7511 = vadd.f32 %v7475, %v7498
      %v7512 = vadd.f32 %v7476, %v7498
      %v7513 = vadd.f32 %v7477, %v7498
      %v7514 = vadd.f32 %v7478, %v7498
      %v7515 = vadd.f32 %v7479, %v7498
      %v7516 = vadd.f32 %v7480, %v7498
      %v7517 = vadd.f32 %v7481, %v7498
      %v7518 = vadd.f32 %v7482, %v7498
      %v7519 = vadd.f32 %v7483, %v7498
      %v7520 = vadd.f32 %v7484, %v7498
      %v7521 = vadd.f32 %v7485, %v7498
      %v7522 = vadd.f32 %v7486, %v7498
      %v7523 = vadd.f32 %v7487, %v7498
      %v7524 = vadd.f32 %v7488, %v7498
      %v7525 = vadd.f32 %v7489, %v7498
      %v7526 = vadd.f32 %v7490, %v7498
      %v7527 = vadd.f32 %v7491, %v7498
      %v7528 = vadd.f32 %v7492, %v7498
      %v7529 = vadd.f32 %v7493, %v7498
      %v7530 = vadd.f32 %v7494, %v7498
      %v7531 = vadd.f32 %v7495, %v7498
      %7532 = vst.msk [vmem:[%s226] sm:$0xff] %vm268, %v7500
      %7533 = vst.msk [vmem:[%s226 + $0x8] sm:$0xff] %vm268, %v7501
      %7534 = vst.msk [vmem:[%s226 + $0x10] sm:$0xff] %vm268, %v7502
      %7535 = vst.msk [vmem:[%s226 + $0x18] sm:$0xff] %vm268, %v7503
      %7536 = vst.msk [vmem:[%s226 + $0x20] sm:$0xff] %vm268, %v7504
      %7537 = vst.msk [vmem:[%s226 + $0x28] sm:$0xff] %vm268, %v7505
      %7538 = vst.msk [vmem:[%s226 + $0x30] sm:$0xff] %vm268, %v7506
      %7539 = vst.msk [vmem:[%s226 + $0x38] sm:$0xff] %vm268, %v7507
      %7540 = vst.msk [vmem:[%s226 + $0x40] sm:$0xff] %vm268, %v7508
      %7541 = vst.msk [vmem:[%s226 + $0x48] sm:$0xff] %vm268, %v7509
      %7542 = vst.msk [vmem:[%s226 + $0x50] sm:$0xff] %vm268, %v7510
      %7543 = vst.msk [vmem:[%s226 + $0x58] sm:$0xff] %vm268, %v7511
      %7544 = vst.msk [vmem:[%s226 + $0x60] sm:$0xff] %vm268, %v7512
      %7545 = vst.msk [vmem:[%s226 + $0x68] sm:$0xff] %vm268, %v7513
      %7546 = vst.msk [vmem:[%s226 + $0x70] sm:$0xff] %vm268, %v7514
      %7547 = vst.msk [vmem:[%s226 + $0x78] sm:$0xff] %vm268, %v7515
      %7548 = vst.msk [vmem:[%s226 + $0x80] sm:$0xff] %vm268, %v7516
      %7549 = vst.msk [vmem:[%s226 + $0x88] sm:$0xff] %vm268, %v7517
      %7550 = vst.msk [vmem:[%s226 + $0x90] sm:$0xff] %vm268, %v7518
      %7551 = vst.msk [vmem:[%s226 + $0x98] sm:$0xff] %vm268, %v7519
      %7552 = vst.msk [vmem:[%s226 + $0xa0] sm:$0xff] %vm268, %v7520
      %7553 = vst.msk [vmem:[%s226 + $0xa8] sm:$0xff] %vm268, %v7521
      %7554 = vst.msk [vmem:[%s226 + $0xb0] sm:$0xff] %vm268, %v7522
      %7555 = vst.msk [vmem:[%s226 + $0xb8] sm:$0xff] %vm268, %v7523
      %7556 = vst.msk [vmem:[%s226 + $0xc0] sm:$0xff] %vm268, %v7524
      %7557 = vst.msk [vmem:[%s226 + $0xc8] sm:$0xff] %vm268, %v7525
      %7558 = vst.msk [vmem:[%s226 + $0xd0] sm:$0xff] %vm268, %v7526
      %7559 = vst.msk [vmem:[%s226 + $0xd8] sm:$0xff] %vm268, %v7527
      %7560 = vst.msk [vmem:[%s226 + $0xe0] sm:$0xff] %vm268, %v7528
      %7561 = vst.msk [vmem:[%s226 + $0xe8] sm:$0xff] %vm268, %v7529
      %7562 = vst.msk [vmem:[%s226 + $0xf0] sm:$0xff] %vm268, %v7530
      %7563 = vst.msk [vmem:[%s226 + $0xf8] sm:$0xff] %vm268, %v7531
      %s7564 = smul.u32 32, %s16
      %p7565 = scmp.lt.s32.totalorder %s7564, 63
      %s7566 = scalar_select %p7565, %s7564, 63
      %s7567 = smul.addr %s7566, 8
      %s7568 = scalar_lea.vmem %s5, %s7567
      // Predicated region
      $region41: #{tpu_custom_call.1} parent=39 // pred_check
        %p7569 = pneg %p144
      $region42: #{tpu_custom_call.1} parent=39 // pred_check_branch
        %7571 = sbr.rel (%p7569) target = $region44
      $region43: #{tpu_custom_call.1} parent=39 // pred_region
        %s7572 = smul.u32 32, %s16
      $region44: #{tpu_custom_call.1} parent=39 // pred_fallthru
        _
    $region40: #{tpu_custom_call.1} parent=5 // pred_fallthru
      _
    %p7573 = scmp.le.s32.totalorder 2, %s11
    // Predicated region
    $region45: #{tpu_custom_call.1} parent=5 // pred_check
      %p7574 = pneg %p7573
    $region46: #{tpu_custom_call.1} parent=5 // pred_check_branch
      %7576 = sbr.rel (%p7574) target = $region48
    $region47: #{tpu_custom_call.1} parent=5 // pred_region
      %s7577 = ssub.s32 %s11, 2
      // Predicated region
      $region49: #{tpu_custom_call.1} parent=47 // pred_check
        %p7578 = pneg %p150
      $region50: #{tpu_custom_call.1} parent=47 // pred_check_branch
        %7580 = sbr.rel (%p7578) target = $region52
      $region51: #{tpu_custom_call.1} parent=47 // pred_region
        %s7581 = smul.u32 32, %s17
        %p7582 = scmp.lt.s32.totalorder %s7581, 63
        %s7583 = scalar_select %p7582, %s7581, 63
        %s7584 = smul.addr %s7583, 8
        %s7585 = scalar_lea.vmem %s5, %s7584
      $region52: #{tpu_custom_call.1} parent=47 // pred_fallthru
        _
    $region48: #{tpu_custom_call.1} parent=5 // pred_fallthru
      _
  $region6: #{tpu_custom_call.1} parent=0 // loop_footer
    %s15 = sadd.s32 1, %s11
  $region7: #{tpu_custom_call.1} parent=0 // loop_footer_branch
    %10 = sbr.rel target = $region3
  $region8: #{tpu_custom_call.1} parent=0 // loop_exit
    _

</llo_original>
